<compile_context>
chip_gen: v6e
topology: v6e:2x2x1
jax: 0.10.0
libtpu: 0.0.40
codegen_flags: <defaults>
</compile_context>

<pallas_src>
import functools

import jax
import jax.numpy as jnp
from jax.experimental import pallas as pl
from jax.experimental.pallas import tpu as pltpu

KSIZE = 7
PAD = 3
INV_SQRT2 = 0.7071067811865476


def block_kernel(xpad_ref, dw_w_ref, dw_b_ref, ln_w_ref, ln_b_ref, gmat_ref,
                 w1_ref, b1_ref, gamma_ref, beta_ref, w2_ref, b2_ref,
                 out_ref, *, H, W, C, Bs):
    """One grid step = Bs images folded into the lane dim (L = Bs*C)."""
    L = Bs * C
    C4 = 4 * C
    L4 = Bs * C4
    Wp = xpad_ref.shape[2]                          # padded W, multiple of 8

    xp = xpad_ref[0]                                # (Hp, Wp, L) f32
    dww = dw_w_ref[...]                             # (7, 7, L)

    # ---- depthwise 7x7 conv ---------------------------------------------------
    # kw taps: sublane rotation (XLU) + aligned [:, :W, :] slice; kh taps: free
    # leading-dim slices.  Rotation wrap-around only lands at columns >= W,
    # which are sliced away (Wp >= W + 6).
    acc = jnp.zeros((H, W, L), jnp.float32)
    resid = None
    for kw in range(KSIZE):
        if kw == 0:
            col = xp[:, :W, :]
        else:
            col = pltpu.roll(xp, shift=Wp - kw, axis=1)[:, :W, :]
        if kw == PAD:
            resid = col[PAD:PAD + H, :, :]          # original (unpadded) input
        for kh in range(KSIZE):
            acc = acc + col[kh:kh + H, :, :] * dww[kh, kw]
    x = (acc + dw_b_ref[0, :]).reshape(H * W, L)

    # ---- LayerNorm over each sample's C channels (eps=1e-6, biased var) -------
    # Per-(row, sample) channel sums computed lane-densely on the MXU with a
    # block-diagonal ones matrix (result comes back already broadcast).
    g = gmat_ref[...]
    inv_c = 1.0 / C
    mean = jnp.dot(x, g, preferred_element_type=jnp.float32) * inv_c
    xc = x - mean
    var = jnp.dot(xc * xc, g, preferred_element_type=jnp.float32) * inv_c
    xn = xc * jax.lax.rsqrt(var + 1e-6) * ln_w_ref[0, :] + ln_b_ref[0, :]

    # ---- pwconv1: block-diag (L, 4L) bf16 MXU matmul, f32 accumulation --------
    y = jnp.dot(xn.astype(jnp.bfloat16), w1_ref[...],
                preferred_element_type=jnp.float32) + b1_ref[0, :]

    # ---- exact GELU (matches torch.nn.GELU() default) --------------------------
    y = 0.5 * y * (1.0 + jax.lax.erf(y * INV_SQRT2))

    # ---- GRN: per-sample per-channel L2 norm over the spatial dims -------------
    gx = jnp.sqrt(jnp.sum(y * y, axis=0, keepdims=True))              # (1, L4)
    gx_g = gx.reshape(Bs, C4)
    mu = jnp.mean(gx_g, axis=-1, keepdims=True)                       # (Bs, 1)
    nx = (gx_g / (mu + 1e-6)).reshape(1, L4)
    y = gamma_ref[0, :] * (y * nx) + beta_ref[0, :] + y

    # ---- pwconv2: block-diag (4L, L) bf16 MXU matmul, f32 accumulation --------
    z = jnp.dot(y.astype(jnp.bfloat16), w2_ref[...],
                preferred_element_type=jnp.float32) + b2_ref[0, :]

    # ---- residual + lane-dense store -------------------------------------------
    out_ref[0] = (resid.reshape(H * W, L) + z).astype(out_ref.dtype)


def convnext_block(x_nchw, params):
    B, C, H, W = x_nchw.shape
    C4 = 4 * C
    HW = H * W

    # Fold Bs images into the lane dim so L = Bs*C fills the 128 lanes.
    Bs = max(1, min(B, 128 // C)) if C <= 128 else 1
    Bpad = -(-B // Bs) * Bs
    G = Bpad // Bs
    L = Bs * C
    L4 = Bs * C4

    Hp = H + 2 * PAD
    Wpp = W + 2 * PAD
    Wpp += (-Wpp) % 8                      # keep sublane rolls/slices aligned

    # NCHW -> folded channels-last (G, H, W, Bs*C), zero-padded for the conv.
    xb = x_nchw
    if Bpad != B:
        xb = jnp.pad(xb, ((0, Bpad - B), (0, 0), (0, 0), (0, 0)))
    xg = xb.reshape(G, Bs, C, H, W).transpose(0, 3, 4, 1, 2).reshape(G, H, W, L)
    xpad = jnp.pad(xg, ((0, 0), (PAD, PAD), (PAD, Wpp - W - PAD), (0, 0)))

    eye = jnp.eye(Bs, dtype=jnp.float32)
    dw_w = jnp.tile(params["dw_w"], (1, 1, Bs))                       # (7,7,L)
    dw_b = jnp.tile(params["dw_b"], Bs).reshape(1, L)
    ln_w = jnp.tile(params["ln_w"], Bs).reshape(1, L)
    ln_b = jnp.tile(params["ln_b"], Bs).reshape(1, L)
    gmat = jnp.kron(eye, jnp.ones((C, C), jnp.float32))               # (L, L)
    w1 = jnp.kron(eye, params["w1"]).astype(jnp.bfloat16)             # (L, L4)
    b1 = jnp.tile(params["b1"], Bs).reshape(1, L4)
    gamma = jnp.tile(params["gamma"], Bs).reshape(1, L4)
    beta = jnp.tile(params["beta"], Bs).reshape(1, L4)
    w2 = jnp.kron(eye, params["w2"]).astype(jnp.bfloat16)             # (L4, L)
    b2 = jnp.tile(params["b2"], Bs).reshape(1, L)

    def full(shape):
        n = len(shape)
        return pl.BlockSpec(shape, lambda g_, _n=n: (0,) * _n)

    kern = functools.partial(block_kernel, H=H, W=W, C=C, Bs=Bs)

    # Right-sized VMEM budget (double-buffered blocks + weights + live
    # intermediates, ~4x headroom) -- never the full 64 MiB of a v7x TC.
    blk_bytes = 4 * (Hp * Wpp * L + HW * L)
    wt_bytes = (4 * (KSIZE * KSIZE * L + 4 * L + L * L + 3 * L4)
                + 2 * (L * L4 + L4 * L))
    interm_bytes = 4 * (3 * HW * L4 + 6 * HW * L + 2 * Hp * Wpp * L)
    vmem_limit = int(min(48 * 2**20,
                         max(16 * 2**20,
                             4 * (2 * blk_bytes + 2 * wt_bytes + interm_bytes))))

    flops_step = (2 * KSIZE * KSIZE * HW * L            # dwconv
                  + 2 * 2 * HW * L * L                  # LN stat matmuls
                  + 2 * HW * L * L4                     # pwconv1 (block-diag)
                  + 2 * HW * L4 * L                     # pwconv2 (block-diag)
                  + 12 * HW * L4)                       # GELU / GRN elementwise
    bytes_step = 4 * (Hp * Wpp * L + HW * L) + wt_bytes
    cost = pl.CostEstimate(flops=G * flops_step,
                           transcendentals=G * (HW * L4 + HW * L),
                           bytes_accessed=G * bytes_step)

    out = pl.pallas_call(
        kern,
        out_shape=jax.ShapeDtypeStruct((G, HW, L), x_nchw.dtype),
        grid=(G,),
        in_specs=[
            pl.BlockSpec((1, Hp, Wpp, L), lambda g_: (g_, 0, 0, 0)),
            full((KSIZE, KSIZE, L)),
            full((1, L)), full((1, L)), full((1, L)),
            full((L, L)),
            full((L, L4)), full((1, L4)), full((1, L4)), full((1, L4)),
            full((L4, L)), full((1, L)),
        ],
        out_specs=pl.BlockSpec((1, HW, L), lambda g_: (g_, 0, 0)),
        compiler_params=pltpu.CompilerParams(
            dimension_semantics=("parallel",),      # grid steps independent
            vmem_limit_bytes=vmem_limit),
        cost_estimate=cost,
    )(xpad, dw_w, dw_b, ln_w, ln_b, gmat, w1, b1, gamma, beta, w2, b2)

    # Unfold: (G, H*W, Bs*C) -> (B, C, H, W)
    out = out.reshape(G, H, W, Bs, C).transpose(0, 3, 4, 1, 2)
    out = out.reshape(Bpad, C, H, W)
    return out[:B]


def reference_block(x_nchw, params):
    """Pure-JAX f32 reference with the module's semantics (NCHW in/out)."""
    B, C, H, W = x_nchw.shape
    w = jnp.transpose(params["dw_w"], (2, 0, 1))[:, None, :, :]       # (C,1,7,7)
    y = jax.lax.conv_general_dilated(
        x_nchw, w, window_strides=(1, 1), padding=((PAD, PAD), (PAD, PAD)),
        dimension_numbers=("NCHW", "OIHW", "NCHW"), feature_group_count=C)
    y = y + params["dw_b"][None, :, None, None]
    y = jnp.transpose(y, (0, 2, 3, 1))                                # NHWC
    mean = jnp.mean(y, axis=-1, keepdims=True)
    var = jnp.mean((y - mean) ** 2, axis=-1, keepdims=True)
    y = (y - mean) / jnp.sqrt(var + 1e-6)
    y = y * params["ln_w"] + params["ln_b"]
    y = y @ params["w1"] + params["b1"]
    y = 0.5 * y * (1.0 + jax.lax.erf(y * INV_SQRT2))
    gx = jnp.sqrt(jnp.sum(y * y, axis=(1, 2), keepdims=True))
    nx = gx / (jnp.mean(gx, axis=-1, keepdims=True) + 1e-6)
    y = params["gamma"] * (y * nx) + params["beta"] + y
    y = y @ params["w2"] + params["b2"]
    y = jnp.transpose(y, (0, 3, 1, 2))
    return x_nchw + y


def init_params(key, dim):
    ks = jax.random.split(key, 10)
    c4 = 4 * dim
    return {
        "dw_w": 0.1 * jax.random.normal(ks[0], (KSIZE, KSIZE, dim), jnp.float32),
        "dw_b": 0.1 * jax.random.normal(ks[1], (dim,), jnp.float32),
        "ln_w": 1.0 + 0.1 * jax.random.normal(ks[2], (dim,), jnp.float32),
        "ln_b": 0.1 * jax.random.normal(ks[3], (dim,), jnp.float32),
        "w1": 0.1 * jax.random.normal(ks[4], (dim, c4), jnp.float32),
        "b1": 0.1 * jax.random.normal(ks[5], (c4,), jnp.float32),
        "gamma": 0.1 * jax.random.normal(ks[6], (c4,), jnp.float32),
        "beta": 0.1 * jax.random.normal(ks[7], (c4,), jnp.float32),
        "w2": 0.1 * jax.random.normal(ks[8], (c4, dim), jnp.float32),
        "b2": 0.1 * jax.random.normal(ks[9], (dim,), jnp.float32),
    }


if __name__ == "__main__":
    key = jax.random.PRNGKey(0)
    k_x, k_p = jax.random.split(key)

    # B=8 with C=32 -> Bs=4 images per grid step, 2 grid steps.
    B, dim, H, W = 8, 32, 16, 16
    x = jax.random.normal(k_x, (B, dim, H, W), jnp.float32)   # NCHW, like PyTorch
    params = init_params(k_p, dim)

    out = jax.block_until_ready(convnext_block(x, params))
    ref = jax.block_until_ready(reference_block(x, params))

    assert out.shape == x.shape and out.dtype == x.dtype
    # Tolerance accounts for bf16 MXU operands (f32 accumulation) in the kernel.
    max_diff = jnp.max(jnp.abs(out - ref))
    assert jnp.allclose(out, ref, atol=2e-2, rtol=2e-2), f"max abs diff {max_diff}"

    print("KERNEL_OK")
</pallas_src>

<mosaic_0001>
module attributes {stable_mosaic.version = 11 : i64} {
  func.func @block_kernel(%arg0: i32, %arg1: memref<1x22x24x128xf32, #tpu.memory_space<vmem>>, %arg2: memref<7x7x128xf32, #tpu.memory_space<vmem>>, %arg3: memref<1x128xf32, #tpu.memory_space<vmem>>, %arg4: memref<1x128xf32, #tpu.memory_space<vmem>>, %arg5: memref<1x128xf32, #tpu.memory_space<vmem>>, %arg6: memref<128x128xf32, #tpu.memory_space<vmem>>, %arg7: memref<128x512xbf16, #tpu.memory_space<vmem>>, %arg8: memref<1x512xf32, #tpu.memory_space<vmem>>, %arg9: memref<1x512xf32, #tpu.memory_space<vmem>>, %arg10: memref<1x512xf32, #tpu.memory_space<vmem>>, %arg11: memref<512x128xbf16, #tpu.memory_space<vmem>>, %arg12: memref<1x128xf32, #tpu.memory_space<vmem>>, %arg13: memref<1x256x128xf32, #tpu.memory_space<vmem>>) attributes {dimension_semantics = [#tpu.dimension_semantics<parallel>], iteration_bounds = array<i64: 2>, scalar_prefetch = 0 : i64, scratch_operands = 0 : i64, tpu.core_type = #tpu.core_type<tc>, window_params = [{transform_indices = @transform_0, window_bounds = array<i64: 1, 22, 24, 128>}, {pipeline_mode = #tpu.pipeline_mode<synchronous>, transform_indices = @transform_1, window_bounds = array<i64: 7, 7, 128>}, {pipeline_mode = #tpu.pipeline_mode<synchronous>, transform_indices = @transform_2, window_bounds = array<i64: 1, 128>}, {pipeline_mode = #tpu.pipeline_mode<synchronous>, transform_indices = @transform_3, window_bounds = array<i64: 1, 128>}, {pipeline_mode = #tpu.pipeline_mode<synchronous>, transform_indices = @transform_4, window_bounds = array<i64: 1, 128>}, {pipeline_mode = #tpu.pipeline_mode<synchronous>, transform_indices = @transform_5, window_bounds = array<i64: 128, 128>}, {pipeline_mode = #tpu.pipeline_mode<synchronous>, transform_indices = @transform_6, window_bounds = array<i64: 128, 512>}, {pipeline_mode = #tpu.pipeline_mode<synchronous>, transform_indices = @transform_7, window_bounds = array<i64: 1, 512>}, {pipeline_mode = #tpu.pipeline_mode<synchronous>, transform_indices = @transform_8, window_bounds = array<i64: 1, 512>}, {pipeline_mode = #tpu.pipeline_mode<synchronous>, transform_indices = @transform_9, window_bounds = array<i64: 1, 512>}, {pipeline_mode = #tpu.pipeline_mode<synchronous>, transform_indices = @transform_10, window_bounds = array<i64: 512, 128>}, {pipeline_mode = #tpu.pipeline_mode<synchronous>, transform_indices = @transform_11, window_bounds = array<i64: 1, 128>}, {transform_indices = @transform_12, window_bounds = array<i64: 1, 256, 128>}]} {
    %c0 = arith.constant 0 : index
    %c0_0 = arith.constant 0 : index
    %c0_1 = arith.constant 0 : index
    %c0_2 = arith.constant 0 : index
    %0 = vector.load %arg1[%c0, %c0_0, %c0_1, %c0_2] : memref<1x22x24x128xf32, #tpu.memory_space<vmem>>, vector<1x22x24x128xf32>
    %1 = vector.shape_cast %0 : vector<1x22x24x128xf32> to vector<22x24x128xf32>
    %c0_3 = arith.constant 0 : index
    %c0_4 = arith.constant 0 : index
    %c0_5 = arith.constant 0 : index
    %2 = vector.load %arg2[%c0_3, %c0_4, %c0_5] : memref<7x7x128xf32, #tpu.memory_space<vmem>>, vector<7x7x128xf32>
    %cst = arith.constant 0.000000e+00 : f32
    %3 = vector.broadcast %cst : f32 to vector<16x16x128xf32>
    %4 = vector.extract_strided_slice %1 {offsets = [0, 0, 0], sizes = [22, 16, 128], strides = [1, 1, 1]} : vector<22x24x128xf32> to vector<22x16x128xf32>
    %5 = vector.extract_strided_slice %4 {offsets = [0, 0, 0], sizes = [16, 16, 128], strides = [1, 1, 1]} : vector<22x16x128xf32> to vector<16x16x128xf32>
    %6 = vector.extract_strided_slice %2 {offsets = [0, 0, 0], sizes = [1, 1, 128], strides = [1, 1, 1]} : vector<7x7x128xf32> to vector<1x1x128xf32>
    %7 = vector.shape_cast %6 : vector<1x1x128xf32> to vector<128xf32>
    %8 = vector.shape_cast %7 : vector<128xf32> to vector<1x1x128xf32>
    %9 = vector.broadcast %8 : vector<1x1x128xf32> to vector<16x16x128xf32>
    %10 = arith.mulf %5, %9 : vector<16x16x128xf32>
    %11 = arith.addf %3, %10 : vector<16x16x128xf32>
    %12 = vector.extract_strided_slice %4 {offsets = [1, 0, 0], sizes = [16, 16, 128], strides = [1, 1, 1]} : vector<22x16x128xf32> to vector<16x16x128xf32>
    %13 = vector.extract_strided_slice %2 {offsets = [1, 0, 0], sizes = [1, 1, 128], strides = [1, 1, 1]} : vector<7x7x128xf32> to vector<1x1x128xf32>
    %14 = vector.shape_cast %13 : vector<1x1x128xf32> to vector<128xf32>
    %15 = vector.shape_cast %14 : vector<128xf32> to vector<1x1x128xf32>
    %16 = vector.broadcast %15 : vector<1x1x128xf32> to vector<16x16x128xf32>
    %17 = arith.mulf %12, %16 : vector<16x16x128xf32>
    %18 = arith.addf %11, %17 : vector<16x16x128xf32>
    %19 = vector.extract_strided_slice %4 {offsets = [2, 0, 0], sizes = [16, 16, 128], strides = [1, 1, 1]} : vector<22x16x128xf32> to vector<16x16x128xf32>
    %20 = vector.extract_strided_slice %2 {offsets = [2, 0, 0], sizes = [1, 1, 128], strides = [1, 1, 1]} : vector<7x7x128xf32> to vector<1x1x128xf32>
    %21 = vector.shape_cast %20 : vector<1x1x128xf32> to vector<128xf32>
    %22 = vector.shape_cast %21 : vector<128xf32> to vector<1x1x128xf32>
    %23 = vector.broadcast %22 : vector<1x1x128xf32> to vector<16x16x128xf32>
    %24 = arith.mulf %19, %23 : vector<16x16x128xf32>
    %25 = arith.addf %18, %24 : vector<16x16x128xf32>
    %26 = vector.extract_strided_slice %4 {offsets = [3, 0, 0], sizes = [16, 16, 128], strides = [1, 1, 1]} : vector<22x16x128xf32> to vector<16x16x128xf32>
    %27 = vector.extract_strided_slice %2 {offsets = [3, 0, 0], sizes = [1, 1, 128], strides = [1, 1, 1]} : vector<7x7x128xf32> to vector<1x1x128xf32>
    %28 = vector.shape_cast %27 : vector<1x1x128xf32> to vector<128xf32>
    %29 = vector.shape_cast %28 : vector<128xf32> to vector<1x1x128xf32>
    %30 = vector.broadcast %29 : vector<1x1x128xf32> to vector<16x16x128xf32>
    %31 = arith.mulf %26, %30 : vector<16x16x128xf32>
    %32 = arith.addf %25, %31 : vector<16x16x128xf32>
    %33 = vector.extract_strided_slice %4 {offsets = [4, 0, 0], sizes = [16, 16, 128], strides = [1, 1, 1]} : vector<22x16x128xf32> to vector<16x16x128xf32>
    %34 = vector.extract_strided_slice %2 {offsets = [4, 0, 0], sizes = [1, 1, 128], strides = [1, 1, 1]} : vector<7x7x128xf32> to vector<1x1x128xf32>
    %35 = vector.shape_cast %34 : vector<1x1x128xf32> to vector<128xf32>
    %36 = vector.shape_cast %35 : vector<128xf32> to vector<1x1x128xf32>
    %37 = vector.broadcast %36 : vector<1x1x128xf32> to vector<16x16x128xf32>
    %38 = arith.mulf %33, %37 : vector<16x16x128xf32>
    %39 = arith.addf %32, %38 : vector<16x16x128xf32>
    %40 = vector.extract_strided_slice %4 {offsets = [5, 0, 0], sizes = [16, 16, 128], strides = [1, 1, 1]} : vector<22x16x128xf32> to vector<16x16x128xf32>
    %41 = vector.extract_strided_slice %2 {offsets = [5, 0, 0], sizes = [1, 1, 128], strides = [1, 1, 1]} : vector<7x7x128xf32> to vector<1x1x128xf32>
    %42 = vector.shape_cast %41 : vector<1x1x128xf32> to vector<128xf32>
    %43 = vector.shape_cast %42 : vector<128xf32> to vector<1x1x128xf32>
    %44 = vector.broadcast %43 : vector<1x1x128xf32> to vector<16x16x128xf32>
    %45 = arith.mulf %40, %44 : vector<16x16x128xf32>
    %46 = arith.addf %39, %45 : vector<16x16x128xf32>
    %47 = vector.extract_strided_slice %4 {offsets = [6, 0, 0], sizes = [16, 16, 128], strides = [1, 1, 1]} : vector<22x16x128xf32> to vector<16x16x128xf32>
    %48 = vector.extract_strided_slice %2 {offsets = [6, 0, 0], sizes = [1, 1, 128], strides = [1, 1, 1]} : vector<7x7x128xf32> to vector<1x1x128xf32>
    %49 = vector.shape_cast %48 : vector<1x1x128xf32> to vector<128xf32>
    %50 = vector.shape_cast %49 : vector<128xf32> to vector<1x1x128xf32>
    %51 = vector.broadcast %50 : vector<1x1x128xf32> to vector<16x16x128xf32>
    %52 = arith.mulf %47, %51 : vector<16x16x128xf32>
    %53 = arith.addf %46, %52 : vector<16x16x128xf32>
    %c23_i32 = arith.constant 23 : i32
    %54 = tpu.dynamic_rotate %1 by %c23_i32 dim 1 : vector<22x24x128xf32>, i32 -> vector<22x24x128xf32>
    %55 = vector.extract_strided_slice %54 {offsets = [0, 0, 0], sizes = [22, 16, 128], strides = [1, 1, 1]} : vector<22x24x128xf32> to vector<22x16x128xf32>
    %56 = vector.extract_strided_slice %55 {offsets = [0, 0, 0], sizes = [16, 16, 128], strides = [1, 1, 1]} : vector<22x16x128xf32> to vector<16x16x128xf32>
    %57 = vector.extract_strided_slice %2 {offsets = [0, 1, 0], sizes = [1, 1, 128], strides = [1, 1, 1]} : vector<7x7x128xf32> to vector<1x1x128xf32>
    %58 = vector.shape_cast %57 : vector<1x1x128xf32> to vector<128xf32>
    %59 = vector.shape_cast %58 : vector<128xf32> to vector<1x1x128xf32>
    %60 = vector.broadcast %59 : vector<1x1x128xf32> to vector<16x16x128xf32>
    %61 = arith.mulf %56, %60 : vector<16x16x128xf32>
    %62 = arith.addf %53, %61 : vector<16x16x128xf32>
    %63 = vector.extract_strided_slice %55 {offsets = [1, 0, 0], sizes = [16, 16, 128], strides = [1, 1, 1]} : vector<22x16x128xf32> to vector<16x16x128xf32>
    %64 = vector.extract_strided_slice %2 {offsets = [1, 1, 0], sizes = [1, 1, 128], strides = [1, 1, 1]} : vector<7x7x128xf32> to vector<1x1x128xf32>
    %65 = vector.shape_cast %64 : vector<1x1x128xf32> to vector<128xf32>
    %66 = vector.shape_cast %65 : vector<128xf32> to vector<1x1x128xf32>
    %67 = vector.broadcast %66 : vector<1x1x128xf32> to vector<16x16x128xf32>
    %68 = arith.mulf %63, %67 : vector<16x16x128xf32>
    %69 = arith.addf %62, %68 : vector<16x16x128xf32>
    %70 = vector.extract_strided_slice %55 {offsets = [2, 0, 0], sizes = [16, 16, 128], strides = [1, 1, 1]} : vector<22x16x128xf32> to vector<16x16x128xf32>
    %71 = vector.extract_strided_slice %2 {offsets = [2, 1, 0], sizes = [1, 1, 128], strides = [1, 1, 1]} : vector<7x7x128xf32> to vector<1x1x128xf32>
    %72 = vector.shape_cast %71 : vector<1x1x128xf32> to vector<128xf32>
    %73 = vector.shape_cast %72 : vector<128xf32> to vector<1x1x128xf32>
    %74 = vector.broadcast %73 : vector<1x1x128xf32> to vector<16x16x128xf32>
    %75 = arith.mulf %70, %74 : vector<16x16x128xf32>
    %76 = arith.addf %69, %75 : vector<16x16x128xf32>
    %77 = vector.extract_strided_slice %55 {offsets = [3, 0, 0], sizes = [16, 16, 128], strides = [1, 1, 1]} : vector<22x16x128xf32> to vector<16x16x128xf32>
    %78 = vector.extract_strided_slice %2 {offsets = [3, 1, 0], sizes = [1, 1, 128], strides = [1, 1, 1]} : vector<7x7x128xf32> to vector<1x1x128xf32>
    %79 = vector.shape_cast %78 : vector<1x1x128xf32> to vector<128xf32>
    %80 = vector.shape_cast %79 : vector<128xf32> to vector<1x1x128xf32>
    %81 = vector.broadcast %80 : vector<1x1x128xf32> to vector<16x16x128xf32>
    %82 = arith.mulf %77, %81 : vector<16x16x128xf32>
    %83 = arith.addf %76, %82 : vector<16x16x128xf32>
    %84 = vector.extract_strided_slice %55 {offsets = [4, 0, 0], sizes = [16, 16, 128], strides = [1, 1, 1]} : vector<22x16x128xf32> to vector<16x16x128xf32>
    %85 = vector.extract_strided_slice %2 {offsets = [4, 1, 0], sizes = [1, 1, 128], strides = [1, 1, 1]} : vector<7x7x128xf32> to vector<1x1x128xf32>
    %86 = vector.shape_cast %85 : vector<1x1x128xf32> to vector<128xf32>
    %87 = vector.shape_cast %86 : vector<128xf32> to vector<1x1x128xf32>
    %88 = vector.broadcast %87 : vector<1x1x128xf32> to vector<16x16x128xf32>
    %89 = arith.mulf %84, %88 : vector<16x16x128xf32>
    %90 = arith.addf %83, %89 : vector<16x16x128xf32>
    %91 = vector.extract_strided_slice %55 {offsets = [5, 0, 0], sizes = [16, 16, 128], strides = [1, 1, 1]} : vector<22x16x128xf32> to vector<16x16x128xf32>
    %92 = vector.extract_strided_slice %2 {offsets = [5, 1, 0], sizes = [1, 1, 128], strides = [1, 1, 1]} : vector<7x7x128xf32> to vector<1x1x128xf32>
    %93 = vector.shape_cast %92 : vector<1x1x128xf32> to vector<128xf32>
    %94 = vector.shape_cast %93 : vector<128xf32> to vector<1x1x128xf32>
    %95 = vector.broadcast %94 : vector<1x1x128xf32> to vector<16x16x128xf32>
    %96 = arith.mulf %91, %95 : vector<16x16x128xf32>
    %97 = arith.addf %90, %96 : vector<16x16x128xf32>
    %98 = vector.extract_strided_slice %55 {offsets = [6, 0, 0], sizes = [16, 16, 128], strides = [1, 1, 1]} : vector<22x16x128xf32> to vector<16x16x128xf32>
    %99 = vector.extract_strided_slice %2 {offsets = [6, 1, 0], sizes = [1, 1, 128], strides = [1, 1, 1]} : vector<7x7x128xf32> to vector<1x1x128xf32>
    %100 = vector.shape_cast %99 : vector<1x1x128xf32> to vector<128xf32>
    %101 = vector.shape_cast %100 : vector<128xf32> to vector<1x1x128xf32>
    %102 = vector.broadcast %101 : vector<1x1x128xf32> to vector<16x16x128xf32>
    %103 = arith.mulf %98, %102 : vector<16x16x128xf32>
    %104 = arith.addf %97, %103 : vector<16x16x128xf32>
    %c22_i32 = arith.constant 22 : i32
    %105 = tpu.dynamic_rotate %1 by %c22_i32 dim 1 : vector<22x24x128xf32>, i32 -> vector<22x24x128xf32>
    %106 = vector.extract_strided_slice %105 {offsets = [0, 0, 0], sizes = [22, 16, 128], strides = [1, 1, 1]} : vector<22x24x128xf32> to vector<22x16x128xf32>
    %107 = vector.extract_strided_slice %106 {offsets = [0, 0, 0], sizes = [16, 16, 128], strides = [1, 1, 1]} : vector<22x16x128xf32> to vector<16x16x128xf32>
    %108 = vector.extract_strided_slice %2 {offsets = [0, 2, 0], sizes = [1, 1, 128], strides = [1, 1, 1]} : vector<7x7x128xf32> to vector<1x1x128xf32>
    %109 = vector.shape_cast %108 : vector<1x1x128xf32> to vector<128xf32>
    %110 = vector.shape_cast %109 : vector<128xf32> to vector<1x1x128xf32>
    %111 = vector.broadcast %110 : vector<1x1x128xf32> to vector<16x16x128xf32>
    %112 = arith.mulf %107, %111 : vector<16x16x128xf32>
    %113 = arith.addf %104, %112 : vector<16x16x128xf32>
    %114 = vector.extract_strided_slice %106 {offsets = [1, 0, 0], sizes = [16, 16, 128], strides = [1, 1, 1]} : vector<22x16x128xf32> to vector<16x16x128xf32>
    %115 = vector.extract_strided_slice %2 {offsets = [1, 2, 0], sizes = [1, 1, 128], strides = [1, 1, 1]} : vector<7x7x128xf32> to vector<1x1x128xf32>
    %116 = vector.shape_cast %115 : vector<1x1x128xf32> to vector<128xf32>
    %117 = vector.shape_cast %116 : vector<128xf32> to vector<1x1x128xf32>
    %118 = vector.broadcast %117 : vector<1x1x128xf32> to vector<16x16x128xf32>
    %119 = arith.mulf %114, %118 : vector<16x16x128xf32>
    %120 = arith.addf %113, %119 : vector<16x16x128xf32>
    %121 = vector.extract_strided_slice %106 {offsets = [2, 0, 0], sizes = [16, 16, 128], strides = [1, 1, 1]} : vector<22x16x128xf32> to vector<16x16x128xf32>
    %122 = vector.extract_strided_slice %2 {offsets = [2, 2, 0], sizes = [1, 1, 128], strides = [1, 1, 1]} : vector<7x7x128xf32> to vector<1x1x128xf32>
    %123 = vector.shape_cast %122 : vector<1x1x128xf32> to vector<128xf32>
    %124 = vector.shape_cast %123 : vector<128xf32> to vector<1x1x128xf32>
    %125 = vector.broadcast %124 : vector<1x1x128xf32> to vector<16x16x128xf32>
    %126 = arith.mulf %121, %125 : vector<16x16x128xf32>
    %127 = arith.addf %120, %126 : vector<16x16x128xf32>
    %128 = vector.extract_strided_slice %106 {offsets = [3, 0, 0], sizes = [16, 16, 128], strides = [1, 1, 1]} : vector<22x16x128xf32> to vector<16x16x128xf32>
    %129 = vector.extract_strided_slice %2 {offsets = [3, 2, 0], sizes = [1, 1, 128], strides = [1, 1, 1]} : vector<7x7x128xf32> to vector<1x1x128xf32>
    %130 = vector.shape_cast %129 : vector<1x1x128xf32> to vector<128xf32>
    %131 = vector.shape_cast %130 : vector<128xf32> to vector<1x1x128xf32>
    %132 = vector.broadcast %131 : vector<1x1x128xf32> to vector<16x16x128xf32>
    %133 = arith.mulf %128, %132 : vector<16x16x128xf32>
    %134 = arith.addf %127, %133 : vector<16x16x128xf32>
    %135 = vector.extract_strided_slice %106 {offsets = [4, 0, 0], sizes = [16, 16, 128], strides = [1, 1, 1]} : vector<22x16x128xf32> to vector<16x16x128xf32>
    %136 = vector.extract_strided_slice %2 {offsets = [4, 2, 0], sizes = [1, 1, 128], strides = [1, 1, 1]} : vector<7x7x128xf32> to vector<1x1x128xf32>
    %137 = vector.shape_cast %136 : vector<1x1x128xf32> to vector<128xf32>
    %138 = vector.shape_cast %137 : vector<128xf32> to vector<1x1x128xf32>
    %139 = vector.broadcast %138 : vector<1x1x128xf32> to vector<16x16x128xf32>
    %140 = arith.mulf %135, %139 : vector<16x16x128xf32>
    %141 = arith.addf %134, %140 : vector<16x16x128xf32>
    %142 = vector.extract_strided_slice %106 {offsets = [5, 0, 0], sizes = [16, 16, 128], strides = [1, 1, 1]} : vector<22x16x128xf32> to vector<16x16x128xf32>
    %143 = vector.extract_strided_slice %2 {offsets = [5, 2, 0], sizes = [1, 1, 128], strides = [1, 1, 1]} : vector<7x7x128xf32> to vector<1x1x128xf32>
    %144 = vector.shape_cast %143 : vector<1x1x128xf32> to vector<128xf32>
    %145 = vector.shape_cast %144 : vector<128xf32> to vector<1x1x128xf32>
    %146 = vector.broadcast %145 : vector<1x1x128xf32> to vector<16x16x128xf32>
    %147 = arith.mulf %142, %146 : vector<16x16x128xf32>
    %148 = arith.addf %141, %147 : vector<16x16x128xf32>
    %149 = vector.extract_strided_slice %106 {offsets = [6, 0, 0], sizes = [16, 16, 128], strides = [1, 1, 1]} : vector<22x16x128xf32> to vector<16x16x128xf32>
    %150 = vector.extract_strided_slice %2 {offsets = [6, 2, 0], sizes = [1, 1, 128], strides = [1, 1, 1]} : vector<7x7x128xf32> to vector<1x1x128xf32>
    %151 = vector.shape_cast %150 : vector<1x1x128xf32> to vector<128xf32>
    %152 = vector.shape_cast %151 : vector<128xf32> to vector<1x1x128xf32>
    %153 = vector.broadcast %152 : vector<1x1x128xf32> to vector<16x16x128xf32>
    %154 = arith.mulf %149, %153 : vector<16x16x128xf32>
    %155 = arith.addf %148, %154 : vector<16x16x128xf32>
    %c21_i32 = arith.constant 21 : i32
    %156 = tpu.dynamic_rotate %1 by %c21_i32 dim 1 : vector<22x24x128xf32>, i32 -> vector<22x24x128xf32>
    %157 = vector.extract_strided_slice %156 {offsets = [0, 0, 0], sizes = [22, 16, 128], strides = [1, 1, 1]} : vector<22x24x128xf32> to vector<22x16x128xf32>
    %158 = vector.extract_strided_slice %157 {offsets = [3, 0, 0], sizes = [16, 16, 128], strides = [1, 1, 1]} : vector<22x16x128xf32> to vector<16x16x128xf32>
    %159 = vector.extract_strided_slice %157 {offsets = [0, 0, 0], sizes = [16, 16, 128], strides = [1, 1, 1]} : vector<22x16x128xf32> to vector<16x16x128xf32>
    %160 = vector.extract_strided_slice %2 {offsets = [0, 3, 0], sizes = [1, 1, 128], strides = [1, 1, 1]} : vector<7x7x128xf32> to vector<1x1x128xf32>
    %161 = vector.shape_cast %160 : vector<1x1x128xf32> to vector<128xf32>
    %162 = vector.shape_cast %161 : vector<128xf32> to vector<1x1x128xf32>
    %163 = vector.broadcast %162 : vector<1x1x128xf32> to vector<16x16x128xf32>
    %164 = arith.mulf %159, %163 : vector<16x16x128xf32>
    %165 = arith.addf %155, %164 : vector<16x16x128xf32>
    %166 = vector.extract_strided_slice %157 {offsets = [1, 0, 0], sizes = [16, 16, 128], strides = [1, 1, 1]} : vector<22x16x128xf32> to vector<16x16x128xf32>
    %167 = vector.extract_strided_slice %2 {offsets = [1, 3, 0], sizes = [1, 1, 128], strides = [1, 1, 1]} : vector<7x7x128xf32> to vector<1x1x128xf32>
    %168 = vector.shape_cast %167 : vector<1x1x128xf32> to vector<128xf32>
    %169 = vector.shape_cast %168 : vector<128xf32> to vector<1x1x128xf32>
    %170 = vector.broadcast %169 : vector<1x1x128xf32> to vector<16x16x128xf32>
    %171 = arith.mulf %166, %170 : vector<16x16x128xf32>
    %172 = arith.addf %165, %171 : vector<16x16x128xf32>
    %173 = vector.extract_strided_slice %157 {offsets = [2, 0, 0], sizes = [16, 16, 128], strides = [1, 1, 1]} : vector<22x16x128xf32> to vector<16x16x128xf32>
    %174 = vector.extract_strided_slice %2 {offsets = [2, 3, 0], sizes = [1, 1, 128], strides = [1, 1, 1]} : vector<7x7x128xf32> to vector<1x1x128xf32>
    %175 = vector.shape_cast %174 : vector<1x1x128xf32> to vector<128xf32>
    %176 = vector.shape_cast %175 : vector<128xf32> to vector<1x1x128xf32>
    %177 = vector.broadcast %176 : vector<1x1x128xf32> to vector<16x16x128xf32>
    %178 = arith.mulf %173, %177 : vector<16x16x128xf32>
    %179 = arith.addf %172, %178 : vector<16x16x128xf32>
    %180 = vector.extract_strided_slice %157 {offsets = [3, 0, 0], sizes = [16, 16, 128], strides = [1, 1, 1]} : vector<22x16x128xf32> to vector<16x16x128xf32>
    %181 = vector.extract_strided_slice %2 {offsets = [3, 3, 0], sizes = [1, 1, 128], strides = [1, 1, 1]} : vector<7x7x128xf32> to vector<1x1x128xf32>
    %182 = vector.shape_cast %181 : vector<1x1x128xf32> to vector<128xf32>
    %183 = vector.shape_cast %182 : vector<128xf32> to vector<1x1x128xf32>
    %184 = vector.broadcast %183 : vector<1x1x128xf32> to vector<16x16x128xf32>
    %185 = arith.mulf %180, %184 : vector<16x16x128xf32>
    %186 = arith.addf %179, %185 : vector<16x16x128xf32>
    %187 = vector.extract_strided_slice %157 {offsets = [4, 0, 0], sizes = [16, 16, 128], strides = [1, 1, 1]} : vector<22x16x128xf32> to vector<16x16x128xf32>
    %188 = vector.extract_strided_slice %2 {offsets = [4, 3, 0], sizes = [1, 1, 128], strides = [1, 1, 1]} : vector<7x7x128xf32> to vector<1x1x128xf32>
    %189 = vector.shape_cast %188 : vector<1x1x128xf32> to vector<128xf32>
    %190 = vector.shape_cast %189 : vector<128xf32> to vector<1x1x128xf32>
    %191 = vector.broadcast %190 : vector<1x1x128xf32> to vector<16x16x128xf32>
    %192 = arith.mulf %187, %191 : vector<16x16x128xf32>
    %193 = arith.addf %186, %192 : vector<16x16x128xf32>
    %194 = vector.extract_strided_slice %157 {offsets = [5, 0, 0], sizes = [16, 16, 128], strides = [1, 1, 1]} : vector<22x16x128xf32> to vector<16x16x128xf32>
    %195 = vector.extract_strided_slice %2 {offsets = [5, 3, 0], sizes = [1, 1, 128], strides = [1, 1, 1]} : vector<7x7x128xf32> to vector<1x1x128xf32>
    %196 = vector.shape_cast %195 : vector<1x1x128xf32> to vector<128xf32>
    %197 = vector.shape_cast %196 : vector<128xf32> to vector<1x1x128xf32>
    %198 = vector.broadcast %197 : vector<1x1x128xf32> to vector<16x16x128xf32>
    %199 = arith.mulf %194, %198 : vector<16x16x128xf32>
    %200 = arith.addf %193, %199 : vector<16x16x128xf32>
    %201 = vector.extract_strided_slice %157 {offsets = [6, 0, 0], sizes = [16, 16, 128], strides = [1, 1, 1]} : vector<22x16x128xf32> to vector<16x16x128xf32>
    %202 = vector.extract_strided_slice %2 {offsets = [6, 3, 0], sizes = [1, 1, 128], strides = [1, 1, 1]} : vector<7x7x128xf32> to vector<1x1x128xf32>
    %203 = vector.shape_cast %202 : vector<1x1x128xf32> to vector<128xf32>
    %204 = vector.shape_cast %203 : vector<128xf32> to vector<1x1x128xf32>
    %205 = vector.broadcast %204 : vector<1x1x128xf32> to vector<16x16x128xf32>
    %206 = arith.mulf %201, %205 : vector<16x16x128xf32>
    %207 = arith.addf %200, %206 : vector<16x16x128xf32>
    %c20_i32 = arith.constant 20 : i32
    %208 = tpu.dynamic_rotate %1 by %c20_i32 dim 1 : vector<22x24x128xf32>, i32 -> vector<22x24x128xf32>
    %209 = vector.extract_strided_slice %208 {offsets = [0, 0, 0], sizes = [22, 16, 128], strides = [1, 1, 1]} : vector<22x24x128xf32> to vector<22x16x128xf32>
    %210 = vector.extract_strided_slice %209 {offsets = [0, 0, 0], sizes = [16, 16, 128], strides = [1, 1, 1]} : vector<22x16x128xf32> to vector<16x16x128xf32>
    %211 = vector.extract_strided_slice %2 {offsets = [0, 4, 0], sizes = [1, 1, 128], strides = [1, 1, 1]} : vector<7x7x128xf32> to vector<1x1x128xf32>
    %212 = vector.shape_cast %211 : vector<1x1x128xf32> to vector<128xf32>
    %213 = vector.shape_cast %212 : vector<128xf32> to vector<1x1x128xf32>
    %214 = vector.broadcast %213 : vector<1x1x128xf32> to vector<16x16x128xf32>
    %215 = arith.mulf %210, %214 : vector<16x16x128xf32>
    %216 = arith.addf %207, %215 : vector<16x16x128xf32>
    %217 = vector.extract_strided_slice %209 {offsets = [1, 0, 0], sizes = [16, 16, 128], strides = [1, 1, 1]} : vector<22x16x128xf32> to vector<16x16x128xf32>
    %218 = vector.extract_strided_slice %2 {offsets = [1, 4, 0], sizes = [1, 1, 128], strides = [1, 1, 1]} : vector<7x7x128xf32> to vector<1x1x128xf32>
    %219 = vector.shape_cast %218 : vector<1x1x128xf32> to vector<128xf32>
    %220 = vector.shape_cast %219 : vector<128xf32> to vector<1x1x128xf32>
    %221 = vector.broadcast %220 : vector<1x1x128xf32> to vector<16x16x128xf32>
    %222 = arith.mulf %217, %221 : vector<16x16x128xf32>
    %223 = arith.addf %216, %222 : vector<16x16x128xf32>
    %224 = vector.extract_strided_slice %209 {offsets = [2, 0, 0], sizes = [16, 16, 128], strides = [1, 1, 1]} : vector<22x16x128xf32> to vector<16x16x128xf32>
    %225 = vector.extract_strided_slice %2 {offsets = [2, 4, 0], sizes = [1, 1, 128], strides = [1, 1, 1]} : vector<7x7x128xf32> to vector<1x1x128xf32>
    %226 = vector.shape_cast %225 : vector<1x1x128xf32> to vector<128xf32>
    %227 = vector.shape_cast %226 : vector<128xf32> to vector<1x1x128xf32>
    %228 = vector.broadcast %227 : vector<1x1x128xf32> to vector<16x16x128xf32>
    %229 = arith.mulf %224, %228 : vector<16x16x128xf32>
    %230 = arith.addf %223, %229 : vector<16x16x128xf32>
    %231 = vector.extract_strided_slice %209 {offsets = [3, 0, 0], sizes = [16, 16, 128], strides = [1, 1, 1]} : vector<22x16x128xf32> to vector<16x16x128xf32>
    %232 = vector.extract_strided_slice %2 {offsets = [3, 4, 0], sizes = [1, 1, 128], strides = [1, 1, 1]} : vector<7x7x128xf32> to vector<1x1x128xf32>
    %233 = vector.shape_cast %232 : vector<1x1x128xf32> to vector<128xf32>
    %234 = vector.shape_cast %233 : vector<128xf32> to vector<1x1x128xf32>
    %235 = vector.broadcast %234 : vector<1x1x128xf32> to vector<16x16x128xf32>
    %236 = arith.mulf %231, %235 : vector<16x16x128xf32>
    %237 = arith.addf %230, %236 : vector<16x16x128xf32>
    %238 = vector.extract_strided_slice %209 {offsets = [4, 0, 0], sizes = [16, 16, 128], strides = [1, 1, 1]} : vector<22x16x128xf32> to vector<16x16x128xf32>
    %239 = vector.extract_strided_slice %2 {offsets = [4, 4, 0], sizes = [1, 1, 128], strides = [1, 1, 1]} : vector<7x7x128xf32> to vector<1x1x128xf32>
    %240 = vector.shape_cast %239 : vector<1x1x128xf32> to vector<128xf32>
    %241 = vector.shape_cast %240 : vector<128xf32> to vector<1x1x128xf32>
    %242 = vector.broadcast %241 : vector<1x1x128xf32> to vector<16x16x128xf32>
    %243 = arith.mulf %238, %242 : vector<16x16x128xf32>
    %244 = arith.addf %237, %243 : vector<16x16x128xf32>
    %245 = vector.extract_strided_slice %209 {offsets = [5, 0, 0], sizes = [16, 16, 128], strides = [1, 1, 1]} : vector<22x16x128xf32> to vector<16x16x128xf32>
    %246 = vector.extract_strided_slice %2 {offsets = [5, 4, 0], sizes = [1, 1, 128], strides = [1, 1, 1]} : vector<7x7x128xf32> to vector<1x1x128xf32>
    %247 = vector.shape_cast %246 : vector<1x1x128xf32> to vector<128xf32>
    %248 = vector.shape_cast %247 : vector<128xf32> to vector<1x1x128xf32>
    %249 = vector.broadcast %248 : vector<1x1x128xf32> to vector<16x16x128xf32>
    %250 = arith.mulf %245, %249 : vector<16x16x128xf32>
    %251 = arith.addf %244, %250 : vector<16x16x128xf32>
    %252 = vector.extract_strided_slice %209 {offsets = [6, 0, 0], sizes = [16, 16, 128], strides = [1, 1, 1]} : vector<22x16x128xf32> to vector<16x16x128xf32>
    %253 = vector.extract_strided_slice %2 {offsets = [6, 4, 0], sizes = [1, 1, 128], strides = [1, 1, 1]} : vector<7x7x128xf32> to vector<1x1x128xf32>
    %254 = vector.shape_cast %253 : vector<1x1x128xf32> to vector<128xf32>
    %255 = vector.shape_cast %254 : vector<128xf32> to vector<1x1x128xf32>
    %256 = vector.broadcast %255 : vector<1x1x128xf32> to vector<16x16x128xf32>
    %257 = arith.mulf %252, %256 : vector<16x16x128xf32>
    %258 = arith.addf %251, %257 : vector<16x16x128xf32>
    %c19_i32 = arith.constant 19 : i32
    %259 = tpu.dynamic_rotate %1 by %c19_i32 dim 1 : vector<22x24x128xf32>, i32 -> vector<22x24x128xf32>
    %260 = vector.extract_strided_slice %259 {offsets = [0, 0, 0], sizes = [22, 16, 128], strides = [1, 1, 1]} : vector<22x24x128xf32> to vector<22x16x128xf32>
    %261 = vector.extract_strided_slice %260 {offsets = [0, 0, 0], sizes = [16, 16, 128], strides = [1, 1, 1]} : vector<22x16x128xf32> to vector<16x16x128xf32>
    %262 = vector.extract_strided_slice %2 {offsets = [0, 5, 0], sizes = [1, 1, 128], strides = [1, 1, 1]} : vector<7x7x128xf32> to vector<1x1x128xf32>
    %263 = vector.shape_cast %262 : vector<1x1x128xf32> to vector<128xf32>
    %264 = vector.shape_cast %263 : vector<128xf32> to vector<1x1x128xf32>
    %265 = vector.broadcast %264 : vector<1x1x128xf32> to vector<16x16x128xf32>
    %266 = arith.mulf %261, %265 : vector<16x16x128xf32>
    %267 = arith.addf %258, %266 : vector<16x16x128xf32>
    %268 = vector.extract_strided_slice %260 {offsets = [1, 0, 0], sizes = [16, 16, 128], strides = [1, 1, 1]} : vector<22x16x128xf32> to vector<16x16x128xf32>
    %269 = vector.extract_strided_slice %2 {offsets = [1, 5, 0], sizes = [1, 1, 128], strides = [1, 1, 1]} : vector<7x7x128xf32> to vector<1x1x128xf32>
    %270 = vector.shape_cast %269 : vector<1x1x128xf32> to vector<128xf32>
    %271 = vector.shape_cast %270 : vector<128xf32> to vector<1x1x128xf32>
    %272 = vector.broadcast %271 : vector<1x1x128xf32> to vector<16x16x128xf32>
    %273 = arith.mulf %268, %272 : vector<16x16x128xf32>
    %274 = arith.addf %267, %273 : vector<16x16x128xf32>
    %275 = vector.extract_strided_slice %260 {offsets = [2, 0, 0], sizes = [16, 16, 128], strides = [1, 1, 1]} : vector<22x16x128xf32> to vector<16x16x128xf32>
    %276 = vector.extract_strided_slice %2 {offsets = [2, 5, 0], sizes = [1, 1, 128], strides = [1, 1, 1]} : vector<7x7x128xf32> to vector<1x1x128xf32>
    %277 = vector.shape_cast %276 : vector<1x1x128xf32> to vector<128xf32>
    %278 = vector.shape_cast %277 : vector<128xf32> to vector<1x1x128xf32>
    %279 = vector.broadcast %278 : vector<1x1x128xf32> to vector<16x16x128xf32>
    %280 = arith.mulf %275, %279 : vector<16x16x128xf32>
    %281 = arith.addf %274, %280 : vector<16x16x128xf32>
    %282 = vector.extract_strided_slice %260 {offsets = [3, 0, 0], sizes = [16, 16, 128], strides = [1, 1, 1]} : vector<22x16x128xf32> to vector<16x16x128xf32>
    %283 = vector.extract_strided_slice %2 {offsets = [3, 5, 0], sizes = [1, 1, 128], strides = [1, 1, 1]} : vector<7x7x128xf32> to vector<1x1x128xf32>
    %284 = vector.shape_cast %283 : vector<1x1x128xf32> to vector<128xf32>
    %285 = vector.shape_cast %284 : vector<128xf32> to vector<1x1x128xf32>
    %286 = vector.broadcast %285 : vector<1x1x128xf32> to vector<16x16x128xf32>
    %287 = arith.mulf %282, %286 : vector<16x16x128xf32>
    %288 = arith.addf %281, %287 : vector<16x16x128xf32>
    %289 = vector.extract_strided_slice %260 {offsets = [4, 0, 0], sizes = [16, 16, 128], strides = [1, 1, 1]} : vector<22x16x128xf32> to vector<16x16x128xf32>
    %290 = vector.extract_strided_slice %2 {offsets = [4, 5, 0], sizes = [1, 1, 128], strides = [1, 1, 1]} : vector<7x7x128xf32> to vector<1x1x128xf32>
    %291 = vector.shape_cast %290 : vector<1x1x128xf32> to vector<128xf32>
    %292 = vector.shape_cast %291 : vector<128xf32> to vector<1x1x128xf32>
    %293 = vector.broadcast %292 : vector<1x1x128xf32> to vector<16x16x128xf32>
    %294 = arith.mulf %289, %293 : vector<16x16x128xf32>
    %295 = arith.addf %288, %294 : vector<16x16x128xf32>
    %296 = vector.extract_strided_slice %260 {offsets = [5, 0, 0], sizes = [16, 16, 128], strides = [1, 1, 1]} : vector<22x16x128xf32> to vector<16x16x128xf32>
    %297 = vector.extract_strided_slice %2 {offsets = [5, 5, 0], sizes = [1, 1, 128], strides = [1, 1, 1]} : vector<7x7x128xf32> to vector<1x1x128xf32>
    %298 = vector.shape_cast %297 : vector<1x1x128xf32> to vector<128xf32>
    %299 = vector.shape_cast %298 : vector<128xf32> to vector<1x1x128xf32>
    %300 = vector.broadcast %299 : vector<1x1x128xf32> to vector<16x16x128xf32>
    %301 = arith.mulf %296, %300 : vector<16x16x128xf32>
    %302 = arith.addf %295, %301 : vector<16x16x128xf32>
    %303 = vector.extract_strided_slice %260 {offsets = [6, 0, 0], sizes = [16, 16, 128], strides = [1, 1, 1]} : vector<22x16x128xf32> to vector<16x16x128xf32>
    %304 = vector.extract_strided_slice %2 {offsets = [6, 5, 0], sizes = [1, 1, 128], strides = [1, 1, 1]} : vector<7x7x128xf32> to vector<1x1x128xf32>
    %305 = vector.shape_cast %304 : vector<1x1x128xf32> to vector<128xf32>
    %306 = vector.shape_cast %305 : vector<128xf32> to vector<1x1x128xf32>
    %307 = vector.broadcast %306 : vector<1x1x128xf32> to vector<16x16x128xf32>
    %308 = arith.mulf %303, %307 : vector<16x16x128xf32>
    %309 = arith.addf %302, %308 : vector<16x16x128xf32>
    %c18_i32 = arith.constant 18 : i32
    %310 = tpu.dynamic_rotate %1 by %c18_i32 dim 1 : vector<22x24x128xf32>, i32 -> vector<22x24x128xf32>
    %311 = vector.extract_strided_slice %310 {offsets = [0, 0, 0], sizes = [22, 16, 128], strides = [1, 1, 1]} : vector<22x24x128xf32> to vector<22x16x128xf32>
    %312 = vector.extract_strided_slice %311 {offsets = [0, 0, 0], sizes = [16, 16, 128], strides = [1, 1, 1]} : vector<22x16x128xf32> to vector<16x16x128xf32>
    %313 = vector.extract_strided_slice %2 {offsets = [0, 6, 0], sizes = [1, 1, 128], strides = [1, 1, 1]} : vector<7x7x128xf32> to vector<1x1x128xf32>
    %314 = vector.shape_cast %313 : vector<1x1x128xf32> to vector<128xf32>
    %315 = vector.shape_cast %314 : vector<128xf32> to vector<1x1x128xf32>
    %316 = vector.broadcast %315 : vector<1x1x128xf32> to vector<16x16x128xf32>
    %317 = arith.mulf %312, %316 : vector<16x16x128xf32>
    %318 = arith.addf %309, %317 : vector<16x16x128xf32>
    %319 = vector.extract_strided_slice %311 {offsets = [1, 0, 0], sizes = [16, 16, 128], strides = [1, 1, 1]} : vector<22x16x128xf32> to vector<16x16x128xf32>
    %320 = vector.extract_strided_slice %2 {offsets = [1, 6, 0], sizes = [1, 1, 128], strides = [1, 1, 1]} : vector<7x7x128xf32> to vector<1x1x128xf32>
    %321 = vector.shape_cast %320 : vector<1x1x128xf32> to vector<128xf32>
    %322 = vector.shape_cast %321 : vector<128xf32> to vector<1x1x128xf32>
    %323 = vector.broadcast %322 : vector<1x1x128xf32> to vector<16x16x128xf32>
    %324 = arith.mulf %319, %323 : vector<16x16x128xf32>
    %325 = arith.addf %318, %324 : vector<16x16x128xf32>
    %326 = vector.extract_strided_slice %311 {offsets = [2, 0, 0], sizes = [16, 16, 128], strides = [1, 1, 1]} : vector<22x16x128xf32> to vector<16x16x128xf32>
    %327 = vector.extract_strided_slice %2 {offsets = [2, 6, 0], sizes = [1, 1, 128], strides = [1, 1, 1]} : vector<7x7x128xf32> to vector<1x1x128xf32>
    %328 = vector.shape_cast %327 : vector<1x1x128xf32> to vector<128xf32>
    %329 = vector.shape_cast %328 : vector<128xf32> to vector<1x1x128xf32>
    %330 = vector.broadcast %329 : vector<1x1x128xf32> to vector<16x16x128xf32>
    %331 = arith.mulf %326, %330 : vector<16x16x128xf32>
    %332 = arith.addf %325, %331 : vector<16x16x128xf32>
    %333 = vector.extract_strided_slice %311 {offsets = [3, 0, 0], sizes = [16, 16, 128], strides = [1, 1, 1]} : vector<22x16x128xf32> to vector<16x16x128xf32>
    %334 = vector.extract_strided_slice %2 {offsets = [3, 6, 0], sizes = [1, 1, 128], strides = [1, 1, 1]} : vector<7x7x128xf32> to vector<1x1x128xf32>
    %335 = vector.shape_cast %334 : vector<1x1x128xf32> to vector<128xf32>
    %336 = vector.shape_cast %335 : vector<128xf32> to vector<1x1x128xf32>
    %337 = vector.broadcast %336 : vector<1x1x128xf32> to vector<16x16x128xf32>
    %338 = arith.mulf %333, %337 : vector<16x16x128xf32>
    %339 = arith.addf %332, %338 : vector<16x16x128xf32>
    %340 = vector.extract_strided_slice %311 {offsets = [4, 0, 0], sizes = [16, 16, 128], strides = [1, 1, 1]} : vector<22x16x128xf32> to vector<16x16x128xf32>
    %341 = vector.extract_strided_slice %2 {offsets = [4, 6, 0], sizes = [1, 1, 128], strides = [1, 1, 1]} : vector<7x7x128xf32> to vector<1x1x128xf32>
    %342 = vector.shape_cast %341 : vector<1x1x128xf32> to vector<128xf32>
    %343 = vector.shape_cast %342 : vector<128xf32> to vector<1x1x128xf32>
    %344 = vector.broadcast %343 : vector<1x1x128xf32> to vector<16x16x128xf32>
    %345 = arith.mulf %340, %344 : vector<16x16x128xf32>
    %346 = arith.addf %339, %345 : vector<16x16x128xf32>
    %347 = vector.extract_strided_slice %311 {offsets = [5, 0, 0], sizes = [16, 16, 128], strides = [1, 1, 1]} : vector<22x16x128xf32> to vector<16x16x128xf32>
    %348 = vector.extract_strided_slice %2 {offsets = [5, 6, 0], sizes = [1, 1, 128], strides = [1, 1, 1]} : vector<7x7x128xf32> to vector<1x1x128xf32>
    %349 = vector.shape_cast %348 : vector<1x1x128xf32> to vector<128xf32>
    %350 = vector.shape_cast %349 : vector<128xf32> to vector<1x1x128xf32>
    %351 = vector.broadcast %350 : vector<1x1x128xf32> to vector<16x16x128xf32>
    %352 = arith.mulf %347, %351 : vector<16x16x128xf32>
    %353 = arith.addf %346, %352 : vector<16x16x128xf32>
    %354 = vector.extract_strided_slice %311 {offsets = [6, 0, 0], sizes = [16, 16, 128], strides = [1, 1, 1]} : vector<22x16x128xf32> to vector<16x16x128xf32>
    %355 = vector.extract_strided_slice %2 {offsets = [6, 6, 0], sizes = [1, 1, 128], strides = [1, 1, 1]} : vector<7x7x128xf32> to vector<1x1x128xf32>
    %356 = vector.shape_cast %355 : vector<1x1x128xf32> to vector<128xf32>
    %357 = vector.shape_cast %356 : vector<128xf32> to vector<1x1x128xf32>
    %358 = vector.broadcast %357 : vector<1x1x128xf32> to vector<16x16x128xf32>
    %359 = arith.mulf %354, %358 : vector<16x16x128xf32>
    %360 = arith.addf %353, %359 : vector<16x16x128xf32>
    %c0_6 = arith.constant 0 : index
    %c0_7 = arith.constant 0 : index
    %361 = vector.load %arg3[%c0_6, %c0_7] : memref<1x128xf32, #tpu.memory_space<vmem>>, vector<1x128xf32>
    %362 = vector.shape_cast %361 : vector<1x128xf32> to vector<128xf32>
    %363 = vector.shape_cast %362 : vector<128xf32> to vector<1x1x128xf32>
    %364 = vector.broadcast %363 : vector<1x1x128xf32> to vector<16x16x128xf32>
    %365 = arith.addf %360, %364 : vector<16x16x128xf32>
    %366 = vector.shape_cast %365 : vector<16x16x128xf32> to vector<256x128xf32>
    %c0_8 = arith.constant 0 : index
    %c0_9 = arith.constant 0 : index
    %367 = vector.load %arg6[%c0_8, %c0_9] : memref<128x128xf32, #tpu.memory_space<vmem>>, vector<128x128xf32>
    %cst_10 = arith.constant dense<0.000000e+00> : vector<256x128xf32>
    %368 = tpu.matmul %366, %367, %cst_10 {dimension_numbers = #tpu.dot_dimension_numbers<[1], [0], [0], [1], [0, 0, 1, 1], [], []>} : vector<256x128xf32>, vector<128x128xf32>, vector<256x128xf32> -> vector<256x128xf32>
    %cst_11 = arith.constant 3.125000e-02 : f32
    %369 = vector.broadcast %cst_11 : f32 to vector<256x128xf32>
    %370 = arith.mulf %368, %369 : vector<256x128xf32>
    %371 = arith.subf %366, %370 : vector<256x128xf32>
    %372 = arith.mulf %371, %371 : vector<256x128xf32>
    %cst_12 = arith.constant dense<0.000000e+00> : vector<256x128xf32>
    %373 = tpu.matmul %372, %367, %cst_12 {dimension_numbers = #tpu.dot_dimension_numbers<[1], [0], [0], [1], [0, 0, 1, 1], [], []>} : vector<256x128xf32>, vector<128x128xf32>, vector<256x128xf32> -> vector<256x128xf32>
    %cst_13 = arith.constant 3.125000e-02 : f32
    %374 = vector.broadcast %cst_13 : f32 to vector<256x128xf32>
    %375 = arith.mulf %373, %374 : vector<256x128xf32>
    %cst_14 = arith.constant 9.99999997E-7 : f32
    %376 = vector.broadcast %cst_14 : f32 to vector<256x128xf32>
    %377 = arith.addf %375, %376 : vector<256x128xf32>
    %378 = math.rsqrt %377 : vector<256x128xf32>
    %379 = arith.mulf %371, %378 : vector<256x128xf32>
    %c0_15 = arith.constant 0 : index
    %c0_16 = arith.constant 0 : index
    %380 = vector.load %arg4[%c0_15, %c0_16] : memref<1x128xf32, #tpu.memory_space<vmem>>, vector<1x128xf32>
    %381 = vector.shape_cast %380 : vector<1x128xf32> to vector<128xf32>
    %382 = vector.shape_cast %381 : vector<128xf32> to vector<1x128xf32>
    %383 = vector.broadcast %382 : vector<1x128xf32> to vector<256x128xf32>
    %384 = arith.mulf %379, %383 : vector<256x128xf32>
    %c0_17 = arith.constant 0 : index
    %c0_18 = arith.constant 0 : index
    %385 = vector.load %arg5[%c0_17, %c0_18] : memref<1x128xf32, #tpu.memory_space<vmem>>, vector<1x128xf32>
    %386 = vector.shape_cast %385 : vector<1x128xf32> to vector<128xf32>
    %387 = vector.shape_cast %386 : vector<128xf32> to vector<1x128xf32>
    %388 = vector.broadcast %387 : vector<1x128xf32> to vector<256x128xf32>
    %389 = arith.addf %384, %388 : vector<256x128xf32>
    %390 = arith.truncf %389 : vector<256x128xf32> to vector<256x128xbf16>
    %c0_19 = arith.constant 0 : index
    %c0_20 = arith.constant 0 : index
    %391 = vector.load %arg7[%c0_19, %c0_20] : memref<128x512xbf16, #tpu.memory_space<vmem>>, vector<128x512xbf16>
    %cst_21 = arith.constant dense<0.000000e+00> : vector<256x512xf32>
    %392 = tpu.matmul %390, %391, %cst_21 {dimension_numbers = #tpu.dot_dimension_numbers<[1], [0], [0], [1], [0, 0, 1, 1], [], []>} : vector<256x128xbf16>, vector<128x512xbf16>, vector<256x512xf32> -> vector<256x512xf32>
    %c0_22 = arith.constant 0 : index
    %c0_23 = arith.constant 0 : index
    %393 = vector.load %arg8[%c0_22, %c0_23] : memref<1x512xf32, #tpu.memory_space<vmem>>, vector<1x512xf32>
    %394 = vector.shape_cast %393 : vector<1x512xf32> to vector<512xf32>
    %395 = vector.shape_cast %394 : vector<512xf32> to vector<1x512xf32>
    %396 = vector.broadcast %395 : vector<1x512xf32> to vector<256x512xf32>
    %397 = arith.addf %392, %396 : vector<256x512xf32>
    %cst_24 = arith.constant 5.000000e-01 : f32
    %398 = vector.broadcast %cst_24 : f32 to vector<256x512xf32>
    %399 = arith.mulf %398, %397 : vector<256x512xf32>
    %cst_25 = arith.constant 0.707106769 : f32
    %400 = vector.broadcast %cst_25 : f32 to vector<256x512xf32>
    %401 = arith.mulf %397, %400 : vector<256x512xf32>
    %402 = math.erf %401 : vector<256x512xf32>
    %cst_26 = arith.constant 1.000000e+00 : f32
    %403 = vector.broadcast %cst_26 : f32 to vector<256x512xf32>
    %404 = arith.addf %403, %402 : vector<256x512xf32>
    %405 = arith.mulf %399, %404 : vector<256x512xf32>
    %406 = arith.mulf %405, %405 : vector<256x512xf32>
    %cst_27 = arith.constant dense<0.000000e+00> : vector<512xf32>
    %407 = vector.multi_reduction <add>, %406, %cst_27 [0] : vector<256x512xf32> to vector<512xf32>
    %408 = vector.shape_cast %407 : vector<512xf32> to vector<1x512xf32>
    %409 = math.sqrt %408 : vector<1x512xf32>
    %410 = vector.shape_cast %409 : vector<1x512xf32> to vector<4x128xf32>
    %cst_28 = arith.constant dense<0.000000e+00> : vector<4xf32>
    %411 = vector.multi_reduction <add>, %410, %cst_28 [1] : vector<4x128xf32> to vector<4xf32>
    %412 = vector.shape_cast %411 : vector<4xf32> to vector<4x1xf32>
    %cst_29 = arith.constant 1.280000e+02 : f32
    %413 = vector.broadcast %cst_29 : f32 to vector<4x1xf32>
    %414 = arith.divf %412, %413 : vector<4x1xf32>
    %cst_30 = arith.constant 9.99999997E-7 : f32
    %415 = vector.broadcast %cst_30 : f32 to vector<4x1xf32>
    %416 = arith.addf %414, %415 : vector<4x1xf32>
    %417 = vector.broadcast %416 : vector<4x1xf32> to vector<4x128xf32>
    %418 = arith.divf %410, %417 : vector<4x128xf32>
    %419 = vector.shape_cast %418 : vector<4x128xf32> to vector<1x512xf32>
    %c0_31 = arith.constant 0 : index
    %c0_32 = arith.constant 0 : index
    %420 = vector.load %arg9[%c0_31, %c0_32] : memref<1x512xf32, #tpu.memory_space<vmem>>, vector<1x512xf32>
    %421 = vector.shape_cast %420 : vector<1x512xf32> to vector<512xf32>
    %422 = vector.broadcast %419 : vector<1x512xf32> to vector<256x512xf32>
    %423 = arith.mulf %405, %422 : vector<256x512xf32>
    %424 = vector.shape_cast %421 : vector<512xf32> to vector<1x512xf32>
    %425 = vector.broadcast %424 : vector<1x512xf32> to vector<256x512xf32>
    %426 = arith.mulf %425, %423 : vector<256x512xf32>
    %c0_33 = arith.constant 0 : index
    %c0_34 = arith.constant 0 : index
    %427 = vector.load %arg10[%c0_33, %c0_34] : memref<1x512xf32, #tpu.memory_space<vmem>>, vector<1x512xf32>
    %428 = vector.shape_cast %427 : vector<1x512xf32> to vector<512xf32>
    %429 = vector.shape_cast %428 : vector<512xf32> to vector<1x512xf32>
    %430 = vector.broadcast %429 : vector<1x512xf32> to vector<256x512xf32>
    %431 = arith.addf %426, %430 : vector<256x512xf32>
    %432 = arith.addf %431, %405 : vector<256x512xf32>
    %433 = arith.truncf %432 : vector<256x512xf32> to vector<256x512xbf16>
    %c0_35 = arith.constant 0 : index
    %c0_36 = arith.constant 0 : index
    %434 = vector.load %arg11[%c0_35, %c0_36] : memref<512x128xbf16, #tpu.memory_space<vmem>>, vector<512x128xbf16>
    %cst_37 = arith.constant dense<0.000000e+00> : vector<256x128xf32>
    %435 = tpu.matmul %433, %434, %cst_37 {dimension_numbers = #tpu.dot_dimension_numbers<[1], [0], [0], [1], [0, 0, 1, 1], [], []>} : vector<256x512xbf16>, vector<512x128xbf16>, vector<256x128xf32> -> vector<256x128xf32>
    %c0_38 = arith.constant 0 : index
    %c0_39 = arith.constant 0 : index
    %436 = vector.load %arg12[%c0_38, %c0_39] : memref<1x128xf32, #tpu.memory_space<vmem>>, vector<1x128xf32>
    %437 = vector.shape_cast %436 : vector<1x128xf32> to vector<128xf32>
    %438 = vector.shape_cast %437 : vector<128xf32> to vector<1x128xf32>
    %439 = vector.broadcast %438 : vector<1x128xf32> to vector<256x128xf32>
    %440 = arith.addf %435, %439 : vector<256x128xf32>
    %441 = vector.shape_cast %158 : vector<16x16x128xf32> to vector<256x128xf32>
    %442 = arith.addf %441, %440 : vector<256x128xf32>
    %c0_40 = arith.constant 0 : index
    %c0_41 = arith.constant 0 : index
    %c0_42 = arith.constant 0 : index
    %443 = vector.load %arg13[%c0_40, %c0_41, %c0_42] : memref<1x256x128xf32, #tpu.memory_space<vmem>>, vector<1x256x128xf32>
    %444 = vector.shape_cast %443 : vector<1x256x128xf32> to vector<256x128xf32>
    %445 = vector.shape_cast %442 : vector<256x128xf32> to vector<1x256x128xf32>
    tpu.vector_store %arg13[%c0_40, %c0_41, %c0_42], %445 {strides = array<i32>} : memref<1x256x128xf32, #tpu.memory_space<vmem>>, vector<1x256x128xf32>,
    return
  }
  func.func @transform_0(%arg0: i32) -> (i32, i32, i32, i32) {
    %c0_i32 = arith.constant 0 : i32
    %c0_i32_0 = arith.constant 0 : i32
    %c0_i32_1 = arith.constant 0 : i32
    %c0_i32_2 = arith.constant 0 : i32
    return %arg0, %c0_i32, %c0_i32_0, %c0_i32_1 : i32, i32, i32, i32
  }
  func.func @transform_1(%arg0: i32) -> (i32, i32, i32) {
    %c0_i32 = arith.constant 0 : i32
    %c0_i32_0 = arith.constant 0 : i32
    %c0_i32_1 = arith.constant 0 : i32
    %c0_i32_2 = arith.constant 0 : i32
    return %c0_i32, %c0_i32_0, %c0_i32_1 : i32, i32, i32
  }
  func.func @transform_2(%arg0: i32) -> (i32, i32) {
    %c0_i32 = arith.constant 0 : i32
    %c0_i32_0 = arith.constant 0 : i32
    %c0_i32_1 = arith.constant 0 : i32
    return %c0_i32, %c0_i32_0 : i32, i32
  }
  func.func @transform_3(%arg0: i32) -> (i32, i32) {
    %c0_i32 = arith.constant 0 : i32
    %c0_i32_0 = arith.constant 0 : i32
    %c0_i32_1 = arith.constant 0 : i32
    return %c0_i32, %c0_i32_0 : i32, i32
  }
  func.func @transform_4(%arg0: i32) -> (i32, i32) {
    %c0_i32 = arith.constant 0 : i32
    %c0_i32_0 = arith.constant 0 : i32
    %c0_i32_1 = arith.constant 0 : i32
    return %c0_i32, %c0_i32_0 : i32, i32
  }
  func.func @transform_5(%arg0: i32) -> (i32, i32) {
    %c0_i32 = arith.constant 0 : i32
    %c0_i32_0 = arith.constant 0 : i32
    %c0_i32_1 = arith.constant 0 : i32
    return %c0_i32, %c0_i32_0 : i32, i32
  }
  func.func @transform_6(%arg0: i32) -> (i32, i32) {
    %c0_i32 = arith.constant 0 : i32
    %c0_i32_0 = arith.constant 0 : i32
    %c0_i32_1 = arith.constant 0 : i32
    return %c0_i32, %c0_i32_0 : i32, i32
  }
  func.func @transform_7(%arg0: i32) -> (i32, i32) {
    %c0_i32 = arith.constant 0 : i32
    %c0_i32_0 = arith.constant 0 : i32
    %c0_i32_1 = arith.constant 0 : i32
    return %c0_i32, %c0_i32_0 : i32, i32
  }
  func.func @transform_8(%arg0: i32) -> (i32, i32) {
    %c0_i32 = arith.constant 0 : i32
    %c0_i32_0 = arith.constant 0 : i32
    %c0_i32_1 = arith.constant 0 : i32
    return %c0_i32, %c0_i32_0 : i32, i32
  }
  func.func @transform_9(%arg0: i32) -> (i32, i32) {
    %c0_i32 = arith.constant 0 : i32
    %c0_i32_0 = arith.constant 0 : i32
    %c0_i32_1 = arith.constant 0 : i32
    return %c0_i32, %c0_i32_0 : i32, i32
  }
  func.func @transform_10(%arg0: i32) -> (i32, i32) {
    %c0_i32 = arith.constant 0 : i32
    %c0_i32_0 = arith.constant 0 : i32
    %c0_i32_1 = arith.constant 0 : i32
    return %c0_i32, %c0_i32_0 : i32, i32
  }
  func.func @transform_11(%arg0: i32) -> (i32, i32) {
    %c0_i32 = arith.constant 0 : i32
    %c0_i32_0 = arith.constant 0 : i32
    %c0_i32_1 = arith.constant 0 : i32
    return %c0_i32, %c0_i32_0 : i32, i32
  }
  func.func @transform_12(%arg0: i32) -> (i32, i32, i32) {
    %c0_i32 = arith.constant 0 : i32
    %c0_i32_0 = arith.constant 0 : i32
    %c0_i32_1 = arith.constant 0 : i32
    return %arg0, %c0_i32, %c0_i32_0 : i32, i32, i32
  }
}

</mosaic_0001>

<llo_original>
// kernel: tpu_custom_call.1
$region0: #{tpu_custom_call.1}
  #allocation0 [shape = 'u32[]', space=smem, size = 0x4, offset = 0x4, fixed_abs, tag = 'smem constant byte address 0x4 - core index']
  #allocation1 [shape = 'u32[144,128]{1,0:T(1,128)}', space=vmem, size = 0x12000, scoped, tag = 'internal scratch']
  %s0 = inlined_call_operand.hbm [shape: f32[2,22,24,128], index: 0, kind: input, shape index: {}]
  %s1 = inlined_call_operand.hbm [shape: f32[7,7,128], index: 1, kind: input, shape index: {}]
  %s2 = inlined_call_operand.hbm [shape: f32[1,128], index: 2, kind: input, shape index: {}]
  %s3 = inlined_call_operand.hbm [shape: f32[1,128], index: 3, kind: input, shape index: {}]
  %s4 = inlined_call_operand.hbm [shape: f32[1,128], index: 4, kind: input, shape index: {}]
  %s5 = inlined_call_operand.hbm [shape: f32[128,128], index: 5, kind: input, shape index: {}]
  %s6 = inlined_call_operand.hbm [shape: bf16[128,512], index: 6, kind: input, shape index: {}]
  %s7 = inlined_call_operand.vmem [shape: f32[1,512], index: 7, kind: input, shape index: {}]
  %s8 = inlined_call_operand.vmem [shape: f32[1,512], index: 8, kind: input, shape index: {}]
  %s9 = inlined_call_operand.vmem [shape: f32[1,512], index: 9, kind: input, shape index: {}]
  %s10 = inlined_call_operand.hbm [shape: bf16[512,128], index: 10, kind: input, shape index: {}]
  %s11 = inlined_call_operand.vmem [shape: f32[1,128], index: 11, kind: input, shape index: {}]
  %s12 = inlined_call_operand.hbm [shape: f32[2,256,128], index: 12, kind: output, shape index: {}]
  %s13 = sld [smem:[#allocation0]]
  $region113: #{tpu_custom_call.1} parent=0
    _
  %s15 = ssub.s32 1, %s13
  %s16 = scalar_select 0, %s15, %s13
  $region1: #{tpu_custom_call.1} parent=0
    #allocation2 [shape = 'u8[540672]{0}', space=vmem, size = 0x84000, scoped, tag = 'input window, operand 0']
    #allocation3 [shape = 's32[2]{0}', space=sflag, size = 0x8, scoped, tag = 'scoped memory for tpu_custom_call.1']
    #allocation4 [shape = 's32[2]{0}', space=sflag, size = 0x8, scoped, tag = 'scoped memory for tpu_custom_call.1']
    #allocation5 [shape = 'u8[28672]{0}', space=vmem, size = 0x7000, scoped, tag = 'input window, operand 1, single buffered']
    #allocation6 [shape = 's32[1]{0}', space=sflag, size = 0x4, scoped, tag = 'scoped memory for tpu_custom_call.1']
    #allocation7 [shape = 'u8[512]{0}', space=vmem, size = 0x400, scoped, tag = 'input window, operand 2, single buffered']
    #allocation8 [shape = 'u8[512]{0}', space=vmem, size = 0x400, scoped, tag = 'input window, operand 3, single buffered']
    #allocation9 [shape = 's32[1]{0}', space=sflag, size = 0x4, scoped, tag = 'scoped memory for tpu_custom_call.1']
    #allocation10 [shape = 'u8[512]{0}', space=vmem, size = 0x400, scoped, tag = 'input window, operand 4, single buffered']
    #allocation11 [shape = 'u8[65536]{0}', space=vmem, size = 0x10000, scoped, tag = 'input window, operand 5, single buffered']
    #allocation12 [shape = 's32[1]{0}', space=sflag, size = 0x4, scoped, tag = 'scoped memory for tpu_custom_call.1']
    #allocation13 [shape = 'u8[131072]{0}', space=vmem, size = 0x20000, scoped, tag = 'input window, operand 6, single buffered']
    #allocation14 [shape = 'u8[131072]{0}', space=vmem, size = 0x20000, scoped, tag = 'input window, operand 10, single buffered']
    #allocation15 [shape = 's32[1]{0}', space=sflag, size = 0x4, scoped, tag = 'scoped memory for tpu_custom_call.1']
    #allocation16 [shape = 'u8[262144]{0}', space=vmem, size = 0x40000, scoped, tag = 'output window, operand 0']
    %17 = vsyncpa [#allocation3], 0
    %s18 = scalar_lea.sflag [#allocation3], 1
    %19 = vsyncpa %s18, 0
    %20 = vsyncpa [#allocation6], 0
    %21 = vsyncpa [#allocation9], 0
    %22 = vsyncpa [#allocation12], 0
    %23 = vsyncpa [#allocation15], 0
    %24 = vsyncpa [#allocation4], 0
    %s25 = scalar_lea.sflag [#allocation4], 1
    %26 = vsyncpa %s25, 0
    loop: start=0, step=1, limit=4
    $region2: #{tpu_custom_call.1} parent=1 // loop_pre_header
      _
    $region3: #{tpu_custom_call.1} parent=1 // loop_header
      %s28 = sphi 0, %s32
      %p29 = scmp.ge.s32.totalorder %s28, 4
      %s38 = sphi 0, %s40
      %s41 = sphi 0, %s38
      %s42 = sphi 0, %s41
      %s58 = sphi 0, %s42
      %s62 = sphi 0, %s62
      %s64 = sphi 0, %s62
      %s65 = sphi 0, %s64
      %s79 = sphi 0, %s65
      %s83 = sphi 0, %s83
      %s85 = sphi 0, %s83
      %s86 = sphi 0, %s85
      %s100 = sphi 0, %s86
      %s104 = sphi 0, %s104
      %s106 = sphi 0, %s104
      %s107 = sphi 0, %s106
      %s121 = sphi 0, %s107
      %s125 = sphi 0, %s125
      %s127 = sphi 0, %s125
      %s128 = sphi 0, %s127
      %s142 = sphi 0, %s128
      %s146 = sphi 0, %s146
      %s148 = sphi 0, %s146
      %s149 = sphi 0, %s148
      %s163 = sphi 0, %s149
      %s167 = sphi 0, %s167
      %s169 = sphi 0, %s167
      %s170 = sphi 0, %s169
      %s184 = sphi 0, %s170
      %s188 = sphi 0, %s188
      %s190 = sphi 0, %s188
      %s191 = sphi 0, %s190
      %s205 = sphi 0, %s191
      %s209 = sphi 0, %s209
      %s211 = sphi 0, %s209
      %s212 = sphi 0, %s211
      %s226 = sphi 0, %s212
      %s230 = sphi 0, %s230
      %s232 = sphi 0, %s230
      %s233 = sphi 0, %s232
      %s247 = sphi 0, %s233
      %s251 = sphi 0, %s251
      %s253 = sphi 0, %s251
      %s254 = sphi 0, %s253
      %s268 = sphi 0, %s254
      %s272 = sphi 0, %s272
      %s274 = sphi 0, %s272
      %s275 = sphi 0, %s274
      %s289 = sphi 0, %s275
      %s295 = sphi 0, %s297
      %s298 = sphi 0, %s295
      %s299 = sphi 0, %s298
      %s315 = sphi 0, %s299
    $region4: #{tpu_custom_call.1} parent=1 // loop_header_branch
      %31 = sbr.rel (%p29) target = $region8
    $region5: #{tpu_custom_call.1} parent=1 // loop_body
      %s33 = ssub.s32 %s28, 1
      %s34 = ssub.s32 %s28, 2
      %s35 = sadd.s32 %s28, 1
      %s36 = ssub.s32 %s28, %s35
      %p37 = scmp.eq.s32.totalorder %s36, 0
      %s39 = sadd.s32 %s38, 1
      %s40 = scalar_select %p37, %s38, %s39
      %p43 = pneg %p37
      %p44 = scmp.eq.s32.totalorder %s28, 1
      %p45 = por %p43, %p44
      %p46 = scmp.ne.s32.totalorder %s38, %s41
      %p47 = scmp.eq.s32.totalorder %s28, 0
      %p48 = por %p46, %p47
      %p49 = scmp.ne.s32.totalorder %s38, %s41
      %p50 = scmp.eq.s32.totalorder %s33, 1
      %p51 = por %p49, %p50
      %p52 = scmp.ne.s32.totalorder %s41, %s42
      %p53 = scmp.eq.s32.totalorder %s33, 0
      %p54 = por %p52, %p53
      %p55 = scmp.ne.s32.totalorder %s41, %s42
      %p56 = scmp.eq.s32.totalorder %s34, 1
      %p57 = por %p55, %p56
      %p59 = scmp.ne.s32.totalorder %s42, %s58
      %p60 = scmp.eq.s32.totalorder %s34, 0
      %p61 = por %p59, %p60
      %s63 = sadd.s32 %s62, 1
      %p66 = scmp.eq.s32.totalorder %s28, 1
      %p67 = scmp.ne.s32.totalorder %s62, %s64
      %p68 = scmp.eq.s32.totalorder %s28, 0
      %p69 = por %p67, %p68
      %p70 = scmp.ne.s32.totalorder %s62, %s64
      %p71 = scmp.eq.s32.totalorder %s33, 1
      %p72 = por %p70, %p71
      %p73 = scmp.ne.s32.totalorder %s64, %s65
      %p74 = scmp.eq.s32.totalorder %s33, 0
      %p75 = por %p73, %p74
      %p76 = scmp.ne.s32.totalorder %s64, %s65
      %p77 = scmp.eq.s32.totalorder %s34, 1
      %p78 = por %p76, %p77
      %p80 = scmp.ne.s32.totalorder %s65, %s79
      %p81 = scmp.eq.s32.totalorder %s34, 0
      %p82 = por %p80, %p81
      %s84 = sadd.s32 %s83, 1
      %p87 = scmp.eq.s32.totalorder %s28, 1
      %p88 = scmp.ne.s32.totalorder %s83, %s85
      %p89 = scmp.eq.s32.totalorder %s28, 0
      %p90 = por %p88, %p89
      %p91 = scmp.ne.s32.totalorder %s83, %s85
      %p92 = scmp.eq.s32.totalorder %s33, 1
      %p93 = por %p91, %p92
      %p94 = scmp.ne.s32.totalorder %s85, %s86
      %p95 = scmp.eq.s32.totalorder %s33, 0
      %p96 = por %p94, %p95
      %p97 = scmp.ne.s32.totalorder %s85, %s86
      %p98 = scmp.eq.s32.totalorder %s34, 1
      %p99 = por %p97, %p98
      %p101 = scmp.ne.s32.totalorder %s86, %s100
      %p102 = scmp.eq.s32.totalorder %s34, 0
      %p103 = por %p101, %p102
      %s105 = sadd.s32 %s104, 1
      %p108 = scmp.eq.s32.totalorder %s28, 1
      %p109 = scmp.ne.s32.totalorder %s104, %s106
      %p110 = scmp.eq.s32.totalorder %s28, 0
      %p111 = por %p109, %p110
      %p112 = scmp.ne.s32.totalorder %s104, %s106
      %p113 = scmp.eq.s32.totalorder %s33, 1
      %p114 = por %p112, %p113
      %p115 = scmp.ne.s32.totalorder %s106, %s107
      %p116 = scmp.eq.s32.totalorder %s33, 0
      %p117 = por %p115, %p116
      %p118 = scmp.ne.s32.totalorder %s106, %s107
      %p119 = scmp.eq.s32.totalorder %s34, 1
      %p120 = por %p118, %p119
      %p122 = scmp.ne.s32.totalorder %s107, %s121
      %p123 = scmp.eq.s32.totalorder %s34, 0
      %p124 = por %p122, %p123
      %s126 = sadd.s32 %s125, 1
      %p129 = scmp.eq.s32.totalorder %s28, 1
      %p130 = scmp.ne.s32.totalorder %s125, %s127
      %p131 = scmp.eq.s32.totalorder %s28, 0
      %p132 = por %p130, %p131
      %p133 = scmp.ne.s32.totalorder %s125, %s127
      %p134 = scmp.eq.s32.totalorder %s33, 1
      %p135 = por %p133, %p134
      %p136 = scmp.ne.s32.totalorder %s127, %s128
      %p137 = scmp.eq.s32.totalorder %s33, 0
      %p138 = por %p136, %p137
      %p139 = scmp.ne.s32.totalorder %s127, %s128
      %p140 = scmp.eq.s32.totalorder %s34, 1
      %p141 = por %p139, %p140
      %p143 = scmp.ne.s32.totalorder %s128, %s142
      %p144 = scmp.eq.s32.totalorder %s34, 0
      %p145 = por %p143, %p144
      %s147 = sadd.s32 %s146, 1
      %p150 = scmp.eq.s32.totalorder %s28, 1
      %p151 = scmp.ne.s32.totalorder %s146, %s148
      %p152 = scmp.eq.s32.totalorder %s28, 0
      %p153 = por %p151, %p152
      %p154 = scmp.ne.s32.totalorder %s146, %s148
      %p155 = scmp.eq.s32.totalorder %s33, 1
      %p156 = por %p154, %p155
      %p157 = scmp.ne.s32.totalorder %s148, %s149
      %p158 = scmp.eq.s32.totalorder %s33, 0
      %p159 = por %p157, %p158
      %p160 = scmp.ne.s32.totalorder %s148, %s149
      %p161 = scmp.eq.s32.totalorder %s34, 1
      %p162 = por %p160, %p161
      %p164 = scmp.ne.s32.totalorder %s149, %s163
      %p165 = scmp.eq.s32.totalorder %s34, 0
      %p166 = por %p164, %p165
      %s168 = sadd.s32 %s167, 1
      %p171 = scmp.eq.s32.totalorder %s28, 1
      %p172 = scmp.ne.s32.totalorder %s167, %s169
      %p173 = scmp.eq.s32.totalorder %s28, 0
      %p174 = por %p172, %p173
      %p175 = scmp.ne.s32.totalorder %s167, %s169
      %p176 = scmp.eq.s32.totalorder %s33, 1
      %p177 = por %p175, %p176
      %p178 = scmp.ne.s32.totalorder %s169, %s170
      %p179 = scmp.eq.s32.totalorder %s33, 0
      %p180 = por %p178, %p179
      %p181 = scmp.ne.s32.totalorder %s169, %s170
      %p182 = scmp.eq.s32.totalorder %s34, 1
      %p183 = por %p181, %p182
      %p185 = scmp.ne.s32.totalorder %s170, %s184
      %p186 = scmp.eq.s32.totalorder %s34, 0
      %p187 = por %p185, %p186
      %s189 = sadd.s32 %s188, 1
      %p192 = scmp.eq.s32.totalorder %s28, 1
      %p193 = scmp.ne.s32.totalorder %s188, %s190
      %p194 = scmp.eq.s32.totalorder %s28, 0
      %p195 = por %p193, %p194
      %p196 = scmp.ne.s32.totalorder %s188, %s190
      %p197 = scmp.eq.s32.totalorder %s33, 1
      %p198 = por %p196, %p197
      %p199 = scmp.ne.s32.totalorder %s190, %s191
      %p200 = scmp.eq.s32.totalorder %s33, 0
      %p201 = por %p199, %p200
      %p202 = scmp.ne.s32.totalorder %s190, %s191
      %p203 = scmp.eq.s32.totalorder %s34, 1
      %p204 = por %p202, %p203
      %p206 = scmp.ne.s32.totalorder %s191, %s205
      %p207 = scmp.eq.s32.totalorder %s34, 0
      %p208 = por %p206, %p207
      %s210 = sadd.s32 %s209, 1
      %p213 = scmp.eq.s32.totalorder %s28, 1
      %p214 = scmp.ne.s32.totalorder %s209, %s211
      %p215 = scmp.eq.s32.totalorder %s28, 0
      %p216 = por %p214, %p215
      %p217 = scmp.ne.s32.totalorder %s209, %s211
      %p218 = scmp.eq.s32.totalorder %s33, 1
      %p219 = por %p217, %p218
      %p220 = scmp.ne.s32.totalorder %s211, %s212
      %p221 = scmp.eq.s32.totalorder %s33, 0
      %p222 = por %p220, %p221
      %p223 = scmp.ne.s32.totalorder %s211, %s212
      %p224 = scmp.eq.s32.totalorder %s34, 1
      %p225 = por %p223, %p224
      %p227 = scmp.ne.s32.totalorder %s212, %s226
      %p228 = scmp.eq.s32.totalorder %s34, 0
      %p229 = por %p227, %p228
      %s231 = sadd.s32 %s230, 1
      %p234 = scmp.eq.s32.totalorder %s28, 1
      %p235 = scmp.ne.s32.totalorder %s230, %s232
      %p236 = scmp.eq.s32.totalorder %s28, 0
      %p237 = por %p235, %p236
      %p238 = scmp.ne.s32.totalorder %s230, %s232
      %p239 = scmp.eq.s32.totalorder %s33, 1
      %p240 = por %p238, %p239
      %p241 = scmp.ne.s32.totalorder %s232, %s233
      %p242 = scmp.eq.s32.totalorder %s33, 0
      %p243 = por %p241, %p242
      %p244 = scmp.ne.s32.totalorder %s232, %s233
      %p245 = scmp.eq.s32.totalorder %s34, 1
      %p246 = por %p244, %p245
      %p248 = scmp.ne.s32.totalorder %s233, %s247
      %p249 = scmp.eq.s32.totalorder %s34, 0
      %p250 = por %p248, %p249
      %s252 = sadd.s32 %s251, 1
      %p255 = scmp.eq.s32.totalorder %s28, 1
      %p256 = scmp.ne.s32.totalorder %s251, %s253
      %p257 = scmp.eq.s32.totalorder %s28, 0
      %p258 = por %p256, %p257
      %p259 = scmp.ne.s32.totalorder %s251, %s253
      %p260 = scmp.eq.s32.totalorder %s33, 1
      %p261 = por %p259, %p260
      %p262 = scmp.ne.s32.totalorder %s253, %s254
      %p263 = scmp.eq.s32.totalorder %s33, 0
      %p264 = por %p262, %p263
      %p265 = scmp.ne.s32.totalorder %s253, %s254
      %p266 = scmp.eq.s32.totalorder %s34, 1
      %p267 = por %p265, %p266
      %p269 = scmp.ne.s32.totalorder %s254, %s268
      %p270 = scmp.eq.s32.totalorder %s34, 0
      %p271 = por %p269, %p270
      %s273 = sadd.s32 %s272, 1
      %p276 = scmp.eq.s32.totalorder %s28, 1
      %p277 = scmp.ne.s32.totalorder %s272, %s274
      %p278 = scmp.eq.s32.totalorder %s28, 0
      %p279 = por %p277, %p278
      %p280 = scmp.ne.s32.totalorder %s272, %s274
      %p281 = scmp.eq.s32.totalorder %s33, 1
      %p282 = por %p280, %p281
      %p283 = scmp.ne.s32.totalorder %s274, %s275
      %p284 = scmp.eq.s32.totalorder %s33, 0
      %p285 = por %p283, %p284
      %p286 = scmp.ne.s32.totalorder %s274, %s275
      %p287 = scmp.eq.s32.totalorder %s34, 1
      %p288 = por %p286, %p287
      %p290 = scmp.ne.s32.totalorder %s275, %s289
      %p291 = scmp.eq.s32.totalorder %s34, 0
      %p292 = por %p290, %p291
      %s293 = ssub.s32 %s28, %s35
      %p294 = scmp.eq.s32.totalorder %s293, 0
      %s296 = sadd.s32 %s295, 1
      %s297 = scalar_select %p294, %s295, %s296
      %p300 = pneg %p294
      %p301 = scmp.eq.s32.totalorder %s28, 1
      %p302 = por %p300, %p301
      %p303 = scmp.ne.s32.totalorder %s295, %s298
      %p304 = scmp.eq.s32.totalorder %s28, 0
      %p305 = por %p303, %p304
      %p306 = scmp.ne.s32.totalorder %s295, %s298
      %p307 = scmp.eq.s32.totalorder %s33, 1
      %p308 = por %p306, %p307
      %p309 = scmp.ne.s32.totalorder %s298, %s299
      %p310 = scmp.eq.s32.totalorder %s33, 0
      %p311 = por %p309, %p310
      %p312 = scmp.ne.s32.totalorder %s298, %s299
      %p313 = scmp.eq.s32.totalorder %s34, 1
      %p314 = por %p312, %p313
      %p316 = scmp.ne.s32.totalorder %s299, %s315
      %p317 = scmp.eq.s32.totalorder %s34, 0
      %p318 = por %p316, %p317
      %p319 = scmp.le.s32.totalorder 1, %s28
      %p320 = scmp.lt.s32.totalorder %s28, 3
      %p321 = pnand %p319, %p320
      %p322 = pneg %p321
      // Predicated region
      $region9: #{tpu_custom_call.1} parent=5 // pred_check
        _
      $region10: #{tpu_custom_call.1} parent=5 // pred_check_branch
        %324 = sbr.rel (%p321) target = $region12
      $region11: #{tpu_custom_call.1} parent=5 // pred_region
        %s325 = ssub.s32 %s28, 1
        // Predicated region
        $region13: #{tpu_custom_call.1} parent=11 // pred_check
          %p326 = pneg %p75
        $region14: #{tpu_custom_call.1} parent=11 // pred_check_branch
          %328 = sbr.rel (%p326) target = $region16
        $region15: #{tpu_custom_call.1} parent=11 // pred_region
          %s330 = ssub.s32 896, 896
          %331 = vsyncadd [#allocation6], %s330
          %s332 = sshll.u32 [#allocation5], 4
          %s333 = int_to_ptr.vmem [resolvable:$true] %s332
          %338 = dma.hbm_to_vmem [thread:$0]  %s1, 896, %s333, [#allocation6], 128, 128, 8
        $region16: #{tpu_custom_call.1} parent=11 // pred_fallthru
          _
        // Predicated region
        $region17: #{tpu_custom_call.1} parent=11 // pred_check
          %p339 = pneg %p96
        $region18: #{tpu_custom_call.1} parent=11 // pred_check_branch
          %341 = sbr.rel (%p339) target = $region20
        $region19: #{tpu_custom_call.1} parent=11 // pred_region
          %s343 = ssub.s32 16, 16
          %344 = vsyncadd [#allocation6], %s343
          %s346 = sshll.u32 [#allocation7], 4
          %s347 = int_to_ptr.vmem [resolvable:$true] %s346
          %349 = dma.hbm_to_vmem [thread:$0]  %s2, 16, %s347, [#allocation6]
        $region20: #{tpu_custom_call.1} parent=11 // pred_fallthru
          _
        // Predicated region
        $region21: #{tpu_custom_call.1} parent=11 // pred_check
          %p350 = pneg %p117
        $region22: #{tpu_custom_call.1} parent=11 // pred_check_branch
          %352 = sbr.rel (%p350) target = $region24
        $region23: #{tpu_custom_call.1} parent=11 // pred_region
          %s354 = ssub.s32 16, 16
          %355 = vsyncadd [#allocation9], %s354
          %s357 = sshll.u32 [#allocation8], 4
          %s358 = int_to_ptr.vmem [resolvable:$true] %s357
          %360 = dma.hbm_to_vmem [thread:$0]  %s3, 16, %s358, [#allocation9]
        $region24: #{tpu_custom_call.1} parent=11 // pred_fallthru
          _
        // Predicated region
        $region25: #{tpu_custom_call.1} parent=11 // pred_check
          %p361 = pneg %p138
        $region26: #{tpu_custom_call.1} parent=11 // pred_check_branch
          %363 = sbr.rel (%p361) target = $region28
        $region27: #{tpu_custom_call.1} parent=11 // pred_region
          %s365 = ssub.s32 16, 16
          %366 = vsyncadd [#allocation9], %s365
          %s368 = sshll.u32 [#allocation10], 4
          %s369 = int_to_ptr.vmem [resolvable:$true] %s368
          %371 = dma.hbm_to_vmem [thread:$0]  %s4, 16, %s369, [#allocation9]
        $region28: #{tpu_custom_call.1} parent=11 // pred_fallthru
          _
        // Predicated region
        $region29: #{tpu_custom_call.1} parent=11 // pred_check
          %p372 = pneg %p159
        $region30: #{tpu_custom_call.1} parent=11 // pred_check_branch
          %374 = sbr.rel (%p372) target = $region32
        $region31: #{tpu_custom_call.1} parent=11 // pred_region
          %s376 = ssub.s32 2048, 2048
          %377 = vsyncadd [#allocation12], %s376
          %s378 = sshll.u32 [#allocation11], 4
          %s379 = int_to_ptr.vmem [resolvable:$true] %s378
          %384 = dma.hbm_to_vmem [thread:$0]  %s5, 2048, %s379, [#allocation12], 128, 128, 8
        $region32: #{tpu_custom_call.1} parent=11 // pred_fallthru
          _
        // Predicated region
        $region33: #{tpu_custom_call.1} parent=11 // pred_check
          %p385 = pneg %p180
        $region34: #{tpu_custom_call.1} parent=11 // pred_check_branch
          %387 = sbr.rel (%p385) target = $region36
        $region35: #{tpu_custom_call.1} parent=11 // pred_region
          %s389 = ssub.s32 4096, 4096
          %390 = vsyncadd [#allocation12], %s389
          %s391 = sshll.u32 [#allocation13], 4
          %s392 = int_to_ptr.vmem [resolvable:$true] %s391
          %397 = dma.hbm_to_vmem [thread:$0]  %s6, 4096, %s392, [#allocation12], 256, 256, 16
        $region36: #{tpu_custom_call.1} parent=11 // pred_fallthru
          _
        // Predicated region
        $region37: #{tpu_custom_call.1} parent=11 // pred_check
          %p398 = pneg %p201
        $region38: #{tpu_custom_call.1} parent=11 // pred_check_branch
          %400 = sbr.rel (%p398) target = $region40
        $region39: #{tpu_custom_call.1} parent=11 // pred_region
          _
        $region40: #{tpu_custom_call.1} parent=11 // pred_fallthru
          _
        // Predicated region
        $region41: #{tpu_custom_call.1} parent=11 // pred_check
          %p401 = pneg %p222
        $region42: #{tpu_custom_call.1} parent=11 // pred_check_branch
          %403 = sbr.rel (%p401) target = $region44
        $region43: #{tpu_custom_call.1} parent=11 // pred_region
          _
        $region44: #{tpu_custom_call.1} parent=11 // pred_fallthru
          _
        // Predicated region
        $region45: #{tpu_custom_call.1} parent=11 // pred_check
          %p404 = pneg %p243
        $region46: #{tpu_custom_call.1} parent=11 // pred_check_branch
          %406 = sbr.rel (%p404) target = $region48
        $region47: #{tpu_custom_call.1} parent=11 // pred_region
          _
        $region48: #{tpu_custom_call.1} parent=11 // pred_fallthru
          _
        // Predicated region
        $region49: #{tpu_custom_call.1} parent=11 // pred_check
          %p407 = pneg %p264
        $region50: #{tpu_custom_call.1} parent=11 // pred_check_branch
          %409 = sbr.rel (%p407) target = $region52
        $region51: #{tpu_custom_call.1} parent=11 // pred_region
          %s411 = ssub.s32 4096, 4096
          %412 = vsyncadd [#allocation15], %s411
          %s413 = sshll.u32 [#allocation14], 4
          %s414 = int_to_ptr.vmem [resolvable:$true] %s413
          %419 = dma.hbm_to_vmem [thread:$0]  %s10, 4096, %s414, [#allocation15], 64, 64, 4
        $region52: #{tpu_custom_call.1} parent=11 // pred_fallthru
          _
        // Predicated region
        $region53: #{tpu_custom_call.1} parent=11 // pred_check
          %p420 = pneg %p285
        $region54: #{tpu_custom_call.1} parent=11 // pred_check_branch
          %422 = sbr.rel (%p420) target = $region56
        $region55: #{tpu_custom_call.1} parent=11 // pred_region
          _
        $region56: #{tpu_custom_call.1} parent=11 // pred_fallthru
          _
      $region12: #{tpu_custom_call.1} parent=5 // pred_fallthru
        _
      %p423 = scmp.lt.s32.totalorder %s28, 2
      // Predicated region
      $region57: #{tpu_custom_call.1} parent=5 // pred_check
        %p424 = pneg %p423
      $region58: #{tpu_custom_call.1} parent=5 // pred_check_branch
        %426 = sbr.rel (%p424) target = $region60
      $region59: #{tpu_custom_call.1} parent=5 // pred_region
        // Predicated region
        $region61: #{tpu_custom_call.1} parent=59 // pred_check
          %p427 = pneg %p48
        $region62: #{tpu_custom_call.1} parent=59 // pred_check_branch
          %429 = sbr.rel (%p427) target = $region64
        $region63: #{tpu_custom_call.1} parent=59 // pred_region
          %s430 = sand.u32 %s38, 1
          %s431 = scalar_lea.sflag [#allocation3], %s430
          %s432 = sand.u32 %s38, 1
          %s433 = smul.addr %s432, 528
          %s434 = scalar_lea.vmem [#allocation2], %s433
          %s436 = ssub.s32 8448, 8448
          %437 = vsyncadd %s431, %s436
          %s438 = smul.addr %s28, 66
          %s439 = smul.addr %s438, 128
          %s440 = scalar_lea.hbm %s0, %s439
          %s441 = sshll.u32 %s434, 4
          %s442 = int_to_ptr.vmem [resolvable:$true] %s441
          %447 = dma.hbm_to_vmem [thread:$0]  %s440, 8448, %s442, %s431, 128, 128, 8
        $region64: #{tpu_custom_call.1} parent=59 // pred_fallthru
          _
      $region60: #{tpu_custom_call.1} parent=5 // pred_fallthru
        _
      %p448 = scmp.le.s32.totalorder 1, %s28
      %p449 = scmp.lt.s32.totalorder %s28, 3
      %p450 = pnand %p448, %p449
      %p451 = pneg %p450
      // Predicated region
      $region65: #{tpu_custom_call.1} parent=5 // pred_check
        _
      $region66: #{tpu_custom_call.1} parent=5 // pred_check_branch
        %453 = sbr.rel (%p450) target = $region68
      $region67: #{tpu_custom_call.1} parent=5 // pred_region
        %s454 = ssub.s32 %s28, 1
        %s455 = sand.u32 %s41, 1
        %s456 = scalar_lea.sflag [#allocation3], %s455
        %s457 = sand.u32 %s41, 1
        %s458 = smul.addr %s457, 528
        %s459 = scalar_lea.vmem [#allocation2], %s458
        // Predicated region
        $region69: #{tpu_custom_call.1} parent=67 // pred_check
          %p460 = pneg %p54
        $region70: #{tpu_custom_call.1} parent=67 // pred_check_branch
          %462 = sbr.rel (%p460) target = $region72
        $region71: #{tpu_custom_call.1} parent=67 // pred_region
          %463 = dma.done %s456, 8448
        $region72: #{tpu_custom_call.1} parent=67 // pred_fallthru
          _
        // Predicated region
        $region73: #{tpu_custom_call.1} parent=67 // pred_check
          %p464 = pneg %p75
        $region74: #{tpu_custom_call.1} parent=67 // pred_check_branch
          %466 = sbr.rel (%p464) target = $region76
        $region75: #{tpu_custom_call.1} parent=67 // pred_region
          %467 = dma.done [#allocation6], 896
        $region76: #{tpu_custom_call.1} parent=67 // pred_fallthru
          _
        // Predicated region
        $region77: #{tpu_custom_call.1} parent=67 // pred_check
          %p468 = pneg %p96
        $region78: #{tpu_custom_call.1} parent=67 // pred_check_branch
          %470 = sbr.rel (%p468) target = $region80
        $region79: #{tpu_custom_call.1} parent=67 // pred_region
          %471 = dma.done [#allocation6], 16
        $region80: #{tpu_custom_call.1} parent=67 // pred_fallthru
          _
        // Predicated region
        $region81: #{tpu_custom_call.1} parent=67 // pred_check
          %p472 = pneg %p117
        $region82: #{tpu_custom_call.1} parent=67 // pred_check_branch
          %474 = sbr.rel (%p472) target = $region84
        $region83: #{tpu_custom_call.1} parent=67 // pred_region
          %475 = dma.done [#allocation9], 16
        $region84: #{tpu_custom_call.1} parent=67 // pred_fallthru
          _
        // Predicated region
        $region85: #{tpu_custom_call.1} parent=67 // pred_check
          %p476 = pneg %p138
        $region86: #{tpu_custom_call.1} parent=67 // pred_check_branch
          %478 = sbr.rel (%p476) target = $region88
        $region87: #{tpu_custom_call.1} parent=67 // pred_region
          %479 = dma.done [#allocation9], 16
        $region88: #{tpu_custom_call.1} parent=67 // pred_fallthru
          _
        // Predicated region
        $region89: #{tpu_custom_call.1} parent=67 // pred_check
          %p480 = pneg %p159
        $region90: #{tpu_custom_call.1} parent=67 // pred_check_branch
          %482 = sbr.rel (%p480) target = $region92
        $region91: #{tpu_custom_call.1} parent=67 // pred_region
          %483 = dma.done [#allocation12], 2048
        $region92: #{tpu_custom_call.1} parent=67 // pred_fallthru
          _
        // Predicated region
        $region93: #{tpu_custom_call.1} parent=67 // pred_check
          %p484 = pneg %p180
        $region94: #{tpu_custom_call.1} parent=67 // pred_check_branch
          %486 = sbr.rel (%p484) target = $region96
        $region95: #{tpu_custom_call.1} parent=67 // pred_region
          %487 = dma.done [#allocation12], 4096
        $region96: #{tpu_custom_call.1} parent=67 // pred_fallthru
          _
        // Predicated region
        $region97: #{tpu_custom_call.1} parent=67 // pred_check
          %p488 = pneg %p264
        $region98: #{tpu_custom_call.1} parent=67 // pred_check_branch
          %490 = sbr.rel (%p488) target = $region100
        $region99: #{tpu_custom_call.1} parent=67 // pred_region
          %491 = dma.done [#allocation15], 4096
        $region100: #{tpu_custom_call.1} parent=67 // pred_fallthru
          _
        %s492 = sand.u32 %s41, 1
        %s493 = scalar_lea.sflag [#allocation3], %s492
        %s494 = sand.u32 %s41, 1
        %s495 = smul.addr %s494, 528
        %s496 = scalar_lea.vmem [#allocation2], %s495
        %p497 = pneg %p54
        %p498 = pneg %p51
        %p499 = pneg %p75
        %p500 = pneg %p72
        %p501 = pneg %p96
        %p502 = pneg %p93
        %p503 = pneg %p117
        %p504 = pneg %p114
        %p505 = pneg %p138
        %p506 = pneg %p135
        %p507 = pneg %p159
        %p508 = pneg %p156
        %p509 = pneg %p180
        %p510 = pneg %p177
        %p511 = pneg %p201
        %p512 = pneg %p198
        %p513 = pneg %p222
        %p514 = pneg %p219
        %p515 = pneg %p243
        %p516 = pneg %p240
        %p517 = pneg %p264
        %p518 = pneg %p261
        %p519 = pneg %p285
        %p520 = pneg %p282
        %p521 = pneg %p311
        %p522 = pneg %p308
        %s523 = sand.u32 %s298, 1
        %s524 = scalar_lea.sflag [#allocation4], %s523
        %s525 = sand.u32 %s298, 1
        %s526 = smul.addr %s525, 256
        %s527 = scalar_lea.vmem [#allocation16], %s526
        %v529 = vld [vmem:[%s459] sm:$0xff]
        %v530 = vld [vmem:[%s459 + $0x8] sm:$0xff]
        %v531 = vld [vmem:[%s459 + $0x10] sm:$0xff]
        %v532 = vld [vmem:[%s459 + $0x18] sm:$0xff]
        %v533 = vld [vmem:[%s459 + $0x20] sm:$0xff]
        %v534 = vld [vmem:[%s459 + $0x28] sm:$0xff]
        %v535 = vld [vmem:[%s459 + $0x30] sm:$0xff]
        %v536 = vld [vmem:[%s459 + $0x38] sm:$0xff]
        %v537 = vld [vmem:[%s459 + $0x40] sm:$0xff]
        %v538 = vld [vmem:[%s459 + $0x48] sm:$0xff]
        %v539 = vld [vmem:[%s459 + $0x50] sm:$0xff]
        %v540 = vld [vmem:[%s459 + $0x58] sm:$0xff]
        %v541 = vld [vmem:[%s459 + $0x60] sm:$0xff]
        %v542 = vld [vmem:[%s459 + $0x68] sm:$0xff]
        %v543 = vld [vmem:[%s459 + $0x70] sm:$0xff]
        %v544 = vld [vmem:[%s459 + $0x78] sm:$0xff]
        %v545 = vld [vmem:[%s459 + $0x80] sm:$0xff]
        %v546 = vld [vmem:[%s459 + $0x88] sm:$0xff]
        %v547 = vld [vmem:[%s459 + $0x90] sm:$0xff]
        %v548 = vld [vmem:[%s459 + $0x98] sm:$0xff]
        %v549 = vld [vmem:[%s459 + $0xa0] sm:$0xff]
        %v550 = vld [vmem:[%s459 + $0xa8] sm:$0xff]
        %v551 = vld [vmem:[%s459 + $0xb0] sm:$0xff]
        %v552 = vld [vmem:[%s459 + $0xb8] sm:$0xff]
        %v553 = vld [vmem:[%s459 + $0xc0] sm:$0xff]
        %v554 = vld [vmem:[%s459 + $0xc8] sm:$0xff]
        %v555 = vld [vmem:[%s459 + $0xd0] sm:$0xff]
        %v556 = vld [vmem:[%s459 + $0xd8] sm:$0xff]
        %v557 = vld [vmem:[%s459 + $0xe0] sm:$0xff]
        %v558 = vld [vmem:[%s459 + $0xe8] sm:$0xff]
        %v559 = vld [vmem:[%s459 + $0xf0] sm:$0xff]
        %v560 = vld [vmem:[%s459 + $0xf8] sm:$0xff]
        %v561 = vld [vmem:[%s459 + $0x100] sm:$0xff]
        %v562 = vld [vmem:[%s459 + $0x108] sm:$0xff]
        %v563 = vld [vmem:[%s459 + $0x110] sm:$0xff]
        %v564 = vld [vmem:[%s459 + $0x118] sm:$0xff]
        %v565 = vld [vmem:[%s459 + $0x120] sm:$0xff]
        %v566 = vld [vmem:[%s459 + $0x128] sm:$0xff]
        %v567 = vld [vmem:[%s459 + $0x130] sm:$0xff]
        %v568 = vld [vmem:[%s459 + $0x138] sm:$0xff]
        %v569 = vld [vmem:[%s459 + $0x140] sm:$0xff]
        %v570 = vld [vmem:[%s459 + $0x148] sm:$0xff]
        %v571 = vld [vmem:[%s459 + $0x150] sm:$0xff]
        %v572 = vld [vmem:[%s459 + $0x158] sm:$0xff]
        %v573 = vld [vmem:[%s459 + $0x160] sm:$0xff]
        %v574 = vld [vmem:[%s459 + $0x168] sm:$0xff]
        %v575 = vld [vmem:[%s459 + $0x170] sm:$0xff]
        %v576 = vld [vmem:[%s459 + $0x178] sm:$0xff]
        %v577 = vld [vmem:[%s459 + $0x180] sm:$0xff]
        %v578 = vld [vmem:[%s459 + $0x188] sm:$0xff]
        %v579 = vld [vmem:[%s459 + $0x190] sm:$0xff]
        %v580 = vld [vmem:[%s459 + $0x198] sm:$0xff]
        %v581 = vld [vmem:[%s459 + $0x1a0] sm:$0xff]
        %v582 = vld [vmem:[%s459 + $0x1a8] sm:$0xff]
        %v583 = vld [vmem:[%s459 + $0x1b0] sm:$0xff]
        %v584 = vld [vmem:[%s459 + $0x1b8] sm:$0xff]
        %v585 = vld [vmem:[%s459 + $0x1c0] sm:$0xff]
        %v586 = vld [vmem:[%s459 + $0x1c8] sm:$0xff]
        %v587 = vld [vmem:[%s459 + $0x1d0] sm:$0xff]
        %v588 = vld [vmem:[%s459 + $0x1d8] sm:$0xff]
        %v589 = vld [vmem:[%s459 + $0x1e0] sm:$0xff]
        %v590 = vld [vmem:[%s459 + $0x1e8] sm:$0xff]
        %v591 = vld [vmem:[%s459 + $0x1f0] sm:$0xff]
        %v592 = vld [vmem:[%s459 + $0x1f8] sm:$0xff]
        %v593 = vld [vmem:[%s459 + $0x200] sm:$0xff]
        %v594 = vld [vmem:[%s459 + $0x208] sm:$0xff]
        %v595 = vld [vmem:[#allocation5] sm:$0x7f]
        %v596 = vld [vmem:[#allocation5 + $0x8] sm:$0x7f]
        %v597 = vld [vmem:[#allocation5 + $0x10] sm:$0x7f]
        %v598 = vld [vmem:[#allocation5 + $0x18] sm:$0x7f]
        %v599 = vld [vmem:[#allocation5 + $0x20] sm:$0x7f]
        %v600 = vld [vmem:[#allocation5 + $0x28] sm:$0x7f]
        %v601 = vld [vmem:[#allocation5 + $0x30] sm:$0x7f]
        %v602 = vlaneseq
        %v603 = vshrl.u32 %v602, 7
        %v604 = vsub.s32 0, %v603
        %v605 = vrot.slane %v595, %v604
        %v606 = vmul.f32 %v529, %v605
        %v607 = vmul.f32 %v530, %v605
        %v608 = vmul.f32 %v532, %v605
        %v609 = vmul.f32 %v533, %v605
        %v610 = vmul.f32 %v535, %v605
        %v611 = vmul.f32 %v536, %v605
        %v612 = vmul.f32 %v538, %v605
        %v613 = vmul.f32 %v539, %v605
        %v614 = vmul.f32 %v541, %v605
        %v615 = vmul.f32 %v542, %v605
        %v616 = vmul.f32 %v544, %v605
        %v617 = vmul.f32 %v545, %v605
        %v618 = vmul.f32 %v547, %v605
        %v619 = vmul.f32 %v548, %v605
        %v620 = vmul.f32 %v550, %v605
        %v621 = vmul.f32 %v551, %v605
        %v622 = vmul.f32 %v553, %v605
        %v623 = vmul.f32 %v554, %v605
        %v624 = vmul.f32 %v556, %v605
        %v625 = vmul.f32 %v557, %v605
        %v626 = vmul.f32 %v559, %v605
        %v627 = vmul.f32 %v560, %v605
        %v628 = vmul.f32 %v562, %v605
        %v629 = vmul.f32 %v563, %v605
        %v630 = vmul.f32 %v565, %v605
        %v631 = vmul.f32 %v566, %v605
        %v632 = vmul.f32 %v568, %v605
        %v633 = vmul.f32 %v569, %v605
        %v634 = vmul.f32 %v571, %v605
        %v635 = vmul.f32 %v572, %v605
        %v636 = vmul.f32 %v574, %v605
        %v637 = vmul.f32 %v575, %v605
        %v638 = vadd.f32 %v606, 0.0
        %v639 = vadd.f32 %v607, 0.0
        %v640 = vadd.f32 %v608, 0.0
        %v641 = vadd.f32 %v609, 0.0
        %v642 = vadd.f32 %v610, 0.0
        %v643 = vadd.f32 %v611, 0.0
        %v644 = vadd.f32 %v612, 0.0
        %v645 = vadd.f32 %v613, 0.0
        %v646 = vadd.f32 %v614, 0.0
        %v647 = vadd.f32 %v615, 0.0
        %v648 = vadd.f32 %v616, 0.0
        %v649 = vadd.f32 %v617, 0.0
        %v650 = vadd.f32 %v618, 0.0
        %v651 = vadd.f32 %v619, 0.0
        %v652 = vadd.f32 %v620, 0.0
        %v653 = vadd.f32 %v621, 0.0
        %v654 = vadd.f32 %v622, 0.0
        %v655 = vadd.f32 %v623, 0.0
        %v656 = vadd.f32 %v624, 0.0
        %v657 = vadd.f32 %v625, 0.0
        %v658 = vadd.f32 %v626, 0.0
        %v659 = vadd.f32 %v627, 0.0
        %v660 = vadd.f32 %v628, 0.0
        %v661 = vadd.f32 %v629, 0.0
        %v662 = vadd.f32 %v630, 0.0
        %v663 = vadd.f32 %v631, 0.0
        %v664 = vadd.f32 %v632, 0.0
        %v665 = vadd.f32 %v633, 0.0
        %v666 = vadd.f32 %v634, 0.0
        %v667 = vadd.f32 %v635, 0.0
        %v668 = vadd.f32 %v636, 0.0
        %v669 = vadd.f32 %v637, 0.0
        %v670 = vlaneseq
        %v671 = vshrl.u32 %v670, 7
        %v672 = vsub.s32 0, %v671
        %v673 = vrot.slane %v596, %v672
        %v674 = vmul.f32 %v532, %v673
        %v675 = vmul.f32 %v533, %v673
        %v676 = vmul.f32 %v535, %v673
        %v677 = vmul.f32 %v536, %v673
        %v678 = vmul.f32 %v538, %v673
        %v679 = vmul.f32 %v539, %v673
        %v680 = vmul.f32 %v541, %v673
        %v681 = vmul.f32 %v542, %v673
        %v682 = vmul.f32 %v544, %v673
        %v683 = vmul.f32 %v545, %v673
        %v684 = vmul.f32 %v547, %v673
        %v685 = vmul.f32 %v548, %v673
        %v686 = vmul.f32 %v550, %v673
        %v687 = vmul.f32 %v551, %v673
        %v688 = vmul.f32 %v553, %v673
        %v689 = vmul.f32 %v554, %v673
        %v690 = vmul.f32 %v556, %v673
        %v691 = vmul.f32 %v557, %v673
        %v692 = vmul.f32 %v559, %v673
        %v693 = vmul.f32 %v560, %v673
        %v694 = vmul.f32 %v562, %v673
        %v695 = vmul.f32 %v563, %v673
        %v696 = vmul.f32 %v565, %v673
        %v697 = vmul.f32 %v566, %v673
        %v698 = vmul.f32 %v568, %v673
        %v699 = vmul.f32 %v569, %v673
        %v700 = vmul.f32 %v571, %v673
        %v701 = vmul.f32 %v572, %v673
        %v702 = vmul.f32 %v574, %v673
        %v703 = vmul.f32 %v575, %v673
        %v704 = vmul.f32 %v577, %v673
        %v705 = vmul.f32 %v578, %v673
        %v706 = vadd.f32 %v638, %v674
        %v707 = vadd.f32 %v639, %v675
        %v708 = vadd.f32 %v640, %v676
        %v709 = vadd.f32 %v641, %v677
        %v710 = vadd.f32 %v642, %v678
        %v711 = vadd.f32 %v643, %v679
        %v712 = vadd.f32 %v644, %v680
        %v713 = vadd.f32 %v645, %v681
        %v714 = vadd.f32 %v646, %v682
        %v715 = vadd.f32 %v647, %v683
        %v716 = vadd.f32 %v648, %v684
        %v717 = vadd.f32 %v649, %v685
        %v718 = vadd.f32 %v650, %v686
        %v719 = vadd.f32 %v651, %v687
        %v720 = vadd.f32 %v652, %v688
        %v721 = vadd.f32 %v653, %v689
        %v722 = vadd.f32 %v654, %v690
        %v723 = vadd.f32 %v655, %v691
        %v724 = vadd.f32 %v656, %v692
        %v725 = vadd.f32 %v657, %v693
        %v726 = vadd.f32 %v658, %v694
        %v727 = vadd.f32 %v659, %v695
        %v728 = vadd.f32 %v660, %v696
        %v729 = vadd.f32 %v661, %v697
        %v730 = vadd.f32 %v662, %v698
        %v731 = vadd.f32 %v663, %v699
        %v732 = vadd.f32 %v664, %v700
        %v733 = vadd.f32 %v665, %v701
        %v734 = vadd.f32 %v666, %v702
        %v735 = vadd.f32 %v667, %v703
        %v736 = vadd.f32 %v668, %v704
        %v737 = vadd.f32 %v669, %v705
        %v738 = vlaneseq
        %v739 = vshrl.u32 %v738, 7
        %v740 = vsub.s32 0, %v739
        %v741 = vrot.slane %v597, %v740
        %v742 = vmul.f32 %v535, %v741
        %v743 = vmul.f32 %v536, %v741
        %v744 = vmul.f32 %v538, %v741
        %v745 = vmul.f32 %v539, %v741
        %v746 = vmul.f32 %v541, %v741
        %v747 = vmul.f32 %v542, %v741
        %v748 = vmul.f32 %v544, %v741
        %v749 = vmul.f32 %v545, %v741
        %v750 = vmul.f32 %v547, %v741
        %v751 = vmul.f32 %v548, %v741
        %v752 = vmul.f32 %v550, %v741
        %v753 = vmul.f32 %v551, %v741
        %v754 = vmul.f32 %v553, %v741
        %v755 = vmul.f32 %v554, %v741
        %v756 = vmul.f32 %v556, %v741
        %v757 = vmul.f32 %v557, %v741
        %v758 = vmul.f32 %v559, %v741
        %v759 = vmul.f32 %v560, %v741
        %v760 = vmul.f32 %v562, %v741
        %v761 = vmul.f32 %v563, %v741
        %v762 = vmul.f32 %v565, %v741
        %v763 = vmul.f32 %v566, %v741
        %v764 = vmul.f32 %v568, %v741
        %v765 = vmul.f32 %v569, %v741
        %v766 = vmul.f32 %v571, %v741
        %v767 = vmul.f32 %v572, %v741
        %v768 = vmul.f32 %v574, %v741
        %v769 = vmul.f32 %v575, %v741
        %v770 = vmul.f32 %v577, %v741
        %v771 = vmul.f32 %v578, %v741
        %v772 = vmul.f32 %v580, %v741
        %v773 = vmul.f32 %v581, %v741
        %v774 = vadd.f32 %v706, %v742
        %v775 = vadd.f32 %v707, %v743
        %v776 = vadd.f32 %v708, %v744
        %v777 = vadd.f32 %v709, %v745
        %v778 = vadd.f32 %v710, %v746
        %v779 = vadd.f32 %v711, %v747
        %v780 = vadd.f32 %v712, %v748
        %v781 = vadd.f32 %v713, %v749
        %v782 = vadd.f32 %v714, %v750
        %v783 = vadd.f32 %v715, %v751
        %v784 = vadd.f32 %v716, %v752
        %v785 = vadd.f32 %v717, %v753
        %v786 = vadd.f32 %v718, %v754
        %v787 = vadd.f32 %v719, %v755
        %v788 = vadd.f32 %v720, %v756
        %v789 = vadd.f32 %v721, %v757
        %v790 = vadd.f32 %v722, %v758
        %v791 = vadd.f32 %v723, %v759
        %v792 = vadd.f32 %v724, %v760
        %v793 = vadd.f32 %v725, %v761
        %v794 = vadd.f32 %v726, %v762
        %v795 = vadd.f32 %v727, %v763
        %v796 = vadd.f32 %v728, %v764
        %v797 = vadd.f32 %v729, %v765
        %v798 = vadd.f32 %v730, %v766
        %v799 = vadd.f32 %v731, %v767
        %v800 = vadd.f32 %v732, %v768
        %v801 = vadd.f32 %v733, %v769
        %v802 = vadd.f32 %v734, %v770
        %v803 = vadd.f32 %v735, %v771
        %v804 = vadd.f32 %v736, %v772
        %v805 = vadd.f32 %v737, %v773
        %v806 = vlaneseq
        %v807 = vshrl.u32 %v806, 7
        %v808 = vsub.s32 0, %v807
        %v809 = vrot.slane %v598, %v808
        %v810 = vmul.f32 %v538, %v809
        %v811 = vmul.f32 %v539, %v809
        %v812 = vmul.f32 %v541, %v809
        %v813 = vmul.f32 %v542, %v809
        %v814 = vmul.f32 %v544, %v809
        %v815 = vmul.f32 %v545, %v809
        %v816 = vmul.f32 %v547, %v809
        %v817 = vmul.f32 %v548, %v809
        %v818 = vmul.f32 %v550, %v809
        %v819 = vmul.f32 %v551, %v809
        %v820 = vmul.f32 %v553, %v809
        %v821 = vmul.f32 %v554, %v809
        %v822 = vmul.f32 %v556, %v809
        %v823 = vmul.f32 %v557, %v809
        %v824 = vmul.f32 %v559, %v809
        %v825 = vmul.f32 %v560, %v809
        %v826 = vmul.f32 %v562, %v809
        %v827 = vmul.f32 %v563, %v809
        %v828 = vmul.f32 %v565, %v809
        %v829 = vmul.f32 %v566, %v809
        %v830 = vmul.f32 %v568, %v809
        %v831 = vmul.f32 %v569, %v809
        %v832 = vmul.f32 %v571, %v809
        %v833 = vmul.f32 %v572, %v809
        %v834 = vmul.f32 %v574, %v809
        %v835 = vmul.f32 %v575, %v809
        %v836 = vmul.f32 %v577, %v809
        %v837 = vmul.f32 %v578, %v809
        %v838 = vmul.f32 %v580, %v809
        %v839 = vmul.f32 %v581, %v809
        %v840 = vmul.f32 %v583, %v809
        %v841 = vmul.f32 %v584, %v809
        %v842 = vadd.f32 %v774, %v810
        %v843 = vadd.f32 %v775, %v811
        %v844 = vadd.f32 %v776, %v812
        %v845 = vadd.f32 %v777, %v813
        %v846 = vadd.f32 %v778, %v814
        %v847 = vadd.f32 %v779, %v815
        %v848 = vadd.f32 %v780, %v816
        %v849 = vadd.f32 %v781, %v817
        %v850 = vadd.f32 %v782, %v818
        %v851 = vadd.f32 %v783, %v819
        %v852 = vadd.f32 %v784, %v820
        %v853 = vadd.f32 %v785, %v821
        %v854 = vadd.f32 %v786, %v822
        %v855 = vadd.f32 %v787, %v823
        %v856 = vadd.f32 %v788, %v824
        %v857 = vadd.f32 %v789, %v825
        %v858 = vadd.f32 %v790, %v826
        %v859 = vadd.f32 %v791, %v827
        %v860 = vadd.f32 %v792, %v828
        %v861 = vadd.f32 %v793, %v829
        %v862 = vadd.f32 %v794, %v830
        %v863 = vadd.f32 %v795, %v831
        %v864 = vadd.f32 %v796, %v832
        %v865 = vadd.f32 %v797, %v833
        %v866 = vadd.f32 %v798, %v834
        %v867 = vadd.f32 %v799, %v835
        %v868 = vadd.f32 %v800, %v836
        %v869 = vadd.f32 %v801, %v837
        %v870 = vadd.f32 %v802, %v838
        %v871 = vadd.f32 %v803, %v839
        %v872 = vadd.f32 %v804, %v840
        %v873 = vadd.f32 %v805, %v841
        %v874 = vlaneseq
        %v875 = vshrl.u32 %v874, 7
        %v876 = vsub.s32 0, %v875
        %v877 = vrot.slane %v599, %v876
        %v878 = vmul.f32 %v541, %v877
        %v879 = vmul.f32 %v542, %v877
        %v880 = vmul.f32 %v544, %v877
        %v881 = vmul.f32 %v545, %v877
        %v882 = vmul.f32 %v547, %v877
        %v883 = vmul.f32 %v548, %v877
        %v884 = vmul.f32 %v550, %v877
        %v885 = vmul.f32 %v551, %v877
        %v886 = vmul.f32 %v553, %v877
        %v887 = vmul.f32 %v554, %v877
        %v888 = vmul.f32 %v556, %v877
        %v889 = vmul.f32 %v557, %v877
        %v890 = vmul.f32 %v559, %v877
        %v891 = vmul.f32 %v560, %v877
        %v892 = vmul.f32 %v562, %v877
        %v893 = vmul.f32 %v563, %v877
        %v894 = vmul.f32 %v565, %v877
        %v895 = vmul.f32 %v566, %v877
        %v896 = vmul.f32 %v568, %v877
        %v897 = vmul.f32 %v569, %v877
        %v898 = vmul.f32 %v571, %v877
        %v899 = vmul.f32 %v572, %v877
        %v900 = vmul.f32 %v574, %v877
        %v901 = vmul.f32 %v575, %v877
        %v902 = vmul.f32 %v577, %v877
        %v903 = vmul.f32 %v578, %v877
        %v904 = vmul.f32 %v580, %v877
        %v905 = vmul.f32 %v581, %v877
        %v906 = vmul.f32 %v583, %v877
        %v907 = vmul.f32 %v584, %v877
        %v908 = vmul.f32 %v586, %v877
        %v909 = vmul.f32 %v587, %v877
        %v910 = vadd.f32 %v842, %v878
        %v911 = vadd.f32 %v843, %v879
        %v912 = vadd.f32 %v844, %v880
        %v913 = vadd.f32 %v845, %v881
        %v914 = vadd.f32 %v846, %v882
        %v915 = vadd.f32 %v847, %v883
        %v916 = vadd.f32 %v848, %v884
        %v917 = vadd.f32 %v849, %v885
        %v918 = vadd.f32 %v850, %v886
        %v919 = vadd.f32 %v851, %v887
        %v920 = vadd.f32 %v852, %v888
        %v921 = vadd.f32 %v853, %v889
        %v922 = vadd.f32 %v854, %v890
        %v923 = vadd.f32 %v855, %v891
        %v924 = vadd.f32 %v856, %v892
        %v925 = vadd.f32 %v857, %v893
        %v926 = vadd.f32 %v858, %v894
        %v927 = vadd.f32 %v859, %v895
        %v928 = vadd.f32 %v860, %v896
        %v929 = vadd.f32 %v861, %v897
        %v930 = vadd.f32 %v862, %v898
        %v931 = vadd.f32 %v863, %v899
        %v932 = vadd.f32 %v864, %v900
        %v933 = vadd.f32 %v865, %v901
        %v934 = vadd.f32 %v866, %v902
        %v935 = vadd.f32 %v867, %v903
        %v936 = vadd.f32 %v868, %v904
        %v937 = vadd.f32 %v869, %v905
        %v938 = vadd.f32 %v870, %v906
        %v939 = vadd.f32 %v871, %v907
        %v940 = vadd.f32 %v872, %v908
        %v941 = vadd.f32 %v873, %v909
        %v942 = vlaneseq
        %v943 = vshrl.u32 %v942, 7
        %v944 = vsub.s32 0, %v943
        %v945 = vrot.slane %v600, %v944
        %v946 = vmul.f32 %v544, %v945
        %v947 = vmul.f32 %v545, %v945
        %v948 = vmul.f32 %v547, %v945
        %v949 = vmul.f32 %v548, %v945
        %v950 = vmul.f32 %v550, %v945
        %v951 = vmul.f32 %v551, %v945
        %v952 = vmul.f32 %v553, %v945
        %v953 = vmul.f32 %v554, %v945
        %v954 = vmul.f32 %v556, %v945
        %v955 = vmul.f32 %v557, %v945
        %v956 = vmul.f32 %v559, %v945
        %v957 = vmul.f32 %v560, %v945
        %v958 = vmul.f32 %v562, %v945
        %v959 = vmul.f32 %v563, %v945
        %v960 = vmul.f32 %v565, %v945
        %v961 = vmul.f32 %v566, %v945
        %v962 = vmul.f32 %v568, %v945
        %v963 = vmul.f32 %v569, %v945
        %v964 = vmul.f32 %v571, %v945
        %v965 = vmul.f32 %v572, %v945
        %v966 = vmul.f32 %v574, %v945
        %v967 = vmul.f32 %v575, %v945
        %v968 = vmul.f32 %v577, %v945
        %v969 = vmul.f32 %v578, %v945
        %v970 = vmul.f32 %v580, %v945
        %v971 = vmul.f32 %v581, %v945
        %v972 = vmul.f32 %v583, %v945
        %v973 = vmul.f32 %v584, %v945
        %v974 = vmul.f32 %v586, %v945
        %v975 = vmul.f32 %v587, %v945
        %v976 = vmul.f32 %v589, %v945
        %v977 = vmul.f32 %v590, %v945
        %v978 = vadd.f32 %v910, %v946
        %v979 = vadd.f32 %v911, %v947
        %v980 = vadd.f32 %v912, %v948
        %v981 = vadd.f32 %v913, %v949
        %v982 = vadd.f32 %v914, %v950
        %v983 = vadd.f32 %v915, %v951
        %v984 = vadd.f32 %v916, %v952
        %v985 = vadd.f32 %v917, %v953
        %v986 = vadd.f32 %v918, %v954
        %v987 = vadd.f32 %v919, %v955
        %v988 = vadd.f32 %v920, %v956
        %v989 = vadd.f32 %v921, %v957
        %v990 = vadd.f32 %v922, %v958
        %v991 = vadd.f32 %v923, %v959
        %v992 = vadd.f32 %v924, %v960
        %v993 = vadd.f32 %v925, %v961
        %v994 = vadd.f32 %v926, %v962
        %v995 = vadd.f32 %v927, %v963
        %v996 = vadd.f32 %v928, %v964
        %v997 = vadd.f32 %v929, %v965
        %v998 = vadd.f32 %v930, %v966
        %v999 = vadd.f32 %v931, %v967
        %v1000 = vadd.f32 %v932, %v968
        %v1001 = vadd.f32 %v933, %v969
        %v1002 = vadd.f32 %v934, %v970
        %v1003 = vadd.f32 %v935, %v971
        %v1004 = vadd.f32 %v936, %v972
        %v1005 = vadd.f32 %v937, %v973
        %v1006 = vadd.f32 %v938, %v974
        %v1007 = vadd.f32 %v939, %v975
        %v1008 = vadd.f32 %v940, %v976
        %v1009 = vadd.f32 %v941, %v977
        %v1010 = vlaneseq
        %v1011 = vshrl.u32 %v1010, 7
        %v1012 = vsub.s32 0, %v1011
        %v1013 = vrot.slane %v601, %v1012
        %v1014 = vmul.f32 %v547, %v1013
        %v1015 = vmul.f32 %v548, %v1013
        %v1016 = vmul.f32 %v550, %v1013
        %v1017 = vmul.f32 %v551, %v1013
        %v1018 = vmul.f32 %v553, %v1013
        %v1019 = vmul.f32 %v554, %v1013
        %v1020 = vmul.f32 %v556, %v1013
        %v1021 = vmul.f32 %v557, %v1013
        %v1022 = vmul.f32 %v559, %v1013
        %v1023 = vmul.f32 %v560, %v1013
        %v1024 = vmul.f32 %v562, %v1013
        %v1025 = vmul.f32 %v563, %v1013
        %v1026 = vmul.f32 %v565, %v1013
        %v1027 = vmul.f32 %v566, %v1013
        %v1028 = vmul.f32 %v568, %v1013
        %v1029 = vmul.f32 %v569, %v1013
        %v1030 = vmul.f32 %v571, %v1013
        %v1031 = vmul.f32 %v572, %v1013
        %v1032 = vmul.f32 %v574, %v1013
        %v1033 = vmul.f32 %v575, %v1013
        %v1034 = vmul.f32 %v577, %v1013
        %v1035 = vmul.f32 %v578, %v1013
        %v1036 = vmul.f32 %v580, %v1013
        %v1037 = vmul.f32 %v581, %v1013
        %v1038 = vmul.f32 %v583, %v1013
        %v1039 = vmul.f32 %v584, %v1013
        %v1040 = vmul.f32 %v586, %v1013
        %v1041 = vmul.f32 %v587, %v1013
        %v1042 = vmul.f32 %v589, %v1013
        %v1043 = vmul.f32 %v590, %v1013
        %v1044 = vmul.f32 %v592, %v1013
        %v1045 = vmul.f32 %v593, %v1013
        %v1046 = vadd.f32 %v978, %v1014
        %v1047 = vadd.f32 %v979, %v1015
        %v1048 = vadd.f32 %v980, %v1016
        %v1049 = vadd.f32 %v981, %v1017
        %v1050 = vadd.f32 %v982, %v1018
        %v1051 = vadd.f32 %v983, %v1019
        %v1052 = vadd.f32 %v984, %v1020
        %v1053 = vadd.f32 %v985, %v1021
        %v1054 = vadd.f32 %v986, %v1022
        %v1055 = vadd.f32 %v987, %v1023
        %v1056 = vadd.f32 %v988, %v1024
        %v1057 = vadd.f32 %v989, %v1025
        %v1058 = vadd.f32 %v990, %v1026
        %v1059 = vadd.f32 %v991, %v1027
        %v1060 = vadd.f32 %v992, %v1028
        %v1061 = vadd.f32 %v993, %v1029
        %v1062 = vadd.f32 %v994, %v1030
        %v1063 = vadd.f32 %v995, %v1031
        %v1064 = vadd.f32 %v996, %v1032
        %v1065 = vadd.f32 %v997, %v1033
        %v1066 = vadd.f32 %v998, %v1034
        %v1067 = vadd.f32 %v999, %v1035
        %v1068 = vadd.f32 %v1000, %v1036
        %v1069 = vadd.f32 %v1001, %v1037
        %v1070 = vadd.f32 %v1002, %v1038
        %v1071 = vadd.f32 %v1003, %v1039
        %v1072 = vadd.f32 %v1004, %v1040
        %v1073 = vadd.f32 %v1005, %v1041
        %v1074 = vadd.f32 %v1006, %v1042
        %v1075 = vadd.f32 %v1007, %v1043
        %v1076 = vadd.f32 %v1008, %v1044
        %v1077 = vadd.f32 %v1009, %v1045
        %v1078 = vrot.slane %v529, 1
        %v1079 = vrot.slane %v532, 1
        %v1080 = vrot.slane %v535, 1
        %v1081 = vrot.slane %v538, 1
        %v1082 = vrot.slane %v541, 1
        %v1083 = vrot.slane %v544, 1
        %v1084 = vrot.slane %v547, 1
        %v1085 = vrot.slane %v550, 1
        %v1086 = vrot.slane %v553, 1
        %v1087 = vrot.slane %v556, 1
        %v1088 = vrot.slane %v559, 1
        %v1089 = vrot.slane %v562, 1
        %v1090 = vrot.slane %v565, 1
        %v1091 = vrot.slane %v568, 1
        %v1092 = vrot.slane %v571, 1
        %v1093 = vrot.slane %v574, 1
        %v1094 = vrot.slane %v577, 1
        %v1095 = vrot.slane %v580, 1
        %v1096 = vrot.slane %v583, 1
        %v1097 = vrot.slane %v586, 1
        %v1098 = vrot.slane %v589, 1
        %v1099 = vrot.slane %v592, 1
        %v1100 = vrot.slane %v530, 1
        %v1101 = vrot.slane %v533, 1
        %v1102 = vrot.slane %v536, 1
        %v1103 = vrot.slane %v539, 1
        %v1104 = vrot.slane %v542, 1
        %v1105 = vrot.slane %v545, 1
        %v1106 = vrot.slane %v548, 1
        %v1107 = vrot.slane %v551, 1
        %v1108 = vrot.slane %v554, 1
        %v1109 = vrot.slane %v557, 1
        %v1110 = vrot.slane %v560, 1
        %v1111 = vrot.slane %v563, 1
        %v1112 = vrot.slane %v566, 1
        %v1113 = vrot.slane %v569, 1
        %v1114 = vrot.slane %v572, 1
        %v1115 = vrot.slane %v575, 1
        %v1116 = vrot.slane %v578, 1
        %v1117 = vrot.slane %v581, 1
        %v1118 = vrot.slane %v584, 1
        %v1119 = vrot.slane %v587, 1
        %v1120 = vrot.slane %v590, 1
        %v1121 = vrot.slane %v593, 1
        %v1122 = vrot.slane %v531, 1
        %v1123 = vrot.slane %v534, 1
        %v1124 = vrot.slane %v537, 1
        %v1125 = vrot.slane %v540, 1
        %v1126 = vrot.slane %v543, 1
        %v1127 = vrot.slane %v546, 1
        %v1128 = vrot.slane %v549, 1
        %v1129 = vrot.slane %v552, 1
        %v1130 = vrot.slane %v555, 1
        %v1131 = vrot.slane %v558, 1
        %v1132 = vrot.slane %v561, 1
        %v1133 = vrot.slane %v564, 1
        %v1134 = vrot.slane %v567, 1
        %v1135 = vrot.slane %v570, 1
        %v1136 = vrot.slane %v573, 1
        %v1137 = vrot.slane %v576, 1
        %v1138 = vrot.slane %v579, 1
        %v1139 = vrot.slane %v582, 1
        %v1140 = vrot.slane %v585, 1
        %v1141 = vrot.slane %v588, 1
        %v1142 = vrot.slane %v591, 1
        %v1143 = vrot.slane %v594, 1
        %v1144 = vlaneseq
        %v1145 = vshrl.u32 %v1144, 7
        %vm1146 = vcmp.lt.s32.totalorder %v1145, 7
        %v1147 = vsel %vm1146, %v1100, %v1122
        %v1148 = vsel %vm1146, %v1101, %v1123
        %v1149 = vsel %vm1146, %v1102, %v1124
        %v1150 = vsel %vm1146, %v1103, %v1125
        %v1151 = vsel %vm1146, %v1104, %v1126
        %v1152 = vsel %vm1146, %v1105, %v1127
        %v1153 = vsel %vm1146, %v1106, %v1128
        %v1154 = vsel %vm1146, %v1107, %v1129
        %v1155 = vsel %vm1146, %v1108, %v1130
        %v1156 = vsel %vm1146, %v1109, %v1131
        %v1157 = vsel %vm1146, %v1110, %v1132
        %v1158 = vsel %vm1146, %v1111, %v1133
        %v1159 = vsel %vm1146, %v1112, %v1134
        %v1160 = vsel %vm1146, %v1113, %v1135
        %v1161 = vsel %vm1146, %v1114, %v1136
        %v1162 = vsel %vm1146, %v1115, %v1137
        %v1163 = vsel %vm1146, %v1116, %v1138
        %v1164 = vsel %vm1146, %v1117, %v1139
        %v1165 = vsel %vm1146, %v1118, %v1140
        %v1166 = vsel %vm1146, %v1119, %v1141
        %v1167 = vsel %vm1146, %v1120, %v1142
        %v1168 = vsel %vm1146, %v1121, %v1143
        %v1169 = vsel %vm1146, %v1078, %v1100
        %v1170 = vsel %vm1146, %v1079, %v1101
        %v1171 = vsel %vm1146, %v1080, %v1102
        %v1172 = vsel %vm1146, %v1081, %v1103
        %v1173 = vsel %vm1146, %v1082, %v1104
        %v1174 = vsel %vm1146, %v1083, %v1105
        %v1175 = vsel %vm1146, %v1084, %v1106
        %v1176 = vsel %vm1146, %v1085, %v1107
        %v1177 = vsel %vm1146, %v1086, %v1108
        %v1178 = vsel %vm1146, %v1087, %v1109
        %v1179 = vsel %vm1146, %v1088, %v1110
        %v1180 = vsel %vm1146, %v1089, %v1111
        %v1181 = vsel %vm1146, %v1090, %v1112
        %v1182 = vsel %vm1146, %v1091, %v1113
        %v1183 = vsel %vm1146, %v1092, %v1114
        %v1184 = vsel %vm1146, %v1093, %v1115
        %v1185 = vsel %vm1146, %v1094, %v1116
        %v1186 = vsel %vm1146, %v1095, %v1117
        %v1187 = vsel %vm1146, %v1096, %v1118
        %v1188 = vsel %vm1146, %v1097, %v1119
        %v1189 = vsel %vm1146, %v1098, %v1120
        %v1190 = vsel %vm1146, %v1099, %v1121
        %v1191 = vlaneseq
        %v1192 = vshrl.u32 %v1191, 7
        %v1193 = vsub.s32 1, %v1192
        %v1194 = vrot.slane %v595, %v1193
        %v1195 = vmul.f32 %v1169, %v1194
        %v1196 = vmul.f32 %v1147, %v1194
        %v1197 = vmul.f32 %v1170, %v1194
        %v1198 = vmul.f32 %v1148, %v1194
        %v1199 = vmul.f32 %v1171, %v1194
        %v1200 = vmul.f32 %v1149, %v1194
        %v1201 = vmul.f32 %v1172, %v1194
        %v1202 = vmul.f32 %v1150, %v1194
        %v1203 = vmul.f32 %v1173, %v1194
        %v1204 = vmul.f32 %v1151, %v1194
        %v1205 = vmul.f32 %v1174, %v1194
        %v1206 = vmul.f32 %v1152, %v1194
        %v1207 = vmul.f32 %v1175, %v1194
        %v1208 = vmul.f32 %v1153, %v1194
        %v1209 = vmul.f32 %v1176, %v1194
        %v1210 = vmul.f32 %v1154, %v1194
        %v1211 = vmul.f32 %v1177, %v1194
        %v1212 = vmul.f32 %v1155, %v1194
        %v1213 = vmul.f32 %v1178, %v1194
        %v1214 = vmul.f32 %v1156, %v1194
        %v1215 = vmul.f32 %v1179, %v1194
        %v1216 = vmul.f32 %v1157, %v1194
        %v1217 = vmul.f32 %v1180, %v1194
        %v1218 = vmul.f32 %v1158, %v1194
        %v1219 = vmul.f32 %v1181, %v1194
        %v1220 = vmul.f32 %v1159, %v1194
        %v1221 = vmul.f32 %v1182, %v1194
        %v1222 = vmul.f32 %v1160, %v1194
        %v1223 = vmul.f32 %v1183, %v1194
        %v1224 = vmul.f32 %v1161, %v1194
        %v1225 = vmul.f32 %v1184, %v1194
        %v1226 = vmul.f32 %v1162, %v1194
        %v1227 = vadd.f32 %v1046, %v1195
        %v1228 = vadd.f32 %v1047, %v1196
        %v1229 = vadd.f32 %v1048, %v1197
        %v1230 = vadd.f32 %v1049, %v1198
        %v1231 = vadd.f32 %v1050, %v1199
        %v1232 = vadd.f32 %v1051, %v1200
        %v1233 = vadd.f32 %v1052, %v1201
        %v1234 = vadd.f32 %v1053, %v1202
        %v1235 = vadd.f32 %v1054, %v1203
        %v1236 = vadd.f32 %v1055, %v1204
        %v1237 = vadd.f32 %v1056, %v1205
        %v1238 = vadd.f32 %v1057, %v1206
        %v1239 = vadd.f32 %v1058, %v1207
        %v1240 = vadd.f32 %v1059, %v1208
        %v1241 = vadd.f32 %v1060, %v1209
        %v1242 = vadd.f32 %v1061, %v1210
        %v1243 = vadd.f32 %v1062, %v1211
        %v1244 = vadd.f32 %v1063, %v1212
        %v1245 = vadd.f32 %v1064, %v1213
        %v1246 = vadd.f32 %v1065, %v1214
        %v1247 = vadd.f32 %v1066, %v1215
        %v1248 = vadd.f32 %v1067, %v1216
        %v1249 = vadd.f32 %v1068, %v1217
        %v1250 = vadd.f32 %v1069, %v1218
        %v1251 = vadd.f32 %v1070, %v1219
        %v1252 = vadd.f32 %v1071, %v1220
        %v1253 = vadd.f32 %v1072, %v1221
        %v1254 = vadd.f32 %v1073, %v1222
        %v1255 = vadd.f32 %v1074, %v1223
        %v1256 = vadd.f32 %v1075, %v1224
        %v1257 = vadd.f32 %v1076, %v1225
        %v1258 = vadd.f32 %v1077, %v1226
        %v1259 = vlaneseq
        %v1260 = vshrl.u32 %v1259, 7
        %v1261 = vsub.s32 1, %v1260
        %v1262 = vrot.slane %v596, %v1261
        %v1263 = vmul.f32 %v1170, %v1262
        %v1264 = vmul.f32 %v1148, %v1262
        %v1265 = vmul.f32 %v1171, %v1262
        %v1266 = vmul.f32 %v1149, %v1262
        %v1267 = vmul.f32 %v1172, %v1262
        %v1268 = vmul.f32 %v1150, %v1262
        %v1269 = vmul.f32 %v1173, %v1262
        %v1270 = vmul.f32 %v1151, %v1262
        %v1271 = vmul.f32 %v1174, %v1262
        %v1272 = vmul.f32 %v1152, %v1262
        %v1273 = vmul.f32 %v1175, %v1262
        %v1274 = vmul.f32 %v1153, %v1262
        %v1275 = vmul.f32 %v1176, %v1262
        %v1276 = vmul.f32 %v1154, %v1262
        %v1277 = vmul.f32 %v1177, %v1262
        %v1278 = vmul.f32 %v1155, %v1262
        %v1279 = vmul.f32 %v1178, %v1262
        %v1280 = vmul.f32 %v1156, %v1262
        %v1281 = vmul.f32 %v1179, %v1262
        %v1282 = vmul.f32 %v1157, %v1262
        %v1283 = vmul.f32 %v1180, %v1262
        %v1284 = vmul.f32 %v1158, %v1262
        %v1285 = vmul.f32 %v1181, %v1262
        %v1286 = vmul.f32 %v1159, %v1262
        %v1287 = vmul.f32 %v1182, %v1262
        %v1288 = vmul.f32 %v1160, %v1262
        %v1289 = vmul.f32 %v1183, %v1262
        %v1290 = vmul.f32 %v1161, %v1262
        %v1291 = vmul.f32 %v1184, %v1262
        %v1292 = vmul.f32 %v1162, %v1262
        %v1293 = vmul.f32 %v1185, %v1262
        %v1294 = vmul.f32 %v1163, %v1262
        %v1295 = vadd.f32 %v1227, %v1263
        %v1296 = vadd.f32 %v1228, %v1264
        %v1297 = vadd.f32 %v1229, %v1265
        %v1298 = vadd.f32 %v1230, %v1266
        %v1299 = vadd.f32 %v1231, %v1267
        %v1300 = vadd.f32 %v1232, %v1268
        %v1301 = vadd.f32 %v1233, %v1269
        %v1302 = vadd.f32 %v1234, %v1270
        %v1303 = vadd.f32 %v1235, %v1271
        %v1304 = vadd.f32 %v1236, %v1272
        %v1305 = vadd.f32 %v1237, %v1273
        %v1306 = vadd.f32 %v1238, %v1274
        %v1307 = vadd.f32 %v1239, %v1275
        %v1308 = vadd.f32 %v1240, %v1276
        %v1309 = vadd.f32 %v1241, %v1277
        %v1310 = vadd.f32 %v1242, %v1278
        %v1311 = vadd.f32 %v1243, %v1279
        %v1312 = vadd.f32 %v1244, %v1280
        %v1313 = vadd.f32 %v1245, %v1281
        %v1314 = vadd.f32 %v1246, %v1282
        %v1315 = vadd.f32 %v1247, %v1283
        %v1316 = vadd.f32 %v1248, %v1284
        %v1317 = vadd.f32 %v1249, %v1285
        %v1318 = vadd.f32 %v1250, %v1286
        %v1319 = vadd.f32 %v1251, %v1287
        %v1320 = vadd.f32 %v1252, %v1288
        %v1321 = vadd.f32 %v1253, %v1289
        %v1322 = vadd.f32 %v1254, %v1290
        %v1323 = vadd.f32 %v1255, %v1291
        %v1324 = vadd.f32 %v1256, %v1292
        %v1325 = vadd.f32 %v1257, %v1293
        %v1326 = vadd.f32 %v1258, %v1294
        %v1327 = vlaneseq
        %v1328 = vshrl.u32 %v1327, 7
        %v1329 = vsub.s32 1, %v1328
        %v1330 = vrot.slane %v597, %v1329
        %v1331 = vmul.f32 %v1171, %v1330
        %v1332 = vmul.f32 %v1149, %v1330
        %v1333 = vmul.f32 %v1172, %v1330
        %v1334 = vmul.f32 %v1150, %v1330
        %v1335 = vmul.f32 %v1173, %v1330
        %v1336 = vmul.f32 %v1151, %v1330
        %v1337 = vmul.f32 %v1174, %v1330
        %v1338 = vmul.f32 %v1152, %v1330
        %v1339 = vmul.f32 %v1175, %v1330
        %v1340 = vmul.f32 %v1153, %v1330
        %v1341 = vmul.f32 %v1176, %v1330
        %v1342 = vmul.f32 %v1154, %v1330
        %v1343 = vmul.f32 %v1177, %v1330
        %v1344 = vmul.f32 %v1155, %v1330
        %v1345 = vmul.f32 %v1178, %v1330
        %v1346 = vmul.f32 %v1156, %v1330
        %v1347 = vmul.f32 %v1179, %v1330
        %v1348 = vmul.f32 %v1157, %v1330
        %v1349 = vmul.f32 %v1180, %v1330
        %v1350 = vmul.f32 %v1158, %v1330
        %v1351 = vmul.f32 %v1181, %v1330
        %v1352 = vmul.f32 %v1159, %v1330
        %v1353 = vmul.f32 %v1182, %v1330
        %v1354 = vmul.f32 %v1160, %v1330
        %v1355 = vmul.f32 %v1183, %v1330
        %v1356 = vmul.f32 %v1161, %v1330
        %v1357 = vmul.f32 %v1184, %v1330
        %v1358 = vmul.f32 %v1162, %v1330
        %v1359 = vmul.f32 %v1185, %v1330
        %v1360 = vmul.f32 %v1163, %v1330
        %v1361 = vmul.f32 %v1186, %v1330
        %v1362 = vmul.f32 %v1164, %v1330
        %v1363 = vadd.f32 %v1295, %v1331
        %v1364 = vadd.f32 %v1296, %v1332
        %v1365 = vadd.f32 %v1297, %v1333
        %v1366 = vadd.f32 %v1298, %v1334
        %v1367 = vadd.f32 %v1299, %v1335
        %v1368 = vadd.f32 %v1300, %v1336
        %v1369 = vadd.f32 %v1301, %v1337
        %v1370 = vadd.f32 %v1302, %v1338
        %v1371 = vadd.f32 %v1303, %v1339
        %v1372 = vadd.f32 %v1304, %v1340
        %v1373 = vadd.f32 %v1305, %v1341
        %v1374 = vadd.f32 %v1306, %v1342
        %v1375 = vadd.f32 %v1307, %v1343
        %v1376 = vadd.f32 %v1308, %v1344
        %v1377 = vadd.f32 %v1309, %v1345
        %v1378 = vadd.f32 %v1310, %v1346
        %v1379 = vadd.f32 %v1311, %v1347
        %v1380 = vadd.f32 %v1312, %v1348
        %v1381 = vadd.f32 %v1313, %v1349
        %v1382 = vadd.f32 %v1314, %v1350
        %v1383 = vadd.f32 %v1315, %v1351
        %v1384 = vadd.f32 %v1316, %v1352
        %v1385 = vadd.f32 %v1317, %v1353
        %v1386 = vadd.f32 %v1318, %v1354
        %v1387 = vadd.f32 %v1319, %v1355
        %v1388 = vadd.f32 %v1320, %v1356
        %v1389 = vadd.f32 %v1321, %v1357
        %v1390 = vadd.f32 %v1322, %v1358
        %v1391 = vadd.f32 %v1323, %v1359
        %v1392 = vadd.f32 %v1324, %v1360
        %v1393 = vadd.f32 %v1325, %v1361
        %v1394 = vadd.f32 %v1326, %v1362
        %v1395 = vlaneseq
        %v1396 = vshrl.u32 %v1395, 7
        %v1397 = vsub.s32 1, %v1396
        %v1398 = vrot.slane %v598, %v1397
        %v1399 = vmul.f32 %v1172, %v1398
        %v1400 = vmul.f32 %v1150, %v1398
        %v1401 = vmul.f32 %v1173, %v1398
        %v1402 = vmul.f32 %v1151, %v1398
        %v1403 = vmul.f32 %v1174, %v1398
        %v1404 = vmul.f32 %v1152, %v1398
        %v1405 = vmul.f32 %v1175, %v1398
        %v1406 = vmul.f32 %v1153, %v1398
        %v1407 = vmul.f32 %v1176, %v1398
        %v1408 = vmul.f32 %v1154, %v1398
        %v1409 = vmul.f32 %v1177, %v1398
        %v1410 = vmul.f32 %v1155, %v1398
        %v1411 = vmul.f32 %v1178, %v1398
        %v1412 = vmul.f32 %v1156, %v1398
        %v1413 = vmul.f32 %v1179, %v1398
        %v1414 = vmul.f32 %v1157, %v1398
        %v1415 = vmul.f32 %v1180, %v1398
        %v1416 = vmul.f32 %v1158, %v1398
        %v1417 = vmul.f32 %v1181, %v1398
        %v1418 = vmul.f32 %v1159, %v1398
        %v1419 = vmul.f32 %v1182, %v1398
        %v1420 = vmul.f32 %v1160, %v1398
        %v1421 = vmul.f32 %v1183, %v1398
        %v1422 = vmul.f32 %v1161, %v1398
        %v1423 = vmul.f32 %v1184, %v1398
        %v1424 = vmul.f32 %v1162, %v1398
        %v1425 = vmul.f32 %v1185, %v1398
        %v1426 = vmul.f32 %v1163, %v1398
        %v1427 = vmul.f32 %v1186, %v1398
        %v1428 = vmul.f32 %v1164, %v1398
        %v1429 = vmul.f32 %v1187, %v1398
        %v1430 = vmul.f32 %v1165, %v1398
        %v1431 = vadd.f32 %v1363, %v1399
        %v1432 = vadd.f32 %v1364, %v1400
        %v1433 = vadd.f32 %v1365, %v1401
        %v1434 = vadd.f32 %v1366, %v1402
        %v1435 = vadd.f32 %v1367, %v1403
        %v1436 = vadd.f32 %v1368, %v1404
        %v1437 = vadd.f32 %v1369, %v1405
        %v1438 = vadd.f32 %v1370, %v1406
        %v1439 = vadd.f32 %v1371, %v1407
        %v1440 = vadd.f32 %v1372, %v1408
        %v1441 = vadd.f32 %v1373, %v1409
        %v1442 = vadd.f32 %v1374, %v1410
        %v1443 = vadd.f32 %v1375, %v1411
        %v1444 = vadd.f32 %v1376, %v1412
        %v1445 = vadd.f32 %v1377, %v1413
        %v1446 = vadd.f32 %v1378, %v1414
        %v1447 = vadd.f32 %v1379, %v1415
        %v1448 = vadd.f32 %v1380, %v1416
        %v1449 = vadd.f32 %v1381, %v1417
        %v1450 = vadd.f32 %v1382, %v1418
        %v1451 = vadd.f32 %v1383, %v1419
        %v1452 = vadd.f32 %v1384, %v1420
        %v1453 = vadd.f32 %v1385, %v1421
        %v1454 = vadd.f32 %v1386, %v1422
        %v1455 = vadd.f32 %v1387, %v1423
        %v1456 = vadd.f32 %v1388, %v1424
        %v1457 = vadd.f32 %v1389, %v1425
        %v1458 = vadd.f32 %v1390, %v1426
        %v1459 = vadd.f32 %v1391, %v1427
        %v1460 = vadd.f32 %v1392, %v1428
        %v1461 = vadd.f32 %v1393, %v1429
        %v1462 = vadd.f32 %v1394, %v1430
        %v1463 = vlaneseq
        %v1464 = vshrl.u32 %v1463, 7
        %v1465 = vsub.s32 1, %v1464
        %v1466 = vrot.slane %v599, %v1465
        %v1467 = vmul.f32 %v1173, %v1466
        %v1468 = vmul.f32 %v1151, %v1466
        %v1469 = vmul.f32 %v1174, %v1466
        %v1470 = vmul.f32 %v1152, %v1466
        %v1471 = vmul.f32 %v1175, %v1466
        %v1472 = vmul.f32 %v1153, %v1466
        %v1473 = vmul.f32 %v1176, %v1466
        %v1474 = vmul.f32 %v1154, %v1466
        %v1475 = vmul.f32 %v1177, %v1466
        %v1476 = vmul.f32 %v1155, %v1466
        %v1477 = vmul.f32 %v1178, %v1466
        %v1478 = vmul.f32 %v1156, %v1466
        %v1479 = vmul.f32 %v1179, %v1466
        %v1480 = vmul.f32 %v1157, %v1466
        %v1481 = vmul.f32 %v1180, %v1466
        %v1482 = vmul.f32 %v1158, %v1466
        %v1483 = vmul.f32 %v1181, %v1466
        %v1484 = vmul.f32 %v1159, %v1466
        %v1485 = vmul.f32 %v1182, %v1466
        %v1486 = vmul.f32 %v1160, %v1466
        %v1487 = vmul.f32 %v1183, %v1466
        %v1488 = vmul.f32 %v1161, %v1466
        %v1489 = vmul.f32 %v1184, %v1466
        %v1490 = vmul.f32 %v1162, %v1466
        %v1491 = vmul.f32 %v1185, %v1466
        %v1492 = vmul.f32 %v1163, %v1466
        %v1493 = vmul.f32 %v1186, %v1466
        %v1494 = vmul.f32 %v1164, %v1466
        %v1495 = vmul.f32 %v1187, %v1466
        %v1496 = vmul.f32 %v1165, %v1466
        %v1497 = vmul.f32 %v1188, %v1466
        %v1498 = vmul.f32 %v1166, %v1466
        %v1499 = vadd.f32 %v1431, %v1467
        %v1500 = vadd.f32 %v1432, %v1468
        %v1501 = vadd.f32 %v1433, %v1469
        %v1502 = vadd.f32 %v1434, %v1470
        %v1503 = vadd.f32 %v1435, %v1471
        %v1504 = vadd.f32 %v1436, %v1472
        %v1505 = vadd.f32 %v1437, %v1473
        %v1506 = vadd.f32 %v1438, %v1474
        %v1507 = vadd.f32 %v1439, %v1475
        %v1508 = vadd.f32 %v1440, %v1476
        %v1509 = vadd.f32 %v1441, %v1477
        %v1510 = vadd.f32 %v1442, %v1478
        %v1511 = vadd.f32 %v1443, %v1479
        %v1512 = vadd.f32 %v1444, %v1480
        %v1513 = vadd.f32 %v1445, %v1481
        %v1514 = vadd.f32 %v1446, %v1482
        %v1515 = vadd.f32 %v1447, %v1483
        %v1516 = vadd.f32 %v1448, %v1484
        %v1517 = vadd.f32 %v1449, %v1485
        %v1518 = vadd.f32 %v1450, %v1486
        %v1519 = vadd.f32 %v1451, %v1487
        %v1520 = vadd.f32 %v1452, %v1488
        %v1521 = vadd.f32 %v1453, %v1489
        %v1522 = vadd.f32 %v1454, %v1490
        %v1523 = vadd.f32 %v1455, %v1491
        %v1524 = vadd.f32 %v1456, %v1492
        %v1525 = vadd.f32 %v1457, %v1493
        %v1526 = vadd.f32 %v1458, %v1494
        %v1527 = vadd.f32 %v1459, %v1495
        %v1528 = vadd.f32 %v1460, %v1496
        %v1529 = vadd.f32 %v1461, %v1497
        %v1530 = vadd.f32 %v1462, %v1498
        %v1531 = vlaneseq
        %v1532 = vshrl.u32 %v1531, 7
        %v1533 = vsub.s32 1, %v1532
        %v1534 = vrot.slane %v600, %v1533
        %v1535 = vmul.f32 %v1174, %v1534
        %v1536 = vmul.f32 %v1152, %v1534
        %v1537 = vmul.f32 %v1175, %v1534
        %v1538 = vmul.f32 %v1153, %v1534
        %v1539 = vmul.f32 %v1176, %v1534
        %v1540 = vmul.f32 %v1154, %v1534
        %v1541 = vmul.f32 %v1177, %v1534
        %v1542 = vmul.f32 %v1155, %v1534
        %v1543 = vmul.f32 %v1178, %v1534
        %v1544 = vmul.f32 %v1156, %v1534
        %v1545 = vmul.f32 %v1179, %v1534
        %v1546 = vmul.f32 %v1157, %v1534
        %v1547 = vmul.f32 %v1180, %v1534
        %v1548 = vmul.f32 %v1158, %v1534
        %v1549 = vmul.f32 %v1181, %v1534
        %v1550 = vmul.f32 %v1159, %v1534
        %v1551 = vmul.f32 %v1182, %v1534
        %v1552 = vmul.f32 %v1160, %v1534
        %v1553 = vmul.f32 %v1183, %v1534
        %v1554 = vmul.f32 %v1161, %v1534
        %v1555 = vmul.f32 %v1184, %v1534
        %v1556 = vmul.f32 %v1162, %v1534
        %v1557 = vmul.f32 %v1185, %v1534
        %v1558 = vmul.f32 %v1163, %v1534
        %v1559 = vmul.f32 %v1186, %v1534
        %v1560 = vmul.f32 %v1164, %v1534
        %v1561 = vmul.f32 %v1187, %v1534
        %v1562 = vmul.f32 %v1165, %v1534
        %v1563 = vmul.f32 %v1188, %v1534
        %v1564 = vmul.f32 %v1166, %v1534
        %v1565 = vmul.f32 %v1189, %v1534
        %v1566 = vmul.f32 %v1167, %v1534
        %v1567 = vadd.f32 %v1499, %v1535
        %v1568 = vadd.f32 %v1500, %v1536
        %v1569 = vadd.f32 %v1501, %v1537
        %v1570 = vadd.f32 %v1502, %v1538
        %v1571 = vadd.f32 %v1503, %v1539
        %v1572 = vadd.f32 %v1504, %v1540
        %v1573 = vadd.f32 %v1505, %v1541
        %v1574 = vadd.f32 %v1506, %v1542
        %v1575 = vadd.f32 %v1507, %v1543
        %v1576 = vadd.f32 %v1508, %v1544
        %v1577 = vadd.f32 %v1509, %v1545
        %v1578 = vadd.f32 %v1510, %v1546
        %v1579 = vadd.f32 %v1511, %v1547
        %v1580 = vadd.f32 %v1512, %v1548
        %v1581 = vadd.f32 %v1513, %v1549
        %v1582 = vadd.f32 %v1514, %v1550
        %v1583 = vadd.f32 %v1515, %v1551
        %v1584 = vadd.f32 %v1516, %v1552
        %v1585 = vadd.f32 %v1517, %v1553
        %v1586 = vadd.f32 %v1518, %v1554
        %v1587 = vadd.f32 %v1519, %v1555
        %v1588 = vadd.f32 %v1520, %v1556
        %v1589 = vadd.f32 %v1521, %v1557
        %v1590 = vadd.f32 %v1522, %v1558
        %v1591 = vadd.f32 %v1523, %v1559
        %v1592 = vadd.f32 %v1524, %v1560
        %v1593 = vadd.f32 %v1525, %v1561
        %v1594 = vadd.f32 %v1526, %v1562
        %v1595 = vadd.f32 %v1527, %v1563
        %v1596 = vadd.f32 %v1528, %v1564
        %v1597 = vadd.f32 %v1529, %v1565
        %v1598 = vadd.f32 %v1530, %v1566
        %v1599 = vlaneseq
        %v1600 = vshrl.u32 %v1599, 7
        %v1601 = vsub.s32 1, %v1600
        %v1602 = vrot.slane %v601, %v1601
        %v1603 = vmul.f32 %v1175, %v1602
        %v1604 = vmul.f32 %v1153, %v1602
        %v1605 = vmul.f32 %v1176, %v1602
        %v1606 = vmul.f32 %v1154, %v1602
        %v1607 = vmul.f32 %v1177, %v1602
        %v1608 = vmul.f32 %v1155, %v1602
        %v1609 = vmul.f32 %v1178, %v1602
        %v1610 = vmul.f32 %v1156, %v1602
        %v1611 = vmul.f32 %v1179, %v1602
        %v1612 = vmul.f32 %v1157, %v1602
        %v1613 = vmul.f32 %v1180, %v1602
        %v1614 = vmul.f32 %v1158, %v1602
        %v1615 = vmul.f32 %v1181, %v1602
        %v1616 = vmul.f32 %v1159, %v1602
        %v1617 = vmul.f32 %v1182, %v1602
        %v1618 = vmul.f32 %v1160, %v1602
        %v1619 = vmul.f32 %v1183, %v1602
        %v1620 = vmul.f32 %v1161, %v1602
        %v1621 = vmul.f32 %v1184, %v1602
        %v1622 = vmul.f32 %v1162, %v1602
        %v1623 = vmul.f32 %v1185, %v1602
        %v1624 = vmul.f32 %v1163, %v1602
        %v1625 = vmul.f32 %v1186, %v1602
        %v1626 = vmul.f32 %v1164, %v1602
        %v1627 = vmul.f32 %v1187, %v1602
        %v1628 = vmul.f32 %v1165, %v1602
        %v1629 = vmul.f32 %v1188, %v1602
        %v1630 = vmul.f32 %v1166, %v1602
        %v1631 = vmul.f32 %v1189, %v1602
        %v1632 = vmul.f32 %v1167, %v1602
        %v1633 = vmul.f32 %v1190, %v1602
        %v1634 = vmul.f32 %v1168, %v1602
        %v1635 = vadd.f32 %v1567, %v1603
        %v1636 = vadd.f32 %v1568, %v1604
        %v1637 = vadd.f32 %v1569, %v1605
        %v1638 = vadd.f32 %v1570, %v1606
        %v1639 = vadd.f32 %v1571, %v1607
        %v1640 = vadd.f32 %v1572, %v1608
        %v1641 = vadd.f32 %v1573, %v1609
        %v1642 = vadd.f32 %v1574, %v1610
        %v1643 = vadd.f32 %v1575, %v1611
        %v1644 = vadd.f32 %v1576, %v1612
        %v1645 = vadd.f32 %v1577, %v1613
        %v1646 = vadd.f32 %v1578, %v1614
        %v1647 = vadd.f32 %v1579, %v1615
        %v1648 = vadd.f32 %v1580, %v1616
        %v1649 = vadd.f32 %v1581, %v1617
        %v1650 = vadd.f32 %v1582, %v1618
        %v1651 = vadd.f32 %v1583, %v1619
        %v1652 = vadd.f32 %v1584, %v1620
        %v1653 = vadd.f32 %v1585, %v1621
        %v1654 = vadd.f32 %v1586, %v1622
        %v1655 = vadd.f32 %v1587, %v1623
        %v1656 = vadd.f32 %v1588, %v1624
        %v1657 = vadd.f32 %v1589, %v1625
        %v1658 = vadd.f32 %v1590, %v1626
        %v1659 = vadd.f32 %v1591, %v1627
        %v1660 = vadd.f32 %v1592, %v1628
        %v1661 = vadd.f32 %v1593, %v1629
        %v1662 = vadd.f32 %v1594, %v1630
        %v1663 = vadd.f32 %v1595, %v1631
        %v1664 = vadd.f32 %v1596, %v1632
        %v1665 = vadd.f32 %v1597, %v1633
        %v1666 = vadd.f32 %v1598, %v1634
        %v1667 = vrot.slane %v529, 2
        %v1668 = vrot.slane %v532, 2
        %v1669 = vrot.slane %v535, 2
        %v1670 = vrot.slane %v538, 2
        %v1671 = vrot.slane %v541, 2
        %v1672 = vrot.slane %v544, 2
        %v1673 = vrot.slane %v547, 2
        %v1674 = vrot.slane %v550, 2
        %v1675 = vrot.slane %v553, 2
        %v1676 = vrot.slane %v556, 2
        %v1677 = vrot.slane %v559, 2
        %v1678 = vrot.slane %v562, 2
        %v1679 = vrot.slane %v565, 2
        %v1680 = vrot.slane %v568, 2
        %v1681 = vrot.slane %v571, 2
        %v1682 = vrot.slane %v574, 2
        %v1683 = vrot.slane %v577, 2
        %v1684 = vrot.slane %v580, 2
        %v1685 = vrot.slane %v583, 2
        %v1686 = vrot.slane %v586, 2
        %v1687 = vrot.slane %v589, 2
        %v1688 = vrot.slane %v592, 2
        %v1689 = vrot.slane %v530, 2
        %v1690 = vrot.slane %v533, 2
        %v1691 = vrot.slane %v536, 2
        %v1692 = vrot.slane %v539, 2
        %v1693 = vrot.slane %v542, 2
        %v1694 = vrot.slane %v545, 2
        %v1695 = vrot.slane %v548, 2
        %v1696 = vrot.slane %v551, 2
        %v1697 = vrot.slane %v554, 2
        %v1698 = vrot.slane %v557, 2
        %v1699 = vrot.slane %v560, 2
        %v1700 = vrot.slane %v563, 2
        %v1701 = vrot.slane %v566, 2
        %v1702 = vrot.slane %v569, 2
        %v1703 = vrot.slane %v572, 2
        %v1704 = vrot.slane %v575, 2
        %v1705 = vrot.slane %v578, 2
        %v1706 = vrot.slane %v581, 2
        %v1707 = vrot.slane %v584, 2
        %v1708 = vrot.slane %v587, 2
        %v1709 = vrot.slane %v590, 2
        %v1710 = vrot.slane %v593, 2
        %v1711 = vrot.slane %v531, 2
        %v1712 = vrot.slane %v534, 2
        %v1713 = vrot.slane %v537, 2
        %v1714 = vrot.slane %v540, 2
        %v1715 = vrot.slane %v543, 2
        %v1716 = vrot.slane %v546, 2
        %v1717 = vrot.slane %v549, 2
        %v1718 = vrot.slane %v552, 2
        %v1719 = vrot.slane %v555, 2
        %v1720 = vrot.slane %v558, 2
        %v1721 = vrot.slane %v561, 2
        %v1722 = vrot.slane %v564, 2
        %v1723 = vrot.slane %v567, 2
        %v1724 = vrot.slane %v570, 2
        %v1725 = vrot.slane %v573, 2
        %v1726 = vrot.slane %v576, 2
        %v1727 = vrot.slane %v579, 2
        %v1728 = vrot.slane %v582, 2
        %v1729 = vrot.slane %v585, 2
        %v1730 = vrot.slane %v588, 2
        %v1731 = vrot.slane %v591, 2
        %v1732 = vrot.slane %v594, 2
        %vm1733 = vcmp.lt.s32.totalorder %v1145, 6
        %v1734 = vsel %vm1733, %v1689, %v1711
        %v1735 = vsel %vm1733, %v1690, %v1712
        %v1736 = vsel %vm1733, %v1691, %v1713
        %v1737 = vsel %vm1733, %v1692, %v1714
        %v1738 = vsel %vm1733, %v1693, %v1715
        %v1739 = vsel %vm1733, %v1694, %v1716
        %v1740 = vsel %vm1733, %v1695, %v1717
        %v1741 = vsel %vm1733, %v1696, %v1718
        %v1742 = vsel %vm1733, %v1697, %v1719
        %v1743 = vsel %vm1733, %v1698, %v1720
        %v1744 = vsel %vm1733, %v1699, %v1721
        %v1745 = vsel %vm1733, %v1700, %v1722
        %v1746 = vsel %vm1733, %v1701, %v1723
        %v1747 = vsel %vm1733, %v1702, %v1724
        %v1748 = vsel %vm1733, %v1703, %v1725
        %v1749 = vsel %vm1733, %v1704, %v1726
        %v1750 = vsel %vm1733, %v1705, %v1727
        %v1751 = vsel %vm1733, %v1706, %v1728
        %v1752 = vsel %vm1733, %v1707, %v1729
        %v1753 = vsel %vm1733, %v1708, %v1730
        %v1754 = vsel %vm1733, %v1709, %v1731
        %v1755 = vsel %vm1733, %v1710, %v1732
        %v1756 = vsel %vm1733, %v1667, %v1689
        %v1757 = vsel %vm1733, %v1668, %v1690
        %v1758 = vsel %vm1733, %v1669, %v1691
        %v1759 = vsel %vm1733, %v1670, %v1692
        %v1760 = vsel %vm1733, %v1671, %v1693
        %v1761 = vsel %vm1733, %v1672, %v1694
        %v1762 = vsel %vm1733, %v1673, %v1695
        %v1763 = vsel %vm1733, %v1674, %v1696
        %v1764 = vsel %vm1733, %v1675, %v1697
        %v1765 = vsel %vm1733, %v1676, %v1698
        %v1766 = vsel %vm1733, %v1677, %v1699
        %v1767 = vsel %vm1733, %v1678, %v1700
        %v1768 = vsel %vm1733, %v1679, %v1701
        %v1769 = vsel %vm1733, %v1680, %v1702
        %v1770 = vsel %vm1733, %v1681, %v1703
        %v1771 = vsel %vm1733, %v1682, %v1704
        %v1772 = vsel %vm1733, %v1683, %v1705
        %v1773 = vsel %vm1733, %v1684, %v1706
        %v1774 = vsel %vm1733, %v1685, %v1707
        %v1775 = vsel %vm1733, %v1686, %v1708
        %v1776 = vsel %vm1733, %v1687, %v1709
        %v1777 = vsel %vm1733, %v1688, %v1710
        %v1778 = vlaneseq
        %v1779 = vshrl.u32 %v1778, 7
        %v1780 = vsub.s32 2, %v1779
        %v1781 = vrot.slane %v595, %v1780
        %v1782 = vmul.f32 %v1756, %v1781
        %v1783 = vmul.f32 %v1734, %v1781
        %v1784 = vmul.f32 %v1757, %v1781
        %v1785 = vmul.f32 %v1735, %v1781
        %v1786 = vmul.f32 %v1758, %v1781
        %v1787 = vmul.f32 %v1736, %v1781
        %v1788 = vmul.f32 %v1759, %v1781
        %v1789 = vmul.f32 %v1737, %v1781
        %v1790 = vmul.f32 %v1760, %v1781
        %v1791 = vmul.f32 %v1738, %v1781
        %v1792 = vmul.f32 %v1761, %v1781
        %v1793 = vmul.f32 %v1739, %v1781
        %v1794 = vmul.f32 %v1762, %v1781
        %v1795 = vmul.f32 %v1740, %v1781
        %v1796 = vmul.f32 %v1763, %v1781
        %v1797 = vmul.f32 %v1741, %v1781
        %v1798 = vmul.f32 %v1764, %v1781
        %v1799 = vmul.f32 %v1742, %v1781
        %v1800 = vmul.f32 %v1765, %v1781
        %v1801 = vmul.f32 %v1743, %v1781
        %v1802 = vmul.f32 %v1766, %v1781
        %v1803 = vmul.f32 %v1744, %v1781
        %v1804 = vmul.f32 %v1767, %v1781
        %v1805 = vmul.f32 %v1745, %v1781
        %v1806 = vmul.f32 %v1768, %v1781
        %v1807 = vmul.f32 %v1746, %v1781
        %v1808 = vmul.f32 %v1769, %v1781
        %v1809 = vmul.f32 %v1747, %v1781
        %v1810 = vmul.f32 %v1770, %v1781
        %v1811 = vmul.f32 %v1748, %v1781
        %v1812 = vmul.f32 %v1771, %v1781
        %v1813 = vmul.f32 %v1749, %v1781
        %v1814 = vadd.f32 %v1635, %v1782
        %v1815 = vadd.f32 %v1636, %v1783
        %v1816 = vadd.f32 %v1637, %v1784
        %v1817 = vadd.f32 %v1638, %v1785
        %v1818 = vadd.f32 %v1639, %v1786
        %v1819 = vadd.f32 %v1640, %v1787
        %v1820 = vadd.f32 %v1641, %v1788
        %v1821 = vadd.f32 %v1642, %v1789
        %v1822 = vadd.f32 %v1643, %v1790
        %v1823 = vadd.f32 %v1644, %v1791
        %v1824 = vadd.f32 %v1645, %v1792
        %v1825 = vadd.f32 %v1646, %v1793
        %v1826 = vadd.f32 %v1647, %v1794
        %v1827 = vadd.f32 %v1648, %v1795
        %v1828 = vadd.f32 %v1649, %v1796
        %v1829 = vadd.f32 %v1650, %v1797
        %v1830 = vadd.f32 %v1651, %v1798
        %v1831 = vadd.f32 %v1652, %v1799
        %v1832 = vadd.f32 %v1653, %v1800
        %v1833 = vadd.f32 %v1654, %v1801
        %v1834 = vadd.f32 %v1655, %v1802
        %v1835 = vadd.f32 %v1656, %v1803
        %v1836 = vadd.f32 %v1657, %v1804
        %v1837 = vadd.f32 %v1658, %v1805
        %v1838 = vadd.f32 %v1659, %v1806
        %v1839 = vadd.f32 %v1660, %v1807
        %v1840 = vadd.f32 %v1661, %v1808
        %v1841 = vadd.f32 %v1662, %v1809
        %v1842 = vadd.f32 %v1663, %v1810
        %v1843 = vadd.f32 %v1664, %v1811
        %v1844 = vadd.f32 %v1665, %v1812
        %v1845 = vadd.f32 %v1666, %v1813
        %v1846 = vlaneseq
        %v1847 = vshrl.u32 %v1846, 7
        %v1848 = vsub.s32 2, %v1847
        %v1849 = vrot.slane %v596, %v1848
        %v1850 = vmul.f32 %v1757, %v1849
        %v1851 = vmul.f32 %v1735, %v1849
        %v1852 = vmul.f32 %v1758, %v1849
        %v1853 = vmul.f32 %v1736, %v1849
        %v1854 = vmul.f32 %v1759, %v1849
        %v1855 = vmul.f32 %v1737, %v1849
        %v1856 = vmul.f32 %v1760, %v1849
        %v1857 = vmul.f32 %v1738, %v1849
        %v1858 = vmul.f32 %v1761, %v1849
        %v1859 = vmul.f32 %v1739, %v1849
        %v1860 = vmul.f32 %v1762, %v1849
        %v1861 = vmul.f32 %v1740, %v1849
        %v1862 = vmul.f32 %v1763, %v1849
        %v1863 = vmul.f32 %v1741, %v1849
        %v1864 = vmul.f32 %v1764, %v1849
        %v1865 = vmul.f32 %v1742, %v1849
        %v1866 = vmul.f32 %v1765, %v1849
        %v1867 = vmul.f32 %v1743, %v1849
        %v1868 = vmul.f32 %v1766, %v1849
        %v1869 = vmul.f32 %v1744, %v1849
        %v1870 = vmul.f32 %v1767, %v1849
        %v1871 = vmul.f32 %v1745, %v1849
        %v1872 = vmul.f32 %v1768, %v1849
        %v1873 = vmul.f32 %v1746, %v1849
        %v1874 = vmul.f32 %v1769, %v1849
        %v1875 = vmul.f32 %v1747, %v1849
        %v1876 = vmul.f32 %v1770, %v1849
        %v1877 = vmul.f32 %v1748, %v1849
        %v1878 = vmul.f32 %v1771, %v1849
        %v1879 = vmul.f32 %v1749, %v1849
        %v1880 = vmul.f32 %v1772, %v1849
        %v1881 = vmul.f32 %v1750, %v1849
        %v1882 = vadd.f32 %v1814, %v1850
        %v1883 = vadd.f32 %v1815, %v1851
        %v1884 = vadd.f32 %v1816, %v1852
        %v1885 = vadd.f32 %v1817, %v1853
        %v1886 = vadd.f32 %v1818, %v1854
        %v1887 = vadd.f32 %v1819, %v1855
        %v1888 = vadd.f32 %v1820, %v1856
        %v1889 = vadd.f32 %v1821, %v1857
        %v1890 = vadd.f32 %v1822, %v1858
        %v1891 = vadd.f32 %v1823, %v1859
        %v1892 = vadd.f32 %v1824, %v1860
        %v1893 = vadd.f32 %v1825, %v1861
        %v1894 = vadd.f32 %v1826, %v1862
        %v1895 = vadd.f32 %v1827, %v1863
        %v1896 = vadd.f32 %v1828, %v1864
        %v1897 = vadd.f32 %v1829, %v1865
        %v1898 = vadd.f32 %v1830, %v1866
        %v1899 = vadd.f32 %v1831, %v1867
        %v1900 = vadd.f32 %v1832, %v1868
        %v1901 = vadd.f32 %v1833, %v1869
        %v1902 = vadd.f32 %v1834, %v1870
        %v1903 = vadd.f32 %v1835, %v1871
        %v1904 = vadd.f32 %v1836, %v1872
        %v1905 = vadd.f32 %v1837, %v1873
        %v1906 = vadd.f32 %v1838, %v1874
        %v1907 = vadd.f32 %v1839, %v1875
        %v1908 = vadd.f32 %v1840, %v1876
        %v1909 = vadd.f32 %v1841, %v1877
        %v1910 = vadd.f32 %v1842, %v1878
        %v1911 = vadd.f32 %v1843, %v1879
        %v1912 = vadd.f32 %v1844, %v1880
        %v1913 = vadd.f32 %v1845, %v1881
        %v1914 = vlaneseq
        %v1915 = vshrl.u32 %v1914, 7
        %v1916 = vsub.s32 2, %v1915
        %v1917 = vrot.slane %v597, %v1916
        %v1918 = vmul.f32 %v1758, %v1917
        %v1919 = vmul.f32 %v1736, %v1917
        %v1920 = vmul.f32 %v1759, %v1917
        %v1921 = vmul.f32 %v1737, %v1917
        %v1922 = vmul.f32 %v1760, %v1917
        %v1923 = vmul.f32 %v1738, %v1917
        %v1924 = vmul.f32 %v1761, %v1917
        %v1925 = vmul.f32 %v1739, %v1917
        %v1926 = vmul.f32 %v1762, %v1917
        %v1927 = vmul.f32 %v1740, %v1917
        %v1928 = vmul.f32 %v1763, %v1917
        %v1929 = vmul.f32 %v1741, %v1917
        %v1930 = vmul.f32 %v1764, %v1917
        %v1931 = vmul.f32 %v1742, %v1917
        %v1932 = vmul.f32 %v1765, %v1917
        %v1933 = vmul.f32 %v1743, %v1917
        %v1934 = vmul.f32 %v1766, %v1917
        %v1935 = vmul.f32 %v1744, %v1917
        %v1936 = vmul.f32 %v1767, %v1917
        %v1937 = vmul.f32 %v1745, %v1917
        %v1938 = vmul.f32 %v1768, %v1917
        %v1939 = vmul.f32 %v1746, %v1917
        %v1940 = vmul.f32 %v1769, %v1917
        %v1941 = vmul.f32 %v1747, %v1917
        %v1942 = vmul.f32 %v1770, %v1917
        %v1943 = vmul.f32 %v1748, %v1917
        %v1944 = vmul.f32 %v1771, %v1917
        %v1945 = vmul.f32 %v1749, %v1917
        %v1946 = vmul.f32 %v1772, %v1917
        %v1947 = vmul.f32 %v1750, %v1917
        %v1948 = vmul.f32 %v1773, %v1917
        %v1949 = vmul.f32 %v1751, %v1917
        %v1950 = vadd.f32 %v1882, %v1918
        %v1951 = vadd.f32 %v1883, %v1919
        %v1952 = vadd.f32 %v1884, %v1920
        %v1953 = vadd.f32 %v1885, %v1921
        %v1954 = vadd.f32 %v1886, %v1922
        %v1955 = vadd.f32 %v1887, %v1923
        %v1956 = vadd.f32 %v1888, %v1924
        %v1957 = vadd.f32 %v1889, %v1925
        %v1958 = vadd.f32 %v1890, %v1926
        %v1959 = vadd.f32 %v1891, %v1927
        %v1960 = vadd.f32 %v1892, %v1928
        %v1961 = vadd.f32 %v1893, %v1929
        %v1962 = vadd.f32 %v1894, %v1930
        %v1963 = vadd.f32 %v1895, %v1931
        %v1964 = vadd.f32 %v1896, %v1932
        %v1965 = vadd.f32 %v1897, %v1933
        %v1966 = vadd.f32 %v1898, %v1934
        %v1967 = vadd.f32 %v1899, %v1935
        %v1968 = vadd.f32 %v1900, %v1936
        %v1969 = vadd.f32 %v1901, %v1937
        %v1970 = vadd.f32 %v1902, %v1938
        %v1971 = vadd.f32 %v1903, %v1939
        %v1972 = vadd.f32 %v1904, %v1940
        %v1973 = vadd.f32 %v1905, %v1941
        %v1974 = vadd.f32 %v1906, %v1942
        %v1975 = vadd.f32 %v1907, %v1943
        %v1976 = vadd.f32 %v1908, %v1944
        %v1977 = vadd.f32 %v1909, %v1945
        %v1978 = vadd.f32 %v1910, %v1946
        %v1979 = vadd.f32 %v1911, %v1947
        %v1980 = vadd.f32 %v1912, %v1948
        %v1981 = vadd.f32 %v1913, %v1949
        %v1982 = vlaneseq
        %v1983 = vshrl.u32 %v1982, 7
        %v1984 = vsub.s32 2, %v1983
        %v1985 = vrot.slane %v598, %v1984
        %v1986 = vmul.f32 %v1759, %v1985
        %v1987 = vmul.f32 %v1737, %v1985
        %v1988 = vmul.f32 %v1760, %v1985
        %v1989 = vmul.f32 %v1738, %v1985
        %v1990 = vmul.f32 %v1761, %v1985
        %v1991 = vmul.f32 %v1739, %v1985
        %v1992 = vmul.f32 %v1762, %v1985
        %v1993 = vmul.f32 %v1740, %v1985
        %v1994 = vmul.f32 %v1763, %v1985
        %v1995 = vmul.f32 %v1741, %v1985
        %v1996 = vmul.f32 %v1764, %v1985
        %v1997 = vmul.f32 %v1742, %v1985
        %v1998 = vmul.f32 %v1765, %v1985
        %v1999 = vmul.f32 %v1743, %v1985
        %v2000 = vmul.f32 %v1766, %v1985
        %v2001 = vmul.f32 %v1744, %v1985
        %v2002 = vmul.f32 %v1767, %v1985
        %v2003 = vmul.f32 %v1745, %v1985
        %v2004 = vmul.f32 %v1768, %v1985
        %v2005 = vmul.f32 %v1746, %v1985
        %v2006 = vmul.f32 %v1769, %v1985
        %v2007 = vmul.f32 %v1747, %v1985
        %v2008 = vmul.f32 %v1770, %v1985
        %v2009 = vmul.f32 %v1748, %v1985
        %v2010 = vmul.f32 %v1771, %v1985
        %v2011 = vmul.f32 %v1749, %v1985
        %v2012 = vmul.f32 %v1772, %v1985
        %v2013 = vmul.f32 %v1750, %v1985
        %v2014 = vmul.f32 %v1773, %v1985
        %v2015 = vmul.f32 %v1751, %v1985
        %v2016 = vmul.f32 %v1774, %v1985
        %v2017 = vmul.f32 %v1752, %v1985
        %v2018 = vadd.f32 %v1950, %v1986
        %v2019 = vadd.f32 %v1951, %v1987
        %v2020 = vadd.f32 %v1952, %v1988
        %v2021 = vadd.f32 %v1953, %v1989
        %v2022 = vadd.f32 %v1954, %v1990
        %v2023 = vadd.f32 %v1955, %v1991
        %v2024 = vadd.f32 %v1956, %v1992
        %v2025 = vadd.f32 %v1957, %v1993
        %v2026 = vadd.f32 %v1958, %v1994
        %v2027 = vadd.f32 %v1959, %v1995
        %v2028 = vadd.f32 %v1960, %v1996
        %v2029 = vadd.f32 %v1961, %v1997
        %v2030 = vadd.f32 %v1962, %v1998
        %v2031 = vadd.f32 %v1963, %v1999
        %v2032 = vadd.f32 %v1964, %v2000
        %v2033 = vadd.f32 %v1965, %v2001
        %v2034 = vadd.f32 %v1966, %v2002
        %v2035 = vadd.f32 %v1967, %v2003
        %v2036 = vadd.f32 %v1968, %v2004
        %v2037 = vadd.f32 %v1969, %v2005
        %v2038 = vadd.f32 %v1970, %v2006
        %v2039 = vadd.f32 %v1971, %v2007
        %v2040 = vadd.f32 %v1972, %v2008
        %v2041 = vadd.f32 %v1973, %v2009
        %v2042 = vadd.f32 %v1974, %v2010
        %v2043 = vadd.f32 %v1975, %v2011
        %v2044 = vadd.f32 %v1976, %v2012
        %v2045 = vadd.f32 %v1977, %v2013
        %v2046 = vadd.f32 %v1978, %v2014
        %v2047 = vadd.f32 %v1979, %v2015
        %v2048 = vadd.f32 %v1980, %v2016
        %v2049 = vadd.f32 %v1981, %v2017
        %v2050 = vlaneseq
        %v2051 = vshrl.u32 %v2050, 7
        %v2052 = vsub.s32 2, %v2051
        %v2053 = vrot.slane %v599, %v2052
        %v2054 = vmul.f32 %v1760, %v2053
        %v2055 = vmul.f32 %v1738, %v2053
        %v2056 = vmul.f32 %v1761, %v2053
        %v2057 = vmul.f32 %v1739, %v2053
        %v2058 = vmul.f32 %v1762, %v2053
        %v2059 = vmul.f32 %v1740, %v2053
        %v2060 = vmul.f32 %v1763, %v2053
        %v2061 = vmul.f32 %v1741, %v2053
        %v2062 = vmul.f32 %v1764, %v2053
        %v2063 = vmul.f32 %v1742, %v2053
        %v2064 = vmul.f32 %v1765, %v2053
        %v2065 = vmul.f32 %v1743, %v2053
        %v2066 = vmul.f32 %v1766, %v2053
        %v2067 = vmul.f32 %v1744, %v2053
        %v2068 = vmul.f32 %v1767, %v2053
        %v2069 = vmul.f32 %v1745, %v2053
        %v2070 = vmul.f32 %v1768, %v2053
        %v2071 = vmul.f32 %v1746, %v2053
        %v2072 = vmul.f32 %v1769, %v2053
        %v2073 = vmul.f32 %v1747, %v2053
        %v2074 = vmul.f32 %v1770, %v2053
        %v2075 = vmul.f32 %v1748, %v2053
        %v2076 = vmul.f32 %v1771, %v2053
        %v2077 = vmul.f32 %v1749, %v2053
        %v2078 = vmul.f32 %v1772, %v2053
        %v2079 = vmul.f32 %v1750, %v2053
        %v2080 = vmul.f32 %v1773, %v2053
        %v2081 = vmul.f32 %v1751, %v2053
        %v2082 = vmul.f32 %v1774, %v2053
        %v2083 = vmul.f32 %v1752, %v2053
        %v2084 = vmul.f32 %v1775, %v2053
        %v2085 = vmul.f32 %v1753, %v2053
        %v2086 = vadd.f32 %v2018, %v2054
        %v2087 = vadd.f32 %v2019, %v2055
        %v2088 = vadd.f32 %v2020, %v2056
        %v2089 = vadd.f32 %v2021, %v2057
        %v2090 = vadd.f32 %v2022, %v2058
        %v2091 = vadd.f32 %v2023, %v2059
        %v2092 = vadd.f32 %v2024, %v2060
        %v2093 = vadd.f32 %v2025, %v2061
        %v2094 = vadd.f32 %v2026, %v2062
        %v2095 = vadd.f32 %v2027, %v2063
        %v2096 = vadd.f32 %v2028, %v2064
        %v2097 = vadd.f32 %v2029, %v2065
        %v2098 = vadd.f32 %v2030, %v2066
        %v2099 = vadd.f32 %v2031, %v2067
        %v2100 = vadd.f32 %v2032, %v2068
        %v2101 = vadd.f32 %v2033, %v2069
        %v2102 = vadd.f32 %v2034, %v2070
        %v2103 = vadd.f32 %v2035, %v2071
        %v2104 = vadd.f32 %v2036, %v2072
        %v2105 = vadd.f32 %v2037, %v2073
        %v2106 = vadd.f32 %v2038, %v2074
        %v2107 = vadd.f32 %v2039, %v2075
        %v2108 = vadd.f32 %v2040, %v2076
        %v2109 = vadd.f32 %v2041, %v2077
        %v2110 = vadd.f32 %v2042, %v2078
        %v2111 = vadd.f32 %v2043, %v2079
        %v2112 = vadd.f32 %v2044, %v2080
        %v2113 = vadd.f32 %v2045, %v2081
        %v2114 = vadd.f32 %v2046, %v2082
        %v2115 = vadd.f32 %v2047, %v2083
        %v2116 = vadd.f32 %v2048, %v2084
        %v2117 = vadd.f32 %v2049, %v2085
        %v2118 = vlaneseq
        %v2119 = vshrl.u32 %v2118, 7
        %v2120 = vsub.s32 2, %v2119
        %v2121 = vrot.slane %v600, %v2120
        %v2122 = vmul.f32 %v1761, %v2121
        %v2123 = vmul.f32 %v1739, %v2121
        %v2124 = vmul.f32 %v1762, %v2121
        %v2125 = vmul.f32 %v1740, %v2121
        %v2126 = vmul.f32 %v1763, %v2121
        %v2127 = vmul.f32 %v1741, %v2121
        %v2128 = vmul.f32 %v1764, %v2121
        %v2129 = vmul.f32 %v1742, %v2121
        %v2130 = vmul.f32 %v1765, %v2121
        %v2131 = vmul.f32 %v1743, %v2121
        %v2132 = vmul.f32 %v1766, %v2121
        %v2133 = vmul.f32 %v1744, %v2121
        %v2134 = vmul.f32 %v1767, %v2121
        %v2135 = vmul.f32 %v1745, %v2121
        %v2136 = vmul.f32 %v1768, %v2121
        %v2137 = vmul.f32 %v1746, %v2121
        %v2138 = vmul.f32 %v1769, %v2121
        %v2139 = vmul.f32 %v1747, %v2121
        %v2140 = vmul.f32 %v1770, %v2121
        %v2141 = vmul.f32 %v1748, %v2121
        %v2142 = vmul.f32 %v1771, %v2121
        %v2143 = vmul.f32 %v1749, %v2121
        %v2144 = vmul.f32 %v1772, %v2121
        %v2145 = vmul.f32 %v1750, %v2121
        %v2146 = vmul.f32 %v1773, %v2121
        %v2147 = vmul.f32 %v1751, %v2121
        %v2148 = vmul.f32 %v1774, %v2121
        %v2149 = vmul.f32 %v1752, %v2121
        %v2150 = vmul.f32 %v1775, %v2121
        %v2151 = vmul.f32 %v1753, %v2121
        %v2152 = vmul.f32 %v1776, %v2121
        %v2153 = vmul.f32 %v1754, %v2121
        %v2154 = vadd.f32 %v2086, %v2122
        %v2155 = vadd.f32 %v2087, %v2123
        %v2156 = vadd.f32 %v2088, %v2124
        %v2157 = vadd.f32 %v2089, %v2125
        %v2158 = vadd.f32 %v2090, %v2126
        %v2159 = vadd.f32 %v2091, %v2127
        %v2160 = vadd.f32 %v2092, %v2128
        %v2161 = vadd.f32 %v2093, %v2129
        %v2162 = vadd.f32 %v2094, %v2130
        %v2163 = vadd.f32 %v2095, %v2131
        %v2164 = vadd.f32 %v2096, %v2132
        %v2165 = vadd.f32 %v2097, %v2133
        %v2166 = vadd.f32 %v2098, %v2134
        %v2167 = vadd.f32 %v2099, %v2135
        %v2168 = vadd.f32 %v2100, %v2136
        %v2169 = vadd.f32 %v2101, %v2137
        %v2170 = vadd.f32 %v2102, %v2138
        %v2171 = vadd.f32 %v2103, %v2139
        %v2172 = vadd.f32 %v2104, %v2140
        %v2173 = vadd.f32 %v2105, %v2141
        %v2174 = vadd.f32 %v2106, %v2142
        %v2175 = vadd.f32 %v2107, %v2143
        %v2176 = vadd.f32 %v2108, %v2144
        %v2177 = vadd.f32 %v2109, %v2145
        %v2178 = vadd.f32 %v2110, %v2146
        %v2179 = vadd.f32 %v2111, %v2147
        %v2180 = vadd.f32 %v2112, %v2148
        %v2181 = vadd.f32 %v2113, %v2149
        %v2182 = vadd.f32 %v2114, %v2150
        %v2183 = vadd.f32 %v2115, %v2151
        %v2184 = vadd.f32 %v2116, %v2152
        %v2185 = vadd.f32 %v2117, %v2153
        %v2186 = vlaneseq
        %v2187 = vshrl.u32 %v2186, 7
        %v2188 = vsub.s32 2, %v2187
        %v2189 = vrot.slane %v601, %v2188
        %v2190 = vmul.f32 %v1762, %v2189
        %v2191 = vmul.f32 %v1740, %v2189
        %v2192 = vmul.f32 %v1763, %v2189
        %v2193 = vmul.f32 %v1741, %v2189
        %v2194 = vmul.f32 %v1764, %v2189
        %v2195 = vmul.f32 %v1742, %v2189
        %v2196 = vmul.f32 %v1765, %v2189
        %v2197 = vmul.f32 %v1743, %v2189
        %v2198 = vmul.f32 %v1766, %v2189
        %v2199 = vmul.f32 %v1744, %v2189
        %v2200 = vmul.f32 %v1767, %v2189
        %v2201 = vmul.f32 %v1745, %v2189
        %v2202 = vmul.f32 %v1768, %v2189
        %v2203 = vmul.f32 %v1746, %v2189
        %v2204 = vmul.f32 %v1769, %v2189
        %v2205 = vmul.f32 %v1747, %v2189
        %v2206 = vmul.f32 %v1770, %v2189
        %v2207 = vmul.f32 %v1748, %v2189
        %v2208 = vmul.f32 %v1771, %v2189
        %v2209 = vmul.f32 %v1749, %v2189
        %v2210 = vmul.f32 %v1772, %v2189
        %v2211 = vmul.f32 %v1750, %v2189
        %v2212 = vmul.f32 %v1773, %v2189
        %v2213 = vmul.f32 %v1751, %v2189
        %v2214 = vmul.f32 %v1774, %v2189
        %v2215 = vmul.f32 %v1752, %v2189
        %v2216 = vmul.f32 %v1775, %v2189
        %v2217 = vmul.f32 %v1753, %v2189
        %v2218 = vmul.f32 %v1776, %v2189
        %v2219 = vmul.f32 %v1754, %v2189
        %v2220 = vmul.f32 %v1777, %v2189
        %v2221 = vmul.f32 %v1755, %v2189
        %v2222 = vadd.f32 %v2154, %v2190
        %v2223 = vadd.f32 %v2155, %v2191
        %v2224 = vadd.f32 %v2156, %v2192
        %v2225 = vadd.f32 %v2157, %v2193
        %v2226 = vadd.f32 %v2158, %v2194
        %v2227 = vadd.f32 %v2159, %v2195
        %v2228 = vadd.f32 %v2160, %v2196
        %v2229 = vadd.f32 %v2161, %v2197
        %v2230 = vadd.f32 %v2162, %v2198
        %v2231 = vadd.f32 %v2163, %v2199
        %v2232 = vadd.f32 %v2164, %v2200
        %v2233 = vadd.f32 %v2165, %v2201
        %v2234 = vadd.f32 %v2166, %v2202
        %v2235 = vadd.f32 %v2167, %v2203
        %v2236 = vadd.f32 %v2168, %v2204
        %v2237 = vadd.f32 %v2169, %v2205
        %v2238 = vadd.f32 %v2170, %v2206
        %v2239 = vadd.f32 %v2171, %v2207
        %v2240 = vadd.f32 %v2172, %v2208
        %v2241 = vadd.f32 %v2173, %v2209
        %v2242 = vadd.f32 %v2174, %v2210
        %v2243 = vadd.f32 %v2175, %v2211
        %v2244 = vadd.f32 %v2176, %v2212
        %v2245 = vadd.f32 %v2177, %v2213
        %v2246 = vadd.f32 %v2178, %v2214
        %v2247 = vadd.f32 %v2179, %v2215
        %v2248 = vadd.f32 %v2180, %v2216
        %v2249 = vadd.f32 %v2181, %v2217
        %v2250 = vadd.f32 %v2182, %v2218
        %v2251 = vadd.f32 %v2183, %v2219
        %v2252 = vadd.f32 %v2184, %v2220
        %v2253 = vadd.f32 %v2185, %v2221
        %v2254 = vrot.slane %v529, 3
        %v2255 = vrot.slane %v532, 3
        %v2256 = vrot.slane %v535, 3
        %v2257 = vrot.slane %v538, 3
        %v2258 = vrot.slane %v541, 3
        %v2259 = vrot.slane %v544, 3
        %v2260 = vrot.slane %v547, 3
        %v2261 = vrot.slane %v550, 3
        %v2262 = vrot.slane %v553, 3
        %v2263 = vrot.slane %v556, 3
        %v2264 = vrot.slane %v559, 3
        %v2265 = vrot.slane %v562, 3
        %v2266 = vrot.slane %v565, 3
        %v2267 = vrot.slane %v568, 3
        %v2268 = vrot.slane %v571, 3
        %v2269 = vrot.slane %v574, 3
        %v2270 = vrot.slane %v577, 3
        %v2271 = vrot.slane %v580, 3
        %v2272 = vrot.slane %v583, 3
        %v2273 = vrot.slane %v586, 3
        %v2274 = vrot.slane %v589, 3
        %v2275 = vrot.slane %v592, 3
        %v2276 = vrot.slane %v530, 3
        %v2277 = vrot.slane %v533, 3
        %v2278 = vrot.slane %v536, 3
        %v2279 = vrot.slane %v539, 3
        %v2280 = vrot.slane %v542, 3
        %v2281 = vrot.slane %v545, 3
        %v2282 = vrot.slane %v548, 3
        %v2283 = vrot.slane %v551, 3
        %v2284 = vrot.slane %v554, 3
        %v2285 = vrot.slane %v557, 3
        %v2286 = vrot.slane %v560, 3
        %v2287 = vrot.slane %v563, 3
        %v2288 = vrot.slane %v566, 3
        %v2289 = vrot.slane %v569, 3
        %v2290 = vrot.slane %v572, 3
        %v2291 = vrot.slane %v575, 3
        %v2292 = vrot.slane %v578, 3
        %v2293 = vrot.slane %v581, 3
        %v2294 = vrot.slane %v584, 3
        %v2295 = vrot.slane %v587, 3
        %v2296 = vrot.slane %v590, 3
        %v2297 = vrot.slane %v593, 3
        %v2298 = vrot.slane %v531, 3
        %v2299 = vrot.slane %v534, 3
        %v2300 = vrot.slane %v537, 3
        %v2301 = vrot.slane %v540, 3
        %v2302 = vrot.slane %v543, 3
        %v2303 = vrot.slane %v546, 3
        %v2304 = vrot.slane %v549, 3
        %v2305 = vrot.slane %v552, 3
        %v2306 = vrot.slane %v555, 3
        %v2307 = vrot.slane %v558, 3
        %v2308 = vrot.slane %v561, 3
        %v2309 = vrot.slane %v564, 3
        %v2310 = vrot.slane %v567, 3
        %v2311 = vrot.slane %v570, 3
        %v2312 = vrot.slane %v573, 3
        %v2313 = vrot.slane %v576, 3
        %v2314 = vrot.slane %v579, 3
        %v2315 = vrot.slane %v582, 3
        %v2316 = vrot.slane %v585, 3
        %v2317 = vrot.slane %v588, 3
        %v2318 = vrot.slane %v591, 3
        %v2319 = vrot.slane %v594, 3
        %vm2320 = vcmp.lt.s32.totalorder %v1145, 5
        %v2321 = vsel %vm2320, %v2276, %v2298
        %v2322 = vsel %vm2320, %v2277, %v2299
        %v2323 = vsel %vm2320, %v2278, %v2300
        %v2324 = vsel %vm2320, %v2279, %v2301
        %v2325 = vsel %vm2320, %v2280, %v2302
        %v2326 = vsel %vm2320, %v2281, %v2303
        %v2327 = vsel %vm2320, %v2282, %v2304
        %v2328 = vsel %vm2320, %v2283, %v2305
        %v2329 = vsel %vm2320, %v2284, %v2306
        %v2330 = vsel %vm2320, %v2285, %v2307
        %v2331 = vsel %vm2320, %v2286, %v2308
        %v2332 = vsel %vm2320, %v2287, %v2309
        %v2333 = vsel %vm2320, %v2288, %v2310
        %v2334 = vsel %vm2320, %v2289, %v2311
        %v2335 = vsel %vm2320, %v2290, %v2312
        %v2336 = vsel %vm2320, %v2291, %v2313
        %v2337 = vsel %vm2320, %v2292, %v2314
        %v2338 = vsel %vm2320, %v2293, %v2315
        %v2339 = vsel %vm2320, %v2294, %v2316
        %v2340 = vsel %vm2320, %v2295, %v2317
        %v2341 = vsel %vm2320, %v2296, %v2318
        %v2342 = vsel %vm2320, %v2297, %v2319
        %v2343 = vsel %vm2320, %v2254, %v2276
        %v2344 = vsel %vm2320, %v2255, %v2277
        %v2345 = vsel %vm2320, %v2256, %v2278
        %v2346 = vsel %vm2320, %v2257, %v2279
        %v2347 = vsel %vm2320, %v2258, %v2280
        %v2348 = vsel %vm2320, %v2259, %v2281
        %v2349 = vsel %vm2320, %v2260, %v2282
        %v2350 = vsel %vm2320, %v2261, %v2283
        %v2351 = vsel %vm2320, %v2262, %v2284
        %v2352 = vsel %vm2320, %v2263, %v2285
        %v2353 = vsel %vm2320, %v2264, %v2286
        %v2354 = vsel %vm2320, %v2265, %v2287
        %v2355 = vsel %vm2320, %v2266, %v2288
        %v2356 = vsel %vm2320, %v2267, %v2289
        %v2357 = vsel %vm2320, %v2268, %v2290
        %v2358 = vsel %vm2320, %v2269, %v2291
        %v2359 = vsel %vm2320, %v2270, %v2292
        %v2360 = vsel %vm2320, %v2271, %v2293
        %v2361 = vsel %vm2320, %v2272, %v2294
        %v2362 = vsel %vm2320, %v2273, %v2295
        %v2363 = vsel %vm2320, %v2274, %v2296
        %v2364 = vsel %vm2320, %v2275, %v2297
        %v2365 = vlaneseq
        %v2366 = vshrl.u32 %v2365, 7
        %v2367 = vsub.s32 3, %v2366
        %v2368 = vrot.slane %v595, %v2367
        %v2369 = vmul.f32 %v2343, %v2368
        %v2370 = vmul.f32 %v2321, %v2368
        %v2371 = vmul.f32 %v2344, %v2368
        %v2372 = vmul.f32 %v2322, %v2368
        %v2373 = vmul.f32 %v2345, %v2368
        %v2374 = vmul.f32 %v2323, %v2368
        %v2375 = vmul.f32 %v2346, %v2368
        %v2376 = vmul.f32 %v2324, %v2368
        %v2377 = vmul.f32 %v2347, %v2368
        %v2378 = vmul.f32 %v2325, %v2368
        %v2379 = vmul.f32 %v2348, %v2368
        %v2380 = vmul.f32 %v2326, %v2368
        %v2381 = vmul.f32 %v2349, %v2368
        %v2382 = vmul.f32 %v2327, %v2368
        %v2383 = vmul.f32 %v2350, %v2368
        %v2384 = vmul.f32 %v2328, %v2368
        %v2385 = vmul.f32 %v2351, %v2368
        %v2386 = vmul.f32 %v2329, %v2368
        %v2387 = vmul.f32 %v2352, %v2368
        %v2388 = vmul.f32 %v2330, %v2368
        %v2389 = vmul.f32 %v2353, %v2368
        %v2390 = vmul.f32 %v2331, %v2368
        %v2391 = vmul.f32 %v2354, %v2368
        %v2392 = vmul.f32 %v2332, %v2368
        %v2393 = vmul.f32 %v2355, %v2368
        %v2394 = vmul.f32 %v2333, %v2368
        %v2395 = vmul.f32 %v2356, %v2368
        %v2396 = vmul.f32 %v2334, %v2368
        %v2397 = vmul.f32 %v2357, %v2368
        %v2398 = vmul.f32 %v2335, %v2368
        %v2399 = vmul.f32 %v2358, %v2368
        %v2400 = vmul.f32 %v2336, %v2368
        %v2401 = vadd.f32 %v2222, %v2369
        %v2402 = vadd.f32 %v2223, %v2370
        %v2403 = vadd.f32 %v2224, %v2371
        %v2404 = vadd.f32 %v2225, %v2372
        %v2405 = vadd.f32 %v2226, %v2373
        %v2406 = vadd.f32 %v2227, %v2374
        %v2407 = vadd.f32 %v2228, %v2375
        %v2408 = vadd.f32 %v2229, %v2376
        %v2409 = vadd.f32 %v2230, %v2377
        %v2410 = vadd.f32 %v2231, %v2378
        %v2411 = vadd.f32 %v2232, %v2379
        %v2412 = vadd.f32 %v2233, %v2380
        %v2413 = vadd.f32 %v2234, %v2381
        %v2414 = vadd.f32 %v2235, %v2382
        %v2415 = vadd.f32 %v2236, %v2383
        %v2416 = vadd.f32 %v2237, %v2384
        %v2417 = vadd.f32 %v2238, %v2385
        %v2418 = vadd.f32 %v2239, %v2386
        %v2419 = vadd.f32 %v2240, %v2387
        %v2420 = vadd.f32 %v2241, %v2388
        %v2421 = vadd.f32 %v2242, %v2389
        %v2422 = vadd.f32 %v2243, %v2390
        %v2423 = vadd.f32 %v2244, %v2391
        %v2424 = vadd.f32 %v2245, %v2392
        %v2425 = vadd.f32 %v2246, %v2393
        %v2426 = vadd.f32 %v2247, %v2394
        %v2427 = vadd.f32 %v2248, %v2395
        %v2428 = vadd.f32 %v2249, %v2396
        %v2429 = vadd.f32 %v2250, %v2397
        %v2430 = vadd.f32 %v2251, %v2398
        %v2431 = vadd.f32 %v2252, %v2399
        %v2432 = vadd.f32 %v2253, %v2400
        %v2433 = vlaneseq
        %v2434 = vshrl.u32 %v2433, 7
        %v2435 = vsub.s32 3, %v2434
        %v2436 = vrot.slane %v596, %v2435
        %v2437 = vmul.f32 %v2344, %v2436
        %v2438 = vmul.f32 %v2322, %v2436
        %v2439 = vmul.f32 %v2345, %v2436
        %v2440 = vmul.f32 %v2323, %v2436
        %v2441 = vmul.f32 %v2346, %v2436
        %v2442 = vmul.f32 %v2324, %v2436
        %v2443 = vmul.f32 %v2347, %v2436
        %v2444 = vmul.f32 %v2325, %v2436
        %v2445 = vmul.f32 %v2348, %v2436
        %v2446 = vmul.f32 %v2326, %v2436
        %v2447 = vmul.f32 %v2349, %v2436
        %v2448 = vmul.f32 %v2327, %v2436
        %v2449 = vmul.f32 %v2350, %v2436
        %v2450 = vmul.f32 %v2328, %v2436
        %v2451 = vmul.f32 %v2351, %v2436
        %v2452 = vmul.f32 %v2329, %v2436
        %v2453 = vmul.f32 %v2352, %v2436
        %v2454 = vmul.f32 %v2330, %v2436
        %v2455 = vmul.f32 %v2353, %v2436
        %v2456 = vmul.f32 %v2331, %v2436
        %v2457 = vmul.f32 %v2354, %v2436
        %v2458 = vmul.f32 %v2332, %v2436
        %v2459 = vmul.f32 %v2355, %v2436
        %v2460 = vmul.f32 %v2333, %v2436
        %v2461 = vmul.f32 %v2356, %v2436
        %v2462 = vmul.f32 %v2334, %v2436
        %v2463 = vmul.f32 %v2357, %v2436
        %v2464 = vmul.f32 %v2335, %v2436
        %v2465 = vmul.f32 %v2358, %v2436
        %v2466 = vmul.f32 %v2336, %v2436
        %v2467 = vmul.f32 %v2359, %v2436
        %v2468 = vmul.f32 %v2337, %v2436
        %v2469 = vadd.f32 %v2401, %v2437
        %v2470 = vadd.f32 %v2402, %v2438
        %v2471 = vadd.f32 %v2403, %v2439
        %v2472 = vadd.f32 %v2404, %v2440
        %v2473 = vadd.f32 %v2405, %v2441
        %v2474 = vadd.f32 %v2406, %v2442
        %v2475 = vadd.f32 %v2407, %v2443
        %v2476 = vadd.f32 %v2408, %v2444
        %v2477 = vadd.f32 %v2409, %v2445
        %v2478 = vadd.f32 %v2410, %v2446
        %v2479 = vadd.f32 %v2411, %v2447
        %v2480 = vadd.f32 %v2412, %v2448
        %v2481 = vadd.f32 %v2413, %v2449
        %v2482 = vadd.f32 %v2414, %v2450
        %v2483 = vadd.f32 %v2415, %v2451
        %v2484 = vadd.f32 %v2416, %v2452
        %v2485 = vadd.f32 %v2417, %v2453
        %v2486 = vadd.f32 %v2418, %v2454
        %v2487 = vadd.f32 %v2419, %v2455
        %v2488 = vadd.f32 %v2420, %v2456
        %v2489 = vadd.f32 %v2421, %v2457
        %v2490 = vadd.f32 %v2422, %v2458
        %v2491 = vadd.f32 %v2423, %v2459
        %v2492 = vadd.f32 %v2424, %v2460
        %v2493 = vadd.f32 %v2425, %v2461
        %v2494 = vadd.f32 %v2426, %v2462
        %v2495 = vadd.f32 %v2427, %v2463
        %v2496 = vadd.f32 %v2428, %v2464
        %v2497 = vadd.f32 %v2429, %v2465
        %v2498 = vadd.f32 %v2430, %v2466
        %v2499 = vadd.f32 %v2431, %v2467
        %v2500 = vadd.f32 %v2432, %v2468
        %v2501 = vlaneseq
        %v2502 = vshrl.u32 %v2501, 7
        %v2503 = vsub.s32 3, %v2502
        %v2504 = vrot.slane %v597, %v2503
        %v2505 = vmul.f32 %v2345, %v2504
        %v2506 = vmul.f32 %v2323, %v2504
        %v2507 = vmul.f32 %v2346, %v2504
        %v2508 = vmul.f32 %v2324, %v2504
        %v2509 = vmul.f32 %v2347, %v2504
        %v2510 = vmul.f32 %v2325, %v2504
        %v2511 = vmul.f32 %v2348, %v2504
        %v2512 = vmul.f32 %v2326, %v2504
        %v2513 = vmul.f32 %v2349, %v2504
        %v2514 = vmul.f32 %v2327, %v2504
        %v2515 = vmul.f32 %v2350, %v2504
        %v2516 = vmul.f32 %v2328, %v2504
        %v2517 = vmul.f32 %v2351, %v2504
        %v2518 = vmul.f32 %v2329, %v2504
        %v2519 = vmul.f32 %v2352, %v2504
        %v2520 = vmul.f32 %v2330, %v2504
        %v2521 = vmul.f32 %v2353, %v2504
        %v2522 = vmul.f32 %v2331, %v2504
        %v2523 = vmul.f32 %v2354, %v2504
        %v2524 = vmul.f32 %v2332, %v2504
        %v2525 = vmul.f32 %v2355, %v2504
        %v2526 = vmul.f32 %v2333, %v2504
        %v2527 = vmul.f32 %v2356, %v2504
        %v2528 = vmul.f32 %v2334, %v2504
        %v2529 = vmul.f32 %v2357, %v2504
        %v2530 = vmul.f32 %v2335, %v2504
        %v2531 = vmul.f32 %v2358, %v2504
        %v2532 = vmul.f32 %v2336, %v2504
        %v2533 = vmul.f32 %v2359, %v2504
        %v2534 = vmul.f32 %v2337, %v2504
        %v2535 = vmul.f32 %v2360, %v2504
        %v2536 = vmul.f32 %v2338, %v2504
        %v2537 = vadd.f32 %v2469, %v2505
        %v2538 = vadd.f32 %v2470, %v2506
        %v2539 = vadd.f32 %v2471, %v2507
        %v2540 = vadd.f32 %v2472, %v2508
        %v2541 = vadd.f32 %v2473, %v2509
        %v2542 = vadd.f32 %v2474, %v2510
        %v2543 = vadd.f32 %v2475, %v2511
        %v2544 = vadd.f32 %v2476, %v2512
        %v2545 = vadd.f32 %v2477, %v2513
        %v2546 = vadd.f32 %v2478, %v2514
        %v2547 = vadd.f32 %v2479, %v2515
        %v2548 = vadd.f32 %v2480, %v2516
        %v2549 = vadd.f32 %v2481, %v2517
        %v2550 = vadd.f32 %v2482, %v2518
        %v2551 = vadd.f32 %v2483, %v2519
        %v2552 = vadd.f32 %v2484, %v2520
        %v2553 = vadd.f32 %v2485, %v2521
        %v2554 = vadd.f32 %v2486, %v2522
        %v2555 = vadd.f32 %v2487, %v2523
        %v2556 = vadd.f32 %v2488, %v2524
        %v2557 = vadd.f32 %v2489, %v2525
        %v2558 = vadd.f32 %v2490, %v2526
        %v2559 = vadd.f32 %v2491, %v2527
        %v2560 = vadd.f32 %v2492, %v2528
        %v2561 = vadd.f32 %v2493, %v2529
        %v2562 = vadd.f32 %v2494, %v2530
        %v2563 = vadd.f32 %v2495, %v2531
        %v2564 = vadd.f32 %v2496, %v2532
        %v2565 = vadd.f32 %v2497, %v2533
        %v2566 = vadd.f32 %v2498, %v2534
        %v2567 = vadd.f32 %v2499, %v2535
        %v2568 = vadd.f32 %v2500, %v2536
        %v2569 = vlaneseq
        %v2570 = vshrl.u32 %v2569, 7
        %v2571 = vsub.s32 3, %v2570
        %v2572 = vrot.slane %v598, %v2571
        %v2573 = vmul.f32 %v2346, %v2572
        %v2574 = vmul.f32 %v2324, %v2572
        %v2575 = vmul.f32 %v2347, %v2572
        %v2576 = vmul.f32 %v2325, %v2572
        %v2577 = vmul.f32 %v2348, %v2572
        %v2578 = vmul.f32 %v2326, %v2572
        %v2579 = vmul.f32 %v2349, %v2572
        %v2580 = vmul.f32 %v2327, %v2572
        %v2581 = vmul.f32 %v2350, %v2572
        %v2582 = vmul.f32 %v2328, %v2572
        %v2583 = vmul.f32 %v2351, %v2572
        %v2584 = vmul.f32 %v2329, %v2572
        %v2585 = vmul.f32 %v2352, %v2572
        %v2586 = vmul.f32 %v2330, %v2572
        %v2587 = vmul.f32 %v2353, %v2572
        %v2588 = vmul.f32 %v2331, %v2572
        %v2589 = vmul.f32 %v2354, %v2572
        %v2590 = vmul.f32 %v2332, %v2572
        %v2591 = vmul.f32 %v2355, %v2572
        %v2592 = vmul.f32 %v2333, %v2572
        %v2593 = vmul.f32 %v2356, %v2572
        %v2594 = vmul.f32 %v2334, %v2572
        %v2595 = vmul.f32 %v2357, %v2572
        %v2596 = vmul.f32 %v2335, %v2572
        %v2597 = vmul.f32 %v2358, %v2572
        %v2598 = vmul.f32 %v2336, %v2572
        %v2599 = vmul.f32 %v2359, %v2572
        %v2600 = vmul.f32 %v2337, %v2572
        %v2601 = vmul.f32 %v2360, %v2572
        %v2602 = vmul.f32 %v2338, %v2572
        %v2603 = vmul.f32 %v2361, %v2572
        %v2604 = vmul.f32 %v2339, %v2572
        %v2605 = vadd.f32 %v2537, %v2573
        %v2606 = vadd.f32 %v2538, %v2574
        %v2607 = vadd.f32 %v2539, %v2575
        %v2608 = vadd.f32 %v2540, %v2576
        %v2609 = vadd.f32 %v2541, %v2577
        %v2610 = vadd.f32 %v2542, %v2578
        %v2611 = vadd.f32 %v2543, %v2579
        %v2612 = vadd.f32 %v2544, %v2580
        %v2613 = vadd.f32 %v2545, %v2581
        %v2614 = vadd.f32 %v2546, %v2582
        %v2615 = vadd.f32 %v2547, %v2583
        %v2616 = vadd.f32 %v2548, %v2584
        %v2617 = vadd.f32 %v2549, %v2585
        %v2618 = vadd.f32 %v2550, %v2586
        %v2619 = vadd.f32 %v2551, %v2587
        %v2620 = vadd.f32 %v2552, %v2588
        %v2621 = vadd.f32 %v2553, %v2589
        %v2622 = vadd.f32 %v2554, %v2590
        %v2623 = vadd.f32 %v2555, %v2591
        %v2624 = vadd.f32 %v2556, %v2592
        %v2625 = vadd.f32 %v2557, %v2593
        %v2626 = vadd.f32 %v2558, %v2594
        %v2627 = vadd.f32 %v2559, %v2595
        %v2628 = vadd.f32 %v2560, %v2596
        %v2629 = vadd.f32 %v2561, %v2597
        %v2630 = vadd.f32 %v2562, %v2598
        %v2631 = vadd.f32 %v2563, %v2599
        %v2632 = vadd.f32 %v2564, %v2600
        %v2633 = vadd.f32 %v2565, %v2601
        %v2634 = vadd.f32 %v2566, %v2602
        %v2635 = vadd.f32 %v2567, %v2603
        %v2636 = vadd.f32 %v2568, %v2604
        %v2637 = vlaneseq
        %v2638 = vshrl.u32 %v2637, 7
        %v2639 = vsub.s32 3, %v2638
        %v2640 = vrot.slane %v599, %v2639
        %v2641 = vmul.f32 %v2347, %v2640
        %v2642 = vmul.f32 %v2325, %v2640
        %v2643 = vmul.f32 %v2348, %v2640
        %v2644 = vmul.f32 %v2326, %v2640
        %v2645 = vmul.f32 %v2349, %v2640
        %v2646 = vmul.f32 %v2327, %v2640
        %v2647 = vmul.f32 %v2350, %v2640
        %v2648 = vmul.f32 %v2328, %v2640
        %v2649 = vmul.f32 %v2351, %v2640
        %v2650 = vmul.f32 %v2329, %v2640
        %v2651 = vmul.f32 %v2352, %v2640
        %v2652 = vmul.f32 %v2330, %v2640
        %v2653 = vmul.f32 %v2353, %v2640
        %v2654 = vmul.f32 %v2331, %v2640
        %v2655 = vmul.f32 %v2354, %v2640
        %v2656 = vmul.f32 %v2332, %v2640
        %v2657 = vmul.f32 %v2355, %v2640
        %v2658 = vmul.f32 %v2333, %v2640
        %v2659 = vmul.f32 %v2356, %v2640
        %v2660 = vmul.f32 %v2334, %v2640
        %v2661 = vmul.f32 %v2357, %v2640
        %v2662 = vmul.f32 %v2335, %v2640
        %v2663 = vmul.f32 %v2358, %v2640
        %v2664 = vmul.f32 %v2336, %v2640
        %v2665 = vmul.f32 %v2359, %v2640
        %v2666 = vmul.f32 %v2337, %v2640
        %v2667 = vmul.f32 %v2360, %v2640
        %v2668 = vmul.f32 %v2338, %v2640
        %v2669 = vmul.f32 %v2361, %v2640
        %v2670 = vmul.f32 %v2339, %v2640
        %v2671 = vmul.f32 %v2362, %v2640
        %v2672 = vmul.f32 %v2340, %v2640
        %v2673 = vadd.f32 %v2605, %v2641
        %v2674 = vadd.f32 %v2606, %v2642
        %v2675 = vadd.f32 %v2607, %v2643
        %v2676 = vadd.f32 %v2608, %v2644
        %v2677 = vadd.f32 %v2609, %v2645
        %v2678 = vadd.f32 %v2610, %v2646
        %v2679 = vadd.f32 %v2611, %v2647
        %v2680 = vadd.f32 %v2612, %v2648
        %v2681 = vadd.f32 %v2613, %v2649
        %v2682 = vadd.f32 %v2614, %v2650
        %v2683 = vadd.f32 %v2615, %v2651
        %v2684 = vadd.f32 %v2616, %v2652
        %v2685 = vadd.f32 %v2617, %v2653
        %v2686 = vadd.f32 %v2618, %v2654
        %v2687 = vadd.f32 %v2619, %v2655
        %v2688 = vadd.f32 %v2620, %v2656
        %v2689 = vadd.f32 %v2621, %v2657
        %v2690 = vadd.f32 %v2622, %v2658
        %v2691 = vadd.f32 %v2623, %v2659
        %v2692 = vadd.f32 %v2624, %v2660
        %v2693 = vadd.f32 %v2625, %v2661
        %v2694 = vadd.f32 %v2626, %v2662
        %v2695 = vadd.f32 %v2627, %v2663
        %v2696 = vadd.f32 %v2628, %v2664
        %v2697 = vadd.f32 %v2629, %v2665
        %v2698 = vadd.f32 %v2630, %v2666
        %v2699 = vadd.f32 %v2631, %v2667
        %v2700 = vadd.f32 %v2632, %v2668
        %v2701 = vadd.f32 %v2633, %v2669
        %v2702 = vadd.f32 %v2634, %v2670
        %v2703 = vadd.f32 %v2635, %v2671
        %v2704 = vadd.f32 %v2636, %v2672
        %v2705 = vlaneseq
        %v2706 = vshrl.u32 %v2705, 7
        %v2707 = vsub.s32 3, %v2706
        %v2708 = vrot.slane %v600, %v2707
        %v2709 = vmul.f32 %v2348, %v2708
        %v2710 = vmul.f32 %v2326, %v2708
        %v2711 = vmul.f32 %v2349, %v2708
        %v2712 = vmul.f32 %v2327, %v2708
        %v2713 = vmul.f32 %v2350, %v2708
        %v2714 = vmul.f32 %v2328, %v2708
        %v2715 = vmul.f32 %v2351, %v2708
        %v2716 = vmul.f32 %v2329, %v2708
        %v2717 = vmul.f32 %v2352, %v2708
        %v2718 = vmul.f32 %v2330, %v2708
        %v2719 = vmul.f32 %v2353, %v2708
        %v2720 = vmul.f32 %v2331, %v2708
        %v2721 = vmul.f32 %v2354, %v2708
        %v2722 = vmul.f32 %v2332, %v2708
        %v2723 = vmul.f32 %v2355, %v2708
        %v2724 = vmul.f32 %v2333, %v2708
        %v2725 = vmul.f32 %v2356, %v2708
        %v2726 = vmul.f32 %v2334, %v2708
        %v2727 = vmul.f32 %v2357, %v2708
        %v2728 = vmul.f32 %v2335, %v2708
        %v2729 = vmul.f32 %v2358, %v2708
        %v2730 = vmul.f32 %v2336, %v2708
        %v2731 = vmul.f32 %v2359, %v2708
        %v2732 = vmul.f32 %v2337, %v2708
        %v2733 = vmul.f32 %v2360, %v2708
        %v2734 = vmul.f32 %v2338, %v2708
        %v2735 = vmul.f32 %v2361, %v2708
        %v2736 = vmul.f32 %v2339, %v2708
        %v2737 = vmul.f32 %v2362, %v2708
        %v2738 = vmul.f32 %v2340, %v2708
        %v2739 = vmul.f32 %v2363, %v2708
        %v2740 = vmul.f32 %v2341, %v2708
        %v2741 = vadd.f32 %v2673, %v2709
        %v2742 = vadd.f32 %v2674, %v2710
        %v2743 = vadd.f32 %v2675, %v2711
        %v2744 = vadd.f32 %v2676, %v2712
        %v2745 = vadd.f32 %v2677, %v2713
        %v2746 = vadd.f32 %v2678, %v2714
        %v2747 = vadd.f32 %v2679, %v2715
        %v2748 = vadd.f32 %v2680, %v2716
        %v2749 = vadd.f32 %v2681, %v2717
        %v2750 = vadd.f32 %v2682, %v2718
        %v2751 = vadd.f32 %v2683, %v2719
        %v2752 = vadd.f32 %v2684, %v2720
        %v2753 = vadd.f32 %v2685, %v2721
        %v2754 = vadd.f32 %v2686, %v2722
        %v2755 = vadd.f32 %v2687, %v2723
        %v2756 = vadd.f32 %v2688, %v2724
        %v2757 = vadd.f32 %v2689, %v2725
        %v2758 = vadd.f32 %v2690, %v2726
        %v2759 = vadd.f32 %v2691, %v2727
        %v2760 = vadd.f32 %v2692, %v2728
        %v2761 = vadd.f32 %v2693, %v2729
        %v2762 = vadd.f32 %v2694, %v2730
        %v2763 = vadd.f32 %v2695, %v2731
        %v2764 = vadd.f32 %v2696, %v2732
        %v2765 = vadd.f32 %v2697, %v2733
        %v2766 = vadd.f32 %v2698, %v2734
        %v2767 = vadd.f32 %v2699, %v2735
        %v2768 = vadd.f32 %v2700, %v2736
        %v2769 = vadd.f32 %v2701, %v2737
        %v2770 = vadd.f32 %v2702, %v2738
        %v2771 = vadd.f32 %v2703, %v2739
        %v2772 = vadd.f32 %v2704, %v2740
        %v2773 = vlaneseq
        %v2774 = vshrl.u32 %v2773, 7
        %v2775 = vsub.s32 3, %v2774
        %v2776 = vrot.slane %v601, %v2775
        %v2777 = vmul.f32 %v2349, %v2776
        %v2778 = vmul.f32 %v2327, %v2776
        %v2779 = vmul.f32 %v2350, %v2776
        %v2780 = vmul.f32 %v2328, %v2776
        %v2781 = vmul.f32 %v2351, %v2776
        %v2782 = vmul.f32 %v2329, %v2776
        %v2783 = vmul.f32 %v2352, %v2776
        %v2784 = vmul.f32 %v2330, %v2776
        %v2785 = vmul.f32 %v2353, %v2776
        %v2786 = vmul.f32 %v2331, %v2776
        %v2787 = vmul.f32 %v2354, %v2776
        %v2788 = vmul.f32 %v2332, %v2776
        %v2789 = vmul.f32 %v2355, %v2776
        %v2790 = vmul.f32 %v2333, %v2776
        %v2791 = vmul.f32 %v2356, %v2776
        %v2792 = vmul.f32 %v2334, %v2776
        %v2793 = vmul.f32 %v2357, %v2776
        %v2794 = vmul.f32 %v2335, %v2776
        %v2795 = vmul.f32 %v2358, %v2776
        %v2796 = vmul.f32 %v2336, %v2776
        %v2797 = vmul.f32 %v2359, %v2776
        %v2798 = vmul.f32 %v2337, %v2776
        %v2799 = vmul.f32 %v2360, %v2776
        %v2800 = vmul.f32 %v2338, %v2776
        %v2801 = vmul.f32 %v2361, %v2776
        %v2802 = vmul.f32 %v2339, %v2776
        %v2803 = vmul.f32 %v2362, %v2776
        %v2804 = vmul.f32 %v2340, %v2776
        %v2805 = vmul.f32 %v2363, %v2776
        %v2806 = vmul.f32 %v2341, %v2776
        %v2807 = vmul.f32 %v2364, %v2776
        %v2808 = vmul.f32 %v2342, %v2776
        %v2809 = vadd.f32 %v2741, %v2777
        %v2810 = vadd.f32 %v2742, %v2778
        %v2811 = vadd.f32 %v2743, %v2779
        %v2812 = vadd.f32 %v2744, %v2780
        %v2813 = vadd.f32 %v2745, %v2781
        %v2814 = vadd.f32 %v2746, %v2782
        %v2815 = vadd.f32 %v2747, %v2783
        %v2816 = vadd.f32 %v2748, %v2784
        %v2817 = vadd.f32 %v2749, %v2785
        %v2818 = vadd.f32 %v2750, %v2786
        %v2819 = vadd.f32 %v2751, %v2787
        %v2820 = vadd.f32 %v2752, %v2788
        %v2821 = vadd.f32 %v2753, %v2789
        %v2822 = vadd.f32 %v2754, %v2790
        %v2823 = vadd.f32 %v2755, %v2791
        %v2824 = vadd.f32 %v2756, %v2792
        %v2825 = vadd.f32 %v2757, %v2793
        %v2826 = vadd.f32 %v2758, %v2794
        %v2827 = vadd.f32 %v2759, %v2795
        %v2828 = vadd.f32 %v2760, %v2796
        %v2829 = vadd.f32 %v2761, %v2797
        %v2830 = vadd.f32 %v2762, %v2798
        %v2831 = vadd.f32 %v2763, %v2799
        %v2832 = vadd.f32 %v2764, %v2800
        %v2833 = vadd.f32 %v2765, %v2801
        %v2834 = vadd.f32 %v2766, %v2802
        %v2835 = vadd.f32 %v2767, %v2803
        %v2836 = vadd.f32 %v2768, %v2804
        %v2837 = vadd.f32 %v2769, %v2805
        %v2838 = vadd.f32 %v2770, %v2806
        %v2839 = vadd.f32 %v2771, %v2807
        %v2840 = vadd.f32 %v2772, %v2808
        %v2841 = vrot.slane %v529, 4
        %v2842 = vrot.slane %v532, 4
        %v2843 = vrot.slane %v535, 4
        %v2844 = vrot.slane %v538, 4
        %v2845 = vrot.slane %v541, 4
        %v2846 = vrot.slane %v544, 4
        %v2847 = vrot.slane %v547, 4
        %v2848 = vrot.slane %v550, 4
        %v2849 = vrot.slane %v553, 4
        %v2850 = vrot.slane %v556, 4
        %v2851 = vrot.slane %v559, 4
        %v2852 = vrot.slane %v562, 4
        %v2853 = vrot.slane %v565, 4
        %v2854 = vrot.slane %v568, 4
        %v2855 = vrot.slane %v571, 4
        %v2856 = vrot.slane %v574, 4
        %v2857 = vrot.slane %v577, 4
        %v2858 = vrot.slane %v580, 4
        %v2859 = vrot.slane %v583, 4
        %v2860 = vrot.slane %v586, 4
        %v2861 = vrot.slane %v589, 4
        %v2862 = vrot.slane %v592, 4
        %v2863 = vrot.slane %v530, 4
        %v2864 = vrot.slane %v533, 4
        %v2865 = vrot.slane %v536, 4
        %v2866 = vrot.slane %v539, 4
        %v2867 = vrot.slane %v542, 4
        %v2868 = vrot.slane %v545, 4
        %v2869 = vrot.slane %v548, 4
        %v2870 = vrot.slane %v551, 4
        %v2871 = vrot.slane %v554, 4
        %v2872 = vrot.slane %v557, 4
        %v2873 = vrot.slane %v560, 4
        %v2874 = vrot.slane %v563, 4
        %v2875 = vrot.slane %v566, 4
        %v2876 = vrot.slane %v569, 4
        %v2877 = vrot.slane %v572, 4
        %v2878 = vrot.slane %v575, 4
        %v2879 = vrot.slane %v578, 4
        %v2880 = vrot.slane %v581, 4
        %v2881 = vrot.slane %v584, 4
        %v2882 = vrot.slane %v587, 4
        %v2883 = vrot.slane %v590, 4
        %v2884 = vrot.slane %v593, 4
        %v2885 = vrot.slane %v531, 4
        %v2886 = vrot.slane %v534, 4
        %v2887 = vrot.slane %v537, 4
        %v2888 = vrot.slane %v540, 4
        %v2889 = vrot.slane %v543, 4
        %v2890 = vrot.slane %v546, 4
        %v2891 = vrot.slane %v549, 4
        %v2892 = vrot.slane %v552, 4
        %v2893 = vrot.slane %v555, 4
        %v2894 = vrot.slane %v558, 4
        %v2895 = vrot.slane %v561, 4
        %v2896 = vrot.slane %v564, 4
        %v2897 = vrot.slane %v567, 4
        %v2898 = vrot.slane %v570, 4
        %v2899 = vrot.slane %v573, 4
        %v2900 = vrot.slane %v576, 4
        %v2901 = vrot.slane %v579, 4
        %v2902 = vrot.slane %v582, 4
        %v2903 = vrot.slane %v585, 4
        %v2904 = vrot.slane %v588, 4
        %v2905 = vrot.slane %v591, 4
        %v2906 = vrot.slane %v594, 4
        %vm2907 = vcmp.lt.s32.totalorder %v1145, 4
        %v2908 = vsel %vm2907, %v2863, %v2885
        %v2909 = vsel %vm2907, %v2864, %v2886
        %v2910 = vsel %vm2907, %v2865, %v2887
        %v2911 = vsel %vm2907, %v2866, %v2888
        %v2912 = vsel %vm2907, %v2867, %v2889
        %v2913 = vsel %vm2907, %v2868, %v2890
        %v2914 = vsel %vm2907, %v2869, %v2891
        %v2915 = vsel %vm2907, %v2870, %v2892
        %v2916 = vsel %vm2907, %v2871, %v2893
        %v2917 = vsel %vm2907, %v2872, %v2894
        %v2918 = vsel %vm2907, %v2873, %v2895
        %v2919 = vsel %vm2907, %v2874, %v2896
        %v2920 = vsel %vm2907, %v2875, %v2897
        %v2921 = vsel %vm2907, %v2876, %v2898
        %v2922 = vsel %vm2907, %v2877, %v2899
        %v2923 = vsel %vm2907, %v2878, %v2900
        %v2924 = vsel %vm2907, %v2879, %v2901
        %v2925 = vsel %vm2907, %v2880, %v2902
        %v2926 = vsel %vm2907, %v2881, %v2903
        %v2927 = vsel %vm2907, %v2882, %v2904
        %v2928 = vsel %vm2907, %v2883, %v2905
        %v2929 = vsel %vm2907, %v2884, %v2906
        %v2930 = vsel %vm2907, %v2841, %v2863
        %v2931 = vsel %vm2907, %v2842, %v2864
        %v2932 = vsel %vm2907, %v2843, %v2865
        %v2933 = vsel %vm2907, %v2844, %v2866
        %v2934 = vsel %vm2907, %v2845, %v2867
        %v2935 = vsel %vm2907, %v2846, %v2868
        %v2936 = vsel %vm2907, %v2847, %v2869
        %v2937 = vsel %vm2907, %v2848, %v2870
        %v2938 = vsel %vm2907, %v2849, %v2871
        %v2939 = vsel %vm2907, %v2850, %v2872
        %v2940 = vsel %vm2907, %v2851, %v2873
        %v2941 = vsel %vm2907, %v2852, %v2874
        %v2942 = vsel %vm2907, %v2853, %v2875
        %v2943 = vsel %vm2907, %v2854, %v2876
        %v2944 = vsel %vm2907, %v2855, %v2877
        %v2945 = vsel %vm2907, %v2856, %v2878
        %v2946 = vsel %vm2907, %v2857, %v2879
        %v2947 = vsel %vm2907, %v2858, %v2880
        %v2948 = vsel %vm2907, %v2859, %v2881
        %v2949 = vsel %vm2907, %v2860, %v2882
        %v2950 = vsel %vm2907, %v2861, %v2883
        %v2951 = vsel %vm2907, %v2862, %v2884
        %v2952 = vlaneseq
        %v2953 = vshrl.u32 %v2952, 7
        %v2954 = vsub.s32 4, %v2953
        %v2955 = vrot.slane %v595, %v2954
        %v2956 = vmul.f32 %v2930, %v2955
        %v2957 = vmul.f32 %v2908, %v2955
        %v2958 = vmul.f32 %v2931, %v2955
        %v2959 = vmul.f32 %v2909, %v2955
        %v2960 = vmul.f32 %v2932, %v2955
        %v2961 = vmul.f32 %v2910, %v2955
        %v2962 = vmul.f32 %v2933, %v2955
        %v2963 = vmul.f32 %v2911, %v2955
        %v2964 = vmul.f32 %v2934, %v2955
        %v2965 = vmul.f32 %v2912, %v2955
        %v2966 = vmul.f32 %v2935, %v2955
        %v2967 = vmul.f32 %v2913, %v2955
        %v2968 = vmul.f32 %v2936, %v2955
        %v2969 = vmul.f32 %v2914, %v2955
        %v2970 = vmul.f32 %v2937, %v2955
        %v2971 = vmul.f32 %v2915, %v2955
        %v2972 = vmul.f32 %v2938, %v2955
        %v2973 = vmul.f32 %v2916, %v2955
        %v2974 = vmul.f32 %v2939, %v2955
        %v2975 = vmul.f32 %v2917, %v2955
        %v2976 = vmul.f32 %v2940, %v2955
        %v2977 = vmul.f32 %v2918, %v2955
        %v2978 = vmul.f32 %v2941, %v2955
        %v2979 = vmul.f32 %v2919, %v2955
        %v2980 = vmul.f32 %v2942, %v2955
        %v2981 = vmul.f32 %v2920, %v2955
        %v2982 = vmul.f32 %v2943, %v2955
        %v2983 = vmul.f32 %v2921, %v2955
        %v2984 = vmul.f32 %v2944, %v2955
        %v2985 = vmul.f32 %v2922, %v2955
        %v2986 = vmul.f32 %v2945, %v2955
        %v2987 = vmul.f32 %v2923, %v2955
        %v2988 = vadd.f32 %v2809, %v2956
        %v2989 = vadd.f32 %v2810, %v2957
        %v2990 = vadd.f32 %v2811, %v2958
        %v2991 = vadd.f32 %v2812, %v2959
        %v2992 = vadd.f32 %v2813, %v2960
        %v2993 = vadd.f32 %v2814, %v2961
        %v2994 = vadd.f32 %v2815, %v2962
        %v2995 = vadd.f32 %v2816, %v2963
        %v2996 = vadd.f32 %v2817, %v2964
        %v2997 = vadd.f32 %v2818, %v2965
        %v2998 = vadd.f32 %v2819, %v2966
        %v2999 = vadd.f32 %v2820, %v2967
        %v3000 = vadd.f32 %v2821, %v2968
        %v3001 = vadd.f32 %v2822, %v2969
        %v3002 = vadd.f32 %v2823, %v2970
        %v3003 = vadd.f32 %v2824, %v2971
        %v3004 = vadd.f32 %v2825, %v2972
        %v3005 = vadd.f32 %v2826, %v2973
        %v3006 = vadd.f32 %v2827, %v2974
        %v3007 = vadd.f32 %v2828, %v2975
        %v3008 = vadd.f32 %v2829, %v2976
        %v3009 = vadd.f32 %v2830, %v2977
        %v3010 = vadd.f32 %v2831, %v2978
        %v3011 = vadd.f32 %v2832, %v2979
        %v3012 = vadd.f32 %v2833, %v2980
        %v3013 = vadd.f32 %v2834, %v2981
        %v3014 = vadd.f32 %v2835, %v2982
        %v3015 = vadd.f32 %v2836, %v2983
        %v3016 = vadd.f32 %v2837, %v2984
        %v3017 = vadd.f32 %v2838, %v2985
        %v3018 = vadd.f32 %v2839, %v2986
        %v3019 = vadd.f32 %v2840, %v2987
        %v3020 = vlaneseq
        %v3021 = vshrl.u32 %v3020, 7
        %v3022 = vsub.s32 4, %v3021
        %v3023 = vrot.slane %v596, %v3022
        %v3024 = vmul.f32 %v2931, %v3023
        %v3025 = vmul.f32 %v2909, %v3023
        %v3026 = vmul.f32 %v2932, %v3023
        %v3027 = vmul.f32 %v2910, %v3023
        %v3028 = vmul.f32 %v2933, %v3023
        %v3029 = vmul.f32 %v2911, %v3023
        %v3030 = vmul.f32 %v2934, %v3023
        %v3031 = vmul.f32 %v2912, %v3023
        %v3032 = vmul.f32 %v2935, %v3023
        %v3033 = vmul.f32 %v2913, %v3023
        %v3034 = vmul.f32 %v2936, %v3023
        %v3035 = vmul.f32 %v2914, %v3023
        %v3036 = vmul.f32 %v2937, %v3023
        %v3037 = vmul.f32 %v2915, %v3023
        %v3038 = vmul.f32 %v2938, %v3023
        %v3039 = vmul.f32 %v2916, %v3023
        %v3040 = vmul.f32 %v2939, %v3023
        %v3041 = vmul.f32 %v2917, %v3023
        %v3042 = vmul.f32 %v2940, %v3023
        %v3043 = vmul.f32 %v2918, %v3023
        %v3044 = vmul.f32 %v2941, %v3023
        %v3045 = vmul.f32 %v2919, %v3023
        %v3046 = vmul.f32 %v2942, %v3023
        %v3047 = vmul.f32 %v2920, %v3023
        %v3048 = vmul.f32 %v2943, %v3023
        %v3049 = vmul.f32 %v2921, %v3023
        %v3050 = vmul.f32 %v2944, %v3023
        %v3051 = vmul.f32 %v2922, %v3023
        %v3052 = vmul.f32 %v2945, %v3023
        %v3053 = vmul.f32 %v2923, %v3023
        %v3054 = vmul.f32 %v2946, %v3023
        %v3055 = vmul.f32 %v2924, %v3023
        %v3056 = vadd.f32 %v2988, %v3024
        %v3057 = vadd.f32 %v2989, %v3025
        %v3058 = vadd.f32 %v2990, %v3026
        %v3059 = vadd.f32 %v2991, %v3027
        %v3060 = vadd.f32 %v2992, %v3028
        %v3061 = vadd.f32 %v2993, %v3029
        %v3062 = vadd.f32 %v2994, %v3030
        %v3063 = vadd.f32 %v2995, %v3031
        %v3064 = vadd.f32 %v2996, %v3032
        %v3065 = vadd.f32 %v2997, %v3033
        %v3066 = vadd.f32 %v2998, %v3034
        %v3067 = vadd.f32 %v2999, %v3035
        %v3068 = vadd.f32 %v3000, %v3036
        %v3069 = vadd.f32 %v3001, %v3037
        %v3070 = vadd.f32 %v3002, %v3038
        %v3071 = vadd.f32 %v3003, %v3039
        %v3072 = vadd.f32 %v3004, %v3040
        %v3073 = vadd.f32 %v3005, %v3041
        %v3074 = vadd.f32 %v3006, %v3042
        %v3075 = vadd.f32 %v3007, %v3043
        %v3076 = vadd.f32 %v3008, %v3044
        %v3077 = vadd.f32 %v3009, %v3045
        %v3078 = vadd.f32 %v3010, %v3046
        %v3079 = vadd.f32 %v3011, %v3047
        %v3080 = vadd.f32 %v3012, %v3048
        %v3081 = vadd.f32 %v3013, %v3049
        %v3082 = vadd.f32 %v3014, %v3050
        %v3083 = vadd.f32 %v3015, %v3051
        %v3084 = vadd.f32 %v3016, %v3052
        %v3085 = vadd.f32 %v3017, %v3053
        %v3086 = vadd.f32 %v3018, %v3054
        %v3087 = vadd.f32 %v3019, %v3055
        %v3088 = vlaneseq
        %v3089 = vshrl.u32 %v3088, 7
        %v3090 = vsub.s32 4, %v3089
        %v3091 = vrot.slane %v597, %v3090
        %v3092 = vmul.f32 %v2932, %v3091
        %v3093 = vmul.f32 %v2910, %v3091
        %v3094 = vmul.f32 %v2933, %v3091
        %v3095 = vmul.f32 %v2911, %v3091
        %v3096 = vmul.f32 %v2934, %v3091
        %v3097 = vmul.f32 %v2912, %v3091
        %v3098 = vmul.f32 %v2935, %v3091
        %v3099 = vmul.f32 %v2913, %v3091
        %v3100 = vmul.f32 %v2936, %v3091
        %v3101 = vmul.f32 %v2914, %v3091
        %v3102 = vmul.f32 %v2937, %v3091
        %v3103 = vmul.f32 %v2915, %v3091
        %v3104 = vmul.f32 %v2938, %v3091
        %v3105 = vmul.f32 %v2916, %v3091
        %v3106 = vmul.f32 %v2939, %v3091
        %v3107 = vmul.f32 %v2917, %v3091
        %v3108 = vmul.f32 %v2940, %v3091
        %v3109 = vmul.f32 %v2918, %v3091
        %v3110 = vmul.f32 %v2941, %v3091
        %v3111 = vmul.f32 %v2919, %v3091
        %v3112 = vmul.f32 %v2942, %v3091
        %v3113 = vmul.f32 %v2920, %v3091
        %v3114 = vmul.f32 %v2943, %v3091
        %v3115 = vmul.f32 %v2921, %v3091
        %v3116 = vmul.f32 %v2944, %v3091
        %v3117 = vmul.f32 %v2922, %v3091
        %v3118 = vmul.f32 %v2945, %v3091
        %v3119 = vmul.f32 %v2923, %v3091
        %v3120 = vmul.f32 %v2946, %v3091
        %v3121 = vmul.f32 %v2924, %v3091
        %v3122 = vmul.f32 %v2947, %v3091
        %v3123 = vmul.f32 %v2925, %v3091
        %v3124 = vadd.f32 %v3056, %v3092
        %v3125 = vadd.f32 %v3057, %v3093
        %v3126 = vadd.f32 %v3058, %v3094
        %v3127 = vadd.f32 %v3059, %v3095
        %v3128 = vadd.f32 %v3060, %v3096
        %v3129 = vadd.f32 %v3061, %v3097
        %v3130 = vadd.f32 %v3062, %v3098
        %v3131 = vadd.f32 %v3063, %v3099
        %v3132 = vadd.f32 %v3064, %v3100
        %v3133 = vadd.f32 %v3065, %v3101
        %v3134 = vadd.f32 %v3066, %v3102
        %v3135 = vadd.f32 %v3067, %v3103
        %v3136 = vadd.f32 %v3068, %v3104
        %v3137 = vadd.f32 %v3069, %v3105
        %v3138 = vadd.f32 %v3070, %v3106
        %v3139 = vadd.f32 %v3071, %v3107
        %v3140 = vadd.f32 %v3072, %v3108
        %v3141 = vadd.f32 %v3073, %v3109
        %v3142 = vadd.f32 %v3074, %v3110
        %v3143 = vadd.f32 %v3075, %v3111
        %v3144 = vadd.f32 %v3076, %v3112
        %v3145 = vadd.f32 %v3077, %v3113
        %v3146 = vadd.f32 %v3078, %v3114
        %v3147 = vadd.f32 %v3079, %v3115
        %v3148 = vadd.f32 %v3080, %v3116
        %v3149 = vadd.f32 %v3081, %v3117
        %v3150 = vadd.f32 %v3082, %v3118
        %v3151 = vadd.f32 %v3083, %v3119
        %v3152 = vadd.f32 %v3084, %v3120
        %v3153 = vadd.f32 %v3085, %v3121
        %v3154 = vadd.f32 %v3086, %v3122
        %v3155 = vadd.f32 %v3087, %v3123
        %v3156 = vlaneseq
        %v3157 = vshrl.u32 %v3156, 7
        %v3158 = vsub.s32 4, %v3157
        %v3159 = vrot.slane %v598, %v3158
        %v3160 = vmul.f32 %v2933, %v3159
        %v3161 = vmul.f32 %v2911, %v3159
        %v3162 = vmul.f32 %v2934, %v3159
        %v3163 = vmul.f32 %v2912, %v3159
        %v3164 = vmul.f32 %v2935, %v3159
        %v3165 = vmul.f32 %v2913, %v3159
        %v3166 = vmul.f32 %v2936, %v3159
        %v3167 = vmul.f32 %v2914, %v3159
        %v3168 = vmul.f32 %v2937, %v3159
        %v3169 = vmul.f32 %v2915, %v3159
        %v3170 = vmul.f32 %v2938, %v3159
        %v3171 = vmul.f32 %v2916, %v3159
        %v3172 = vmul.f32 %v2939, %v3159
        %v3173 = vmul.f32 %v2917, %v3159
        %v3174 = vmul.f32 %v2940, %v3159
        %v3175 = vmul.f32 %v2918, %v3159
        %v3176 = vmul.f32 %v2941, %v3159
        %v3177 = vmul.f32 %v2919, %v3159
        %v3178 = vmul.f32 %v2942, %v3159
        %v3179 = vmul.f32 %v2920, %v3159
        %v3180 = vmul.f32 %v2943, %v3159
        %v3181 = vmul.f32 %v2921, %v3159
        %v3182 = vmul.f32 %v2944, %v3159
        %v3183 = vmul.f32 %v2922, %v3159
        %v3184 = vmul.f32 %v2945, %v3159
        %v3185 = vmul.f32 %v2923, %v3159
        %v3186 = vmul.f32 %v2946, %v3159
        %v3187 = vmul.f32 %v2924, %v3159
        %v3188 = vmul.f32 %v2947, %v3159
        %v3189 = vmul.f32 %v2925, %v3159
        %v3190 = vmul.f32 %v2948, %v3159
        %v3191 = vmul.f32 %v2926, %v3159
        %v3192 = vadd.f32 %v3124, %v3160
        %v3193 = vadd.f32 %v3125, %v3161
        %v3194 = vadd.f32 %v3126, %v3162
        %v3195 = vadd.f32 %v3127, %v3163
        %v3196 = vadd.f32 %v3128, %v3164
        %v3197 = vadd.f32 %v3129, %v3165
        %v3198 = vadd.f32 %v3130, %v3166
        %v3199 = vadd.f32 %v3131, %v3167
        %v3200 = vadd.f32 %v3132, %v3168
        %v3201 = vadd.f32 %v3133, %v3169
        %v3202 = vadd.f32 %v3134, %v3170
        %v3203 = vadd.f32 %v3135, %v3171
        %v3204 = vadd.f32 %v3136, %v3172
        %v3205 = vadd.f32 %v3137, %v3173
        %v3206 = vadd.f32 %v3138, %v3174
        %v3207 = vadd.f32 %v3139, %v3175
        %v3208 = vadd.f32 %v3140, %v3176
        %v3209 = vadd.f32 %v3141, %v3177
        %v3210 = vadd.f32 %v3142, %v3178
        %v3211 = vadd.f32 %v3143, %v3179
        %v3212 = vadd.f32 %v3144, %v3180
        %v3213 = vadd.f32 %v3145, %v3181
        %v3214 = vadd.f32 %v3146, %v3182
        %v3215 = vadd.f32 %v3147, %v3183
        %v3216 = vadd.f32 %v3148, %v3184
        %v3217 = vadd.f32 %v3149, %v3185
        %v3218 = vadd.f32 %v3150, %v3186
        %v3219 = vadd.f32 %v3151, %v3187
        %v3220 = vadd.f32 %v3152, %v3188
        %v3221 = vadd.f32 %v3153, %v3189
        %v3222 = vadd.f32 %v3154, %v3190
        %v3223 = vadd.f32 %v3155, %v3191
        %v3224 = vlaneseq
        %v3225 = vshrl.u32 %v3224, 7
        %v3226 = vsub.s32 4, %v3225
        %v3227 = vrot.slane %v599, %v3226
        %v3228 = vmul.f32 %v2934, %v3227
        %v3229 = vmul.f32 %v2912, %v3227
        %v3230 = vmul.f32 %v2935, %v3227
        %v3231 = vmul.f32 %v2913, %v3227
        %v3232 = vmul.f32 %v2936, %v3227
        %v3233 = vmul.f32 %v2914, %v3227
        %v3234 = vmul.f32 %v2937, %v3227
        %v3235 = vmul.f32 %v2915, %v3227
        %v3236 = vmul.f32 %v2938, %v3227
        %v3237 = vmul.f32 %v2916, %v3227
        %v3238 = vmul.f32 %v2939, %v3227
        %v3239 = vmul.f32 %v2917, %v3227
        %v3240 = vmul.f32 %v2940, %v3227
        %v3241 = vmul.f32 %v2918, %v3227
        %v3242 = vmul.f32 %v2941, %v3227
        %v3243 = vmul.f32 %v2919, %v3227
        %v3244 = vmul.f32 %v2942, %v3227
        %v3245 = vmul.f32 %v2920, %v3227
        %v3246 = vmul.f32 %v2943, %v3227
        %v3247 = vmul.f32 %v2921, %v3227
        %v3248 = vmul.f32 %v2944, %v3227
        %v3249 = vmul.f32 %v2922, %v3227
        %v3250 = vmul.f32 %v2945, %v3227
        %v3251 = vmul.f32 %v2923, %v3227
        %v3252 = vmul.f32 %v2946, %v3227
        %v3253 = vmul.f32 %v2924, %v3227
        %v3254 = vmul.f32 %v2947, %v3227
        %v3255 = vmul.f32 %v2925, %v3227
        %v3256 = vmul.f32 %v2948, %v3227
        %v3257 = vmul.f32 %v2926, %v3227
        %v3258 = vmul.f32 %v2949, %v3227
        %v3259 = vmul.f32 %v2927, %v3227
        %v3260 = vadd.f32 %v3192, %v3228
        %v3261 = vadd.f32 %v3193, %v3229
        %v3262 = vadd.f32 %v3194, %v3230
        %v3263 = vadd.f32 %v3195, %v3231
        %v3264 = vadd.f32 %v3196, %v3232
        %v3265 = vadd.f32 %v3197, %v3233
        %v3266 = vadd.f32 %v3198, %v3234
        %v3267 = vadd.f32 %v3199, %v3235
        %v3268 = vadd.f32 %v3200, %v3236
        %v3269 = vadd.f32 %v3201, %v3237
        %v3270 = vadd.f32 %v3202, %v3238
        %v3271 = vadd.f32 %v3203, %v3239
        %v3272 = vadd.f32 %v3204, %v3240
        %v3273 = vadd.f32 %v3205, %v3241
        %v3274 = vadd.f32 %v3206, %v3242
        %v3275 = vadd.f32 %v3207, %v3243
        %v3276 = vadd.f32 %v3208, %v3244
        %v3277 = vadd.f32 %v3209, %v3245
        %v3278 = vadd.f32 %v3210, %v3246
        %v3279 = vadd.f32 %v3211, %v3247
        %v3280 = vadd.f32 %v3212, %v3248
        %v3281 = vadd.f32 %v3213, %v3249
        %v3282 = vadd.f32 %v3214, %v3250
        %v3283 = vadd.f32 %v3215, %v3251
        %v3284 = vadd.f32 %v3216, %v3252
        %v3285 = vadd.f32 %v3217, %v3253
        %v3286 = vadd.f32 %v3218, %v3254
        %v3287 = vadd.f32 %v3219, %v3255
        %v3288 = vadd.f32 %v3220, %v3256
        %v3289 = vadd.f32 %v3221, %v3257
        %v3290 = vadd.f32 %v3222, %v3258
        %v3291 = vadd.f32 %v3223, %v3259
        %v3292 = vlaneseq
        %v3293 = vshrl.u32 %v3292, 7
        %v3294 = vsub.s32 4, %v3293
        %v3295 = vrot.slane %v600, %v3294
        %v3296 = vmul.f32 %v2935, %v3295
        %v3297 = vmul.f32 %v2913, %v3295
        %v3298 = vmul.f32 %v2936, %v3295
        %v3299 = vmul.f32 %v2914, %v3295
        %v3300 = vmul.f32 %v2937, %v3295
        %v3301 = vmul.f32 %v2915, %v3295
        %v3302 = vmul.f32 %v2938, %v3295
        %v3303 = vmul.f32 %v2916, %v3295
        %v3304 = vmul.f32 %v2939, %v3295
        %v3305 = vmul.f32 %v2917, %v3295
        %v3306 = vmul.f32 %v2940, %v3295
        %v3307 = vmul.f32 %v2918, %v3295
        %v3308 = vmul.f32 %v2941, %v3295
        %v3309 = vmul.f32 %v2919, %v3295
        %v3310 = vmul.f32 %v2942, %v3295
        %v3311 = vmul.f32 %v2920, %v3295
        %v3312 = vmul.f32 %v2943, %v3295
        %v3313 = vmul.f32 %v2921, %v3295
        %v3314 = vmul.f32 %v2944, %v3295
        %v3315 = vmul.f32 %v2922, %v3295
        %v3316 = vmul.f32 %v2945, %v3295
        %v3317 = vmul.f32 %v2923, %v3295
        %v3318 = vmul.f32 %v2946, %v3295
        %v3319 = vmul.f32 %v2924, %v3295
        %v3320 = vmul.f32 %v2947, %v3295
        %v3321 = vmul.f32 %v2925, %v3295
        %v3322 = vmul.f32 %v2948, %v3295
        %v3323 = vmul.f32 %v2926, %v3295
        %v3324 = vmul.f32 %v2949, %v3295
        %v3325 = vmul.f32 %v2927, %v3295
        %v3326 = vmul.f32 %v2950, %v3295
        %v3327 = vmul.f32 %v2928, %v3295
        %v3328 = vadd.f32 %v3260, %v3296
        %v3329 = vadd.f32 %v3261, %v3297
        %v3330 = vadd.f32 %v3262, %v3298
        %v3331 = vadd.f32 %v3263, %v3299
        %v3332 = vadd.f32 %v3264, %v3300
        %v3333 = vadd.f32 %v3265, %v3301
        %v3334 = vadd.f32 %v3266, %v3302
        %v3335 = vadd.f32 %v3267, %v3303
        %v3336 = vadd.f32 %v3268, %v3304
        %v3337 = vadd.f32 %v3269, %v3305
        %v3338 = vadd.f32 %v3270, %v3306
        %v3339 = vadd.f32 %v3271, %v3307
        %v3340 = vadd.f32 %v3272, %v3308
        %v3341 = vadd.f32 %v3273, %v3309
        %v3342 = vadd.f32 %v3274, %v3310
        %v3343 = vadd.f32 %v3275, %v3311
        %v3344 = vadd.f32 %v3276, %v3312
        %v3345 = vadd.f32 %v3277, %v3313
        %v3346 = vadd.f32 %v3278, %v3314
        %v3347 = vadd.f32 %v3279, %v3315
        %v3348 = vadd.f32 %v3280, %v3316
        %v3349 = vadd.f32 %v3281, %v3317
        %v3350 = vadd.f32 %v3282, %v3318
        %v3351 = vadd.f32 %v3283, %v3319
        %v3352 = vadd.f32 %v3284, %v3320
        %v3353 = vadd.f32 %v3285, %v3321
        %v3354 = vadd.f32 %v3286, %v3322
        %v3355 = vadd.f32 %v3287, %v3323
        %v3356 = vadd.f32 %v3288, %v3324
        %v3357 = vadd.f32 %v3289, %v3325
        %v3358 = vadd.f32 %v3290, %v3326
        %v3359 = vadd.f32 %v3291, %v3327
        %v3360 = vlaneseq
        %v3361 = vshrl.u32 %v3360, 7
        %v3362 = vsub.s32 4, %v3361
        %v3363 = vrot.slane %v601, %v3362
        %v3364 = vmul.f32 %v2936, %v3363
        %v3365 = vmul.f32 %v2914, %v3363
        %v3366 = vmul.f32 %v2937, %v3363
        %v3367 = vmul.f32 %v2915, %v3363
        %v3368 = vmul.f32 %v2938, %v3363
        %v3369 = vmul.f32 %v2916, %v3363
        %v3370 = vmul.f32 %v2939, %v3363
        %v3371 = vmul.f32 %v2917, %v3363
        %v3372 = vmul.f32 %v2940, %v3363
        %v3373 = vmul.f32 %v2918, %v3363
        %v3374 = vmul.f32 %v2941, %v3363
        %v3375 = vmul.f32 %v2919, %v3363
        %v3376 = vmul.f32 %v2942, %v3363
        %v3377 = vmul.f32 %v2920, %v3363
        %v3378 = vmul.f32 %v2943, %v3363
        %v3379 = vmul.f32 %v2921, %v3363
        %v3380 = vmul.f32 %v2944, %v3363
        %v3381 = vmul.f32 %v2922, %v3363
        %v3382 = vmul.f32 %v2945, %v3363
        %v3383 = vmul.f32 %v2923, %v3363
        %v3384 = vmul.f32 %v2946, %v3363
        %v3385 = vmul.f32 %v2924, %v3363
        %v3386 = vmul.f32 %v2947, %v3363
        %v3387 = vmul.f32 %v2925, %v3363
        %v3388 = vmul.f32 %v2948, %v3363
        %v3389 = vmul.f32 %v2926, %v3363
        %v3390 = vmul.f32 %v2949, %v3363
        %v3391 = vmul.f32 %v2927, %v3363
        %v3392 = vmul.f32 %v2950, %v3363
        %v3393 = vmul.f32 %v2928, %v3363
        %v3394 = vmul.f32 %v2951, %v3363
        %v3395 = vmul.f32 %v2929, %v3363
        %v3396 = vadd.f32 %v3328, %v3364
        %v3397 = vadd.f32 %v3329, %v3365
        %v3398 = vadd.f32 %v3330, %v3366
        %v3399 = vadd.f32 %v3331, %v3367
        %v3400 = vadd.f32 %v3332, %v3368
        %v3401 = vadd.f32 %v3333, %v3369
        %v3402 = vadd.f32 %v3334, %v3370
        %v3403 = vadd.f32 %v3335, %v3371
        %v3404 = vadd.f32 %v3336, %v3372
        %v3405 = vadd.f32 %v3337, %v3373
        %v3406 = vadd.f32 %v3338, %v3374
        %v3407 = vadd.f32 %v3339, %v3375
        %v3408 = vadd.f32 %v3340, %v3376
        %v3409 = vadd.f32 %v3341, %v3377
        %v3410 = vadd.f32 %v3342, %v3378
        %v3411 = vadd.f32 %v3343, %v3379
        %v3412 = vadd.f32 %v3344, %v3380
        %v3413 = vadd.f32 %v3345, %v3381
        %v3414 = vadd.f32 %v3346, %v3382
        %v3415 = vadd.f32 %v3347, %v3383
        %v3416 = vadd.f32 %v3348, %v3384
        %v3417 = vadd.f32 %v3349, %v3385
        %v3418 = vadd.f32 %v3350, %v3386
        %v3419 = vadd.f32 %v3351, %v3387
        %v3420 = vadd.f32 %v3352, %v3388
        %v3421 = vadd.f32 %v3353, %v3389
        %v3422 = vadd.f32 %v3354, %v3390
        %v3423 = vadd.f32 %v3355, %v3391
        %v3424 = vadd.f32 %v3356, %v3392
        %v3425 = vadd.f32 %v3357, %v3393
        %v3426 = vadd.f32 %v3358, %v3394
        %v3427 = vadd.f32 %v3359, %v3395
        %v3428 = vrot.slane %v529, 5
        %v3429 = vrot.slane %v532, 5
        %v3430 = vrot.slane %v535, 5
        %v3431 = vrot.slane %v538, 5
        %v3432 = vrot.slane %v541, 5
        %v3433 = vrot.slane %v544, 5
        %v3434 = vrot.slane %v547, 5
        %v3435 = vrot.slane %v550, 5
        %v3436 = vrot.slane %v553, 5
        %v3437 = vrot.slane %v556, 5
        %v3438 = vrot.slane %v559, 5
        %v3439 = vrot.slane %v562, 5
        %v3440 = vrot.slane %v565, 5
        %v3441 = vrot.slane %v568, 5
        %v3442 = vrot.slane %v571, 5
        %v3443 = vrot.slane %v574, 5
        %v3444 = vrot.slane %v577, 5
        %v3445 = vrot.slane %v580, 5
        %v3446 = vrot.slane %v583, 5
        %v3447 = vrot.slane %v586, 5
        %v3448 = vrot.slane %v589, 5
        %v3449 = vrot.slane %v592, 5
        %v3450 = vrot.slane %v530, 5
        %v3451 = vrot.slane %v533, 5
        %v3452 = vrot.slane %v536, 5
        %v3453 = vrot.slane %v539, 5
        %v3454 = vrot.slane %v542, 5
        %v3455 = vrot.slane %v545, 5
        %v3456 = vrot.slane %v548, 5
        %v3457 = vrot.slane %v551, 5
        %v3458 = vrot.slane %v554, 5
        %v3459 = vrot.slane %v557, 5
        %v3460 = vrot.slane %v560, 5
        %v3461 = vrot.slane %v563, 5
        %v3462 = vrot.slane %v566, 5
        %v3463 = vrot.slane %v569, 5
        %v3464 = vrot.slane %v572, 5
        %v3465 = vrot.slane %v575, 5
        %v3466 = vrot.slane %v578, 5
        %v3467 = vrot.slane %v581, 5
        %v3468 = vrot.slane %v584, 5
        %v3469 = vrot.slane %v587, 5
        %v3470 = vrot.slane %v590, 5
        %v3471 = vrot.slane %v593, 5
        %v3472 = vrot.slane %v531, 5
        %v3473 = vrot.slane %v534, 5
        %v3474 = vrot.slane %v537, 5
        %v3475 = vrot.slane %v540, 5
        %v3476 = vrot.slane %v543, 5
        %v3477 = vrot.slane %v546, 5
        %v3478 = vrot.slane %v549, 5
        %v3479 = vrot.slane %v552, 5
        %v3480 = vrot.slane %v555, 5
        %v3481 = vrot.slane %v558, 5
        %v3482 = vrot.slane %v561, 5
        %v3483 = vrot.slane %v564, 5
        %v3484 = vrot.slane %v567, 5
        %v3485 = vrot.slane %v570, 5
        %v3486 = vrot.slane %v573, 5
        %v3487 = vrot.slane %v576, 5
        %v3488 = vrot.slane %v579, 5
        %v3489 = vrot.slane %v582, 5
        %v3490 = vrot.slane %v585, 5
        %v3491 = vrot.slane %v588, 5
        %v3492 = vrot.slane %v591, 5
        %v3493 = vrot.slane %v594, 5
        %vm3494 = vcmp.lt.s32.totalorder %v1145, 3
        %v3495 = vsel %vm3494, %v3450, %v3472
        %v3496 = vsel %vm3494, %v3451, %v3473
        %v3497 = vsel %vm3494, %v3452, %v3474
        %v3498 = vsel %vm3494, %v3453, %v3475
        %v3499 = vsel %vm3494, %v3454, %v3476
        %v3500 = vsel %vm3494, %v3455, %v3477
        %v3501 = vsel %vm3494, %v3456, %v3478
        %v3502 = vsel %vm3494, %v3457, %v3479
        %v3503 = vsel %vm3494, %v3458, %v3480
        %v3504 = vsel %vm3494, %v3459, %v3481
        %v3505 = vsel %vm3494, %v3460, %v3482
        %v3506 = vsel %vm3494, %v3461, %v3483
        %v3507 = vsel %vm3494, %v3462, %v3484
        %v3508 = vsel %vm3494, %v3463, %v3485
        %v3509 = vsel %vm3494, %v3464, %v3486
        %v3510 = vsel %vm3494, %v3465, %v3487
        %v3511 = vsel %vm3494, %v3466, %v3488
        %v3512 = vsel %vm3494, %v3467, %v3489
        %v3513 = vsel %vm3494, %v3468, %v3490
        %v3514 = vsel %vm3494, %v3469, %v3491
        %v3515 = vsel %vm3494, %v3470, %v3492
        %v3516 = vsel %vm3494, %v3471, %v3493
        %v3517 = vsel %vm3494, %v3428, %v3450
        %v3518 = vsel %vm3494, %v3429, %v3451
        %v3519 = vsel %vm3494, %v3430, %v3452
        %v3520 = vsel %vm3494, %v3431, %v3453
        %v3521 = vsel %vm3494, %v3432, %v3454
        %v3522 = vsel %vm3494, %v3433, %v3455
        %v3523 = vsel %vm3494, %v3434, %v3456
        %v3524 = vsel %vm3494, %v3435, %v3457
        %v3525 = vsel %vm3494, %v3436, %v3458
        %v3526 = vsel %vm3494, %v3437, %v3459
        %v3527 = vsel %vm3494, %v3438, %v3460
        %v3528 = vsel %vm3494, %v3439, %v3461
        %v3529 = vsel %vm3494, %v3440, %v3462
        %v3530 = vsel %vm3494, %v3441, %v3463
        %v3531 = vsel %vm3494, %v3442, %v3464
        %v3532 = vsel %vm3494, %v3443, %v3465
        %v3533 = vsel %vm3494, %v3444, %v3466
        %v3534 = vsel %vm3494, %v3445, %v3467
        %v3535 = vsel %vm3494, %v3446, %v3468
        %v3536 = vsel %vm3494, %v3447, %v3469
        %v3537 = vsel %vm3494, %v3448, %v3470
        %v3538 = vsel %vm3494, %v3449, %v3471
        %v3539 = vlaneseq
        %v3540 = vshrl.u32 %v3539, 7
        %v3541 = vsub.s32 5, %v3540
        %v3542 = vrot.slane %v595, %v3541
        %v3543 = vmul.f32 %v3517, %v3542
        %v3544 = vmul.f32 %v3495, %v3542
        %v3545 = vmul.f32 %v3518, %v3542
        %v3546 = vmul.f32 %v3496, %v3542
        %v3547 = vmul.f32 %v3519, %v3542
        %v3548 = vmul.f32 %v3497, %v3542
        %v3549 = vmul.f32 %v3520, %v3542
        %v3550 = vmul.f32 %v3498, %v3542
        %v3551 = vmul.f32 %v3521, %v3542
        %v3552 = vmul.f32 %v3499, %v3542
        %v3553 = vmul.f32 %v3522, %v3542
        %v3554 = vmul.f32 %v3500, %v3542
        %v3555 = vmul.f32 %v3523, %v3542
        %v3556 = vmul.f32 %v3501, %v3542
        %v3557 = vmul.f32 %v3524, %v3542
        %v3558 = vmul.f32 %v3502, %v3542
        %v3559 = vmul.f32 %v3525, %v3542
        %v3560 = vmul.f32 %v3503, %v3542
        %v3561 = vmul.f32 %v3526, %v3542
        %v3562 = vmul.f32 %v3504, %v3542
        %v3563 = vmul.f32 %v3527, %v3542
        %v3564 = vmul.f32 %v3505, %v3542
        %v3565 = vmul.f32 %v3528, %v3542
        %v3566 = vmul.f32 %v3506, %v3542
        %v3567 = vmul.f32 %v3529, %v3542
        %v3568 = vmul.f32 %v3507, %v3542
        %v3569 = vmul.f32 %v3530, %v3542
        %v3570 = vmul.f32 %v3508, %v3542
        %v3571 = vmul.f32 %v3531, %v3542
        %v3572 = vmul.f32 %v3509, %v3542
        %v3573 = vmul.f32 %v3532, %v3542
        %v3574 = vmul.f32 %v3510, %v3542
        %v3575 = vadd.f32 %v3396, %v3543
        %v3576 = vadd.f32 %v3397, %v3544
        %v3577 = vadd.f32 %v3398, %v3545
        %v3578 = vadd.f32 %v3399, %v3546
        %v3579 = vadd.f32 %v3400, %v3547
        %v3580 = vadd.f32 %v3401, %v3548
        %v3581 = vadd.f32 %v3402, %v3549
        %v3582 = vadd.f32 %v3403, %v3550
        %v3583 = vadd.f32 %v3404, %v3551
        %v3584 = vadd.f32 %v3405, %v3552
        %v3585 = vadd.f32 %v3406, %v3553
        %v3586 = vadd.f32 %v3407, %v3554
        %v3587 = vadd.f32 %v3408, %v3555
        %v3588 = vadd.f32 %v3409, %v3556
        %v3589 = vadd.f32 %v3410, %v3557
        %v3590 = vadd.f32 %v3411, %v3558
        %v3591 = vadd.f32 %v3412, %v3559
        %v3592 = vadd.f32 %v3413, %v3560
        %v3593 = vadd.f32 %v3414, %v3561
        %v3594 = vadd.f32 %v3415, %v3562
        %v3595 = vadd.f32 %v3416, %v3563
        %v3596 = vadd.f32 %v3417, %v3564
        %v3597 = vadd.f32 %v3418, %v3565
        %v3598 = vadd.f32 %v3419, %v3566
        %v3599 = vadd.f32 %v3420, %v3567
        %v3600 = vadd.f32 %v3421, %v3568
        %v3601 = vadd.f32 %v3422, %v3569
        %v3602 = vadd.f32 %v3423, %v3570
        %v3603 = vadd.f32 %v3424, %v3571
        %v3604 = vadd.f32 %v3425, %v3572
        %v3605 = vadd.f32 %v3426, %v3573
        %v3606 = vadd.f32 %v3427, %v3574
        %v3607 = vlaneseq
        %v3608 = vshrl.u32 %v3607, 7
        %v3609 = vsub.s32 5, %v3608
        %v3610 = vrot.slane %v596, %v3609
        %v3611 = vmul.f32 %v3518, %v3610
        %v3612 = vmul.f32 %v3496, %v3610
        %v3613 = vmul.f32 %v3519, %v3610
        %v3614 = vmul.f32 %v3497, %v3610
        %v3615 = vmul.f32 %v3520, %v3610
        %v3616 = vmul.f32 %v3498, %v3610
        %v3617 = vmul.f32 %v3521, %v3610
        %v3618 = vmul.f32 %v3499, %v3610
        %v3619 = vmul.f32 %v3522, %v3610
        %v3620 = vmul.f32 %v3500, %v3610
        %v3621 = vmul.f32 %v3523, %v3610
        %v3622 = vmul.f32 %v3501, %v3610
        %v3623 = vmul.f32 %v3524, %v3610
        %v3624 = vmul.f32 %v3502, %v3610
        %v3625 = vmul.f32 %v3525, %v3610
        %v3626 = vmul.f32 %v3503, %v3610
        %v3627 = vmul.f32 %v3526, %v3610
        %v3628 = vmul.f32 %v3504, %v3610
        %v3629 = vmul.f32 %v3527, %v3610
        %v3630 = vmul.f32 %v3505, %v3610
        %v3631 = vmul.f32 %v3528, %v3610
        %v3632 = vmul.f32 %v3506, %v3610
        %v3633 = vmul.f32 %v3529, %v3610
        %v3634 = vmul.f32 %v3507, %v3610
        %v3635 = vmul.f32 %v3530, %v3610
        %v3636 = vmul.f32 %v3508, %v3610
        %v3637 = vmul.f32 %v3531, %v3610
        %v3638 = vmul.f32 %v3509, %v3610
        %v3639 = vmul.f32 %v3532, %v3610
        %v3640 = vmul.f32 %v3510, %v3610
        %v3641 = vmul.f32 %v3533, %v3610
        %v3642 = vmul.f32 %v3511, %v3610
        %v3643 = vadd.f32 %v3575, %v3611
        %v3644 = vadd.f32 %v3576, %v3612
        %v3645 = vadd.f32 %v3577, %v3613
        %v3646 = vadd.f32 %v3578, %v3614
        %v3647 = vadd.f32 %v3579, %v3615
        %v3648 = vadd.f32 %v3580, %v3616
        %v3649 = vadd.f32 %v3581, %v3617
        %v3650 = vadd.f32 %v3582, %v3618
        %v3651 = vadd.f32 %v3583, %v3619
        %v3652 = vadd.f32 %v3584, %v3620
        %v3653 = vadd.f32 %v3585, %v3621
        %v3654 = vadd.f32 %v3586, %v3622
        %v3655 = vadd.f32 %v3587, %v3623
        %v3656 = vadd.f32 %v3588, %v3624
        %v3657 = vadd.f32 %v3589, %v3625
        %v3658 = vadd.f32 %v3590, %v3626
        %v3659 = vadd.f32 %v3591, %v3627
        %v3660 = vadd.f32 %v3592, %v3628
        %v3661 = vadd.f32 %v3593, %v3629
        %v3662 = vadd.f32 %v3594, %v3630
        %v3663 = vadd.f32 %v3595, %v3631
        %v3664 = vadd.f32 %v3596, %v3632
        %v3665 = vadd.f32 %v3597, %v3633
        %v3666 = vadd.f32 %v3598, %v3634
        %v3667 = vadd.f32 %v3599, %v3635
        %v3668 = vadd.f32 %v3600, %v3636
        %v3669 = vadd.f32 %v3601, %v3637
        %v3670 = vadd.f32 %v3602, %v3638
        %v3671 = vadd.f32 %v3603, %v3639
        %v3672 = vadd.f32 %v3604, %v3640
        %v3673 = vadd.f32 %v3605, %v3641
        %v3674 = vadd.f32 %v3606, %v3642
        %v3675 = vlaneseq
        %v3676 = vshrl.u32 %v3675, 7
        %v3677 = vsub.s32 5, %v3676
        %v3678 = vrot.slane %v597, %v3677
        %v3679 = vmul.f32 %v3519, %v3678
        %v3680 = vmul.f32 %v3497, %v3678
        %v3681 = vmul.f32 %v3520, %v3678
        %v3682 = vmul.f32 %v3498, %v3678
        %v3683 = vmul.f32 %v3521, %v3678
        %v3684 = vmul.f32 %v3499, %v3678
        %v3685 = vmul.f32 %v3522, %v3678
        %v3686 = vmul.f32 %v3500, %v3678
        %v3687 = vmul.f32 %v3523, %v3678
        %v3688 = vmul.f32 %v3501, %v3678
        %v3689 = vmul.f32 %v3524, %v3678
        %v3690 = vmul.f32 %v3502, %v3678
        %v3691 = vmul.f32 %v3525, %v3678
        %v3692 = vmul.f32 %v3503, %v3678
        %v3693 = vmul.f32 %v3526, %v3678
        %v3694 = vmul.f32 %v3504, %v3678
        %v3695 = vmul.f32 %v3527, %v3678
        %v3696 = vmul.f32 %v3505, %v3678
        %v3697 = vmul.f32 %v3528, %v3678
        %v3698 = vmul.f32 %v3506, %v3678
        %v3699 = vmul.f32 %v3529, %v3678
        %v3700 = vmul.f32 %v3507, %v3678
        %v3701 = vmul.f32 %v3530, %v3678
        %v3702 = vmul.f32 %v3508, %v3678
        %v3703 = vmul.f32 %v3531, %v3678
        %v3704 = vmul.f32 %v3509, %v3678
        %v3705 = vmul.f32 %v3532, %v3678
        %v3706 = vmul.f32 %v3510, %v3678
        %v3707 = vmul.f32 %v3533, %v3678
        %v3708 = vmul.f32 %v3511, %v3678
        %v3709 = vmul.f32 %v3534, %v3678
        %v3710 = vmul.f32 %v3512, %v3678
        %v3711 = vadd.f32 %v3643, %v3679
        %v3712 = vadd.f32 %v3644, %v3680
        %v3713 = vadd.f32 %v3645, %v3681
        %v3714 = vadd.f32 %v3646, %v3682
        %v3715 = vadd.f32 %v3647, %v3683
        %v3716 = vadd.f32 %v3648, %v3684
        %v3717 = vadd.f32 %v3649, %v3685
        %v3718 = vadd.f32 %v3650, %v3686
        %v3719 = vadd.f32 %v3651, %v3687
        %v3720 = vadd.f32 %v3652, %v3688
        %v3721 = vadd.f32 %v3653, %v3689
        %v3722 = vadd.f32 %v3654, %v3690
        %v3723 = vadd.f32 %v3655, %v3691
        %v3724 = vadd.f32 %v3656, %v3692
        %v3725 = vadd.f32 %v3657, %v3693
        %v3726 = vadd.f32 %v3658, %v3694
        %v3727 = vadd.f32 %v3659, %v3695
        %v3728 = vadd.f32 %v3660, %v3696
        %v3729 = vadd.f32 %v3661, %v3697
        %v3730 = vadd.f32 %v3662, %v3698
        %v3731 = vadd.f32 %v3663, %v3699
        %v3732 = vadd.f32 %v3664, %v3700
        %v3733 = vadd.f32 %v3665, %v3701
        %v3734 = vadd.f32 %v3666, %v3702
        %v3735 = vadd.f32 %v3667, %v3703
        %v3736 = vadd.f32 %v3668, %v3704
        %v3737 = vadd.f32 %v3669, %v3705
        %v3738 = vadd.f32 %v3670, %v3706
        %v3739 = vadd.f32 %v3671, %v3707
        %v3740 = vadd.f32 %v3672, %v3708
        %v3741 = vadd.f32 %v3673, %v3709
        %v3742 = vadd.f32 %v3674, %v3710
        %v3743 = vlaneseq
        %v3744 = vshrl.u32 %v3743, 7
        %v3745 = vsub.s32 5, %v3744
        %v3746 = vrot.slane %v598, %v3745
        %v3747 = vmul.f32 %v3520, %v3746
        %v3748 = vmul.f32 %v3498, %v3746
        %v3749 = vmul.f32 %v3521, %v3746
        %v3750 = vmul.f32 %v3499, %v3746
        %v3751 = vmul.f32 %v3522, %v3746
        %v3752 = vmul.f32 %v3500, %v3746
        %v3753 = vmul.f32 %v3523, %v3746
        %v3754 = vmul.f32 %v3501, %v3746
        %v3755 = vmul.f32 %v3524, %v3746
        %v3756 = vmul.f32 %v3502, %v3746
        %v3757 = vmul.f32 %v3525, %v3746
        %v3758 = vmul.f32 %v3503, %v3746
        %v3759 = vmul.f32 %v3526, %v3746
        %v3760 = vmul.f32 %v3504, %v3746
        %v3761 = vmul.f32 %v3527, %v3746
        %v3762 = vmul.f32 %v3505, %v3746
        %v3763 = vmul.f32 %v3528, %v3746
        %v3764 = vmul.f32 %v3506, %v3746
        %v3765 = vmul.f32 %v3529, %v3746
        %v3766 = vmul.f32 %v3507, %v3746
        %v3767 = vmul.f32 %v3530, %v3746
        %v3768 = vmul.f32 %v3508, %v3746
        %v3769 = vmul.f32 %v3531, %v3746
        %v3770 = vmul.f32 %v3509, %v3746
        %v3771 = vmul.f32 %v3532, %v3746
        %v3772 = vmul.f32 %v3510, %v3746
        %v3773 = vmul.f32 %v3533, %v3746
        %v3774 = vmul.f32 %v3511, %v3746
        %v3775 = vmul.f32 %v3534, %v3746
        %v3776 = vmul.f32 %v3512, %v3746
        %v3777 = vmul.f32 %v3535, %v3746
        %v3778 = vmul.f32 %v3513, %v3746
        %v3779 = vadd.f32 %v3711, %v3747
        %v3780 = vadd.f32 %v3712, %v3748
        %v3781 = vadd.f32 %v3713, %v3749
        %v3782 = vadd.f32 %v3714, %v3750
        %v3783 = vadd.f32 %v3715, %v3751
        %v3784 = vadd.f32 %v3716, %v3752
        %v3785 = vadd.f32 %v3717, %v3753
        %v3786 = vadd.f32 %v3718, %v3754
        %v3787 = vadd.f32 %v3719, %v3755
        %v3788 = vadd.f32 %v3720, %v3756
        %v3789 = vadd.f32 %v3721, %v3757
        %v3790 = vadd.f32 %v3722, %v3758
        %v3791 = vadd.f32 %v3723, %v3759
        %v3792 = vadd.f32 %v3724, %v3760
        %v3793 = vadd.f32 %v3725, %v3761
        %v3794 = vadd.f32 %v3726, %v3762
        %v3795 = vadd.f32 %v3727, %v3763
        %v3796 = vadd.f32 %v3728, %v3764
        %v3797 = vadd.f32 %v3729, %v3765
        %v3798 = vadd.f32 %v3730, %v3766
        %v3799 = vadd.f32 %v3731, %v3767
        %v3800 = vadd.f32 %v3732, %v3768
        %v3801 = vadd.f32 %v3733, %v3769
        %v3802 = vadd.f32 %v3734, %v3770
        %v3803 = vadd.f32 %v3735, %v3771
        %v3804 = vadd.f32 %v3736, %v3772
        %v3805 = vadd.f32 %v3737, %v3773
        %v3806 = vadd.f32 %v3738, %v3774
        %v3807 = vadd.f32 %v3739, %v3775
        %v3808 = vadd.f32 %v3740, %v3776
        %v3809 = vadd.f32 %v3741, %v3777
        %v3810 = vadd.f32 %v3742, %v3778
        %v3811 = vlaneseq
        %v3812 = vshrl.u32 %v3811, 7
        %v3813 = vsub.s32 5, %v3812
        %v3814 = vrot.slane %v599, %v3813
        %v3815 = vmul.f32 %v3521, %v3814
        %v3816 = vmul.f32 %v3499, %v3814
        %v3817 = vmul.f32 %v3522, %v3814
        %v3818 = vmul.f32 %v3500, %v3814
        %v3819 = vmul.f32 %v3523, %v3814
        %v3820 = vmul.f32 %v3501, %v3814
        %v3821 = vmul.f32 %v3524, %v3814
        %v3822 = vmul.f32 %v3502, %v3814
        %v3823 = vmul.f32 %v3525, %v3814
        %v3824 = vmul.f32 %v3503, %v3814
        %v3825 = vmul.f32 %v3526, %v3814
        %v3826 = vmul.f32 %v3504, %v3814
        %v3827 = vmul.f32 %v3527, %v3814
        %v3828 = vmul.f32 %v3505, %v3814
        %v3829 = vmul.f32 %v3528, %v3814
        %v3830 = vmul.f32 %v3506, %v3814
        %v3831 = vmul.f32 %v3529, %v3814
        %v3832 = vmul.f32 %v3507, %v3814
        %v3833 = vmul.f32 %v3530, %v3814
        %v3834 = vmul.f32 %v3508, %v3814
        %v3835 = vmul.f32 %v3531, %v3814
        %v3836 = vmul.f32 %v3509, %v3814
        %v3837 = vmul.f32 %v3532, %v3814
        %v3838 = vmul.f32 %v3510, %v3814
        %v3839 = vmul.f32 %v3533, %v3814
        %v3840 = vmul.f32 %v3511, %v3814
        %v3841 = vmul.f32 %v3534, %v3814
        %v3842 = vmul.f32 %v3512, %v3814
        %v3843 = vmul.f32 %v3535, %v3814
        %v3844 = vmul.f32 %v3513, %v3814
        %v3845 = vmul.f32 %v3536, %v3814
        %v3846 = vmul.f32 %v3514, %v3814
        %v3847 = vadd.f32 %v3779, %v3815
        %v3848 = vadd.f32 %v3780, %v3816
        %v3849 = vadd.f32 %v3781, %v3817
        %v3850 = vadd.f32 %v3782, %v3818
        %v3851 = vadd.f32 %v3783, %v3819
        %v3852 = vadd.f32 %v3784, %v3820
        %v3853 = vadd.f32 %v3785, %v3821
        %v3854 = vadd.f32 %v3786, %v3822
        %v3855 = vadd.f32 %v3787, %v3823
        %v3856 = vadd.f32 %v3788, %v3824
        %v3857 = vadd.f32 %v3789, %v3825
        %v3858 = vadd.f32 %v3790, %v3826
        %v3859 = vadd.f32 %v3791, %v3827
        %v3860 = vadd.f32 %v3792, %v3828
        %v3861 = vadd.f32 %v3793, %v3829
        %v3862 = vadd.f32 %v3794, %v3830
        %v3863 = vadd.f32 %v3795, %v3831
        %v3864 = vadd.f32 %v3796, %v3832
        %v3865 = vadd.f32 %v3797, %v3833
        %v3866 = vadd.f32 %v3798, %v3834
        %v3867 = vadd.f32 %v3799, %v3835
        %v3868 = vadd.f32 %v3800, %v3836
        %v3869 = vadd.f32 %v3801, %v3837
        %v3870 = vadd.f32 %v3802, %v3838
        %v3871 = vadd.f32 %v3803, %v3839
        %v3872 = vadd.f32 %v3804, %v3840
        %v3873 = vadd.f32 %v3805, %v3841
        %v3874 = vadd.f32 %v3806, %v3842
        %v3875 = vadd.f32 %v3807, %v3843
        %v3876 = vadd.f32 %v3808, %v3844
        %v3877 = vadd.f32 %v3809, %v3845
        %v3878 = vadd.f32 %v3810, %v3846
        %v3879 = vlaneseq
        %v3880 = vshrl.u32 %v3879, 7
        %v3881 = vsub.s32 5, %v3880
        %v3882 = vrot.slane %v600, %v3881
        %v3883 = vmul.f32 %v3522, %v3882
        %v3884 = vmul.f32 %v3500, %v3882
        %v3885 = vmul.f32 %v3523, %v3882
        %v3886 = vmul.f32 %v3501, %v3882
        %v3887 = vmul.f32 %v3524, %v3882
        %v3888 = vmul.f32 %v3502, %v3882
        %v3889 = vmul.f32 %v3525, %v3882
        %v3890 = vmul.f32 %v3503, %v3882
        %v3891 = vmul.f32 %v3526, %v3882
        %v3892 = vmul.f32 %v3504, %v3882
        %v3893 = vmul.f32 %v3527, %v3882
        %v3894 = vmul.f32 %v3505, %v3882
        %v3895 = vmul.f32 %v3528, %v3882
        %v3896 = vmul.f32 %v3506, %v3882
        %v3897 = vmul.f32 %v3529, %v3882
        %v3898 = vmul.f32 %v3507, %v3882
        %v3899 = vmul.f32 %v3530, %v3882
        %v3900 = vmul.f32 %v3508, %v3882
        %v3901 = vmul.f32 %v3531, %v3882
        %v3902 = vmul.f32 %v3509, %v3882
        %v3903 = vmul.f32 %v3532, %v3882
        %v3904 = vmul.f32 %v3510, %v3882
        %v3905 = vmul.f32 %v3533, %v3882
        %v3906 = vmul.f32 %v3511, %v3882
        %v3907 = vmul.f32 %v3534, %v3882
        %v3908 = vmul.f32 %v3512, %v3882
        %v3909 = vmul.f32 %v3535, %v3882
        %v3910 = vmul.f32 %v3513, %v3882
        %v3911 = vmul.f32 %v3536, %v3882
        %v3912 = vmul.f32 %v3514, %v3882
        %v3913 = vmul.f32 %v3537, %v3882
        %v3914 = vmul.f32 %v3515, %v3882
        %v3915 = vadd.f32 %v3847, %v3883
        %v3916 = vadd.f32 %v3848, %v3884
        %v3917 = vadd.f32 %v3849, %v3885
        %v3918 = vadd.f32 %v3850, %v3886
        %v3919 = vadd.f32 %v3851, %v3887
        %v3920 = vadd.f32 %v3852, %v3888
        %v3921 = vadd.f32 %v3853, %v3889
        %v3922 = vadd.f32 %v3854, %v3890
        %v3923 = vadd.f32 %v3855, %v3891
        %v3924 = vadd.f32 %v3856, %v3892
        %v3925 = vadd.f32 %v3857, %v3893
        %v3926 = vadd.f32 %v3858, %v3894
        %v3927 = vadd.f32 %v3859, %v3895
        %v3928 = vadd.f32 %v3860, %v3896
        %v3929 = vadd.f32 %v3861, %v3897
        %v3930 = vadd.f32 %v3862, %v3898
        %v3931 = vadd.f32 %v3863, %v3899
        %v3932 = vadd.f32 %v3864, %v3900
        %v3933 = vadd.f32 %v3865, %v3901
        %v3934 = vadd.f32 %v3866, %v3902
        %v3935 = vadd.f32 %v3867, %v3903
        %v3936 = vadd.f32 %v3868, %v3904
        %v3937 = vadd.f32 %v3869, %v3905
        %v3938 = vadd.f32 %v3870, %v3906
        %v3939 = vadd.f32 %v3871, %v3907
        %v3940 = vadd.f32 %v3872, %v3908
        %v3941 = vadd.f32 %v3873, %v3909
        %v3942 = vadd.f32 %v3874, %v3910
        %v3943 = vadd.f32 %v3875, %v3911
        %v3944 = vadd.f32 %v3876, %v3912
        %v3945 = vadd.f32 %v3877, %v3913
        %v3946 = vadd.f32 %v3878, %v3914
        %v3947 = vlaneseq
        %v3948 = vshrl.u32 %v3947, 7
        %v3949 = vsub.s32 5, %v3948
        %v3950 = vrot.slane %v601, %v3949
        %v3951 = vmul.f32 %v3523, %v3950
        %v3952 = vmul.f32 %v3501, %v3950
        %v3953 = vmul.f32 %v3524, %v3950
        %v3954 = vmul.f32 %v3502, %v3950
        %v3955 = vmul.f32 %v3525, %v3950
        %v3956 = vmul.f32 %v3503, %v3950
        %v3957 = vmul.f32 %v3526, %v3950
        %v3958 = vmul.f32 %v3504, %v3950
        %v3959 = vmul.f32 %v3527, %v3950
        %v3960 = vmul.f32 %v3505, %v3950
        %v3961 = vmul.f32 %v3528, %v3950
        %v3962 = vmul.f32 %v3506, %v3950
        %v3963 = vmul.f32 %v3529, %v3950
        %v3964 = vmul.f32 %v3507, %v3950
        %v3965 = vmul.f32 %v3530, %v3950
        %v3966 = vmul.f32 %v3508, %v3950
        %v3967 = vmul.f32 %v3531, %v3950
        %v3968 = vmul.f32 %v3509, %v3950
        %v3969 = vmul.f32 %v3532, %v3950
        %v3970 = vmul.f32 %v3510, %v3950
        %v3971 = vmul.f32 %v3533, %v3950
        %v3972 = vmul.f32 %v3511, %v3950
        %v3973 = vmul.f32 %v3534, %v3950
        %v3974 = vmul.f32 %v3512, %v3950
        %v3975 = vmul.f32 %v3535, %v3950
        %v3976 = vmul.f32 %v3513, %v3950
        %v3977 = vmul.f32 %v3536, %v3950
        %v3978 = vmul.f32 %v3514, %v3950
        %v3979 = vmul.f32 %v3537, %v3950
        %v3980 = vmul.f32 %v3515, %v3950
        %v3981 = vmul.f32 %v3538, %v3950
        %v3982 = vmul.f32 %v3516, %v3950
        %v3983 = vadd.f32 %v3915, %v3951
        %v3984 = vadd.f32 %v3916, %v3952
        %v3985 = vadd.f32 %v3917, %v3953
        %v3986 = vadd.f32 %v3918, %v3954
        %v3987 = vadd.f32 %v3919, %v3955
        %v3988 = vadd.f32 %v3920, %v3956
        %v3989 = vadd.f32 %v3921, %v3957
        %v3990 = vadd.f32 %v3922, %v3958
        %v3991 = vadd.f32 %v3923, %v3959
        %v3992 = vadd.f32 %v3924, %v3960
        %v3993 = vadd.f32 %v3925, %v3961
        %v3994 = vadd.f32 %v3926, %v3962
        %v3995 = vadd.f32 %v3927, %v3963
        %v3996 = vadd.f32 %v3928, %v3964
        %v3997 = vadd.f32 %v3929, %v3965
        %v3998 = vadd.f32 %v3930, %v3966
        %v3999 = vadd.f32 %v3931, %v3967
        %v4000 = vadd.f32 %v3932, %v3968
        %v4001 = vadd.f32 %v3933, %v3969
        %v4002 = vadd.f32 %v3934, %v3970
        %v4003 = vadd.f32 %v3935, %v3971
        %v4004 = vadd.f32 %v3936, %v3972
        %v4005 = vadd.f32 %v3937, %v3973
        %v4006 = vadd.f32 %v3938, %v3974
        %v4007 = vadd.f32 %v3939, %v3975
        %v4008 = vadd.f32 %v3940, %v3976
        %v4009 = vadd.f32 %v3941, %v3977
        %v4010 = vadd.f32 %v3942, %v3978
        %v4011 = vadd.f32 %v3943, %v3979
        %v4012 = vadd.f32 %v3944, %v3980
        %v4013 = vadd.f32 %v3945, %v3981
        %v4014 = vadd.f32 %v3946, %v3982
        %v4015 = vrot.slane %v529, 6
        %v4016 = vrot.slane %v532, 6
        %v4017 = vrot.slane %v535, 6
        %v4018 = vrot.slane %v538, 6
        %v4019 = vrot.slane %v541, 6
        %v4020 = vrot.slane %v544, 6
        %v4021 = vrot.slane %v547, 6
        %v4022 = vrot.slane %v550, 6
        %v4023 = vrot.slane %v553, 6
        %v4024 = vrot.slane %v556, 6
        %v4025 = vrot.slane %v559, 6
        %v4026 = vrot.slane %v562, 6
        %v4027 = vrot.slane %v565, 6
        %v4028 = vrot.slane %v568, 6
        %v4029 = vrot.slane %v571, 6
        %v4030 = vrot.slane %v574, 6
        %v4031 = vrot.slane %v577, 6
        %v4032 = vrot.slane %v580, 6
        %v4033 = vrot.slane %v583, 6
        %v4034 = vrot.slane %v586, 6
        %v4035 = vrot.slane %v589, 6
        %v4036 = vrot.slane %v592, 6
        %v4037 = vrot.slane %v530, 6
        %v4038 = vrot.slane %v533, 6
        %v4039 = vrot.slane %v536, 6
        %v4040 = vrot.slane %v539, 6
        %v4041 = vrot.slane %v542, 6
        %v4042 = vrot.slane %v545, 6
        %v4043 = vrot.slane %v548, 6
        %v4044 = vrot.slane %v551, 6
        %v4045 = vrot.slane %v554, 6
        %v4046 = vrot.slane %v557, 6
        %v4047 = vrot.slane %v560, 6
        %v4048 = vrot.slane %v563, 6
        %v4049 = vrot.slane %v566, 6
        %v4050 = vrot.slane %v569, 6
        %v4051 = vrot.slane %v572, 6
        %v4052 = vrot.slane %v575, 6
        %v4053 = vrot.slane %v578, 6
        %v4054 = vrot.slane %v581, 6
        %v4055 = vrot.slane %v584, 6
        %v4056 = vrot.slane %v587, 6
        %v4057 = vrot.slane %v590, 6
        %v4058 = vrot.slane %v593, 6
        %v4059 = vrot.slane %v531, 6
        %v4060 = vrot.slane %v534, 6
        %v4061 = vrot.slane %v537, 6
        %v4062 = vrot.slane %v540, 6
        %v4063 = vrot.slane %v543, 6
        %v4064 = vrot.slane %v546, 6
        %v4065 = vrot.slane %v549, 6
        %v4066 = vrot.slane %v552, 6
        %v4067 = vrot.slane %v555, 6
        %v4068 = vrot.slane %v558, 6
        %v4069 = vrot.slane %v561, 6
        %v4070 = vrot.slane %v564, 6
        %v4071 = vrot.slane %v567, 6
        %v4072 = vrot.slane %v570, 6
        %v4073 = vrot.slane %v573, 6
        %v4074 = vrot.slane %v576, 6
        %v4075 = vrot.slane %v579, 6
        %v4076 = vrot.slane %v582, 6
        %v4077 = vrot.slane %v585, 6
        %v4078 = vrot.slane %v588, 6
        %v4079 = vrot.slane %v591, 6
        %v4080 = vrot.slane %v594, 6
        %vm4081 = vcmp.lt.s32.totalorder %v1145, 2
        %v4082 = vsel %vm4081, %v4037, %v4059
        %v4083 = vsel %vm4081, %v4038, %v4060
        %v4084 = vsel %vm4081, %v4039, %v4061
        %v4085 = vsel %vm4081, %v4040, %v4062
        %v4086 = vsel %vm4081, %v4041, %v4063
        %v4087 = vsel %vm4081, %v4042, %v4064
        %v4088 = vsel %vm4081, %v4043, %v4065
        %v4089 = vsel %vm4081, %v4044, %v4066
        %v4090 = vsel %vm4081, %v4045, %v4067
        %v4091 = vsel %vm4081, %v4046, %v4068
        %v4092 = vsel %vm4081, %v4047, %v4069
        %v4093 = vsel %vm4081, %v4048, %v4070
        %v4094 = vsel %vm4081, %v4049, %v4071
        %v4095 = vsel %vm4081, %v4050, %v4072
        %v4096 = vsel %vm4081, %v4051, %v4073
        %v4097 = vsel %vm4081, %v4052, %v4074
        %v4098 = vsel %vm4081, %v4053, %v4075
        %v4099 = vsel %vm4081, %v4054, %v4076
        %v4100 = vsel %vm4081, %v4055, %v4077
        %v4101 = vsel %vm4081, %v4056, %v4078
        %v4102 = vsel %vm4081, %v4057, %v4079
        %v4103 = vsel %vm4081, %v4058, %v4080
        %v4104 = vsel %vm4081, %v4015, %v4037
        %v4105 = vsel %vm4081, %v4016, %v4038
        %v4106 = vsel %vm4081, %v4017, %v4039
        %v4107 = vsel %vm4081, %v4018, %v4040
        %v4108 = vsel %vm4081, %v4019, %v4041
        %v4109 = vsel %vm4081, %v4020, %v4042
        %v4110 = vsel %vm4081, %v4021, %v4043
        %v4111 = vsel %vm4081, %v4022, %v4044
        %v4112 = vsel %vm4081, %v4023, %v4045
        %v4113 = vsel %vm4081, %v4024, %v4046
        %v4114 = vsel %vm4081, %v4025, %v4047
        %v4115 = vsel %vm4081, %v4026, %v4048
        %v4116 = vsel %vm4081, %v4027, %v4049
        %v4117 = vsel %vm4081, %v4028, %v4050
        %v4118 = vsel %vm4081, %v4029, %v4051
        %v4119 = vsel %vm4081, %v4030, %v4052
        %v4120 = vsel %vm4081, %v4031, %v4053
        %v4121 = vsel %vm4081, %v4032, %v4054
        %v4122 = vsel %vm4081, %v4033, %v4055
        %v4123 = vsel %vm4081, %v4034, %v4056
        %v4124 = vsel %vm4081, %v4035, %v4057
        %v4125 = vsel %vm4081, %v4036, %v4058
        %v4126 = vlaneseq
        %v4127 = vshrl.u32 %v4126, 7
        %v4128 = vsub.s32 6, %v4127
        %v4129 = vrot.slane %v595, %v4128
        %v4130 = vmul.f32 %v4104, %v4129
        %v4131 = vmul.f32 %v4082, %v4129
        %v4132 = vmul.f32 %v4105, %v4129
        %v4133 = vmul.f32 %v4083, %v4129
        %v4134 = vmul.f32 %v4106, %v4129
        %v4135 = vmul.f32 %v4084, %v4129
        %v4136 = vmul.f32 %v4107, %v4129
        %v4137 = vmul.f32 %v4085, %v4129
        %v4138 = vmul.f32 %v4108, %v4129
        %v4139 = vmul.f32 %v4086, %v4129
        %v4140 = vmul.f32 %v4109, %v4129
        %v4141 = vmul.f32 %v4087, %v4129
        %v4142 = vmul.f32 %v4110, %v4129
        %v4143 = vmul.f32 %v4088, %v4129
        %v4144 = vmul.f32 %v4111, %v4129
        %v4145 = vmul.f32 %v4089, %v4129
        %v4146 = vmul.f32 %v4112, %v4129
        %v4147 = vmul.f32 %v4090, %v4129
        %v4148 = vmul.f32 %v4113, %v4129
        %v4149 = vmul.f32 %v4091, %v4129
        %v4150 = vmul.f32 %v4114, %v4129
        %v4151 = vmul.f32 %v4092, %v4129
        %v4152 = vmul.f32 %v4115, %v4129
        %v4153 = vmul.f32 %v4093, %v4129
        %v4154 = vmul.f32 %v4116, %v4129
        %v4155 = vmul.f32 %v4094, %v4129
        %v4156 = vmul.f32 %v4117, %v4129
        %v4157 = vmul.f32 %v4095, %v4129
        %v4158 = vmul.f32 %v4118, %v4129
        %v4159 = vmul.f32 %v4096, %v4129
        %v4160 = vmul.f32 %v4119, %v4129
        %v4161 = vmul.f32 %v4097, %v4129
        %v4162 = vadd.f32 %v3983, %v4130
        %v4163 = vadd.f32 %v3984, %v4131
        %v4164 = vadd.f32 %v3985, %v4132
        %v4165 = vadd.f32 %v3986, %v4133
        %v4166 = vadd.f32 %v3987, %v4134
        %v4167 = vadd.f32 %v3988, %v4135
        %v4168 = vadd.f32 %v3989, %v4136
        %v4169 = vadd.f32 %v3990, %v4137
        %v4170 = vadd.f32 %v3991, %v4138
        %v4171 = vadd.f32 %v3992, %v4139
        %v4172 = vadd.f32 %v3993, %v4140
        %v4173 = vadd.f32 %v3994, %v4141
        %v4174 = vadd.f32 %v3995, %v4142
        %v4175 = vadd.f32 %v3996, %v4143
        %v4176 = vadd.f32 %v3997, %v4144
        %v4177 = vadd.f32 %v3998, %v4145
        %v4178 = vadd.f32 %v3999, %v4146
        %v4179 = vadd.f32 %v4000, %v4147
        %v4180 = vadd.f32 %v4001, %v4148
        %v4181 = vadd.f32 %v4002, %v4149
        %v4182 = vadd.f32 %v4003, %v4150
        %v4183 = vadd.f32 %v4004, %v4151
        %v4184 = vadd.f32 %v4005, %v4152
        %v4185 = vadd.f32 %v4006, %v4153
        %v4186 = vadd.f32 %v4007, %v4154
        %v4187 = vadd.f32 %v4008, %v4155
        %v4188 = vadd.f32 %v4009, %v4156
        %v4189 = vadd.f32 %v4010, %v4157
        %v4190 = vadd.f32 %v4011, %v4158
        %v4191 = vadd.f32 %v4012, %v4159
        %v4192 = vadd.f32 %v4013, %v4160
        %v4193 = vadd.f32 %v4014, %v4161
        %v4194 = vlaneseq
        %v4195 = vshrl.u32 %v4194, 7
        %v4196 = vsub.s32 6, %v4195
        %v4197 = vrot.slane %v596, %v4196
        %v4198 = vmul.f32 %v4105, %v4197
        %v4199 = vmul.f32 %v4083, %v4197
        %v4200 = vmul.f32 %v4106, %v4197
        %v4201 = vmul.f32 %v4084, %v4197
        %v4202 = vmul.f32 %v4107, %v4197
        %v4203 = vmul.f32 %v4085, %v4197
        %v4204 = vmul.f32 %v4108, %v4197
        %v4205 = vmul.f32 %v4086, %v4197
        %v4206 = vmul.f32 %v4109, %v4197
        %v4207 = vmul.f32 %v4087, %v4197
        %v4208 = vmul.f32 %v4110, %v4197
        %v4209 = vmul.f32 %v4088, %v4197
        %v4210 = vmul.f32 %v4111, %v4197
        %v4211 = vmul.f32 %v4089, %v4197
        %v4212 = vmul.f32 %v4112, %v4197
        %v4213 = vmul.f32 %v4090, %v4197
        %v4214 = vmul.f32 %v4113, %v4197
        %v4215 = vmul.f32 %v4091, %v4197
        %v4216 = vmul.f32 %v4114, %v4197
        %v4217 = vmul.f32 %v4092, %v4197
        %v4218 = vmul.f32 %v4115, %v4197
        %v4219 = vmul.f32 %v4093, %v4197
        %v4220 = vmul.f32 %v4116, %v4197
        %v4221 = vmul.f32 %v4094, %v4197
        %v4222 = vmul.f32 %v4117, %v4197
        %v4223 = vmul.f32 %v4095, %v4197
        %v4224 = vmul.f32 %v4118, %v4197
        %v4225 = vmul.f32 %v4096, %v4197
        %v4226 = vmul.f32 %v4119, %v4197
        %v4227 = vmul.f32 %v4097, %v4197
        %v4228 = vmul.f32 %v4120, %v4197
        %v4229 = vmul.f32 %v4098, %v4197
        %v4230 = vadd.f32 %v4162, %v4198
        %v4231 = vadd.f32 %v4163, %v4199
        %v4232 = vadd.f32 %v4164, %v4200
        %v4233 = vadd.f32 %v4165, %v4201
        %v4234 = vadd.f32 %v4166, %v4202
        %v4235 = vadd.f32 %v4167, %v4203
        %v4236 = vadd.f32 %v4168, %v4204
        %v4237 = vadd.f32 %v4169, %v4205
        %v4238 = vadd.f32 %v4170, %v4206
        %v4239 = vadd.f32 %v4171, %v4207
        %v4240 = vadd.f32 %v4172, %v4208
        %v4241 = vadd.f32 %v4173, %v4209
        %v4242 = vadd.f32 %v4174, %v4210
        %v4243 = vadd.f32 %v4175, %v4211
        %v4244 = vadd.f32 %v4176, %v4212
        %v4245 = vadd.f32 %v4177, %v4213
        %v4246 = vadd.f32 %v4178, %v4214
        %v4247 = vadd.f32 %v4179, %v4215
        %v4248 = vadd.f32 %v4180, %v4216
        %v4249 = vadd.f32 %v4181, %v4217
        %v4250 = vadd.f32 %v4182, %v4218
        %v4251 = vadd.f32 %v4183, %v4219
        %v4252 = vadd.f32 %v4184, %v4220
        %v4253 = vadd.f32 %v4185, %v4221
        %v4254 = vadd.f32 %v4186, %v4222
        %v4255 = vadd.f32 %v4187, %v4223
        %v4256 = vadd.f32 %v4188, %v4224
        %v4257 = vadd.f32 %v4189, %v4225
        %v4258 = vadd.f32 %v4190, %v4226
        %v4259 = vadd.f32 %v4191, %v4227
        %v4260 = vadd.f32 %v4192, %v4228
        %v4261 = vadd.f32 %v4193, %v4229
        %v4262 = vlaneseq
        %v4263 = vshrl.u32 %v4262, 7
        %v4264 = vsub.s32 6, %v4263
        %v4265 = vrot.slane %v597, %v4264
        %v4266 = vmul.f32 %v4106, %v4265
        %v4267 = vmul.f32 %v4084, %v4265
        %v4268 = vmul.f32 %v4107, %v4265
        %v4269 = vmul.f32 %v4085, %v4265
        %v4270 = vmul.f32 %v4108, %v4265
        %v4271 = vmul.f32 %v4086, %v4265
        %v4272 = vmul.f32 %v4109, %v4265
        %v4273 = vmul.f32 %v4087, %v4265
        %v4274 = vmul.f32 %v4110, %v4265
        %v4275 = vmul.f32 %v4088, %v4265
        %v4276 = vmul.f32 %v4111, %v4265
        %v4277 = vmul.f32 %v4089, %v4265
        %v4278 = vmul.f32 %v4112, %v4265
        %v4279 = vmul.f32 %v4090, %v4265
        %v4280 = vmul.f32 %v4113, %v4265
        %v4281 = vmul.f32 %v4091, %v4265
        %v4282 = vmul.f32 %v4114, %v4265
        %v4283 = vmul.f32 %v4092, %v4265
        %v4284 = vmul.f32 %v4115, %v4265
        %v4285 = vmul.f32 %v4093, %v4265
        %v4286 = vmul.f32 %v4116, %v4265
        %v4287 = vmul.f32 %v4094, %v4265
        %v4288 = vmul.f32 %v4117, %v4265
        %v4289 = vmul.f32 %v4095, %v4265
        %v4290 = vmul.f32 %v4118, %v4265
        %v4291 = vmul.f32 %v4096, %v4265
        %v4292 = vmul.f32 %v4119, %v4265
        %v4293 = vmul.f32 %v4097, %v4265
        %v4294 = vmul.f32 %v4120, %v4265
        %v4295 = vmul.f32 %v4098, %v4265
        %v4296 = vmul.f32 %v4121, %v4265
        %v4297 = vmul.f32 %v4099, %v4265
        %v4298 = vadd.f32 %v4230, %v4266
        %v4299 = vadd.f32 %v4231, %v4267
        %v4300 = vadd.f32 %v4232, %v4268
        %v4301 = vadd.f32 %v4233, %v4269
        %v4302 = vadd.f32 %v4234, %v4270
        %v4303 = vadd.f32 %v4235, %v4271
        %v4304 = vadd.f32 %v4236, %v4272
        %v4305 = vadd.f32 %v4237, %v4273
        %v4306 = vadd.f32 %v4238, %v4274
        %v4307 = vadd.f32 %v4239, %v4275
        %v4308 = vadd.f32 %v4240, %v4276
        %v4309 = vadd.f32 %v4241, %v4277
        %v4310 = vadd.f32 %v4242, %v4278
        %v4311 = vadd.f32 %v4243, %v4279
        %v4312 = vadd.f32 %v4244, %v4280
        %v4313 = vadd.f32 %v4245, %v4281
        %v4314 = vadd.f32 %v4246, %v4282
        %v4315 = vadd.f32 %v4247, %v4283
        %v4316 = vadd.f32 %v4248, %v4284
        %v4317 = vadd.f32 %v4249, %v4285
        %v4318 = vadd.f32 %v4250, %v4286
        %v4319 = vadd.f32 %v4251, %v4287
        %v4320 = vadd.f32 %v4252, %v4288
        %v4321 = vadd.f32 %v4253, %v4289
        %v4322 = vadd.f32 %v4254, %v4290
        %v4323 = vadd.f32 %v4255, %v4291
        %v4324 = vadd.f32 %v4256, %v4292
        %v4325 = vadd.f32 %v4257, %v4293
        %v4326 = vadd.f32 %v4258, %v4294
        %v4327 = vadd.f32 %v4259, %v4295
        %v4328 = vadd.f32 %v4260, %v4296
        %v4329 = vadd.f32 %v4261, %v4297
        %v4330 = vlaneseq
        %v4331 = vshrl.u32 %v4330, 7
        %v4332 = vsub.s32 6, %v4331
        %v4333 = vrot.slane %v598, %v4332
        %v4334 = vmul.f32 %v4107, %v4333
        %v4335 = vmul.f32 %v4085, %v4333
        %v4336 = vmul.f32 %v4108, %v4333
        %v4337 = vmul.f32 %v4086, %v4333
        %v4338 = vmul.f32 %v4109, %v4333
        %v4339 = vmul.f32 %v4087, %v4333
        %v4340 = vmul.f32 %v4110, %v4333
        %v4341 = vmul.f32 %v4088, %v4333
        %v4342 = vmul.f32 %v4111, %v4333
        %v4343 = vmul.f32 %v4089, %v4333
        %v4344 = vmul.f32 %v4112, %v4333
        %v4345 = vmul.f32 %v4090, %v4333
        %v4346 = vmul.f32 %v4113, %v4333
        %v4347 = vmul.f32 %v4091, %v4333
        %v4348 = vmul.f32 %v4114, %v4333
        %v4349 = vmul.f32 %v4092, %v4333
        %v4350 = vmul.f32 %v4115, %v4333
        %v4351 = vmul.f32 %v4093, %v4333
        %v4352 = vmul.f32 %v4116, %v4333
        %v4353 = vmul.f32 %v4094, %v4333
        %v4354 = vmul.f32 %v4117, %v4333
        %v4355 = vmul.f32 %v4095, %v4333
        %v4356 = vmul.f32 %v4118, %v4333
        %v4357 = vmul.f32 %v4096, %v4333
        %v4358 = vmul.f32 %v4119, %v4333
        %v4359 = vmul.f32 %v4097, %v4333
        %v4360 = vmul.f32 %v4120, %v4333
        %v4361 = vmul.f32 %v4098, %v4333
        %v4362 = vmul.f32 %v4121, %v4333
        %v4363 = vmul.f32 %v4099, %v4333
        %v4364 = vmul.f32 %v4122, %v4333
        %v4365 = vmul.f32 %v4100, %v4333
        %v4366 = vadd.f32 %v4298, %v4334
        %v4367 = vadd.f32 %v4299, %v4335
        %v4368 = vadd.f32 %v4300, %v4336
        %v4369 = vadd.f32 %v4301, %v4337
        %v4370 = vadd.f32 %v4302, %v4338
        %v4371 = vadd.f32 %v4303, %v4339
        %v4372 = vadd.f32 %v4304, %v4340
        %v4373 = vadd.f32 %v4305, %v4341
        %v4374 = vadd.f32 %v4306, %v4342
        %v4375 = vadd.f32 %v4307, %v4343
        %v4376 = vadd.f32 %v4308, %v4344
        %v4377 = vadd.f32 %v4309, %v4345
        %v4378 = vadd.f32 %v4310, %v4346
        %v4379 = vadd.f32 %v4311, %v4347
        %v4380 = vadd.f32 %v4312, %v4348
        %v4381 = vadd.f32 %v4313, %v4349
        %v4382 = vadd.f32 %v4314, %v4350
        %v4383 = vadd.f32 %v4315, %v4351
        %v4384 = vadd.f32 %v4316, %v4352
        %v4385 = vadd.f32 %v4317, %v4353
        %v4386 = vadd.f32 %v4318, %v4354
        %v4387 = vadd.f32 %v4319, %v4355
        %v4388 = vadd.f32 %v4320, %v4356
        %v4389 = vadd.f32 %v4321, %v4357
        %v4390 = vadd.f32 %v4322, %v4358
        %v4391 = vadd.f32 %v4323, %v4359
        %v4392 = vadd.f32 %v4324, %v4360
        %v4393 = vadd.f32 %v4325, %v4361
        %v4394 = vadd.f32 %v4326, %v4362
        %v4395 = vadd.f32 %v4327, %v4363
        %v4396 = vadd.f32 %v4328, %v4364
        %v4397 = vadd.f32 %v4329, %v4365
        %v4398 = vlaneseq
        %v4399 = vshrl.u32 %v4398, 7
        %v4400 = vsub.s32 6, %v4399
        %v4401 = vrot.slane %v599, %v4400
        %v4402 = vmul.f32 %v4108, %v4401
        %v4403 = vmul.f32 %v4086, %v4401
        %v4404 = vmul.f32 %v4109, %v4401
        %v4405 = vmul.f32 %v4087, %v4401
        %v4406 = vmul.f32 %v4110, %v4401
        %v4407 = vmul.f32 %v4088, %v4401
        %v4408 = vmul.f32 %v4111, %v4401
        %v4409 = vmul.f32 %v4089, %v4401
        %v4410 = vmul.f32 %v4112, %v4401
        %v4411 = vmul.f32 %v4090, %v4401
        %v4412 = vmul.f32 %v4113, %v4401
        %v4413 = vmul.f32 %v4091, %v4401
        %v4414 = vmul.f32 %v4114, %v4401
        %v4415 = vmul.f32 %v4092, %v4401
        %v4416 = vmul.f32 %v4115, %v4401
        %v4417 = vmul.f32 %v4093, %v4401
        %v4418 = vmul.f32 %v4116, %v4401
        %v4419 = vmul.f32 %v4094, %v4401
        %v4420 = vmul.f32 %v4117, %v4401
        %v4421 = vmul.f32 %v4095, %v4401
        %v4422 = vmul.f32 %v4118, %v4401
        %v4423 = vmul.f32 %v4096, %v4401
        %v4424 = vmul.f32 %v4119, %v4401
        %v4425 = vmul.f32 %v4097, %v4401
        %v4426 = vmul.f32 %v4120, %v4401
        %v4427 = vmul.f32 %v4098, %v4401
        %v4428 = vmul.f32 %v4121, %v4401
        %v4429 = vmul.f32 %v4099, %v4401
        %v4430 = vmul.f32 %v4122, %v4401
        %v4431 = vmul.f32 %v4100, %v4401
        %v4432 = vmul.f32 %v4123, %v4401
        %v4433 = vmul.f32 %v4101, %v4401
        %v4434 = vadd.f32 %v4366, %v4402
        %v4435 = vadd.f32 %v4367, %v4403
        %v4436 = vadd.f32 %v4368, %v4404
        %v4437 = vadd.f32 %v4369, %v4405
        %v4438 = vadd.f32 %v4370, %v4406
        %v4439 = vadd.f32 %v4371, %v4407
        %v4440 = vadd.f32 %v4372, %v4408
        %v4441 = vadd.f32 %v4373, %v4409
        %v4442 = vadd.f32 %v4374, %v4410
        %v4443 = vadd.f32 %v4375, %v4411
        %v4444 = vadd.f32 %v4376, %v4412
        %v4445 = vadd.f32 %v4377, %v4413
        %v4446 = vadd.f32 %v4378, %v4414
        %v4447 = vadd.f32 %v4379, %v4415
        %v4448 = vadd.f32 %v4380, %v4416
        %v4449 = vadd.f32 %v4381, %v4417
        %v4450 = vadd.f32 %v4382, %v4418
        %v4451 = vadd.f32 %v4383, %v4419
        %v4452 = vadd.f32 %v4384, %v4420
        %v4453 = vadd.f32 %v4385, %v4421
        %v4454 = vadd.f32 %v4386, %v4422
        %v4455 = vadd.f32 %v4387, %v4423
        %v4456 = vadd.f32 %v4388, %v4424
        %v4457 = vadd.f32 %v4389, %v4425
        %v4458 = vadd.f32 %v4390, %v4426
        %v4459 = vadd.f32 %v4391, %v4427
        %v4460 = vadd.f32 %v4392, %v4428
        %v4461 = vadd.f32 %v4393, %v4429
        %v4462 = vadd.f32 %v4394, %v4430
        %v4463 = vadd.f32 %v4395, %v4431
        %v4464 = vadd.f32 %v4396, %v4432
        %v4465 = vadd.f32 %v4397, %v4433
        %v4466 = vlaneseq
        %v4467 = vshrl.u32 %v4466, 7
        %v4468 = vsub.s32 6, %v4467
        %v4469 = vrot.slane %v600, %v4468
        %v4470 = vmul.f32 %v4109, %v4469
        %v4471 = vmul.f32 %v4087, %v4469
        %v4472 = vmul.f32 %v4110, %v4469
        %v4473 = vmul.f32 %v4088, %v4469
        %v4474 = vmul.f32 %v4111, %v4469
        %v4475 = vmul.f32 %v4089, %v4469
        %v4476 = vmul.f32 %v4112, %v4469
        %v4477 = vmul.f32 %v4090, %v4469
        %v4478 = vmul.f32 %v4113, %v4469
        %v4479 = vmul.f32 %v4091, %v4469
        %v4480 = vmul.f32 %v4114, %v4469
        %v4481 = vmul.f32 %v4092, %v4469
        %v4482 = vmul.f32 %v4115, %v4469
        %v4483 = vmul.f32 %v4093, %v4469
        %v4484 = vmul.f32 %v4116, %v4469
        %v4485 = vmul.f32 %v4094, %v4469
        %v4486 = vmul.f32 %v4117, %v4469
        %v4487 = vmul.f32 %v4095, %v4469
        %v4488 = vmul.f32 %v4118, %v4469
        %v4489 = vmul.f32 %v4096, %v4469
        %v4490 = vmul.f32 %v4119, %v4469
        %v4491 = vmul.f32 %v4097, %v4469
        %v4492 = vmul.f32 %v4120, %v4469
        %v4493 = vmul.f32 %v4098, %v4469
        %v4494 = vmul.f32 %v4121, %v4469
        %v4495 = vmul.f32 %v4099, %v4469
        %v4496 = vmul.f32 %v4122, %v4469
        %v4497 = vmul.f32 %v4100, %v4469
        %v4498 = vmul.f32 %v4123, %v4469
        %v4499 = vmul.f32 %v4101, %v4469
        %v4500 = vmul.f32 %v4124, %v4469
        %v4501 = vmul.f32 %v4102, %v4469
        %v4502 = vadd.f32 %v4434, %v4470
        %v4503 = vadd.f32 %v4435, %v4471
        %v4504 = vadd.f32 %v4436, %v4472
        %v4505 = vadd.f32 %v4437, %v4473
        %v4506 = vadd.f32 %v4438, %v4474
        %v4507 = vadd.f32 %v4439, %v4475
        %v4508 = vadd.f32 %v4440, %v4476
        %v4509 = vadd.f32 %v4441, %v4477
        %v4510 = vadd.f32 %v4442, %v4478
        %v4511 = vadd.f32 %v4443, %v4479
        %v4512 = vadd.f32 %v4444, %v4480
        %v4513 = vadd.f32 %v4445, %v4481
        %v4514 = vadd.f32 %v4446, %v4482
        %v4515 = vadd.f32 %v4447, %v4483
        %v4516 = vadd.f32 %v4448, %v4484
        %v4517 = vadd.f32 %v4449, %v4485
        %v4518 = vadd.f32 %v4450, %v4486
        %v4519 = vadd.f32 %v4451, %v4487
        %v4520 = vadd.f32 %v4452, %v4488
        %v4521 = vadd.f32 %v4453, %v4489
        %v4522 = vadd.f32 %v4454, %v4490
        %v4523 = vadd.f32 %v4455, %v4491
        %v4524 = vadd.f32 %v4456, %v4492
        %v4525 = vadd.f32 %v4457, %v4493
        %v4526 = vadd.f32 %v4458, %v4494
        %v4527 = vadd.f32 %v4459, %v4495
        %v4528 = vadd.f32 %v4460, %v4496
        %v4529 = vadd.f32 %v4461, %v4497
        %v4530 = vadd.f32 %v4462, %v4498
        %v4531 = vadd.f32 %v4463, %v4499
        %v4532 = vadd.f32 %v4464, %v4500
        %v4533 = vadd.f32 %v4465, %v4501
        %v4534 = vlaneseq
        %v4535 = vshrl.u32 %v4534, 7
        %v4536 = vsub.s32 6, %v4535
        %v4537 = vrot.slane %v601, %v4536
        %v4538 = vmul.f32 %v4110, %v4537
        %v4539 = vmul.f32 %v4088, %v4537
        %v4540 = vmul.f32 %v4111, %v4537
        %v4541 = vmul.f32 %v4089, %v4537
        %v4542 = vmul.f32 %v4112, %v4537
        %v4543 = vmul.f32 %v4090, %v4537
        %v4544 = vmul.f32 %v4113, %v4537
        %v4545 = vmul.f32 %v4091, %v4537
        %v4546 = vmul.f32 %v4114, %v4537
        %v4547 = vmul.f32 %v4092, %v4537
        %v4548 = vmul.f32 %v4115, %v4537
        %v4549 = vmul.f32 %v4093, %v4537
        %v4550 = vmul.f32 %v4116, %v4537
        %v4551 = vmul.f32 %v4094, %v4537
        %v4552 = vmul.f32 %v4117, %v4537
        %v4553 = vmul.f32 %v4095, %v4537
        %v4554 = vmul.f32 %v4118, %v4537
        %v4555 = vmul.f32 %v4096, %v4537
        %v4556 = vmul.f32 %v4119, %v4537
        %v4557 = vmul.f32 %v4097, %v4537
        %v4558 = vmul.f32 %v4120, %v4537
        %v4559 = vmul.f32 %v4098, %v4537
        %v4560 = vmul.f32 %v4121, %v4537
        %v4561 = vmul.f32 %v4099, %v4537
        %v4562 = vmul.f32 %v4122, %v4537
        %v4563 = vmul.f32 %v4100, %v4537
        %v4564 = vmul.f32 %v4123, %v4537
        %v4565 = vmul.f32 %v4101, %v4537
        %v4566 = vmul.f32 %v4124, %v4537
        %v4567 = vmul.f32 %v4102, %v4537
        %v4568 = vmul.f32 %v4125, %v4537
        %v4569 = vmul.f32 %v4103, %v4537
        %v4570 = vadd.f32 %v4502, %v4538
        %v4571 = vadd.f32 %v4503, %v4539
        %v4572 = vadd.f32 %v4504, %v4540
        %v4573 = vadd.f32 %v4505, %v4541
        %v4574 = vadd.f32 %v4506, %v4542
        %v4575 = vadd.f32 %v4507, %v4543
        %v4576 = vadd.f32 %v4508, %v4544
        %v4577 = vadd.f32 %v4509, %v4545
        %v4578 = vadd.f32 %v4510, %v4546
        %v4579 = vadd.f32 %v4511, %v4547
        %v4580 = vadd.f32 %v4512, %v4548
        %v4581 = vadd.f32 %v4513, %v4549
        %v4582 = vadd.f32 %v4514, %v4550
        %v4583 = vadd.f32 %v4515, %v4551
        %v4584 = vadd.f32 %v4516, %v4552
        %v4585 = vadd.f32 %v4517, %v4553
        %v4586 = vadd.f32 %v4518, %v4554
        %v4587 = vadd.f32 %v4519, %v4555
        %v4588 = vadd.f32 %v4520, %v4556
        %v4589 = vadd.f32 %v4521, %v4557
        %v4590 = vadd.f32 %v4522, %v4558
        %v4591 = vadd.f32 %v4523, %v4559
        %v4592 = vadd.f32 %v4524, %v4560
        %v4593 = vadd.f32 %v4525, %v4561
        %v4594 = vadd.f32 %v4526, %v4562
        %v4595 = vadd.f32 %v4527, %v4563
        %v4596 = vadd.f32 %v4528, %v4564
        %v4597 = vadd.f32 %v4529, %v4565
        %v4598 = vadd.f32 %v4530, %v4566
        %v4599 = vadd.f32 %v4531, %v4567
        %v4600 = vadd.f32 %v4532, %v4568
        %v4601 = vadd.f32 %v4533, %v4569
        %v4602 = vld [vmem:[#allocation7] sm:$0x1]
        %v4604 = vlaneseq
        %v4605 = vshrl.u32 %v4604, 7
        %v4606 = vsub.s32 0, %v4605
        %v4607 = vrot.slane %v4602, %v4606
        %v4609 = vadd.f32 %v4570, %v4607
        %v4610 = vadd.f32 %v4571, %v4607
        %v4611 = vadd.f32 %v4572, %v4607
        %v4612 = vadd.f32 %v4573, %v4607
        %v4613 = vadd.f32 %v4574, %v4607
        %v4614 = vadd.f32 %v4575, %v4607
        %v4615 = vadd.f32 %v4576, %v4607
        %v4616 = vadd.f32 %v4577, %v4607
        %v4617 = vadd.f32 %v4578, %v4607
        %v4618 = vadd.f32 %v4579, %v4607
        %v4619 = vadd.f32 %v4580, %v4607
        %v4620 = vadd.f32 %v4581, %v4607
        %v4621 = vadd.f32 %v4582, %v4607
        %v4622 = vadd.f32 %v4583, %v4607
        %v4623 = vadd.f32 %v4584, %v4607
        %v4624 = vadd.f32 %v4585, %v4607
        %v4625 = vadd.f32 %v4586, %v4607
        %v4626 = vadd.f32 %v4587, %v4607
        %v4627 = vadd.f32 %v4588, %v4607
        %v4628 = vadd.f32 %v4589, %v4607
        %v4629 = vadd.f32 %v4590, %v4607
        %v4630 = vadd.f32 %v4591, %v4607
        %v4631 = vadd.f32 %v4592, %v4607
        %v4632 = vadd.f32 %v4593, %v4607
        %v4633 = vadd.f32 %v4594, %v4607
        %v4634 = vadd.f32 %v4595, %v4607
        %v4635 = vadd.f32 %v4596, %v4607
        %v4636 = vadd.f32 %v4597, %v4607
        %v4637 = vadd.f32 %v4598, %v4607
        %v4638 = vadd.f32 %v4599, %v4607
        %v4639 = vadd.f32 %v4600, %v4607
        %v4640 = vadd.f32 %v4601, %v4607
        %v4641 = vld [vmem:[#allocation11] sm:$0xff]
        %v4642 = vld [vmem:[#allocation11 + $0x8] sm:$0xff]
        %v4643 = vld [vmem:[#allocation11 + $0x10] sm:$0xff]
        %v4644 = vld [vmem:[#allocation11 + $0x18] sm:$0xff]
        %v4645 = vld [vmem:[#allocation11 + $0x20] sm:$0xff]
        %v4646 = vld [vmem:[#allocation11 + $0x28] sm:$0xff]
        %v4647 = vld [vmem:[#allocation11 + $0x30] sm:$0xff]
        %v4648 = vld [vmem:[#allocation11 + $0x38] sm:$0xff]
        %v4649 = vld [vmem:[#allocation11 + $0x40] sm:$0xff]
        %v4650 = vld [vmem:[#allocation11 + $0x48] sm:$0xff]
        %v4651 = vld [vmem:[#allocation11 + $0x50] sm:$0xff]
        %v4652 = vld [vmem:[#allocation11 + $0x58] sm:$0xff]
        %v4653 = vld [vmem:[#allocation11 + $0x60] sm:$0xff]
        %v4654 = vld [vmem:[#allocation11 + $0x68] sm:$0xff]
        %v4655 = vld [vmem:[#allocation11 + $0x70] sm:$0xff]
        %v4656 = vld [vmem:[#allocation11 + $0x78] sm:$0xff]
        %4657 = vmatprep.subr.mxu0 0.0
        %4658 = vmatpush1.msra.mxu0 %v4656
        %4659 = vmatprep.subr.mxu0 0.0
        %4660 = vmatpush1.msra.mxu0 %v4655
        %4661 = vmatprep.subr.mxu0 0.0
        %4662 = vmatpush1.msra.mxu0 %v4654
        %4663 = vmatprep.subr.mxu0 0.0
        %4664 = vmatpush1.msra.mxu0 %v4653
        %4665 = vmatprep.subr.mxu0 0.0
        %4666 = vmatpush1.msra.mxu0 %v4652
        %4667 = vmatprep.subr.mxu0 0.0
        %4668 = vmatpush1.msra.mxu0 %v4651
        %4669 = vmatprep.subr.mxu0 0.0
        %4670 = vmatpush1.msra.mxu0 %v4650
        %4671 = vmatprep.subr.mxu0 0.0
        %4672 = vmatpush1.msra.mxu0 %v4649
        %4673 = vmatprep.subr.mxu0 0.0
        %4674 = vmatpush1.msra.mxu0 %v4648
        %4675 = vmatprep.subr.mxu0 0.0
        %4676 = vmatpush1.msra.mxu0 %v4647
        %4677 = vmatprep.subr.mxu0 0.0
        %4678 = vmatpush1.msra.mxu0 %v4646
        %4679 = vmatprep.subr.mxu0 0.0
        %4680 = vmatpush1.msra.mxu0 %v4645
        %4681 = vmatprep.subr.mxu0 0.0
        %4682 = vmatpush1.msra.mxu0 %v4644
        %4683 = vmatprep.subr.mxu0 0.0
        %4684 = vmatpush1.msra.mxu0 %v4643
        %4685 = vmatprep.subr.mxu0 0.0
        %4686 = vmatpush1.msra.mxu0 %v4642
        %4687 = vmatprep.subr.mxu0 0.0
        %4688 = vmatpush1.msra.mxu0 %v4641
        %4689 = vmatprep.subr.mxu0 0.0
        %4690 = vmatpush2.msra.mxu0 0.0
        %4691 = vmatprep.subr.mxu0 0.0
        %4692 = vmatpush2.msra.mxu0 0.0
        %4693 = vmatprep.subr.mxu0 0.0
        %4694 = vmatpush2.msra.mxu0 0.0
        %4695 = vmatprep.subr.mxu0 0.0
        %4696 = vmatpush2.msra.mxu0 0.0
        %4697 = vmatprep.subr.mxu0 0.0
        %4698 = vmatpush2.msra.mxu0 0.0
        %4699 = vmatprep.subr.mxu0 0.0
        %4700 = vmatpush2.msra.mxu0 0.0
        %4701 = vmatprep.subr.mxu0 0.0
        %4702 = vmatpush2.msra.mxu0 0.0
        %4703 = vmatprep.subr.mxu0 0.0
        %4704 = vmatpush2.msra.mxu0 0.0
        %4705 = vmatprep.subr.mxu0 0.0
        %4706 = vmatpush2.msra.mxu0 0.0
        %4707 = vmatprep.subr.mxu0 0.0
        %4708 = vmatpush2.msra.mxu0 0.0
        %4709 = vmatprep.subr.mxu0 0.0
        %4710 = vmatpush2.msra.mxu0 0.0
        %4711 = vmatprep.subr.mxu0 0.0
        %4712 = vmatpush2.msra.mxu0 0.0
        %4713 = vmatprep.subr.mxu0 0.0
        %4714 = vmatpush2.msra.mxu0 0.0
        %4715 = vmatprep.subr.mxu0 0.0
        %4716 = vmatpush2.msra.mxu0 0.0
        %4717 = vmatprep.subr.mxu0 0.0
        %4718 = vmatpush2.msra.mxu0 0.0
        %4719 = vmatprep.subr.mxu0 0.0
        %4720 = vmatpush2.msra.mxu0 0.0
        %4721 = vmatprep.mubr.f32.mxu0 0.0
        %4722 = vmatmul.mubr.f32.gmra.mxu0 %v4609
        %v4723 = vpop.f32.mrf.mxu0
        %v4724 = vadd.f32 0.0, %v4723
        %v4725 = vpop.f32.mrf.mxu0
        %4726 = vmatprep.mubr.f32.mxu0 0.0
        %4727 = vmatmul.mubr.f32.gmra.mxu0 %v4610
        %v4728 = vpop.f32.mrf.mxu0
        %v4729 = vadd.f32 0.0, %v4728
        %v4730 = vpop.f32.mrf.mxu0
        %4731 = vmatprep.mubr.f32.mxu0 0.0
        %4732 = vmatmul.mubr.f32.gmra.mxu0 %v4611
        %v4733 = vpop.f32.mrf.mxu0
        %v4734 = vadd.f32 0.0, %v4733
        %v4735 = vpop.f32.mrf.mxu0
        %4736 = vmatprep.mubr.f32.mxu0 0.0
        %4737 = vmatmul.mubr.f32.gmra.mxu0 %v4612
        %v4738 = vpop.f32.mrf.mxu0
        %v4739 = vadd.f32 0.0, %v4738
        %v4740 = vpop.f32.mrf.mxu0
        %4741 = vmatprep.mubr.f32.mxu0 0.0
        %4742 = vmatmul.mubr.f32.gmra.mxu0 %v4613
        %v4743 = vpop.f32.mrf.mxu0
        %v4744 = vadd.f32 0.0, %v4743
        %v4745 = vpop.f32.mrf.mxu0
        %4746 = vmatprep.mubr.f32.mxu0 0.0
        %4747 = vmatmul.mubr.f32.gmra.mxu0 %v4614
        %v4748 = vpop.f32.mrf.mxu0
        %v4749 = vadd.f32 0.0, %v4748
        %v4750 = vpop.f32.mrf.mxu0
        %4751 = vmatprep.mubr.f32.mxu0 0.0
        %4752 = vmatmul.mubr.f32.gmra.mxu0 %v4615
        %v4753 = vpop.f32.mrf.mxu0
        %v4754 = vadd.f32 0.0, %v4753
        %v4755 = vpop.f32.mrf.mxu0
        %4756 = vmatprep.mubr.f32.mxu0 0.0
        %4757 = vmatmul.mubr.f32.gmra.mxu0 %v4616
        %v4758 = vpop.f32.mrf.mxu0
        %v4759 = vadd.f32 0.0, %v4758
        %v4760 = vpop.f32.mrf.mxu0
        %4761 = vmatprep.mubr.f32.mxu0 0.0
        %4762 = vmatmul.mubr.f32.gmra.mxu0 %v4617
        %v4763 = vpop.f32.mrf.mxu0
        %v4764 = vadd.f32 0.0, %v4763
        %v4765 = vpop.f32.mrf.mxu0
        %4766 = vmatprep.mubr.f32.mxu0 0.0
        %4767 = vmatmul.mubr.f32.gmra.mxu0 %v4618
        %v4768 = vpop.f32.mrf.mxu0
        %v4769 = vadd.f32 0.0, %v4768
        %v4770 = vpop.f32.mrf.mxu0
        %4771 = vmatprep.mubr.f32.mxu0 0.0
        %4772 = vmatmul.mubr.f32.gmra.mxu0 %v4619
        %v4773 = vpop.f32.mrf.mxu0
        %v4774 = vadd.f32 0.0, %v4773
        %v4775 = vpop.f32.mrf.mxu0
        %4776 = vmatprep.mubr.f32.mxu0 0.0
        %4777 = vmatmul.mubr.f32.gmra.mxu0 %v4620
        %v4778 = vpop.f32.mrf.mxu0
        %v4779 = vadd.f32 0.0, %v4778
        %v4780 = vpop.f32.mrf.mxu0
        %4781 = vmatprep.mubr.f32.mxu0 0.0
        %4782 = vmatmul.mubr.f32.gmra.mxu0 %v4621
        %v4783 = vpop.f32.mrf.mxu0
        %v4784 = vadd.f32 0.0, %v4783
        %v4785 = vpop.f32.mrf.mxu0
        %4786 = vmatprep.mubr.f32.mxu0 0.0
        %4787 = vmatmul.mubr.f32.gmra.mxu0 %v4622
        %v4788 = vpop.f32.mrf.mxu0
        %v4789 = vadd.f32 0.0, %v4788
        %v4790 = vpop.f32.mrf.mxu0
        %4791 = vmatprep.mubr.f32.mxu0 0.0
        %4792 = vmatmul.mubr.f32.gmra.mxu0 %v4623
        %v4793 = vpop.f32.mrf.mxu0
        %v4794 = vadd.f32 0.0, %v4793
        %v4795 = vpop.f32.mrf.mxu0
        %4796 = vmatprep.mubr.f32.mxu0 0.0
        %4797 = vmatmul.mubr.f32.gmra.mxu0 %v4624
        %v4798 = vpop.f32.mrf.mxu0
        %v4799 = vadd.f32 0.0, %v4798
        %v4800 = vpop.f32.mrf.mxu0
        %4801 = vmatprep.mubr.f32.mxu0 0.0
        %4802 = vmatmul.mubr.f32.gmra.mxu0 %v4625
        %v4803 = vpop.f32.mrf.mxu0
        %v4804 = vadd.f32 0.0, %v4803
        %v4805 = vpop.f32.mrf.mxu0
        %4806 = vmatprep.mubr.f32.mxu0 0.0
        %4807 = vmatmul.mubr.f32.gmra.mxu0 %v4626
        %v4808 = vpop.f32.mrf.mxu0
        %v4809 = vadd.f32 0.0, %v4808
        %v4810 = vpop.f32.mrf.mxu0
        %4811 = vmatprep.mubr.f32.mxu0 0.0
        %4812 = vmatmul.mubr.f32.gmra.mxu0 %v4627
        %v4813 = vpop.f32.mrf.mxu0
        %v4814 = vadd.f32 0.0, %v4813
        %v4815 = vpop.f32.mrf.mxu0
        %4816 = vmatprep.mubr.f32.mxu0 0.0
        %4817 = vmatmul.mubr.f32.gmra.mxu0 %v4628
        %v4818 = vpop.f32.mrf.mxu0
        %v4819 = vadd.f32 0.0, %v4818
        %v4820 = vpop.f32.mrf.mxu0
        %4821 = vmatprep.mubr.f32.mxu0 0.0
        %4822 = vmatmul.mubr.f32.gmra.mxu0 %v4629
        %v4823 = vpop.f32.mrf.mxu0
        %v4824 = vadd.f32 0.0, %v4823
        %v4825 = vpop.f32.mrf.mxu0
        %4826 = vmatprep.mubr.f32.mxu0 0.0
        %4827 = vmatmul.mubr.f32.gmra.mxu0 %v4630
        %v4828 = vpop.f32.mrf.mxu0
        %v4829 = vadd.f32 0.0, %v4828
        %v4830 = vpop.f32.mrf.mxu0
        %4831 = vmatprep.mubr.f32.mxu0 0.0
        %4832 = vmatmul.mubr.f32.gmra.mxu0 %v4631
        %v4833 = vpop.f32.mrf.mxu0
        %v4834 = vadd.f32 0.0, %v4833
        %v4835 = vpop.f32.mrf.mxu0
        %4836 = vmatprep.mubr.f32.mxu0 0.0
        %4837 = vmatmul.mubr.f32.gmra.mxu0 %v4632
        %v4838 = vpop.f32.mrf.mxu0
        %v4839 = vadd.f32 0.0, %v4838
        %v4840 = vpop.f32.mrf.mxu0
        %4841 = vmatprep.mubr.f32.mxu0 0.0
        %4842 = vmatmul.mubr.f32.gmra.mxu0 %v4633
        %v4843 = vpop.f32.mrf.mxu0
        %v4844 = vadd.f32 0.0, %v4843
        %v4845 = vpop.f32.mrf.mxu0
        %4846 = vmatprep.mubr.f32.mxu0 0.0
        %4847 = vmatmul.mubr.f32.gmra.mxu0 %v4634
        %v4848 = vpop.f32.mrf.mxu0
        %v4849 = vadd.f32 0.0, %v4848
        %v4850 = vpop.f32.mrf.mxu0
        %4851 = vmatprep.mubr.f32.mxu0 0.0
        %4852 = vmatmul.mubr.f32.gmra.mxu0 %v4635
        %v4853 = vpop.f32.mrf.mxu0
        %v4854 = vadd.f32 0.0, %v4853
        %v4855 = vpop.f32.mrf.mxu0
        %4856 = vmatprep.mubr.f32.mxu0 0.0
        %4857 = vmatmul.mubr.f32.gmra.mxu0 %v4636
        %v4858 = vpop.f32.mrf.mxu0
        %v4859 = vadd.f32 0.0, %v4858
        %v4860 = vpop.f32.mrf.mxu0
        %4861 = vmatprep.mubr.f32.mxu0 0.0
        %4862 = vmatmul.mubr.f32.gmra.mxu0 %v4637
        %v4863 = vpop.f32.mrf.mxu0
        %v4864 = vadd.f32 0.0, %v4863
        %v4865 = vpop.f32.mrf.mxu0
        %4866 = vmatprep.mubr.f32.mxu0 0.0
        %4867 = vmatmul.mubr.f32.gmra.mxu0 %v4638
        %v4868 = vpop.f32.mrf.mxu0
        %v4869 = vadd.f32 0.0, %v4868
        %v4870 = vpop.f32.mrf.mxu0
        %4871 = vmatprep.mubr.f32.mxu0 0.0
        %4872 = vmatmul.mubr.f32.gmra.mxu0 %v4639
        %v4873 = vpop.f32.mrf.mxu0
        %v4874 = vadd.f32 0.0, %v4873
        %v4875 = vpop.f32.mrf.mxu0
        %4876 = vmatprep.mubr.f32.mxu0 0.0
        %4877 = vmatmul.mubr.f32.gmra.mxu0 %v4640
        %v4878 = vpop.f32.mrf.mxu0
        %v4879 = vadd.f32 0.0, %v4878
        %v4880 = vpop.f32.mrf.mxu0
        %4881 = vdwg.mxu0
        %v4882 = vmul.f32 %v4724, 0.03125
        %v4883 = vmul.f32 %v4729, 0.03125
        %v4884 = vmul.f32 %v4734, 0.03125
        %v4885 = vmul.f32 %v4739, 0.03125
        %v4886 = vmul.f32 %v4744, 0.03125
        %v4887 = vmul.f32 %v4749, 0.03125
        %v4888 = vmul.f32 %v4754, 0.03125
        %v4889 = vmul.f32 %v4759, 0.03125
        %v4890 = vmul.f32 %v4764, 0.03125
        %v4891 = vmul.f32 %v4769, 0.03125
        %v4892 = vmul.f32 %v4774, 0.03125
        %v4893 = vmul.f32 %v4779, 0.03125
        %v4894 = vmul.f32 %v4784, 0.03125
        %v4895 = vmul.f32 %v4789, 0.03125
        %v4896 = vmul.f32 %v4794, 0.03125
        %v4897 = vmul.f32 %v4799, 0.03125
        %v4898 = vmul.f32 %v4804, 0.03125
        %v4899 = vmul.f32 %v4809, 0.03125
        %v4900 = vmul.f32 %v4814, 0.03125
        %v4901 = vmul.f32 %v4819, 0.03125
        %v4902 = vmul.f32 %v4824, 0.03125
        %v4903 = vmul.f32 %v4829, 0.03125
        %v4904 = vmul.f32 %v4834, 0.03125
        %v4905 = vmul.f32 %v4839, 0.03125
        %v4906 = vmul.f32 %v4844, 0.03125
        %v4907 = vmul.f32 %v4849, 0.03125
        %v4908 = vmul.f32 %v4854, 0.03125
        %v4909 = vmul.f32 %v4859, 0.03125
        %v4910 = vmul.f32 %v4864, 0.03125
        %v4911 = vmul.f32 %v4869, 0.03125
        %v4912 = vmul.f32 %v4874, 0.03125
        %v4913 = vmul.f32 %v4879, 0.03125
        %v4914 = vsub.f32 %v4609, %v4882
        %v4915 = vsub.f32 %v4610, %v4883
        %v4916 = vsub.f32 %v4611, %v4884
        %v4917 = vsub.f32 %v4612, %v4885
        %v4918 = vsub.f32 %v4613, %v4886
        %v4919 = vsub.f32 %v4614, %v4887
        %v4920 = vsub.f32 %v4615, %v4888
        %v4921 = vsub.f32 %v4616, %v4889
        %v4922 = vsub.f32 %v4617, %v4890
        %v4923 = vsub.f32 %v4618, %v4891
        %v4924 = vsub.f32 %v4619, %v4892
        %v4925 = vsub.f32 %v4620, %v4893
        %v4926 = vsub.f32 %v4621, %v4894
        %v4927 = vsub.f32 %v4622, %v4895
        %v4928 = vsub.f32 %v4623, %v4896
        %v4929 = vsub.f32 %v4624, %v4897
        %v4930 = vsub.f32 %v4625, %v4898
        %v4931 = vsub.f32 %v4626, %v4899
        %v4932 = vsub.f32 %v4627, %v4900
        %v4933 = vsub.f32 %v4628, %v4901
        %v4934 = vsub.f32 %v4629, %v4902
        %v4935 = vsub.f32 %v4630, %v4903
        %v4936 = vsub.f32 %v4631, %v4904
        %v4937 = vsub.f32 %v4632, %v4905
        %v4938 = vsub.f32 %v4633, %v4906
        %v4939 = vsub.f32 %v4634, %v4907
        %v4940 = vsub.f32 %v4635, %v4908
        %v4941 = vsub.f32 %v4636, %v4909
        %v4942 = vsub.f32 %v4637, %v4910
        %v4943 = vsub.f32 %v4638, %v4911
        %v4944 = vsub.f32 %v4639, %v4912
        %v4945 = vsub.f32 %v4640, %v4913
        %v4946 = vmul.f32 %v4914, %v4914
        %v4947 = vmul.f32 %v4915, %v4915
        %v4948 = vmul.f32 %v4916, %v4916
        %v4949 = vmul.f32 %v4917, %v4917
        %v4950 = vmul.f32 %v4918, %v4918
        %v4951 = vmul.f32 %v4919, %v4919
        %v4952 = vmul.f32 %v4920, %v4920
        %v4953 = vmul.f32 %v4921, %v4921
        %v4954 = vmul.f32 %v4922, %v4922
        %v4955 = vmul.f32 %v4923, %v4923
        %v4956 = vmul.f32 %v4924, %v4924
        %v4957 = vmul.f32 %v4925, %v4925
        %v4958 = vmul.f32 %v4926, %v4926
        %v4959 = vmul.f32 %v4927, %v4927
        %v4960 = vmul.f32 %v4928, %v4928
        %v4961 = vmul.f32 %v4929, %v4929
        %v4962 = vmul.f32 %v4930, %v4930
        %v4963 = vmul.f32 %v4931, %v4931
        %v4964 = vmul.f32 %v4932, %v4932
        %v4965 = vmul.f32 %v4933, %v4933
        %v4966 = vmul.f32 %v4934, %v4934
        %v4967 = vmul.f32 %v4935, %v4935
        %v4968 = vmul.f32 %v4936, %v4936
        %v4969 = vmul.f32 %v4937, %v4937
        %v4970 = vmul.f32 %v4938, %v4938
        %v4971 = vmul.f32 %v4939, %v4939
        %v4972 = vmul.f32 %v4940, %v4940
        %v4973 = vmul.f32 %v4941, %v4941
        %v4974 = vmul.f32 %v4942, %v4942
        %v4975 = vmul.f32 %v4943, %v4943
        %v4976 = vmul.f32 %v4944, %v4944
        %v4977 = vmul.f32 %v4945, %v4945
        %4978 = vmatprep.subr.mxu0 0.0
        %4979 = vmatpush1.msra.mxu0 %v4656
        %4980 = vmatprep.subr.mxu0 0.0
        %4981 = vmatpush1.msra.mxu0 %v4655
        %4982 = vmatprep.subr.mxu0 0.0
        %4983 = vmatpush1.msra.mxu0 %v4654
        %4984 = vmatprep.subr.mxu0 0.0
        %4985 = vmatpush1.msra.mxu0 %v4653
        %4986 = vmatprep.subr.mxu0 0.0
        %4987 = vmatpush1.msra.mxu0 %v4652
        %4988 = vmatprep.subr.mxu0 0.0
        %4989 = vmatpush1.msra.mxu0 %v4651
        %4990 = vmatprep.subr.mxu0 0.0
        %4991 = vmatpush1.msra.mxu0 %v4650
        %4992 = vmatprep.subr.mxu0 0.0
        %4993 = vmatpush1.msra.mxu0 %v4649
        %4994 = vmatprep.subr.mxu0 0.0
        %4995 = vmatpush1.msra.mxu0 %v4648
        %4996 = vmatprep.subr.mxu0 0.0
        %4997 = vmatpush1.msra.mxu0 %v4647
        %4998 = vmatprep.subr.mxu0 0.0
        %4999 = vmatpush1.msra.mxu0 %v4646
        %5000 = vmatprep.subr.mxu0 0.0
        %5001 = vmatpush1.msra.mxu0 %v4645
        %5002 = vmatprep.subr.mxu0 0.0
        %5003 = vmatpush1.msra.mxu0 %v4644
        %5004 = vmatprep.subr.mxu0 0.0
        %5005 = vmatpush1.msra.mxu0 %v4643
        %5006 = vmatprep.subr.mxu0 0.0
        %5007 = vmatpush1.msra.mxu0 %v4642
        %5008 = vmatprep.subr.mxu0 0.0
        %5009 = vmatpush1.msra.mxu0 %v4641
        %5010 = vmatprep.subr.mxu0 0.0
        %5011 = vmatpush2.msra.mxu0 0.0
        %5012 = vmatprep.subr.mxu0 0.0
        %5013 = vmatpush2.msra.mxu0 0.0
        %5014 = vmatprep.subr.mxu0 0.0
        %5015 = vmatpush2.msra.mxu0 0.0
        %5016 = vmatprep.subr.mxu0 0.0
        %5017 = vmatpush2.msra.mxu0 0.0
        %5018 = vmatprep.subr.mxu0 0.0
        %5019 = vmatpush2.msra.mxu0 0.0
        %5020 = vmatprep.subr.mxu0 0.0
        %5021 = vmatpush2.msra.mxu0 0.0
        %5022 = vmatprep.subr.mxu0 0.0
        %5023 = vmatpush2.msra.mxu0 0.0
        %5024 = vmatprep.subr.mxu0 0.0
        %5025 = vmatpush2.msra.mxu0 0.0
        %5026 = vmatprep.subr.mxu0 0.0
        %5027 = vmatpush2.msra.mxu0 0.0
        %5028 = vmatprep.subr.mxu0 0.0
        %5029 = vmatpush2.msra.mxu0 0.0
        %5030 = vmatprep.subr.mxu0 0.0
        %5031 = vmatpush2.msra.mxu0 0.0
        %5032 = vmatprep.subr.mxu0 0.0
        %5033 = vmatpush2.msra.mxu0 0.0
        %5034 = vmatprep.subr.mxu0 0.0
        %5035 = vmatpush2.msra.mxu0 0.0
        %5036 = vmatprep.subr.mxu0 0.0
        %5037 = vmatpush2.msra.mxu0 0.0
        %5038 = vmatprep.subr.mxu0 0.0
        %5039 = vmatpush2.msra.mxu0 0.0
        %5040 = vmatprep.subr.mxu0 0.0
        %5041 = vmatpush2.msra.mxu0 0.0
        %5042 = vmatprep.mubr.f32.mxu0 0.0
        %5043 = vmatmul.mubr.f32.gmra.mxu0 %v4946
        %v5044 = vpop.f32.mrf.mxu0
        %v5045 = vadd.f32 0.0, %v5044
        %v5046 = vpop.f32.mrf.mxu0
        %5047 = vmatprep.mubr.f32.mxu0 0.0
        %5048 = vmatmul.mubr.f32.gmra.mxu0 %v4947
        %v5049 = vpop.f32.mrf.mxu0
        %v5050 = vadd.f32 0.0, %v5049
        %v5051 = vpop.f32.mrf.mxu0
        %5052 = vmatprep.mubr.f32.mxu0 0.0
        %5053 = vmatmul.mubr.f32.gmra.mxu0 %v4948
        %v5054 = vpop.f32.mrf.mxu0
        %v5055 = vadd.f32 0.0, %v5054
        %v5056 = vpop.f32.mrf.mxu0
        %5057 = vmatprep.mubr.f32.mxu0 0.0
        %5058 = vmatmul.mubr.f32.gmra.mxu0 %v4949
        %v5059 = vpop.f32.mrf.mxu0
        %v5060 = vadd.f32 0.0, %v5059
        %v5061 = vpop.f32.mrf.mxu0
        %5062 = vmatprep.mubr.f32.mxu0 0.0
        %5063 = vmatmul.mubr.f32.gmra.mxu0 %v4950
        %v5064 = vpop.f32.mrf.mxu0
        %v5065 = vadd.f32 0.0, %v5064
        %v5066 = vpop.f32.mrf.mxu0
        %5067 = vmatprep.mubr.f32.mxu0 0.0
        %5068 = vmatmul.mubr.f32.gmra.mxu0 %v4951
        %v5069 = vpop.f32.mrf.mxu0
        %v5070 = vadd.f32 0.0, %v5069
        %v5071 = vpop.f32.mrf.mxu0
        %5072 = vmatprep.mubr.f32.mxu0 0.0
        %5073 = vmatmul.mubr.f32.gmra.mxu0 %v4952
        %v5074 = vpop.f32.mrf.mxu0
        %v5075 = vadd.f32 0.0, %v5074
        %v5076 = vpop.f32.mrf.mxu0
        %5077 = vmatprep.mubr.f32.mxu0 0.0
        %5078 = vmatmul.mubr.f32.gmra.mxu0 %v4953
        %v5079 = vpop.f32.mrf.mxu0
        %v5080 = vadd.f32 0.0, %v5079
        %v5081 = vpop.f32.mrf.mxu0
        %5082 = vmatprep.mubr.f32.mxu0 0.0
        %5083 = vmatmul.mubr.f32.gmra.mxu0 %v4954
        %v5084 = vpop.f32.mrf.mxu0
        %v5085 = vadd.f32 0.0, %v5084
        %v5086 = vpop.f32.mrf.mxu0
        %5087 = vmatprep.mubr.f32.mxu0 0.0
        %5088 = vmatmul.mubr.f32.gmra.mxu0 %v4955
        %v5089 = vpop.f32.mrf.mxu0
        %v5090 = vadd.f32 0.0, %v5089
        %v5091 = vpop.f32.mrf.mxu0
        %5092 = vmatprep.mubr.f32.mxu0 0.0
        %5093 = vmatmul.mubr.f32.gmra.mxu0 %v4956
        %v5094 = vpop.f32.mrf.mxu0
        %v5095 = vadd.f32 0.0, %v5094
        %v5096 = vpop.f32.mrf.mxu0
        %5097 = vmatprep.mubr.f32.mxu0 0.0
        %5098 = vmatmul.mubr.f32.gmra.mxu0 %v4957
        %v5099 = vpop.f32.mrf.mxu0
        %v5100 = vadd.f32 0.0, %v5099
        %v5101 = vpop.f32.mrf.mxu0
        %5102 = vmatprep.mubr.f32.mxu0 0.0
        %5103 = vmatmul.mubr.f32.gmra.mxu0 %v4958
        %v5104 = vpop.f32.mrf.mxu0
        %v5105 = vadd.f32 0.0, %v5104
        %v5106 = vpop.f32.mrf.mxu0
        %5107 = vmatprep.mubr.f32.mxu0 0.0
        %5108 = vmatmul.mubr.f32.gmra.mxu0 %v4959
        %v5109 = vpop.f32.mrf.mxu0
        %v5110 = vadd.f32 0.0, %v5109
        %v5111 = vpop.f32.mrf.mxu0
        %5112 = vmatprep.mubr.f32.mxu0 0.0
        %5113 = vmatmul.mubr.f32.gmra.mxu0 %v4960
        %v5114 = vpop.f32.mrf.mxu0
        %v5115 = vadd.f32 0.0, %v5114
        %v5116 = vpop.f32.mrf.mxu0
        %5117 = vmatprep.mubr.f32.mxu0 0.0
        %5118 = vmatmul.mubr.f32.gmra.mxu0 %v4961
        %v5119 = vpop.f32.mrf.mxu0
        %v5120 = vadd.f32 0.0, %v5119
        %v5121 = vpop.f32.mrf.mxu0
        %5122 = vmatprep.mubr.f32.mxu0 0.0
        %5123 = vmatmul.mubr.f32.gmra.mxu0 %v4962
        %v5124 = vpop.f32.mrf.mxu0
        %v5125 = vadd.f32 0.0, %v5124
        %v5126 = vpop.f32.mrf.mxu0
        %5127 = vmatprep.mubr.f32.mxu0 0.0
        %5128 = vmatmul.mubr.f32.gmra.mxu0 %v4963
        %v5129 = vpop.f32.mrf.mxu0
        %v5130 = vadd.f32 0.0, %v5129
        %v5131 = vpop.f32.mrf.mxu0
        %5132 = vmatprep.mubr.f32.mxu0 0.0
        %5133 = vmatmul.mubr.f32.gmra.mxu0 %v4964
        %v5134 = vpop.f32.mrf.mxu0
        %v5135 = vadd.f32 0.0, %v5134
        %v5136 = vpop.f32.mrf.mxu0
        %5137 = vmatprep.mubr.f32.mxu0 0.0
        %5138 = vmatmul.mubr.f32.gmra.mxu0 %v4965
        %v5139 = vpop.f32.mrf.mxu0
        %v5140 = vadd.f32 0.0, %v5139
        %v5141 = vpop.f32.mrf.mxu0
        %5142 = vmatprep.mubr.f32.mxu0 0.0
        %5143 = vmatmul.mubr.f32.gmra.mxu0 %v4966
        %v5144 = vpop.f32.mrf.mxu0
        %v5145 = vadd.f32 0.0, %v5144
        %v5146 = vpop.f32.mrf.mxu0
        %5147 = vmatprep.mubr.f32.mxu0 0.0
        %5148 = vmatmul.mubr.f32.gmra.mxu0 %v4967
        %v5149 = vpop.f32.mrf.mxu0
        %v5150 = vadd.f32 0.0, %v5149
        %v5151 = vpop.f32.mrf.mxu0
        %5152 = vmatprep.mubr.f32.mxu0 0.0
        %5153 = vmatmul.mubr.f32.gmra.mxu0 %v4968
        %v5154 = vpop.f32.mrf.mxu0
        %v5155 = vadd.f32 0.0, %v5154
        %v5156 = vpop.f32.mrf.mxu0
        %5157 = vmatprep.mubr.f32.mxu0 0.0
        %5158 = vmatmul.mubr.f32.gmra.mxu0 %v4969
        %v5159 = vpop.f32.mrf.mxu0
        %v5160 = vadd.f32 0.0, %v5159
        %v5161 = vpop.f32.mrf.mxu0
        %5162 = vmatprep.mubr.f32.mxu0 0.0
        %5163 = vmatmul.mubr.f32.gmra.mxu0 %v4970
        %v5164 = vpop.f32.mrf.mxu0
        %v5165 = vadd.f32 0.0, %v5164
        %v5166 = vpop.f32.mrf.mxu0
        %5167 = vmatprep.mubr.f32.mxu0 0.0
        %5168 = vmatmul.mubr.f32.gmra.mxu0 %v4971
        %v5169 = vpop.f32.mrf.mxu0
        %v5170 = vadd.f32 0.0, %v5169
        %v5171 = vpop.f32.mrf.mxu0
        %5172 = vmatprep.mubr.f32.mxu0 0.0
        %5173 = vmatmul.mubr.f32.gmra.mxu0 %v4972
        %v5174 = vpop.f32.mrf.mxu0
        %v5175 = vadd.f32 0.0, %v5174
        %v5176 = vpop.f32.mrf.mxu0
        %5177 = vmatprep.mubr.f32.mxu0 0.0
        %5178 = vmatmul.mubr.f32.gmra.mxu0 %v4973
        %v5179 = vpop.f32.mrf.mxu0
        %v5180 = vadd.f32 0.0, %v5179
        %v5181 = vpop.f32.mrf.mxu0
        %5182 = vmatprep.mubr.f32.mxu0 0.0
        %5183 = vmatmul.mubr.f32.gmra.mxu0 %v4974
        %v5184 = vpop.f32.mrf.mxu0
        %v5185 = vadd.f32 0.0, %v5184
        %v5186 = vpop.f32.mrf.mxu0
        %5187 = vmatprep.mubr.f32.mxu0 0.0
        %5188 = vmatmul.mubr.f32.gmra.mxu0 %v4975
        %v5189 = vpop.f32.mrf.mxu0
        %v5190 = vadd.f32 0.0, %v5189
        %v5191 = vpop.f32.mrf.mxu0
        %5192 = vmatprep.mubr.f32.mxu0 0.0
        %5193 = vmatmul.mubr.f32.gmra.mxu0 %v4976
        %v5194 = vpop.f32.mrf.mxu0
        %v5195 = vadd.f32 0.0, %v5194
        %v5196 = vpop.f32.mrf.mxu0
        %5197 = vmatprep.mubr.f32.mxu0 0.0
        %5198 = vmatmul.mubr.f32.gmra.mxu0 %v4977
        %v5199 = vpop.f32.mrf.mxu0
        %v5200 = vadd.f32 0.0, %v5199
        %v5201 = vpop.f32.mrf.mxu0
        %5202 = vdwg.mxu0
        %v5203 = vmul.f32 %v5045, 0.03125
        %v5204 = vmul.f32 %v5050, 0.03125
        %v5205 = vmul.f32 %v5055, 0.03125
        %v5206 = vmul.f32 %v5060, 0.03125
        %v5207 = vmul.f32 %v5065, 0.03125
        %v5208 = vmul.f32 %v5070, 0.03125
        %v5209 = vmul.f32 %v5075, 0.03125
        %v5210 = vmul.f32 %v5080, 0.03125
        %v5211 = vmul.f32 %v5085, 0.03125
        %v5212 = vmul.f32 %v5090, 0.03125
        %v5213 = vmul.f32 %v5095, 0.03125
        %v5214 = vmul.f32 %v5100, 0.03125
        %v5215 = vmul.f32 %v5105, 0.03125
        %v5216 = vmul.f32 %v5110, 0.03125
        %v5217 = vmul.f32 %v5115, 0.03125
        %v5218 = vmul.f32 %v5120, 0.03125
        %v5219 = vmul.f32 %v5125, 0.03125
        %v5220 = vmul.f32 %v5130, 0.03125
        %v5221 = vmul.f32 %v5135, 0.03125
        %v5222 = vmul.f32 %v5140, 0.03125
        %v5223 = vmul.f32 %v5145, 0.03125
        %v5224 = vmul.f32 %v5150, 0.03125
        %v5225 = vmul.f32 %v5155, 0.03125
        %v5226 = vmul.f32 %v5160, 0.03125
        %v5227 = vmul.f32 %v5165, 0.03125
        %v5228 = vmul.f32 %v5170, 0.03125
        %v5229 = vmul.f32 %v5175, 0.03125
        %v5230 = vmul.f32 %v5180, 0.03125
        %v5231 = vmul.f32 %v5185, 0.03125
        %v5232 = vmul.f32 %v5190, 0.03125
        %v5233 = vmul.f32 %v5195, 0.03125
        %v5234 = vmul.f32 %v5200, 0.03125
        %v5235 = vadd.f32 %v5203, 1e-06
        %v5236 = vadd.f32 %v5204, 1e-06
        %v5237 = vadd.f32 %v5205, 1e-06
        %v5238 = vadd.f32 %v5206, 1e-06
        %v5239 = vadd.f32 %v5207, 1e-06
        %v5240 = vadd.f32 %v5208, 1e-06
        %v5241 = vadd.f32 %v5209, 1e-06
        %v5242 = vadd.f32 %v5210, 1e-06
        %v5243 = vadd.f32 %v5211, 1e-06
        %v5244 = vadd.f32 %v5212, 1e-06
        %v5245 = vadd.f32 %v5213, 1e-06
        %v5246 = vadd.f32 %v5214, 1e-06
        %v5247 = vadd.f32 %v5215, 1e-06
        %v5248 = vadd.f32 %v5216, 1e-06
        %v5249 = vadd.f32 %v5217, 1e-06
        %v5250 = vadd.f32 %v5218, 1e-06
        %v5251 = vadd.f32 %v5219, 1e-06
        %v5252 = vadd.f32 %v5220, 1e-06
        %v5253 = vadd.f32 %v5221, 1e-06
        %v5254 = vadd.f32 %v5222, 1e-06
        %v5255 = vadd.f32 %v5223, 1e-06
        %v5256 = vadd.f32 %v5224, 1e-06
        %v5257 = vadd.f32 %v5225, 1e-06
        %v5258 = vadd.f32 %v5226, 1e-06
        %v5259 = vadd.f32 %v5227, 1e-06
        %v5260 = vadd.f32 %v5228, 1e-06
        %v5261 = vadd.f32 %v5229, 1e-06
        %v5262 = vadd.f32 %v5230, 1e-06
        %v5263 = vadd.f32 %v5231, 1e-06
        %v5264 = vadd.f32 %v5232, 1e-06
        %v5265 = vadd.f32 %v5233, 1e-06
        %v5266 = vadd.f32 %v5234, 1e-06
        %v5267 = vrsqrt.pop %v5235
        %v5268 = vrsqrt.pop %v5236
        %v5269 = vrsqrt.pop %v5237
        %v5270 = vrsqrt.pop %v5238
        %v5271 = vrsqrt.pop %v5239
        %v5272 = vrsqrt.pop %v5240
        %v5273 = vrsqrt.pop %v5241
        %v5274 = vrsqrt.pop %v5242
        %v5275 = vrsqrt.pop %v5243
        %v5276 = vrsqrt.pop %v5244
        %v5277 = vrsqrt.pop %v5245
        %v5278 = vrsqrt.pop %v5246
        %v5279 = vrsqrt.pop %v5247
        %v5280 = vrsqrt.pop %v5248
        %v5281 = vrsqrt.pop %v5249
        %v5282 = vrsqrt.pop %v5250
        %v5283 = vrsqrt.pop %v5251
        %v5284 = vrsqrt.pop %v5252
        %v5285 = vrsqrt.pop %v5253
        %v5286 = vrsqrt.pop %v5254
        %v5287 = vrsqrt.pop %v5255
        %v5288 = vrsqrt.pop %v5256
        %v5289 = vrsqrt.pop %v5257
        %v5290 = vrsqrt.pop %v5258
        %v5291 = vrsqrt.pop %v5259
        %v5292 = vrsqrt.pop %v5260
        %v5293 = vrsqrt.pop %v5261
        %v5294 = vrsqrt.pop %v5262
        %v5295 = vrsqrt.pop %v5263
        %v5296 = vrsqrt.pop %v5264
        %v5297 = vrsqrt.pop %v5265
        %v5298 = vrsqrt.pop %v5266
        %v5299 = vmul.f32 %v4914, %v5267
        %v5300 = vmul.f32 %v4915, %v5268
        %v5301 = vmul.f32 %v4916, %v5269
        %v5302 = vmul.f32 %v4917, %v5270
        %v5303 = vmul.f32 %v4918, %v5271
        %v5304 = vmul.f32 %v4919, %v5272
        %v5305 = vmul.f32 %v4920, %v5273
        %v5306 = vmul.f32 %v4921, %v5274
        %v5307 = vmul.f32 %v4922, %v5275
        %v5308 = vmul.f32 %v4923, %v5276
        %v5309 = vmul.f32 %v4924, %v5277
        %v5310 = vmul.f32 %v4925, %v5278
        %v5311 = vmul.f32 %v4926, %v5279
        %v5312 = vmul.f32 %v4927, %v5280
        %v5313 = vmul.f32 %v4928, %v5281
        %v5314 = vmul.f32 %v4929, %v5282
        %v5315 = vmul.f32 %v4930, %v5283
        %v5316 = vmul.f32 %v4931, %v5284
        %v5317 = vmul.f32 %v4932, %v5285
        %v5318 = vmul.f32 %v4933, %v5286
        %v5319 = vmul.f32 %v4934, %v5287
        %v5320 = vmul.f32 %v4935, %v5288
        %v5321 = vmul.f32 %v4936, %v5289
        %v5322 = vmul.f32 %v4937, %v5290
        %v5323 = vmul.f32 %v4938, %v5291
        %v5324 = vmul.f32 %v4939, %v5292
        %v5325 = vmul.f32 %v4940, %v5293
        %v5326 = vmul.f32 %v4941, %v5294
        %v5327 = vmul.f32 %v4942, %v5295
        %v5328 = vmul.f32 %v4943, %v5296
        %v5329 = vmul.f32 %v4944, %v5297
        %v5330 = vmul.f32 %v4945, %v5298
        %v5331 = vld [vmem:[#allocation8] sm:$0x1]
        %v5333 = vlaneseq
        %v5334 = vshrl.u32 %v5333, 7
        %v5335 = vsub.s32 0, %v5334
        %v5336 = vrot.slane %v5331, %v5335
        %v5338 = vmul.f32 %v5299, %v5336
        %v5339 = vmul.f32 %v5300, %v5336
        %v5340 = vmul.f32 %v5301, %v5336
        %v5341 = vmul.f32 %v5302, %v5336
        %v5342 = vmul.f32 %v5303, %v5336
        %v5343 = vmul.f32 %v5304, %v5336
        %v5344 = vmul.f32 %v5305, %v5336
        %v5345 = vmul.f32 %v5306, %v5336
        %v5346 = vmul.f32 %v5307, %v5336
        %v5347 = vmul.f32 %v5308, %v5336
        %v5348 = vmul.f32 %v5309, %v5336
        %v5349 = vmul.f32 %v5310, %v5336
        %v5350 = vmul.f32 %v5311, %v5336
        %v5351 = vmul.f32 %v5312, %v5336
        %v5352 = vmul.f32 %v5313, %v5336
        %v5353 = vmul.f32 %v5314, %v5336
        %v5354 = vmul.f32 %v5315, %v5336
        %v5355 = vmul.f32 %v5316, %v5336
        %v5356 = vmul.f32 %v5317, %v5336
        %v5357 = vmul.f32 %v5318, %v5336
        %v5358 = vmul.f32 %v5319, %v5336
        %v5359 = vmul.f32 %v5320, %v5336
        %v5360 = vmul.f32 %v5321, %v5336
        %v5361 = vmul.f32 %v5322, %v5336
        %v5362 = vmul.f32 %v5323, %v5336
        %v5363 = vmul.f32 %v5324, %v5336
        %v5364 = vmul.f32 %v5325, %v5336
        %v5365 = vmul.f32 %v5326, %v5336
        %v5366 = vmul.f32 %v5327, %v5336
        %v5367 = vmul.f32 %v5328, %v5336
        %v5368 = vmul.f32 %v5329, %v5336
        %v5369 = vmul.f32 %v5330, %v5336
        %v5370 = vld [vmem:[#allocation10] sm:$0x1]
        %v5372 = vlaneseq
        %v5373 = vshrl.u32 %v5372, 7
        %v5374 = vsub.s32 0, %v5373
        %v5375 = vrot.slane %v5370, %v5374
        %v5377 = vadd.f32 %v5338, %v5375
        %v5378 = vadd.f32 %v5339, %v5375
        %v5379 = vadd.f32 %v5340, %v5375
        %v5380 = vadd.f32 %v5341, %v5375
        %v5381 = vadd.f32 %v5342, %v5375
        %v5382 = vadd.f32 %v5343, %v5375
        %v5383 = vadd.f32 %v5344, %v5375
        %v5384 = vadd.f32 %v5345, %v5375
        %v5385 = vadd.f32 %v5346, %v5375
        %v5386 = vadd.f32 %v5347, %v5375
        %v5387 = vadd.f32 %v5348, %v5375
        %v5388 = vadd.f32 %v5349, %v5375
        %v5389 = vadd.f32 %v5350, %v5375
        %v5390 = vadd.f32 %v5351, %v5375
        %v5391 = vadd.f32 %v5352, %v5375
        %v5392 = vadd.f32 %v5353, %v5375
        %v5393 = vadd.f32 %v5354, %v5375
        %v5394 = vadd.f32 %v5355, %v5375
        %v5395 = vadd.f32 %v5356, %v5375
        %v5396 = vadd.f32 %v5357, %v5375
        %v5397 = vadd.f32 %v5358, %v5375
        %v5398 = vadd.f32 %v5359, %v5375
        %v5399 = vadd.f32 %v5360, %v5375
        %v5400 = vadd.f32 %v5361, %v5375
        %v5401 = vadd.f32 %v5362, %v5375
        %v5402 = vadd.f32 %v5363, %v5375
        %v5403 = vadd.f32 %v5364, %v5375
        %v5404 = vadd.f32 %v5365, %v5375
        %v5405 = vadd.f32 %v5366, %v5375
        %v5406 = vadd.f32 %v5367, %v5375
        %v5407 = vadd.f32 %v5368, %v5375
        %v5408 = vadd.f32 %v5369, %v5375
        %v5409 = vpack.c.bf16 %v5378, %v5377
        %v5410 = vpack.c.bf16 %v5380, %v5379
        %v5411 = vpack.c.bf16 %v5382, %v5381
        %v5412 = vpack.c.bf16 %v5384, %v5383
        %v5413 = vpack.c.bf16 %v5386, %v5385
        %v5414 = vpack.c.bf16 %v5388, %v5387
        %v5415 = vpack.c.bf16 %v5390, %v5389
        %v5416 = vpack.c.bf16 %v5392, %v5391
        %v5417 = vpack.c.bf16 %v5394, %v5393
        %v5418 = vpack.c.bf16 %v5396, %v5395
        %v5419 = vpack.c.bf16 %v5398, %v5397
        %v5420 = vpack.c.bf16 %v5400, %v5399
        %v5421 = vpack.c.bf16 %v5402, %v5401
        %v5422 = vpack.c.bf16 %v5404, %v5403
        %v5423 = vpack.c.bf16 %v5406, %v5405
        %v5424 = vpack.c.bf16 %v5408, %v5407
        %v5425 = vld [vmem:[#allocation13] sm:$0xff]
        %v5426 = vld [vmem:[#allocation13 + $0x8] sm:$0xff]
        %v5427 = vld [vmem:[#allocation13 + $0x10] sm:$0xff]
        %v5428 = vld [vmem:[#allocation13 + $0x18] sm:$0xff]
        %v5429 = vld [vmem:[#allocation13 + $0x20] sm:$0xff]
        %v5430 = vld [vmem:[#allocation13 + $0x28] sm:$0xff]
        %v5431 = vld [vmem:[#allocation13 + $0x30] sm:$0xff]
        %v5432 = vld [vmem:[#allocation13 + $0x38] sm:$0xff]
        %v5433 = vld [vmem:[#allocation13 + $0x40] sm:$0xff]
        %v5434 = vld [vmem:[#allocation13 + $0x48] sm:$0xff]
        %v5435 = vld [vmem:[#allocation13 + $0x50] sm:$0xff]
        %v5436 = vld [vmem:[#allocation13 + $0x58] sm:$0xff]
        %v5437 = vld [vmem:[#allocation13 + $0x60] sm:$0xff]
        %v5438 = vld [vmem:[#allocation13 + $0x68] sm:$0xff]
        %v5439 = vld [vmem:[#allocation13 + $0x70] sm:$0xff]
        %v5440 = vld [vmem:[#allocation13 + $0x78] sm:$0xff]
        %v5441 = vld [vmem:[#allocation13 + $0x80] sm:$0xff]
        %v5442 = vld [vmem:[#allocation13 + $0x88] sm:$0xff]
        %v5443 = vld [vmem:[#allocation13 + $0x90] sm:$0xff]
        %v5444 = vld [vmem:[#allocation13 + $0x98] sm:$0xff]
        %v5445 = vld [vmem:[#allocation13 + $0xa0] sm:$0xff]
        %v5446 = vld [vmem:[#allocation13 + $0xa8] sm:$0xff]
        %v5447 = vld [vmem:[#allocation13 + $0xb0] sm:$0xff]
        %v5448 = vld [vmem:[#allocation13 + $0xb8] sm:$0xff]
        %v5449 = vld [vmem:[#allocation13 + $0xc0] sm:$0xff]
        %v5450 = vld [vmem:[#allocation13 + $0xc8] sm:$0xff]
        %v5451 = vld [vmem:[#allocation13 + $0xd0] sm:$0xff]
        %v5452 = vld [vmem:[#allocation13 + $0xd8] sm:$0xff]
        %v5453 = vld [vmem:[#allocation13 + $0xe0] sm:$0xff]
        %v5454 = vld [vmem:[#allocation13 + $0xe8] sm:$0xff]
        %v5455 = vld [vmem:[#allocation13 + $0xf0] sm:$0xff]
        %v5456 = vld [vmem:[#allocation13 + $0xf8] sm:$0xff]
        %v5457 = vld [vmem:[%s7] sm:$0xf]
        %v5459 = vlaneseq
        %v5460 = vshrl.u32 %v5459, 7
        %v5461 = vsub.s32 0, %v5460
        %v5462 = vrot.slane %v5457, %v5461
        %v5463 = vlaneseq
        %v5464 = vshrl.u32 %v5463, 7
        %v5465 = vsub.s32 1, %v5464
        %v5466 = vrot.slane %v5457, %v5465
        %v5467 = vlaneseq
        %v5468 = vshrl.u32 %v5467, 7
        %v5469 = vsub.s32 2, %v5468
        %v5470 = vrot.slane %v5457, %v5469
        %v5471 = vlaneseq
        %v5472 = vshrl.u32 %v5471, 7
        %v5473 = vsub.s32 3, %v5472
        %v5474 = vrot.slane %v5457, %v5473
        %v5511 = vunpack.c.l.b16 %v5425
        %v5512 = vunpack.c.h.b16 %v5425
        %v5513 = vunpack.c.l.b16 %v5426
        %v5514 = vunpack.c.h.b16 %v5426
        %v5515 = vunpack.c.l.b16 %v5427
        %v5516 = vunpack.c.h.b16 %v5427
        %v5517 = vunpack.c.l.b16 %v5428
        %v5518 = vunpack.c.h.b16 %v5428
        %v5519 = vunpack.c.l.b16 %v5429
        %v5520 = vunpack.c.h.b16 %v5429
        %v5521 = vunpack.c.l.b16 %v5430
        %v5522 = vunpack.c.h.b16 %v5430
        %v5523 = vunpack.c.l.b16 %v5431
        %v5524 = vunpack.c.h.b16 %v5431
        %v5525 = vunpack.c.l.b16 %v5432
        %v5526 = vunpack.c.h.b16 %v5432
        %v5527 = vunpack.c.l.b16 %v5433
        %v5528 = vunpack.c.h.b16 %v5433
        %v5529 = vunpack.c.l.b16 %v5434
        %v5530 = vunpack.c.h.b16 %v5434
        %v5531 = vunpack.c.l.b16 %v5435
        %v5532 = vunpack.c.h.b16 %v5435
        %v5533 = vunpack.c.l.b16 %v5436
        %v5534 = vunpack.c.h.b16 %v5436
        %v5535 = vunpack.c.l.b16 %v5437
        %v5536 = vunpack.c.h.b16 %v5437
        %v5537 = vunpack.c.l.b16 %v5438
        %v5538 = vunpack.c.h.b16 %v5438
        %v5539 = vunpack.c.l.b16 %v5439
        %v5540 = vunpack.c.h.b16 %v5439
        %v5541 = vunpack.c.l.b16 %v5440
        %v5542 = vunpack.c.h.b16 %v5440
        %v5543 = vunpack.c.l.b16 %v5441
        %v5544 = vunpack.c.h.b16 %v5441
        %v5545 = vunpack.c.l.b16 %v5442
        %v5546 = vunpack.c.h.b16 %v5442
        %v5547 = vunpack.c.l.b16 %v5443
        %v5548 = vunpack.c.h.b16 %v5443
        %v5549 = vunpack.c.l.b16 %v5444
        %v5550 = vunpack.c.h.b16 %v5444
        %v5551 = vunpack.c.l.b16 %v5445
        %v5552 = vunpack.c.h.b16 %v5445
        %v5553 = vunpack.c.l.b16 %v5446
        %v5554 = vunpack.c.h.b16 %v5446
        %v5555 = vunpack.c.l.b16 %v5447
        %v5556 = vunpack.c.h.b16 %v5447
        %v5557 = vunpack.c.l.b16 %v5448
        %v5558 = vunpack.c.h.b16 %v5448
        %v5559 = vunpack.c.l.b16 %v5449
        %v5560 = vunpack.c.h.b16 %v5449
        %v5561 = vunpack.c.l.b16 %v5450
        %v5562 = vunpack.c.h.b16 %v5450
        %v5563 = vunpack.c.l.b16 %v5451
        %v5564 = vunpack.c.h.b16 %v5451
        %v5565 = vunpack.c.l.b16 %v5452
        %v5566 = vunpack.c.h.b16 %v5452
        %v5567 = vunpack.c.l.b16 %v5453
        %v5568 = vunpack.c.h.b16 %v5453
        %v5569 = vunpack.c.l.b16 %v5454
        %v5570 = vunpack.c.h.b16 %v5454
        %v5571 = vunpack.c.l.b16 %v5455
        %v5572 = vunpack.c.h.b16 %v5455
        %v5573 = vunpack.c.l.b16 %v5456
        %v5574 = vunpack.c.h.b16 %v5456
        %v5575 = vpack.c.b16 %v5515, %v5511
        %v5576 = vpack.c.b16 %v5516, %v5512
        %v5577 = vpack.c.b16 %v5517, %v5513
        %v5578 = vpack.c.b16 %v5518, %v5514
        %v5579 = vpack.c.b16 %v5523, %v5519
        %v5580 = vpack.c.b16 %v5524, %v5520
        %v5581 = vpack.c.b16 %v5525, %v5521
        %v5582 = vpack.c.b16 %v5526, %v5522
        %v5583 = vpack.c.b16 %v5531, %v5527
        %v5584 = vpack.c.b16 %v5532, %v5528
        %v5585 = vpack.c.b16 %v5533, %v5529
        %v5586 = vpack.c.b16 %v5534, %v5530
        %v5587 = vpack.c.b16 %v5539, %v5535
        %v5588 = vpack.c.b16 %v5540, %v5536
        %v5589 = vpack.c.b16 %v5541, %v5537
        %v5590 = vpack.c.b16 %v5542, %v5538
        %v5591 = vpack.c.b16 %v5547, %v5543
        %v5592 = vpack.c.b16 %v5548, %v5544
        %v5593 = vpack.c.b16 %v5549, %v5545
        %v5594 = vpack.c.b16 %v5550, %v5546
        %v5595 = vpack.c.b16 %v5555, %v5551
        %v5596 = vpack.c.b16 %v5556, %v5552
        %v5597 = vpack.c.b16 %v5557, %v5553
        %v5598 = vpack.c.b16 %v5558, %v5554
        %v5599 = vpack.c.b16 %v5563, %v5559
        %v5600 = vpack.c.b16 %v5564, %v5560
        %v5601 = vpack.c.b16 %v5565, %v5561
        %v5602 = vpack.c.b16 %v5566, %v5562
        %v5603 = vpack.c.b16 %v5571, %v5567
        %v5604 = vpack.c.b16 %v5572, %v5568
        %v5605 = vpack.c.b16 %v5573, %v5569
        %v5606 = vpack.c.b16 %v5574, %v5570
        %5639 = vmatprep.subr.bf16.mxu0 %v5604
        %5640 = vmatpush1.bf16.msra.mxu0 %v5603
        %5641 = vmatprep.subr.bf16.mxu0 %v5600
        %5642 = vmatpush1.bf16.msra.mxu0 %v5599
        %5643 = vmatprep.subr.bf16.mxu0 %v5596
        %5644 = vmatpush1.bf16.msra.mxu0 %v5595
        %5645 = vmatprep.subr.bf16.mxu0 %v5592
        %5646 = vmatpush1.bf16.msra.mxu0 %v5591
        %5647 = vmatprep.subr.bf16.mxu0 %v5588
        %5648 = vmatpush1.bf16.msra.mxu0 %v5587
        %5649 = vmatprep.subr.bf16.mxu0 %v5584
        %5650 = vmatpush1.bf16.msra.mxu0 %v5583
        %5651 = vmatprep.subr.bf16.mxu0 %v5580
        %5652 = vmatpush1.bf16.msra.mxu0 %v5579
        %5653 = vmatprep.subr.bf16.mxu0 %v5576
        %5654 = vmatpush1.bf16.msra.mxu0 %v5575
        %5655 = vmatprep.subr.bf16.mxu0 0
        %5656 = vmatpush2.bf16.msra.mxu0 0
        %5657 = vmatprep.subr.bf16.mxu0 0
        %5658 = vmatpush2.bf16.msra.mxu0 0
        %5659 = vmatprep.subr.bf16.mxu0 0
        %5660 = vmatpush2.bf16.msra.mxu0 0
        %5661 = vmatprep.subr.bf16.mxu0 0
        %5662 = vmatpush2.bf16.msra.mxu0 0
        %5663 = vmatprep.subr.bf16.mxu0 0
        %5664 = vmatpush2.bf16.msra.mxu0 0
        %5665 = vmatprep.subr.bf16.mxu0 0
        %5666 = vmatpush2.bf16.msra.mxu0 0
        %5667 = vmatprep.subr.bf16.mxu0 0
        %5668 = vmatpush2.bf16.msra.mxu0 0
        %5669 = vmatprep.subr.bf16.mxu0 0
        %5670 = vmatpush2.bf16.msra.mxu0 0
        %5671 = vmatprep.mubr.bf16.mxu0 0
        %5672 = vmatmul.mubr.bf16.gmra.mxu0 %v5409
        %v5673 = vpop.f32.mrf.mxu0
        %v5674 = vadd.f32 %v5462, %v5673
        %v5675 = vpop.f32.mrf.mxu0
        %v5676 = vadd.f32 %v5466, %v5675
        %v5677 = vpop.f32.mrf.mxu0
        %v5678 = vadd.f32 %v5462, %v5677
        %v5679 = vpop.f32.mrf.mxu0
        %v5680 = vadd.f32 %v5466, %v5679
        %5681 = vmatprep.mubr.bf16.mxu0 0
        %5682 = vmatmul.mubr.bf16.gmra.mxu0 %v5410
        %v5683 = vpop.f32.mrf.mxu0
        %v5684 = vadd.f32 %v5462, %v5683
        %v5685 = vpop.f32.mrf.mxu0
        %v5686 = vadd.f32 %v5466, %v5685
        %v5687 = vpop.f32.mrf.mxu0
        %v5688 = vadd.f32 %v5462, %v5687
        %v5689 = vpop.f32.mrf.mxu0
        %v5690 = vadd.f32 %v5466, %v5689
        %5691 = vmatprep.mubr.bf16.mxu0 0
        %5692 = vmatmul.mubr.bf16.gmra.mxu0 %v5411
        %v5693 = vpop.f32.mrf.mxu0
        %v5694 = vadd.f32 %v5462, %v5693
        %v5695 = vpop.f32.mrf.mxu0
        %v5696 = vadd.f32 %v5466, %v5695
        %v5697 = vpop.f32.mrf.mxu0
        %v5698 = vadd.f32 %v5462, %v5697
        %v5699 = vpop.f32.mrf.mxu0
        %v5700 = vadd.f32 %v5466, %v5699
        %5701 = vmatprep.mubr.bf16.mxu0 0
        %5702 = vmatmul.mubr.bf16.gmra.mxu0 %v5412
        %v5703 = vpop.f32.mrf.mxu0
        %v5704 = vadd.f32 %v5462, %v5703
        %v5705 = vpop.f32.mrf.mxu0
        %v5706 = vadd.f32 %v5466, %v5705
        %v5707 = vpop.f32.mrf.mxu0
        %v5708 = vadd.f32 %v5462, %v5707
        %v5709 = vpop.f32.mrf.mxu0
        %v5710 = vadd.f32 %v5466, %v5709
        %5711 = vmatprep.mubr.bf16.mxu0 0
        %5712 = vmatmul.mubr.bf16.gmra.mxu0 %v5413
        %v5713 = vpop.f32.mrf.mxu0
        %v5714 = vadd.f32 %v5462, %v5713
        %v5715 = vpop.f32.mrf.mxu0
        %v5716 = vadd.f32 %v5466, %v5715
        %v5717 = vpop.f32.mrf.mxu0
        %v5718 = vadd.f32 %v5462, %v5717
        %v5719 = vpop.f32.mrf.mxu0
        %v5720 = vadd.f32 %v5466, %v5719
        %5721 = vmatprep.mubr.bf16.mxu0 0
        %5722 = vmatmul.mubr.bf16.gmra.mxu0 %v5414
        %v5723 = vpop.f32.mrf.mxu0
        %v5724 = vadd.f32 %v5462, %v5723
        %v5725 = vpop.f32.mrf.mxu0
        %v5726 = vadd.f32 %v5466, %v5725
        %v5727 = vpop.f32.mrf.mxu0
        %v5728 = vadd.f32 %v5462, %v5727
        %v5729 = vpop.f32.mrf.mxu0
        %v5730 = vadd.f32 %v5466, %v5729
        %5731 = vmatprep.mubr.bf16.mxu0 0
        %5732 = vmatmul.mubr.bf16.gmra.mxu0 %v5415
        %v5733 = vpop.f32.mrf.mxu0
        %v5734 = vadd.f32 %v5462, %v5733
        %v5735 = vpop.f32.mrf.mxu0
        %v5736 = vadd.f32 %v5466, %v5735
        %v5737 = vpop.f32.mrf.mxu0
        %v5738 = vadd.f32 %v5462, %v5737
        %v5739 = vpop.f32.mrf.mxu0
        %v5740 = vadd.f32 %v5466, %v5739
        %5741 = vmatprep.mubr.bf16.mxu0 0
        %5742 = vmatmul.mubr.bf16.gmra.mxu0 %v5416
        %v5743 = vpop.f32.mrf.mxu0
        %v5744 = vadd.f32 %v5462, %v5743
        %v5745 = vpop.f32.mrf.mxu0
        %v5746 = vadd.f32 %v5466, %v5745
        %v5747 = vpop.f32.mrf.mxu0
        %v5748 = vadd.f32 %v5462, %v5747
        %v5749 = vpop.f32.mrf.mxu0
        %v5750 = vadd.f32 %v5466, %v5749
        %5751 = vmatprep.mubr.bf16.mxu0 0
        %5752 = vmatmul.mubr.bf16.gmra.mxu0 %v5417
        %v5753 = vpop.f32.mrf.mxu0
        %v5754 = vadd.f32 %v5462, %v5753
        %v5755 = vpop.f32.mrf.mxu0
        %v5756 = vadd.f32 %v5466, %v5755
        %v5757 = vpop.f32.mrf.mxu0
        %v5758 = vadd.f32 %v5462, %v5757
        %v5759 = vpop.f32.mrf.mxu0
        %v5760 = vadd.f32 %v5466, %v5759
        %5761 = vmatprep.mubr.bf16.mxu0 0
        %5762 = vmatmul.mubr.bf16.gmra.mxu0 %v5418
        %v5763 = vpop.f32.mrf.mxu0
        %v5764 = vadd.f32 %v5462, %v5763
        %v5765 = vpop.f32.mrf.mxu0
        %v5766 = vadd.f32 %v5466, %v5765
        %v5767 = vpop.f32.mrf.mxu0
        %v5768 = vadd.f32 %v5462, %v5767
        %v5769 = vpop.f32.mrf.mxu0
        %v5770 = vadd.f32 %v5466, %v5769
        %5771 = vmatprep.mubr.bf16.mxu0 0
        %5772 = vmatmul.mubr.bf16.gmra.mxu0 %v5419
        %v5773 = vpop.f32.mrf.mxu0
        %v5774 = vadd.f32 %v5462, %v5773
        %v5775 = vpop.f32.mrf.mxu0
        %v5776 = vadd.f32 %v5466, %v5775
        %v5777 = vpop.f32.mrf.mxu0
        %v5778 = vadd.f32 %v5462, %v5777
        %v5779 = vpop.f32.mrf.mxu0
        %v5780 = vadd.f32 %v5466, %v5779
        %5781 = vmatprep.mubr.bf16.mxu0 0
        %5782 = vmatmul.mubr.bf16.gmra.mxu0 %v5420
        %v5783 = vpop.f32.mrf.mxu0
        %v5784 = vadd.f32 %v5462, %v5783
        %v5785 = vpop.f32.mrf.mxu0
        %v5786 = vadd.f32 %v5466, %v5785
        %v5787 = vpop.f32.mrf.mxu0
        %v5788 = vadd.f32 %v5462, %v5787
        %v5789 = vpop.f32.mrf.mxu0
        %v5790 = vadd.f32 %v5466, %v5789
        %5791 = vmatprep.mubr.bf16.mxu0 0
        %5792 = vmatmul.mubr.bf16.gmra.mxu0 %v5421
        %v5793 = vpop.f32.mrf.mxu0
        %v5794 = vadd.f32 %v5462, %v5793
        %v5795 = vpop.f32.mrf.mxu0
        %v5796 = vadd.f32 %v5466, %v5795
        %v5797 = vpop.f32.mrf.mxu0
        %v5798 = vadd.f32 %v5462, %v5797
        %v5799 = vpop.f32.mrf.mxu0
        %v5800 = vadd.f32 %v5466, %v5799
        %5801 = vmatprep.mubr.bf16.mxu0 0
        %5802 = vmatmul.mubr.bf16.gmra.mxu0 %v5422
        %v5803 = vpop.f32.mrf.mxu0
        %v5804 = vadd.f32 %v5462, %v5803
        %v5805 = vpop.f32.mrf.mxu0
        %v5806 = vadd.f32 %v5466, %v5805
        %v5807 = vpop.f32.mrf.mxu0
        %v5808 = vadd.f32 %v5462, %v5807
        %v5809 = vpop.f32.mrf.mxu0
        %v5810 = vadd.f32 %v5466, %v5809
        %5811 = vmatprep.mubr.bf16.mxu0 0
        %5812 = vmatmul.mubr.bf16.gmra.mxu0 %v5423
        %v5813 = vpop.f32.mrf.mxu0
        %v5814 = vadd.f32 %v5462, %v5813
        %v5815 = vpop.f32.mrf.mxu0
        %v5816 = vadd.f32 %v5466, %v5815
        %v5817 = vpop.f32.mrf.mxu0
        %v5818 = vadd.f32 %v5462, %v5817
        %v5819 = vpop.f32.mrf.mxu0
        %v5820 = vadd.f32 %v5466, %v5819
        %5821 = vmatprep.mubr.bf16.mxu0 0
        %5822 = vmatmul.mubr.bf16.gmra.mxu0 %v5424
        %v5823 = vpop.f32.mrf.mxu0
        %v5824 = vadd.f32 %v5462, %v5823
        %v5825 = vpop.f32.mrf.mxu0
        %v5826 = vadd.f32 %v5466, %v5825
        %v5827 = vpop.f32.mrf.mxu0
        %v5828 = vadd.f32 %v5462, %v5827
        %v5829 = vpop.f32.mrf.mxu0
        %v5830 = vadd.f32 %v5466, %v5829
        %5831 = vdwg.mxu0
        %5832 = vmatprep.subr.bf16.mxu0 %v5606
        %5833 = vmatpush1.bf16.msra.mxu0 %v5605
        %5834 = vmatprep.subr.bf16.mxu0 %v5602
        %5835 = vmatpush1.bf16.msra.mxu0 %v5601
        %5836 = vmatprep.subr.bf16.mxu0 %v5598
        %5837 = vmatpush1.bf16.msra.mxu0 %v5597
        %5838 = vmatprep.subr.bf16.mxu0 %v5594
        %5839 = vmatpush1.bf16.msra.mxu0 %v5593
        %5840 = vmatprep.subr.bf16.mxu0 %v5590
        %5841 = vmatpush1.bf16.msra.mxu0 %v5589
        %5842 = vmatprep.subr.bf16.mxu0 %v5586
        %5843 = vmatpush1.bf16.msra.mxu0 %v5585
        %5844 = vmatprep.subr.bf16.mxu0 %v5582
        %5845 = vmatpush1.bf16.msra.mxu0 %v5581
        %5846 = vmatprep.subr.bf16.mxu0 %v5578
        %5847 = vmatpush1.bf16.msra.mxu0 %v5577
        %5848 = vmatprep.subr.bf16.mxu0 0
        %5849 = vmatpush2.bf16.msra.mxu0 0
        %5850 = vmatprep.subr.bf16.mxu0 0
        %5851 = vmatpush2.bf16.msra.mxu0 0
        %5852 = vmatprep.subr.bf16.mxu0 0
        %5853 = vmatpush2.bf16.msra.mxu0 0
        %5854 = vmatprep.subr.bf16.mxu0 0
        %5855 = vmatpush2.bf16.msra.mxu0 0
        %5856 = vmatprep.subr.bf16.mxu0 0
        %5857 = vmatpush2.bf16.msra.mxu0 0
        %5858 = vmatprep.subr.bf16.mxu0 0
        %5859 = vmatpush2.bf16.msra.mxu0 0
        %5860 = vmatprep.subr.bf16.mxu0 0
        %5861 = vmatpush2.bf16.msra.mxu0 0
        %5862 = vmatprep.subr.bf16.mxu0 0
        %5863 = vmatpush2.bf16.msra.mxu0 0
        %5864 = vmatprep.mubr.bf16.mxu0 0
        %5865 = vmatmul.mubr.bf16.gmra.mxu0 %v5409
        %v5866 = vpop.f32.mrf.mxu0
        %v5867 = vadd.f32 %v5470, %v5866
        %v5868 = vpop.f32.mrf.mxu0
        %v5869 = vadd.f32 %v5474, %v5868
        %v5870 = vpop.f32.mrf.mxu0
        %v5871 = vadd.f32 %v5470, %v5870
        %v5872 = vpop.f32.mrf.mxu0
        %v5873 = vadd.f32 %v5474, %v5872
        %5874 = vmatprep.mubr.bf16.mxu0 0
        %5875 = vmatmul.mubr.bf16.gmra.mxu0 %v5410
        %v5876 = vpop.f32.mrf.mxu0
        %v5877 = vadd.f32 %v5470, %v5876
        %v5878 = vpop.f32.mrf.mxu0
        %v5879 = vadd.f32 %v5474, %v5878
        %v5880 = vpop.f32.mrf.mxu0
        %v5881 = vadd.f32 %v5470, %v5880
        %v5882 = vpop.f32.mrf.mxu0
        %v5883 = vadd.f32 %v5474, %v5882
        %5884 = vmatprep.mubr.bf16.mxu0 0
        %5885 = vmatmul.mubr.bf16.gmra.mxu0 %v5411
        %v5886 = vpop.f32.mrf.mxu0
        %v5887 = vadd.f32 %v5470, %v5886
        %v5888 = vpop.f32.mrf.mxu0
        %v5889 = vadd.f32 %v5474, %v5888
        %v5890 = vpop.f32.mrf.mxu0
        %v5891 = vadd.f32 %v5470, %v5890
        %v5892 = vpop.f32.mrf.mxu0
        %v5893 = vadd.f32 %v5474, %v5892
        %5894 = vmatprep.mubr.bf16.mxu0 0
        %5895 = vmatmul.mubr.bf16.gmra.mxu0 %v5412
        %v5896 = vpop.f32.mrf.mxu0
        %v5897 = vadd.f32 %v5470, %v5896
        %v5898 = vpop.f32.mrf.mxu0
        %v5899 = vadd.f32 %v5474, %v5898
        %v5900 = vpop.f32.mrf.mxu0
        %v5901 = vadd.f32 %v5470, %v5900
        %v5902 = vpop.f32.mrf.mxu0
        %v5903 = vadd.f32 %v5474, %v5902
        %5904 = vmatprep.mubr.bf16.mxu0 0
        %5905 = vmatmul.mubr.bf16.gmra.mxu0 %v5413
        %v5906 = vpop.f32.mrf.mxu0
        %v5907 = vadd.f32 %v5470, %v5906
        %v5908 = vpop.f32.mrf.mxu0
        %v5909 = vadd.f32 %v5474, %v5908
        %v5910 = vpop.f32.mrf.mxu0
        %v5911 = vadd.f32 %v5470, %v5910
        %v5912 = vpop.f32.mrf.mxu0
        %v5913 = vadd.f32 %v5474, %v5912
        %5914 = vmatprep.mubr.bf16.mxu0 0
        %5915 = vmatmul.mubr.bf16.gmra.mxu0 %v5414
        %v5916 = vpop.f32.mrf.mxu0
        %v5917 = vadd.f32 %v5470, %v5916
        %v5918 = vpop.f32.mrf.mxu0
        %v5919 = vadd.f32 %v5474, %v5918
        %v5920 = vpop.f32.mrf.mxu0
        %v5921 = vadd.f32 %v5470, %v5920
        %v5922 = vpop.f32.mrf.mxu0
        %v5923 = vadd.f32 %v5474, %v5922
        %5924 = vmatprep.mubr.bf16.mxu0 0
        %5925 = vmatmul.mubr.bf16.gmra.mxu0 %v5415
        %v5926 = vpop.f32.mrf.mxu0
        %v5927 = vadd.f32 %v5470, %v5926
        %v5928 = vpop.f32.mrf.mxu0
        %v5929 = vadd.f32 %v5474, %v5928
        %v5930 = vpop.f32.mrf.mxu0
        %v5931 = vadd.f32 %v5470, %v5930
        %v5932 = vpop.f32.mrf.mxu0
        %v5933 = vadd.f32 %v5474, %v5932
        %5934 = vmatprep.mubr.bf16.mxu0 0
        %5935 = vmatmul.mubr.bf16.gmra.mxu0 %v5416
        %v5936 = vpop.f32.mrf.mxu0
        %v5937 = vadd.f32 %v5470, %v5936
        %v5938 = vpop.f32.mrf.mxu0
        %v5939 = vadd.f32 %v5474, %v5938
        %v5940 = vpop.f32.mrf.mxu0
        %v5941 = vadd.f32 %v5470, %v5940
        %v5942 = vpop.f32.mrf.mxu0
        %v5943 = vadd.f32 %v5474, %v5942
        %5944 = vmatprep.mubr.bf16.mxu0 0
        %5945 = vmatmul.mubr.bf16.gmra.mxu0 %v5417
        %v5946 = vpop.f32.mrf.mxu0
        %v5947 = vadd.f32 %v5470, %v5946
        %v5948 = vpop.f32.mrf.mxu0
        %v5949 = vadd.f32 %v5474, %v5948
        %v5950 = vpop.f32.mrf.mxu0
        %v5951 = vadd.f32 %v5470, %v5950
        %v5952 = vpop.f32.mrf.mxu0
        %v5953 = vadd.f32 %v5474, %v5952
        %5954 = vmatprep.mubr.bf16.mxu0 0
        %5955 = vmatmul.mubr.bf16.gmra.mxu0 %v5418
        %v5956 = vpop.f32.mrf.mxu0
        %v5957 = vadd.f32 %v5470, %v5956
        %v5958 = vpop.f32.mrf.mxu0
        %v5959 = vadd.f32 %v5474, %v5958
        %v5960 = vpop.f32.mrf.mxu0
        %v5961 = vadd.f32 %v5470, %v5960
        %v5962 = vpop.f32.mrf.mxu0
        %v5963 = vadd.f32 %v5474, %v5962
        %5964 = vmatprep.mubr.bf16.mxu0 0
        %5965 = vmatmul.mubr.bf16.gmra.mxu0 %v5419
        %v5966 = vpop.f32.mrf.mxu0
        %v5967 = vadd.f32 %v5470, %v5966
        %v5968 = vpop.f32.mrf.mxu0
        %v5969 = vadd.f32 %v5474, %v5968
        %v5970 = vpop.f32.mrf.mxu0
        %v5971 = vadd.f32 %v5470, %v5970
        %v5972 = vpop.f32.mrf.mxu0
        %v5973 = vadd.f32 %v5474, %v5972
        %5974 = vmatprep.mubr.bf16.mxu0 0
        %5975 = vmatmul.mubr.bf16.gmra.mxu0 %v5420
        %v5976 = vpop.f32.mrf.mxu0
        %v5977 = vadd.f32 %v5470, %v5976
        %v5978 = vpop.f32.mrf.mxu0
        %v5979 = vadd.f32 %v5474, %v5978
        %v5980 = vpop.f32.mrf.mxu0
        %v5981 = vadd.f32 %v5470, %v5980
        %v5982 = vpop.f32.mrf.mxu0
        %v5983 = vadd.f32 %v5474, %v5982
        %5984 = vmatprep.mubr.bf16.mxu0 0
        %5985 = vmatmul.mubr.bf16.gmra.mxu0 %v5421
        %v5986 = vpop.f32.mrf.mxu0
        %v5987 = vadd.f32 %v5470, %v5986
        %v5988 = vpop.f32.mrf.mxu0
        %v5989 = vadd.f32 %v5474, %v5988
        %v5990 = vpop.f32.mrf.mxu0
        %v5991 = vadd.f32 %v5470, %v5990
        %v5992 = vpop.f32.mrf.mxu0
        %v5993 = vadd.f32 %v5474, %v5992
        %5994 = vmatprep.mubr.bf16.mxu0 0
        %5995 = vmatmul.mubr.bf16.gmra.mxu0 %v5422
        %v5996 = vpop.f32.mrf.mxu0
        %v5997 = vadd.f32 %v5470, %v5996
        %v5998 = vpop.f32.mrf.mxu0
        %v5999 = vadd.f32 %v5474, %v5998
        %v6000 = vpop.f32.mrf.mxu0
        %v6001 = vadd.f32 %v5470, %v6000
        %v6002 = vpop.f32.mrf.mxu0
        %v6003 = vadd.f32 %v5474, %v6002
        %6004 = vmatprep.mubr.bf16.mxu0 0
        %6005 = vmatmul.mubr.bf16.gmra.mxu0 %v5423
        %v6006 = vpop.f32.mrf.mxu0
        %v6007 = vadd.f32 %v5470, %v6006
        %v6008 = vpop.f32.mrf.mxu0
        %v6009 = vadd.f32 %v5474, %v6008
        %v6010 = vpop.f32.mrf.mxu0
        %v6011 = vadd.f32 %v5470, %v6010
        %v6012 = vpop.f32.mrf.mxu0
        %v6013 = vadd.f32 %v5474, %v6012
        %6014 = vmatprep.mubr.bf16.mxu0 0
        %6015 = vmatmul.mubr.bf16.gmra.mxu0 %v5424
        %v6016 = vpop.f32.mrf.mxu0
        %v6017 = vadd.f32 %v5470, %v6016
        %v6018 = vpop.f32.mrf.mxu0
        %v6019 = vadd.f32 %v5474, %v6018
        %v6020 = vpop.f32.mrf.mxu0
        %v6021 = vadd.f32 %v5470, %v6020
        %v6022 = vpop.f32.mrf.mxu0
        %v6023 = vadd.f32 %v5474, %v6022
        %6024 = vdwg.mxu0
        %v6025 = vmul.f32 %v5674, 0.5
        %v6026 = vmul.f32 %v5676, 0.5
        %v6027 = vmul.f32 %v5867, 0.5
        %v6028 = vmul.f32 %v5869, 0.5
        %v6029 = vmul.f32 %v5678, 0.5
        %v6030 = vmul.f32 %v5680, 0.5
        %v6031 = vmul.f32 %v5871, 0.5
        %v6032 = vmul.f32 %v5873, 0.5
        %v6033 = vmul.f32 %v5684, 0.5
        %v6034 = vmul.f32 %v5686, 0.5
        %v6035 = vmul.f32 %v5877, 0.5
        %v6036 = vmul.f32 %v5879, 0.5
        %v6037 = vmul.f32 %v5688, 0.5
        %v6038 = vmul.f32 %v5690, 0.5
        %v6039 = vmul.f32 %v5881, 0.5
        %v6040 = vmul.f32 %v5883, 0.5
        %v6041 = vmul.f32 %v5694, 0.5
        %v6042 = vmul.f32 %v5696, 0.5
        %v6043 = vmul.f32 %v5887, 0.5
        %v6044 = vmul.f32 %v5889, 0.5
        %v6045 = vmul.f32 %v5698, 0.5
        %v6046 = vmul.f32 %v5700, 0.5
        %v6047 = vmul.f32 %v5891, 0.5
        %v6048 = vmul.f32 %v5893, 0.5
        %v6049 = vmul.f32 %v5704, 0.5
        %v6050 = vmul.f32 %v5706, 0.5
        %v6051 = vmul.f32 %v5897, 0.5
        %v6052 = vmul.f32 %v5899, 0.5
        %v6053 = vmul.f32 %v5708, 0.5
        %v6054 = vmul.f32 %v5710, 0.5
        %v6055 = vmul.f32 %v5901, 0.5
        %v6056 = vmul.f32 %v5903, 0.5
        %v6057 = vmul.f32 %v5714, 0.5
        %v6058 = vmul.f32 %v5716, 0.5
        %v6059 = vmul.f32 %v5907, 0.5
        %v6060 = vmul.f32 %v5909, 0.5
        %v6061 = vmul.f32 %v5718, 0.5
        %v6062 = vmul.f32 %v5720, 0.5
        %v6063 = vmul.f32 %v5911, 0.5
        %v6064 = vmul.f32 %v5913, 0.5
        %v6065 = vmul.f32 %v5724, 0.5
        %v6066 = vmul.f32 %v5726, 0.5
        %v6067 = vmul.f32 %v5917, 0.5
        %v6068 = vmul.f32 %v5919, 0.5
        %v6069 = vmul.f32 %v5728, 0.5
        %v6070 = vmul.f32 %v5730, 0.5
        %v6071 = vmul.f32 %v5921, 0.5
        %v6072 = vmul.f32 %v5923, 0.5
        %v6073 = vmul.f32 %v5734, 0.5
        %v6074 = vmul.f32 %v5736, 0.5
        %v6075 = vmul.f32 %v5927, 0.5
        %v6076 = vmul.f32 %v5929, 0.5
        %v6077 = vmul.f32 %v5738, 0.5
        %v6078 = vmul.f32 %v5740, 0.5
        %v6079 = vmul.f32 %v5931, 0.5
        %v6080 = vmul.f32 %v5933, 0.5
        %v6081 = vmul.f32 %v5744, 0.5
        %v6082 = vmul.f32 %v5746, 0.5
        %v6083 = vmul.f32 %v5937, 0.5
        %v6084 = vmul.f32 %v5939, 0.5
        %v6085 = vmul.f32 %v5748, 0.5
        %v6086 = vmul.f32 %v5750, 0.5
        %v6087 = vmul.f32 %v5941, 0.5
        %v6088 = vmul.f32 %v5943, 0.5
        %v6089 = vmul.f32 %v5754, 0.5
        %v6090 = vmul.f32 %v5756, 0.5
        %v6091 = vmul.f32 %v5947, 0.5
        %v6092 = vmul.f32 %v5949, 0.5
        %v6093 = vmul.f32 %v5758, 0.5
        %v6094 = vmul.f32 %v5760, 0.5
        %v6095 = vmul.f32 %v5951, 0.5
        %v6096 = vmul.f32 %v5953, 0.5
        %v6097 = vmul.f32 %v5764, 0.5
        %v6098 = vmul.f32 %v5766, 0.5
        %v6099 = vmul.f32 %v5957, 0.5
        %v6100 = vmul.f32 %v5959, 0.5
        %v6101 = vmul.f32 %v5768, 0.5
        %v6102 = vmul.f32 %v5770, 0.5
        %v6103 = vmul.f32 %v5961, 0.5
        %v6104 = vmul.f32 %v5963, 0.5
        %v6105 = vmul.f32 %v5774, 0.5
        %v6106 = vmul.f32 %v5776, 0.5
        %v6107 = vmul.f32 %v5967, 0.5
        %v6108 = vmul.f32 %v5969, 0.5
        %v6109 = vmul.f32 %v5778, 0.5
        %v6110 = vmul.f32 %v5780, 0.5
        %v6111 = vmul.f32 %v5971, 0.5
        %v6112 = vmul.f32 %v5973, 0.5
        %v6113 = vmul.f32 %v5784, 0.5
        %v6114 = vmul.f32 %v5786, 0.5
        %v6115 = vmul.f32 %v5977, 0.5
        %v6116 = vmul.f32 %v5979, 0.5
        %v6117 = vmul.f32 %v5788, 0.5
        %v6118 = vmul.f32 %v5790, 0.5
        %v6119 = vmul.f32 %v5981, 0.5
        %v6120 = vmul.f32 %v5983, 0.5
        %v6121 = vmul.f32 %v5794, 0.5
        %v6122 = vmul.f32 %v5796, 0.5
        %v6123 = vmul.f32 %v5987, 0.5
        %v6124 = vmul.f32 %v5989, 0.5
        %v6125 = vmul.f32 %v5798, 0.5
        %v6126 = vmul.f32 %v5800, 0.5
        %v6127 = vmul.f32 %v5991, 0.5
        %v6128 = vmul.f32 %v5993, 0.5
        %v6129 = vmul.f32 %v5804, 0.5
        %v6130 = vmul.f32 %v5806, 0.5
        %v6131 = vmul.f32 %v5997, 0.5
        %v6132 = vmul.f32 %v5999, 0.5
        %v6133 = vmul.f32 %v5808, 0.5
        %v6134 = vmul.f32 %v5810, 0.5
        %v6135 = vmul.f32 %v6001, 0.5
        %v6136 = vmul.f32 %v6003, 0.5
        %v6137 = vmul.f32 %v5814, 0.5
        %v6138 = vmul.f32 %v5816, 0.5
        %v6139 = vmul.f32 %v6007, 0.5
        %v6140 = vmul.f32 %v6009, 0.5
        %v6141 = vmul.f32 %v5818, 0.5
        %v6142 = vmul.f32 %v5820, 0.5
        %v6143 = vmul.f32 %v6011, 0.5
        %v6144 = vmul.f32 %v6013, 0.5
        %v6145 = vmul.f32 %v5824, 0.5
        %v6146 = vmul.f32 %v5826, 0.5
        %v6147 = vmul.f32 %v6017, 0.5
        %v6148 = vmul.f32 %v6019, 0.5
        %v6149 = vmul.f32 %v5828, 0.5
        %v6150 = vmul.f32 %v5830, 0.5
        %v6151 = vmul.f32 %v6021, 0.5
        %v6152 = vmul.f32 %v6023, 0.5
        %v6153 = vmul.f32 %v5674, 0.70710677
        %v6154 = vmul.f32 %v5676, 0.70710677
        %v6155 = vmul.f32 %v5867, 0.70710677
        %v6156 = vmul.f32 %v5869, 0.70710677
        %v6157 = vmul.f32 %v5678, 0.70710677
        %v6158 = vmul.f32 %v5680, 0.70710677
        %v6159 = vmul.f32 %v5871, 0.70710677
        %v6160 = vmul.f32 %v5873, 0.70710677
        %v6161 = vmul.f32 %v5684, 0.70710677
        %v6162 = vmul.f32 %v5686, 0.70710677
        %v6163 = vmul.f32 %v5877, 0.70710677
        %v6164 = vmul.f32 %v5879, 0.70710677
        %v6165 = vmul.f32 %v5688, 0.70710677
        %v6166 = vmul.f32 %v5690, 0.70710677
        %v6167 = vmul.f32 %v5881, 0.70710677
        %v6168 = vmul.f32 %v5883, 0.70710677
        %v6169 = vmul.f32 %v5694, 0.70710677
        %v6170 = vmul.f32 %v5696, 0.70710677
        %v6171 = vmul.f32 %v5887, 0.70710677
        %v6172 = vmul.f32 %v5889, 0.70710677
        %v6173 = vmul.f32 %v5698, 0.70710677
        %v6174 = vmul.f32 %v5700, 0.70710677
        %v6175 = vmul.f32 %v5891, 0.70710677
        %v6176 = vmul.f32 %v5893, 0.70710677
        %v6177 = vmul.f32 %v5704, 0.70710677
        %v6178 = vmul.f32 %v5706, 0.70710677
        %v6179 = vmul.f32 %v5897, 0.70710677
        %v6180 = vmul.f32 %v5899, 0.70710677
        %v6181 = vmul.f32 %v5708, 0.70710677
        %v6182 = vmul.f32 %v5710, 0.70710677
        %v6183 = vmul.f32 %v5901, 0.70710677
        %v6184 = vmul.f32 %v5903, 0.70710677
        %v6185 = vmul.f32 %v5714, 0.70710677
        %v6186 = vmul.f32 %v5716, 0.70710677
        %v6187 = vmul.f32 %v5907, 0.70710677
        %v6188 = vmul.f32 %v5909, 0.70710677
        %v6189 = vmul.f32 %v5718, 0.70710677
        %v6190 = vmul.f32 %v5720, 0.70710677
        %v6191 = vmul.f32 %v5911, 0.70710677
        %v6192 = vmul.f32 %v5913, 0.70710677
        %v6193 = vmul.f32 %v5724, 0.70710677
        %v6194 = vmul.f32 %v5726, 0.70710677
        %v6195 = vmul.f32 %v5917, 0.70710677
        %v6196 = vmul.f32 %v5919, 0.70710677
        %v6197 = vmul.f32 %v5728, 0.70710677
        %v6198 = vmul.f32 %v5730, 0.70710677
        %v6199 = vmul.f32 %v5921, 0.70710677
        %v6200 = vmul.f32 %v5923, 0.70710677
        %v6201 = vmul.f32 %v5734, 0.70710677
        %v6202 = vmul.f32 %v5736, 0.70710677
        %v6203 = vmul.f32 %v5927, 0.70710677
        %v6204 = vmul.f32 %v5929, 0.70710677
        %v6205 = vmul.f32 %v5738, 0.70710677
        %v6206 = vmul.f32 %v5740, 0.70710677
        %v6207 = vmul.f32 %v5931, 0.70710677
        %v6208 = vmul.f32 %v5933, 0.70710677
        %v6209 = vmul.f32 %v5744, 0.70710677
        %v6210 = vmul.f32 %v5746, 0.70710677
        %v6211 = vmul.f32 %v5937, 0.70710677
        %v6212 = vmul.f32 %v5939, 0.70710677
        %v6213 = vmul.f32 %v5748, 0.70710677
        %v6214 = vmul.f32 %v5750, 0.70710677
        %v6215 = vmul.f32 %v5941, 0.70710677
        %v6216 = vmul.f32 %v5943, 0.70710677
        %v6217 = vmul.f32 %v5754, 0.70710677
        %v6218 = vmul.f32 %v5756, 0.70710677
        %v6219 = vmul.f32 %v5947, 0.70710677
        %v6220 = vmul.f32 %v5949, 0.70710677
        %v6221 = vmul.f32 %v5758, 0.70710677
        %v6222 = vmul.f32 %v5760, 0.70710677
        %v6223 = vmul.f32 %v5951, 0.70710677
        %v6224 = vmul.f32 %v5953, 0.70710677
        %v6225 = vmul.f32 %v5764, 0.70710677
        %v6226 = vmul.f32 %v5766, 0.70710677
        %v6227 = vmul.f32 %v5957, 0.70710677
        %v6228 = vmul.f32 %v5959, 0.70710677
        %v6229 = vmul.f32 %v5768, 0.70710677
        %v6230 = vmul.f32 %v5770, 0.70710677
        %v6231 = vmul.f32 %v5961, 0.70710677
        %v6232 = vmul.f32 %v5963, 0.70710677
        %v6233 = vmul.f32 %v5774, 0.70710677
        %v6234 = vmul.f32 %v5776, 0.70710677
        %v6235 = vmul.f32 %v5967, 0.70710677
        %v6236 = vmul.f32 %v5969, 0.70710677
        %v6237 = vmul.f32 %v5778, 0.70710677
        %v6238 = vmul.f32 %v5780, 0.70710677
        %v6239 = vmul.f32 %v5971, 0.70710677
        %v6240 = vmul.f32 %v5973, 0.70710677
        %v6241 = vmul.f32 %v5784, 0.70710677
        %v6242 = vmul.f32 %v5786, 0.70710677
        %v6243 = vmul.f32 %v5977, 0.70710677
        %v6244 = vmul.f32 %v5979, 0.70710677
        %v6245 = vmul.f32 %v5788, 0.70710677
        %v6246 = vmul.f32 %v5790, 0.70710677
        %v6247 = vmul.f32 %v5981, 0.70710677
        %v6248 = vmul.f32 %v5983, 0.70710677
        %v6249 = vmul.f32 %v5794, 0.70710677
        %v6250 = vmul.f32 %v5796, 0.70710677
        %v6251 = vmul.f32 %v5987, 0.70710677
        %v6252 = vmul.f32 %v5989, 0.70710677
        %v6253 = vmul.f32 %v5798, 0.70710677
        %v6254 = vmul.f32 %v5800, 0.70710677
        %v6255 = vmul.f32 %v5991, 0.70710677
        %v6256 = vmul.f32 %v5993, 0.70710677
        %v6257 = vmul.f32 %v5804, 0.70710677
        %v6258 = vmul.f32 %v5806, 0.70710677
        %v6259 = vmul.f32 %v5997, 0.70710677
        %v6260 = vmul.f32 %v5999, 0.70710677
        %v6261 = vmul.f32 %v5808, 0.70710677
        %v6262 = vmul.f32 %v5810, 0.70710677
        %v6263 = vmul.f32 %v6001, 0.70710677
        %v6264 = vmul.f32 %v6003, 0.70710677
        %v6265 = vmul.f32 %v5814, 0.70710677
        %v6266 = vmul.f32 %v5816, 0.70710677
        %v6267 = vmul.f32 %v6007, 0.70710677
        %v6268 = vmul.f32 %v6009, 0.70710677
        %v6269 = vmul.f32 %v5818, 0.70710677
        %v6270 = vmul.f32 %v5820, 0.70710677
        %v6271 = vmul.f32 %v6011, 0.70710677
        %v6272 = vmul.f32 %v6013, 0.70710677
        %v6273 = vmul.f32 %v5824, 0.70710677
        %v6274 = vmul.f32 %v5826, 0.70710677
        %v6275 = vmul.f32 %v6017, 0.70710677
        %v6276 = vmul.f32 %v6019, 0.70710677
        %v6277 = vmul.f32 %v5828, 0.70710677
        %v6278 = vmul.f32 %v5830, 0.70710677
        %v6279 = vmul.f32 %v6021, 0.70710677
        %v6280 = vmul.f32 %v6023, 0.70710677
        %v6281 = verf.f32.pop %v6153
        %v6282 = verf.f32.pop %v6154
        %v6283 = verf.f32.pop %v6155
        %v6284 = verf.f32.pop %v6156
        %v6285 = verf.f32.pop %v6157
        %v6286 = verf.f32.pop %v6158
        %v6287 = verf.f32.pop %v6159
        %v6288 = verf.f32.pop %v6160
        %v6289 = verf.f32.pop %v6161
        %v6290 = verf.f32.pop %v6162
        %v6291 = verf.f32.pop %v6163
        %v6292 = verf.f32.pop %v6164
        %v6293 = verf.f32.pop %v6165
        %v6294 = verf.f32.pop %v6166
        %v6295 = verf.f32.pop %v6167
        %v6296 = verf.f32.pop %v6168
        %v6297 = verf.f32.pop %v6169
        %v6298 = verf.f32.pop %v6170
        %v6299 = verf.f32.pop %v6171
        %v6300 = verf.f32.pop %v6172
        %v6301 = verf.f32.pop %v6173
        %v6302 = verf.f32.pop %v6174
        %v6303 = verf.f32.pop %v6175
        %v6304 = verf.f32.pop %v6176
        %v6305 = verf.f32.pop %v6177
        %v6306 = verf.f32.pop %v6178
        %v6307 = verf.f32.pop %v6179
        %v6308 = verf.f32.pop %v6180
        %v6309 = verf.f32.pop %v6181
        %v6310 = verf.f32.pop %v6182
        %v6311 = verf.f32.pop %v6183
        %v6312 = verf.f32.pop %v6184
        %v6313 = verf.f32.pop %v6185
        %v6314 = verf.f32.pop %v6186
        %v6315 = verf.f32.pop %v6187
        %v6316 = verf.f32.pop %v6188
        %v6317 = verf.f32.pop %v6189
        %v6318 = verf.f32.pop %v6190
        %v6319 = verf.f32.pop %v6191
        %v6320 = verf.f32.pop %v6192
        %v6321 = verf.f32.pop %v6193
        %v6322 = verf.f32.pop %v6194
        %v6323 = verf.f32.pop %v6195
        %v6324 = verf.f32.pop %v6196
        %v6325 = verf.f32.pop %v6197
        %v6326 = verf.f32.pop %v6198
        %v6327 = verf.f32.pop %v6199
        %v6328 = verf.f32.pop %v6200
        %v6329 = verf.f32.pop %v6201
        %v6330 = verf.f32.pop %v6202
        %v6331 = verf.f32.pop %v6203
        %v6332 = verf.f32.pop %v6204
        %v6333 = verf.f32.pop %v6205
        %v6334 = verf.f32.pop %v6206
        %v6335 = verf.f32.pop %v6207
        %v6336 = verf.f32.pop %v6208
        %v6337 = verf.f32.pop %v6209
        %v6338 = verf.f32.pop %v6210
        %v6339 = verf.f32.pop %v6211
        %v6340 = verf.f32.pop %v6212
        %v6341 = verf.f32.pop %v6213
        %v6342 = verf.f32.pop %v6214
        %v6343 = verf.f32.pop %v6215
        %v6344 = verf.f32.pop %v6216
        %v6345 = verf.f32.pop %v6217
        %v6346 = verf.f32.pop %v6218
        %v6347 = verf.f32.pop %v6219
        %v6348 = verf.f32.pop %v6220
        %v6349 = verf.f32.pop %v6221
        %v6350 = verf.f32.pop %v6222
        %v6351 = verf.f32.pop %v6223
        %v6352 = verf.f32.pop %v6224
        %v6353 = verf.f32.pop %v6225
        %v6354 = verf.f32.pop %v6226
        %v6355 = verf.f32.pop %v6227
        %v6356 = verf.f32.pop %v6228
        %v6357 = verf.f32.pop %v6229
        %v6358 = verf.f32.pop %v6230
        %v6359 = verf.f32.pop %v6231
        %v6360 = verf.f32.pop %v6232
        %v6361 = verf.f32.pop %v6233
        %v6362 = verf.f32.pop %v6234
        %v6363 = verf.f32.pop %v6235
        %v6364 = verf.f32.pop %v6236
        %v6365 = verf.f32.pop %v6237
        %v6366 = verf.f32.pop %v6238
        %v6367 = verf.f32.pop %v6239
        %v6368 = verf.f32.pop %v6240
        %v6369 = verf.f32.pop %v6241
        %v6370 = verf.f32.pop %v6242
        %v6371 = verf.f32.pop %v6243
        %v6372 = verf.f32.pop %v6244
        %v6373 = verf.f32.pop %v6245
        %v6374 = verf.f32.pop %v6246
        %v6375 = verf.f32.pop %v6247
        %v6376 = verf.f32.pop %v6248
        %v6377 = verf.f32.pop %v6249
        %v6378 = verf.f32.pop %v6250
        %v6379 = verf.f32.pop %v6251
        %v6380 = verf.f32.pop %v6252
        %v6381 = verf.f32.pop %v6253
        %v6382 = verf.f32.pop %v6254
        %v6383 = verf.f32.pop %v6255
        %v6384 = verf.f32.pop %v6256
        %v6385 = verf.f32.pop %v6257
        %v6386 = verf.f32.pop %v6258
        %v6387 = verf.f32.pop %v6259
        %v6388 = verf.f32.pop %v6260
        %v6389 = verf.f32.pop %v6261
        %v6390 = verf.f32.pop %v6262
        %v6391 = verf.f32.pop %v6263
        %v6392 = verf.f32.pop %v6264
        %v6393 = verf.f32.pop %v6265
        %v6394 = verf.f32.pop %v6266
        %v6395 = verf.f32.pop %v6267
        %v6396 = verf.f32.pop %v6268
        %v6397 = verf.f32.pop %v6269
        %v6398 = verf.f32.pop %v6270
        %v6399 = verf.f32.pop %v6271
        %v6400 = verf.f32.pop %v6272
        %v6401 = verf.f32.pop %v6273
        %v6402 = verf.f32.pop %v6274
        %v6403 = verf.f32.pop %v6275
        %v6404 = verf.f32.pop %v6276
        %v6405 = verf.f32.pop %v6277
        %v6406 = verf.f32.pop %v6278
        %v6407 = verf.f32.pop %v6279
        %v6408 = verf.f32.pop %v6280
        %v6409 = vadd.f32 %v6281, 1.0
        %v6410 = vadd.f32 %v6282, 1.0
        %v6411 = vadd.f32 %v6283, 1.0
        %v6412 = vadd.f32 %v6284, 1.0
        %v6413 = vadd.f32 %v6285, 1.0
        %v6414 = vadd.f32 %v6286, 1.0
        %v6415 = vadd.f32 %v6287, 1.0
        %v6416 = vadd.f32 %v6288, 1.0
        %v6417 = vadd.f32 %v6289, 1.0
        %v6418 = vadd.f32 %v6290, 1.0
        %v6419 = vadd.f32 %v6291, 1.0
        %v6420 = vadd.f32 %v6292, 1.0
        %v6421 = vadd.f32 %v6293, 1.0
        %v6422 = vadd.f32 %v6294, 1.0
        %v6423 = vadd.f32 %v6295, 1.0
        %v6424 = vadd.f32 %v6296, 1.0
        %v6425 = vadd.f32 %v6297, 1.0
        %v6426 = vadd.f32 %v6298, 1.0
        %v6427 = vadd.f32 %v6299, 1.0
        %v6428 = vadd.f32 %v6300, 1.0
        %v6429 = vadd.f32 %v6301, 1.0
        %v6430 = vadd.f32 %v6302, 1.0
        %v6431 = vadd.f32 %v6303, 1.0
        %v6432 = vadd.f32 %v6304, 1.0
        %v6433 = vadd.f32 %v6305, 1.0
        %v6434 = vadd.f32 %v6306, 1.0
        %v6435 = vadd.f32 %v6307, 1.0
        %v6436 = vadd.f32 %v6308, 1.0
        %v6437 = vadd.f32 %v6309, 1.0
        %v6438 = vadd.f32 %v6310, 1.0
        %v6439 = vadd.f32 %v6311, 1.0
        %v6440 = vadd.f32 %v6312, 1.0
        %v6441 = vadd.f32 %v6313, 1.0
        %v6442 = vadd.f32 %v6314, 1.0
        %v6443 = vadd.f32 %v6315, 1.0
        %v6444 = vadd.f32 %v6316, 1.0
        %v6445 = vadd.f32 %v6317, 1.0
        %v6446 = vadd.f32 %v6318, 1.0
        %v6447 = vadd.f32 %v6319, 1.0
        %v6448 = vadd.f32 %v6320, 1.0
        %v6449 = vadd.f32 %v6321, 1.0
        %v6450 = vadd.f32 %v6322, 1.0
        %v6451 = vadd.f32 %v6323, 1.0
        %v6452 = vadd.f32 %v6324, 1.0
        %v6453 = vadd.f32 %v6325, 1.0
        %v6454 = vadd.f32 %v6326, 1.0
        %v6455 = vadd.f32 %v6327, 1.0
        %v6456 = vadd.f32 %v6328, 1.0
        %v6457 = vadd.f32 %v6329, 1.0
        %v6458 = vadd.f32 %v6330, 1.0
        %v6459 = vadd.f32 %v6331, 1.0
        %v6460 = vadd.f32 %v6332, 1.0
        %v6461 = vadd.f32 %v6333, 1.0
        %v6462 = vadd.f32 %v6334, 1.0
        %v6463 = vadd.f32 %v6335, 1.0
        %v6464 = vadd.f32 %v6336, 1.0
        %v6465 = vadd.f32 %v6337, 1.0
        %v6466 = vadd.f32 %v6338, 1.0
        %v6467 = vadd.f32 %v6339, 1.0
        %v6468 = vadd.f32 %v6340, 1.0
        %v6469 = vadd.f32 %v6341, 1.0
        %v6470 = vadd.f32 %v6342, 1.0
        %v6471 = vadd.f32 %v6343, 1.0
        %v6472 = vadd.f32 %v6344, 1.0
        %v6473 = vadd.f32 %v6345, 1.0
        %v6474 = vadd.f32 %v6346, 1.0
        %v6475 = vadd.f32 %v6347, 1.0
        %v6476 = vadd.f32 %v6348, 1.0
        %v6477 = vadd.f32 %v6349, 1.0
        %v6478 = vadd.f32 %v6350, 1.0
        %v6479 = vadd.f32 %v6351, 1.0
        %v6480 = vadd.f32 %v6352, 1.0
        %v6481 = vadd.f32 %v6353, 1.0
        %v6482 = vadd.f32 %v6354, 1.0
        %v6483 = vadd.f32 %v6355, 1.0
        %v6484 = vadd.f32 %v6356, 1.0
        %v6485 = vadd.f32 %v6357, 1.0
        %v6486 = vadd.f32 %v6358, 1.0
        %v6487 = vadd.f32 %v6359, 1.0
        %v6488 = vadd.f32 %v6360, 1.0
        %v6489 = vadd.f32 %v6361, 1.0
        %v6490 = vadd.f32 %v6362, 1.0
        %v6491 = vadd.f32 %v6363, 1.0
        %v6492 = vadd.f32 %v6364, 1.0
        %v6493 = vadd.f32 %v6365, 1.0
        %v6494 = vadd.f32 %v6366, 1.0
        %v6495 = vadd.f32 %v6367, 1.0
        %v6496 = vadd.f32 %v6368, 1.0
        %v6497 = vadd.f32 %v6369, 1.0
        %v6498 = vadd.f32 %v6370, 1.0
        %v6499 = vadd.f32 %v6371, 1.0
        %v6500 = vadd.f32 %v6372, 1.0
        %v6501 = vadd.f32 %v6373, 1.0
        %v6502 = vadd.f32 %v6374, 1.0
        %v6503 = vadd.f32 %v6375, 1.0
        %v6504 = vadd.f32 %v6376, 1.0
        %v6505 = vadd.f32 %v6377, 1.0
        %v6506 = vadd.f32 %v6378, 1.0
        %v6507 = vadd.f32 %v6379, 1.0
        %v6508 = vadd.f32 %v6380, 1.0
        %v6509 = vadd.f32 %v6381, 1.0
        %v6510 = vadd.f32 %v6382, 1.0
        %v6511 = vadd.f32 %v6383, 1.0
        %v6512 = vadd.f32 %v6384, 1.0
        %v6513 = vadd.f32 %v6385, 1.0
        %v6514 = vadd.f32 %v6386, 1.0
        %v6515 = vadd.f32 %v6387, 1.0
        %v6516 = vadd.f32 %v6388, 1.0
        %v6517 = vadd.f32 %v6389, 1.0
        %v6518 = vadd.f32 %v6390, 1.0
        %v6519 = vadd.f32 %v6391, 1.0
        %v6520 = vadd.f32 %v6392, 1.0
        %v6521 = vadd.f32 %v6393, 1.0
        %v6522 = vadd.f32 %v6394, 1.0
        %v6523 = vadd.f32 %v6395, 1.0
        %v6524 = vadd.f32 %v6396, 1.0
        %v6525 = vadd.f32 %v6397, 1.0
        %v6526 = vadd.f32 %v6398, 1.0
        %v6527 = vadd.f32 %v6399, 1.0
        %v6528 = vadd.f32 %v6400, 1.0
        %v6529 = vadd.f32 %v6401, 1.0
        %v6530 = vadd.f32 %v6402, 1.0
        %v6531 = vadd.f32 %v6403, 1.0
        %v6532 = vadd.f32 %v6404, 1.0
        %v6533 = vadd.f32 %v6405, 1.0
        %v6534 = vadd.f32 %v6406, 1.0
        %v6535 = vadd.f32 %v6407, 1.0
        %v6536 = vadd.f32 %v6408, 1.0
        %v6537 = vmul.f32 %v6025, %v6409
        %v6538 = vmul.f32 %v6026, %v6410
        %v6539 = vmul.f32 %v6027, %v6411
        %v6540 = vmul.f32 %v6028, %v6412
        %v6541 = vmul.f32 %v6029, %v6413
        %v6542 = vmul.f32 %v6030, %v6414
        %v6543 = vmul.f32 %v6031, %v6415
        %v6544 = vmul.f32 %v6032, %v6416
        %v6545 = vmul.f32 %v6033, %v6417
        %v6546 = vmul.f32 %v6034, %v6418
        %v6547 = vmul.f32 %v6035, %v6419
        %v6548 = vmul.f32 %v6036, %v6420
        %v6549 = vmul.f32 %v6037, %v6421
        %v6550 = vmul.f32 %v6038, %v6422
        %v6551 = vmul.f32 %v6039, %v6423
        %v6552 = vmul.f32 %v6040, %v6424
        %v6553 = vmul.f32 %v6041, %v6425
        %v6554 = vmul.f32 %v6042, %v6426
        %v6555 = vmul.f32 %v6043, %v6427
        %v6556 = vmul.f32 %v6044, %v6428
        %v6557 = vmul.f32 %v6045, %v6429
        %v6558 = vmul.f32 %v6046, %v6430
        %v6559 = vmul.f32 %v6047, %v6431
        %v6560 = vmul.f32 %v6048, %v6432
        %v6561 = vmul.f32 %v6049, %v6433
        %v6562 = vmul.f32 %v6050, %v6434
        %v6563 = vmul.f32 %v6051, %v6435
        %v6564 = vmul.f32 %v6052, %v6436
        %v6565 = vmul.f32 %v6053, %v6437
        %v6566 = vmul.f32 %v6054, %v6438
        %v6567 = vmul.f32 %v6055, %v6439
        %v6568 = vmul.f32 %v6056, %v6440
        %v6569 = vmul.f32 %v6057, %v6441
        %v6570 = vmul.f32 %v6058, %v6442
        %v6571 = vmul.f32 %v6059, %v6443
        %v6572 = vmul.f32 %v6060, %v6444
        %v6573 = vmul.f32 %v6061, %v6445
        %v6574 = vmul.f32 %v6062, %v6446
        %v6575 = vmul.f32 %v6063, %v6447
        %v6576 = vmul.f32 %v6064, %v6448
        %v6577 = vmul.f32 %v6065, %v6449
        %v6578 = vmul.f32 %v6066, %v6450
        %v6579 = vmul.f32 %v6067, %v6451
        %v6580 = vmul.f32 %v6068, %v6452
        %v6581 = vmul.f32 %v6069, %v6453
        %v6582 = vmul.f32 %v6070, %v6454
        %v6583 = vmul.f32 %v6071, %v6455
        %v6584 = vmul.f32 %v6072, %v6456
        %v6585 = vmul.f32 %v6073, %v6457
        %v6586 = vmul.f32 %v6074, %v6458
        %v6587 = vmul.f32 %v6075, %v6459
        %v6588 = vmul.f32 %v6076, %v6460
        %v6589 = vmul.f32 %v6077, %v6461
        %v6590 = vmul.f32 %v6078, %v6462
        %v6591 = vmul.f32 %v6079, %v6463
        %v6592 = vmul.f32 %v6080, %v6464
        %v6593 = vmul.f32 %v6081, %v6465
        %v6594 = vmul.f32 %v6082, %v6466
        %v6595 = vmul.f32 %v6083, %v6467
        %v6596 = vmul.f32 %v6084, %v6468
        %v6597 = vmul.f32 %v6085, %v6469
        %v6598 = vmul.f32 %v6086, %v6470
        %v6599 = vmul.f32 %v6087, %v6471
        %v6600 = vmul.f32 %v6088, %v6472
        %v6601 = vmul.f32 %v6089, %v6473
        %v6602 = vmul.f32 %v6090, %v6474
        %v6603 = vmul.f32 %v6091, %v6475
        %v6604 = vmul.f32 %v6092, %v6476
        %v6605 = vmul.f32 %v6093, %v6477
        %v6606 = vmul.f32 %v6094, %v6478
        %v6607 = vmul.f32 %v6095, %v6479
        %v6608 = vmul.f32 %v6096, %v6480
        %v6609 = vmul.f32 %v6097, %v6481
        %v6610 = vmul.f32 %v6098, %v6482
        %v6611 = vmul.f32 %v6099, %v6483
        %v6612 = vmul.f32 %v6100, %v6484
        %v6613 = vmul.f32 %v6101, %v6485
        %v6614 = vmul.f32 %v6102, %v6486
        %v6615 = vmul.f32 %v6103, %v6487
        %v6616 = vmul.f32 %v6104, %v6488
        %v6617 = vmul.f32 %v6105, %v6489
        %v6618 = vmul.f32 %v6106, %v6490
        %v6619 = vmul.f32 %v6107, %v6491
        %v6620 = vmul.f32 %v6108, %v6492
        %v6621 = vmul.f32 %v6109, %v6493
        %v6622 = vmul.f32 %v6110, %v6494
        %v6623 = vmul.f32 %v6111, %v6495
        %v6624 = vmul.f32 %v6112, %v6496
        %v6625 = vmul.f32 %v6113, %v6497
        %v6626 = vmul.f32 %v6114, %v6498
        %v6627 = vmul.f32 %v6115, %v6499
        %v6628 = vmul.f32 %v6116, %v6500
        %v6629 = vmul.f32 %v6117, %v6501
        %v6630 = vmul.f32 %v6118, %v6502
        %v6631 = vmul.f32 %v6119, %v6503
        %v6632 = vmul.f32 %v6120, %v6504
        %v6633 = vmul.f32 %v6121, %v6505
        %v6634 = vmul.f32 %v6122, %v6506
        %v6635 = vmul.f32 %v6123, %v6507
        %v6636 = vmul.f32 %v6124, %v6508
        %v6637 = vmul.f32 %v6125, %v6509
        %v6638 = vmul.f32 %v6126, %v6510
        %v6639 = vmul.f32 %v6127, %v6511
        %v6640 = vmul.f32 %v6128, %v6512
        %v6641 = vmul.f32 %v6129, %v6513
        %v6642 = vmul.f32 %v6130, %v6514
        %v6643 = vmul.f32 %v6131, %v6515
        %v6644 = vmul.f32 %v6132, %v6516
        %v6645 = vmul.f32 %v6133, %v6517
        %v6646 = vmul.f32 %v6134, %v6518
        %v6647 = vmul.f32 %v6135, %v6519
        %v6648 = vmul.f32 %v6136, %v6520
        %v6649 = vmul.f32 %v6137, %v6521
        %v6650 = vmul.f32 %v6138, %v6522
        %v6651 = vmul.f32 %v6139, %v6523
        %v6652 = vmul.f32 %v6140, %v6524
        %v6653 = vmul.f32 %v6141, %v6525
        %v6654 = vmul.f32 %v6142, %v6526
        %v6655 = vmul.f32 %v6143, %v6527
        %v6656 = vmul.f32 %v6144, %v6528
        %v6657 = vmul.f32 %v6145, %v6529
        %v6658 = vmul.f32 %v6146, %v6530
        %v6659 = vmul.f32 %v6147, %v6531
        %v6660 = vmul.f32 %v6148, %v6532
        %v6661 = vmul.f32 %v6149, %v6533
        %v6662 = vmul.f32 %v6150, %v6534
        %v6663 = vmul.f32 %v6151, %v6535
        %v6664 = vmul.f32 %v6152, %v6536
        %v6665 = vmul.f32 %v6537, %v6537
        %v6666 = vmul.f32 %v6538, %v6538
        %v6667 = vmul.f32 %v6539, %v6539
        %v6668 = vmul.f32 %v6540, %v6540
        %v6669 = vmul.f32 %v6541, %v6541
        %v6670 = vmul.f32 %v6542, %v6542
        %v6671 = vmul.f32 %v6543, %v6543
        %v6672 = vmul.f32 %v6544, %v6544
        %v6673 = vmul.f32 %v6545, %v6545
        %v6674 = vmul.f32 %v6546, %v6546
        %v6675 = vmul.f32 %v6547, %v6547
        %v6676 = vmul.f32 %v6548, %v6548
        %v6677 = vmul.f32 %v6549, %v6549
        %v6678 = vmul.f32 %v6550, %v6550
        %v6679 = vmul.f32 %v6551, %v6551
        %v6680 = vmul.f32 %v6552, %v6552
        %v6681 = vmul.f32 %v6553, %v6553
        %v6682 = vmul.f32 %v6554, %v6554
        %v6683 = vmul.f32 %v6555, %v6555
        %v6684 = vmul.f32 %v6556, %v6556
        %v6685 = vmul.f32 %v6557, %v6557
        %v6686 = vmul.f32 %v6558, %v6558
        %v6687 = vmul.f32 %v6559, %v6559
        %v6688 = vmul.f32 %v6560, %v6560
        %v6689 = vmul.f32 %v6561, %v6561
        %v6690 = vmul.f32 %v6562, %v6562
        %v6691 = vmul.f32 %v6563, %v6563
        %v6692 = vmul.f32 %v6564, %v6564
        %v6693 = vmul.f32 %v6565, %v6565
        %v6694 = vmul.f32 %v6566, %v6566
        %v6695 = vmul.f32 %v6567, %v6567
        %v6696 = vmul.f32 %v6568, %v6568
        %v6697 = vmul.f32 %v6569, %v6569
        %v6698 = vmul.f32 %v6570, %v6570
        %v6699 = vmul.f32 %v6571, %v6571
        %v6700 = vmul.f32 %v6572, %v6572
        %v6701 = vmul.f32 %v6573, %v6573
        %v6702 = vmul.f32 %v6574, %v6574
        %v6703 = vmul.f32 %v6575, %v6575
        %v6704 = vmul.f32 %v6576, %v6576
        %v6705 = vmul.f32 %v6577, %v6577
        %v6706 = vmul.f32 %v6578, %v6578
        %v6707 = vmul.f32 %v6579, %v6579
        %v6708 = vmul.f32 %v6580, %v6580
        %v6709 = vmul.f32 %v6581, %v6581
        %v6710 = vmul.f32 %v6582, %v6582
        %v6711 = vmul.f32 %v6583, %v6583
        %v6712 = vmul.f32 %v6584, %v6584
        %v6713 = vmul.f32 %v6585, %v6585
        %v6714 = vmul.f32 %v6586, %v6586
        %v6715 = vmul.f32 %v6587, %v6587
        %v6716 = vmul.f32 %v6588, %v6588
        %v6717 = vmul.f32 %v6589, %v6589
        %v6718 = vmul.f32 %v6590, %v6590
        %v6719 = vmul.f32 %v6591, %v6591
        %v6720 = vmul.f32 %v6592, %v6592
        %v6721 = vmul.f32 %v6593, %v6593
        %v6722 = vmul.f32 %v6594, %v6594
        %v6723 = vmul.f32 %v6595, %v6595
        %v6724 = vmul.f32 %v6596, %v6596
        %v6725 = vmul.f32 %v6597, %v6597
        %v6726 = vmul.f32 %v6598, %v6598
        %v6727 = vmul.f32 %v6599, %v6599
        %v6728 = vmul.f32 %v6600, %v6600
        %v6729 = vmul.f32 %v6601, %v6601
        %v6730 = vmul.f32 %v6602, %v6602
        %v6731 = vmul.f32 %v6603, %v6603
        %v6732 = vmul.f32 %v6604, %v6604
        %v6733 = vmul.f32 %v6605, %v6605
        %v6734 = vmul.f32 %v6606, %v6606
        %v6735 = vmul.f32 %v6607, %v6607
        %v6736 = vmul.f32 %v6608, %v6608
        %v6737 = vmul.f32 %v6609, %v6609
        %v6738 = vmul.f32 %v6610, %v6610
        %v6739 = vmul.f32 %v6611, %v6611
        %v6740 = vmul.f32 %v6612, %v6612
        %v6741 = vmul.f32 %v6613, %v6613
        %v6742 = vmul.f32 %v6614, %v6614
        %v6743 = vmul.f32 %v6615, %v6615
        %v6744 = vmul.f32 %v6616, %v6616
        %v6745 = vmul.f32 %v6617, %v6617
        %v6746 = vmul.f32 %v6618, %v6618
        %v6747 = vmul.f32 %v6619, %v6619
        %v6748 = vmul.f32 %v6620, %v6620
        %v6749 = vmul.f32 %v6621, %v6621
        %v6750 = vmul.f32 %v6622, %v6622
        %v6751 = vmul.f32 %v6623, %v6623
        %v6752 = vmul.f32 %v6624, %v6624
        %v6753 = vmul.f32 %v6625, %v6625
        %v6754 = vmul.f32 %v6626, %v6626
        %v6755 = vmul.f32 %v6627, %v6627
        %v6756 = vmul.f32 %v6628, %v6628
        %v6757 = vmul.f32 %v6629, %v6629
        %v6758 = vmul.f32 %v6630, %v6630
        %v6759 = vmul.f32 %v6631, %v6631
        %v6760 = vmul.f32 %v6632, %v6632
        %v6761 = vmul.f32 %v6633, %v6633
        %v6762 = vmul.f32 %v6634, %v6634
        %v6763 = vmul.f32 %v6635, %v6635
        %v6764 = vmul.f32 %v6636, %v6636
        %v6765 = vmul.f32 %v6637, %v6637
        %v6766 = vmul.f32 %v6638, %v6638
        %v6767 = vmul.f32 %v6639, %v6639
        %v6768 = vmul.f32 %v6640, %v6640
        %v6769 = vmul.f32 %v6641, %v6641
        %v6770 = vmul.f32 %v6642, %v6642
        %v6771 = vmul.f32 %v6643, %v6643
        %v6772 = vmul.f32 %v6644, %v6644
        %v6773 = vmul.f32 %v6645, %v6645
        %v6774 = vmul.f32 %v6646, %v6646
        %v6775 = vmul.f32 %v6647, %v6647
        %v6776 = vmul.f32 %v6648, %v6648
        %v6777 = vmul.f32 %v6649, %v6649
        %v6778 = vmul.f32 %v6650, %v6650
        %v6779 = vmul.f32 %v6651, %v6651
        %v6780 = vmul.f32 %v6652, %v6652
        %v6781 = vmul.f32 %v6653, %v6653
        %v6782 = vmul.f32 %v6654, %v6654
        %v6783 = vmul.f32 %v6655, %v6655
        %v6784 = vmul.f32 %v6656, %v6656
        %v6785 = vmul.f32 %v6657, %v6657
        %v6786 = vmul.f32 %v6658, %v6658
        %v6787 = vmul.f32 %v6659, %v6659
        %v6788 = vmul.f32 %v6660, %v6660
        %v6789 = vmul.f32 %v6661, %v6661
        %v6790 = vmul.f32 %v6662, %v6662
        %v6791 = vmul.f32 %v6663, %v6663
        %v6792 = vmul.f32 %v6664, %v6664
        %v6793 = vadd.f32 %v6665, %v6669
        %v6794 = vadd.f32 %v6793, %v6673
        %v6795 = vadd.f32 %v6794, %v6677
        %v6796 = vadd.f32 %v6795, %v6681
        %v6797 = vadd.f32 %v6796, %v6685
        %v6798 = vadd.f32 %v6797, %v6689
        %v6799 = vadd.f32 %v6798, %v6693
        %v6800 = vadd.f32 %v6799, %v6697
        %v6801 = vadd.f32 %v6800, %v6701
        %v6802 = vadd.f32 %v6801, %v6705
        %v6803 = vadd.f32 %v6802, %v6709
        %v6804 = vadd.f32 %v6803, %v6713
        %v6805 = vadd.f32 %v6804, %v6717
        %v6806 = vadd.f32 %v6805, %v6721
        %v6807 = vadd.f32 %v6806, %v6725
        %v6808 = vadd.f32 %v6807, %v6729
        %v6809 = vadd.f32 %v6808, %v6733
        %v6810 = vadd.f32 %v6809, %v6737
        %v6811 = vadd.f32 %v6810, %v6741
        %v6812 = vadd.f32 %v6811, %v6745
        %v6813 = vadd.f32 %v6812, %v6749
        %v6814 = vadd.f32 %v6813, %v6753
        %v6815 = vadd.f32 %v6814, %v6757
        %v6816 = vadd.f32 %v6815, %v6761
        %v6817 = vadd.f32 %v6816, %v6765
        %v6818 = vadd.f32 %v6817, %v6769
        %v6819 = vadd.f32 %v6818, %v6773
        %v6820 = vadd.f32 %v6819, %v6777
        %v6821 = vadd.f32 %v6820, %v6781
        %v6822 = vadd.f32 %v6821, %v6785
        %v6823 = vadd.f32 %v6822, %v6789
        %v6824 = vrot.slane %v6823, 4
        %v6825 = vadd.f32 %v6823, %v6824
        %v6826 = vrot.slane %v6825, 2
        %v6827 = vadd.f32 %v6825, %v6826
        %v6828 = vrot.slane %v6827, 1
        %v6829 = vadd.f32 %v6827, %v6828
        %v6830 = vadd.f32 %v6666, %v6670
        %v6831 = vadd.f32 %v6830, %v6674
        %v6832 = vadd.f32 %v6831, %v6678
        %v6833 = vadd.f32 %v6832, %v6682
        %v6834 = vadd.f32 %v6833, %v6686
        %v6835 = vadd.f32 %v6834, %v6690
        %v6836 = vadd.f32 %v6835, %v6694
        %v6837 = vadd.f32 %v6836, %v6698
        %v6838 = vadd.f32 %v6837, %v6702
        %v6839 = vadd.f32 %v6838, %v6706
        %v6840 = vadd.f32 %v6839, %v6710
        %v6841 = vadd.f32 %v6840, %v6714
        %v6842 = vadd.f32 %v6841, %v6718
        %v6843 = vadd.f32 %v6842, %v6722
        %v6844 = vadd.f32 %v6843, %v6726
        %v6845 = vadd.f32 %v6844, %v6730
        %v6846 = vadd.f32 %v6845, %v6734
        %v6847 = vadd.f32 %v6846, %v6738
        %v6848 = vadd.f32 %v6847, %v6742
        %v6849 = vadd.f32 %v6848, %v6746
        %v6850 = vadd.f32 %v6849, %v6750
        %v6851 = vadd.f32 %v6850, %v6754
        %v6852 = vadd.f32 %v6851, %v6758
        %v6853 = vadd.f32 %v6852, %v6762
        %v6854 = vadd.f32 %v6853, %v6766
        %v6855 = vadd.f32 %v6854, %v6770
        %v6856 = vadd.f32 %v6855, %v6774
        %v6857 = vadd.f32 %v6856, %v6778
        %v6858 = vadd.f32 %v6857, %v6782
        %v6859 = vadd.f32 %v6858, %v6786
        %v6860 = vadd.f32 %v6859, %v6790
        %v6861 = vrot.slane %v6860, 4
        %v6862 = vadd.f32 %v6860, %v6861
        %v6863 = vrot.slane %v6862, 2
        %v6864 = vadd.f32 %v6862, %v6863
        %v6865 = vrot.slane %v6864, 1
        %v6866 = vadd.f32 %v6864, %v6865
        %v6867 = vadd.f32 %v6667, %v6671
        %v6868 = vadd.f32 %v6867, %v6675
        %v6869 = vadd.f32 %v6868, %v6679
        %v6870 = vadd.f32 %v6869, %v6683
        %v6871 = vadd.f32 %v6870, %v6687
        %v6872 = vadd.f32 %v6871, %v6691
        %v6873 = vadd.f32 %v6872, %v6695
        %v6874 = vadd.f32 %v6873, %v6699
        %v6875 = vadd.f32 %v6874, %v6703
        %v6876 = vadd.f32 %v6875, %v6707
        %v6877 = vadd.f32 %v6876, %v6711
        %v6878 = vadd.f32 %v6877, %v6715
        %v6879 = vadd.f32 %v6878, %v6719
        %v6880 = vadd.f32 %v6879, %v6723
        %v6881 = vadd.f32 %v6880, %v6727
        %v6882 = vadd.f32 %v6881, %v6731
        %v6883 = vadd.f32 %v6882, %v6735
        %v6884 = vadd.f32 %v6883, %v6739
        %v6885 = vadd.f32 %v6884, %v6743
        %v6886 = vadd.f32 %v6885, %v6747
        %v6887 = vadd.f32 %v6886, %v6751
        %v6888 = vadd.f32 %v6887, %v6755
        %v6889 = vadd.f32 %v6888, %v6759
        %v6890 = vadd.f32 %v6889, %v6763
        %v6891 = vadd.f32 %v6890, %v6767
        %v6892 = vadd.f32 %v6891, %v6771
        %v6893 = vadd.f32 %v6892, %v6775
        %v6894 = vadd.f32 %v6893, %v6779
        %v6895 = vadd.f32 %v6894, %v6783
        %v6896 = vadd.f32 %v6895, %v6787
        %v6897 = vadd.f32 %v6896, %v6791
        %v6898 = vrot.slane %v6897, 4
        %v6899 = vadd.f32 %v6897, %v6898
        %v6900 = vrot.slane %v6899, 2
        %v6901 = vadd.f32 %v6899, %v6900
        %v6902 = vrot.slane %v6901, 1
        %v6903 = vadd.f32 %v6901, %v6902
        %v6904 = vadd.f32 %v6668, %v6672
        %v6905 = vadd.f32 %v6904, %v6676
        %v6906 = vadd.f32 %v6905, %v6680
        %v6907 = vadd.f32 %v6906, %v6684
        %v6908 = vadd.f32 %v6907, %v6688
        %v6909 = vadd.f32 %v6908, %v6692
        %v6910 = vadd.f32 %v6909, %v6696
        %v6911 = vadd.f32 %v6910, %v6700
        %v6912 = vadd.f32 %v6911, %v6704
        %v6913 = vadd.f32 %v6912, %v6708
        %v6914 = vadd.f32 %v6913, %v6712
        %v6915 = vadd.f32 %v6914, %v6716
        %v6916 = vadd.f32 %v6915, %v6720
        %v6917 = vadd.f32 %v6916, %v6724
        %v6918 = vadd.f32 %v6917, %v6728
        %v6919 = vadd.f32 %v6918, %v6732
        %v6920 = vadd.f32 %v6919, %v6736
        %v6921 = vadd.f32 %v6920, %v6740
        %v6922 = vadd.f32 %v6921, %v6744
        %v6923 = vadd.f32 %v6922, %v6748
        %v6924 = vadd.f32 %v6923, %v6752
        %v6925 = vadd.f32 %v6924, %v6756
        %v6926 = vadd.f32 %v6925, %v6760
        %v6927 = vadd.f32 %v6926, %v6764
        %v6928 = vadd.f32 %v6927, %v6768
        %v6929 = vadd.f32 %v6928, %v6772
        %v6930 = vadd.f32 %v6929, %v6776
        %v6931 = vadd.f32 %v6930, %v6780
        %v6932 = vadd.f32 %v6931, %v6784
        %v6933 = vadd.f32 %v6932, %v6788
        %v6934 = vadd.f32 %v6933, %v6792
        %v6935 = vrot.slane %v6934, 4
        %v6936 = vadd.f32 %v6934, %v6935
        %v6937 = vrot.slane %v6936, 2
        %v6938 = vadd.f32 %v6936, %v6937
        %v6939 = vrot.slane %v6938, 1
        %v6940 = vadd.f32 %v6938, %v6939
        %v6941 = vrsqrt.pop %v6829
        %v6942 = vmul.f32 %v6829, %v6941
        %vm6943 = vcmp.eq.f32.partialorder %v6829, inf
        %v6944 = vsel %vm6943, %v6829, %v6942
        %vm6945 = vcmp.eq.f32.partialorder %v6829, 0.0
        %v6946 = vand.u32 %v6829, 2147483648
        %v6947 = vsel %vm6945, %v6946, %v6944
        %v6948 = vrsqrt.pop %v6866
        %v6949 = vmul.f32 %v6866, %v6948
        %vm6950 = vcmp.eq.f32.partialorder %v6866, inf
        %v6951 = vsel %vm6950, %v6866, %v6949
        %vm6952 = vcmp.eq.f32.partialorder %v6866, 0.0
        %v6953 = vand.u32 %v6866, 2147483648
        %v6954 = vsel %vm6952, %v6953, %v6951
        %v6955 = vrsqrt.pop %v6903
        %v6956 = vmul.f32 %v6903, %v6955
        %vm6957 = vcmp.eq.f32.partialorder %v6903, inf
        %v6958 = vsel %vm6957, %v6903, %v6956
        %vm6959 = vcmp.eq.f32.partialorder %v6903, 0.0
        %v6960 = vand.u32 %v6903, 2147483648
        %v6961 = vsel %vm6959, %v6960, %v6958
        %v6962 = vrsqrt.pop %v6940
        %v6963 = vmul.f32 %v6940, %v6962
        %vm6964 = vcmp.eq.f32.partialorder %v6940, inf
        %v6965 = vsel %vm6964, %v6940, %v6963
        %vm6966 = vcmp.eq.f32.partialorder %v6940, 0.0
        %v6967 = vand.u32 %v6940, 2147483648
        %v6968 = vsel %vm6966, %v6967, %v6965
        %v6973 = vcombine.low %v6947, %v6954
        %v6974 = vcombine.low %v6961, %v6968
        %v6976 = vunpack.c.l.s4 1983009808
        %v6977 = vunpack.c.0.s8 %v6976
        %v6978 = vlaneseq
        %v6979 = vshrl.u32 %v6978, 7
        %v6980 = vsub.s32 %v6977, %v6979
        %v6981 = vrot.slane %v6973, %v6980
        %v6983 = vunpack.c.l.s4 1983009808
        %v6984 = vunpack.c.0.s8 %v6983
        %v6985 = vlaneseq
        %v6986 = vshrl.u32 %v6985, 7
        %v6987 = vsub.s32 %v6984, %v6986
        %v6988 = vrot.slane %v6974, %v6987
        %v6989 = vcombine.low %v6981, %v6988
        %v6992 = vunpack.c.l.s4 1966171168
        %v6993 = vunpack.c.0.s8 %v6992
        %v6994 = vlaneseq
        %v6995 = vshrl.u32 %v6994, 7
        %v6996 = vsub.s32 %v6993, %v6995
        %v6997 = vrot.slane %v6989, %v6996
        %vm6998 = vcmask 1043456
        %v6999 = vsel %vm6998, %v6997, 0.0
        %7000 = vadd.xlane.f32.xlu0 %v6999
        %v7001 = vpop.xlane.xlu0 %7000
        %v7002 = vrcp.pop 128.0
        %v7003 = vmul.f32 %v7001, %v7002
        %v7004 = vadd.f32 %v7003, 1e-06
        %v7005 = vrcp.pop %v7004
        %v7006 = vmul.f32 %v6997, %v7005
        %v7008 = vunpack.c.l.s4 1935823168
        %v7009 = vunpack.c.0.s8 %v7008
        %v7010 = vlaneseq
        %v7011 = vshrl.u32 %v7010, 7
        %v7012 = vsub.s32 %v7009, %v7011
        %v7013 = vrot.slane %v7006, %v7012
        %v7014 = vld [vmem:[%s8] sm:$0xf]
        %v7016 = vlaneseq
        %v7017 = vshrl.u32 %v7016, 7
        %v7018 = vsub.s32 0, %v7017
        %v7019 = vrot.slane %v7013, %v7018
        %v7020 = vlaneseq
        %v7021 = vshrl.u32 %v7020, 7
        %v7022 = vsub.s32 2, %v7021
        %v7023 = vrot.slane %v7013, %v7022
        %v7024 = vlaneseq
        %v7025 = vshrl.u32 %v7024, 7
        %v7026 = vsub.s32 4, %v7025
        %v7027 = vrot.slane %v7013, %v7026
        %v7028 = vlaneseq
        %v7029 = vshrl.u32 %v7028, 7
        %v7030 = vsub.s32 6, %v7029
        %v7031 = vrot.slane %v7013, %v7030
        %v7036 = vlaneseq
        %v7037 = vshrl.u32 %v7036, 7
        %v7038 = vsub.s32 0, %v7037
        %v7039 = vrot.slane %v7019, %v7038
        %v7040 = vlaneseq
        %v7041 = vshrl.u32 %v7040, 7
        %v7042 = vsub.s32 0, %v7041
        %v7043 = vrot.slane %v7023, %v7042
        %v7044 = vlaneseq
        %v7045 = vshrl.u32 %v7044, 7
        %v7046 = vsub.s32 0, %v7045
        %v7047 = vrot.slane %v7027, %v7046
        %v7048 = vlaneseq
        %v7049 = vshrl.u32 %v7048, 7
        %v7050 = vsub.s32 0, %v7049
        %v7051 = vrot.slane %v7031, %v7050
        %v7052 = vmul.f32 %v6537, %v7039
        %v7053 = vmul.f32 %v6538, %v7043
        %v7054 = vmul.f32 %v6539, %v7047
        %v7055 = vmul.f32 %v6540, %v7051
        %v7056 = vmul.f32 %v6541, %v7039
        %v7057 = vmul.f32 %v6542, %v7043
        %v7058 = vmul.f32 %v6543, %v7047
        %v7059 = vmul.f32 %v6544, %v7051
        %v7060 = vmul.f32 %v6545, %v7039
        %v7061 = vmul.f32 %v6546, %v7043
        %v7062 = vmul.f32 %v6547, %v7047
        %v7063 = vmul.f32 %v6548, %v7051
        %v7064 = vmul.f32 %v6549, %v7039
        %v7065 = vmul.f32 %v6550, %v7043
        %v7066 = vmul.f32 %v6551, %v7047
        %v7067 = vmul.f32 %v6552, %v7051
        %v7068 = vmul.f32 %v6553, %v7039
        %v7069 = vmul.f32 %v6554, %v7043
        %v7070 = vmul.f32 %v6555, %v7047
        %v7071 = vmul.f32 %v6556, %v7051
        %v7072 = vmul.f32 %v6557, %v7039
        %v7073 = vmul.f32 %v6558, %v7043
        %v7074 = vmul.f32 %v6559, %v7047
        %v7075 = vmul.f32 %v6560, %v7051
        %v7076 = vmul.f32 %v6561, %v7039
        %v7077 = vmul.f32 %v6562, %v7043
        %v7078 = vmul.f32 %v6563, %v7047
        %v7079 = vmul.f32 %v6564, %v7051
        %v7080 = vmul.f32 %v6565, %v7039
        %v7081 = vmul.f32 %v6566, %v7043
        %v7082 = vmul.f32 %v6567, %v7047
        %v7083 = vmul.f32 %v6568, %v7051
        %v7084 = vmul.f32 %v6569, %v7039
        %v7085 = vmul.f32 %v6570, %v7043
        %v7086 = vmul.f32 %v6571, %v7047
        %v7087 = vmul.f32 %v6572, %v7051
        %v7088 = vmul.f32 %v6573, %v7039
        %v7089 = vmul.f32 %v6574, %v7043
        %v7090 = vmul.f32 %v6575, %v7047
        %v7091 = vmul.f32 %v6576, %v7051
        %v7092 = vmul.f32 %v6577, %v7039
        %v7093 = vmul.f32 %v6578, %v7043
        %v7094 = vmul.f32 %v6579, %v7047
        %v7095 = vmul.f32 %v6580, %v7051
        %v7096 = vmul.f32 %v6581, %v7039
        %v7097 = vmul.f32 %v6582, %v7043
        %v7098 = vmul.f32 %v6583, %v7047
        %v7099 = vmul.f32 %v6584, %v7051
        %v7100 = vmul.f32 %v6585, %v7039
        %v7101 = vmul.f32 %v6586, %v7043
        %v7102 = vmul.f32 %v6587, %v7047
        %v7103 = vmul.f32 %v6588, %v7051
        %v7104 = vmul.f32 %v6589, %v7039
        %v7105 = vmul.f32 %v6590, %v7043
        %v7106 = vmul.f32 %v6591, %v7047
        %v7107 = vmul.f32 %v6592, %v7051
        %v7108 = vmul.f32 %v6593, %v7039
        %v7109 = vmul.f32 %v6594, %v7043
        %v7110 = vmul.f32 %v6595, %v7047
        %v7111 = vmul.f32 %v6596, %v7051
        %v7112 = vmul.f32 %v6597, %v7039
        %v7113 = vmul.f32 %v6598, %v7043
        %v7114 = vmul.f32 %v6599, %v7047
        %v7115 = vmul.f32 %v6600, %v7051
        %v7116 = vmul.f32 %v6601, %v7039
        %v7117 = vmul.f32 %v6602, %v7043
        %v7118 = vmul.f32 %v6603, %v7047
        %v7119 = vmul.f32 %v6604, %v7051
        %v7120 = vmul.f32 %v6605, %v7039
        %v7121 = vmul.f32 %v6606, %v7043
        %v7122 = vmul.f32 %v6607, %v7047
        %v7123 = vmul.f32 %v6608, %v7051
        %v7124 = vmul.f32 %v6609, %v7039
        %v7125 = vmul.f32 %v6610, %v7043
        %v7126 = vmul.f32 %v6611, %v7047
        %v7127 = vmul.f32 %v6612, %v7051
        %v7128 = vmul.f32 %v6613, %v7039
        %v7129 = vmul.f32 %v6614, %v7043
        %v7130 = vmul.f32 %v6615, %v7047
        %v7131 = vmul.f32 %v6616, %v7051
        %v7132 = vmul.f32 %v6617, %v7039
        %v7133 = vmul.f32 %v6618, %v7043
        %v7134 = vmul.f32 %v6619, %v7047
        %v7135 = vmul.f32 %v6620, %v7051
        %v7136 = vmul.f32 %v6621, %v7039
        %v7137 = vmul.f32 %v6622, %v7043
        %v7138 = vmul.f32 %v6623, %v7047
        %v7139 = vmul.f32 %v6624, %v7051
        %v7140 = vmul.f32 %v6625, %v7039
        %v7141 = vmul.f32 %v6626, %v7043
        %v7142 = vmul.f32 %v6627, %v7047
        %v7143 = vmul.f32 %v6628, %v7051
        %v7144 = vmul.f32 %v6629, %v7039
        %v7145 = vmul.f32 %v6630, %v7043
        %v7146 = vmul.f32 %v6631, %v7047
        %v7147 = vmul.f32 %v6632, %v7051
        %v7148 = vmul.f32 %v6633, %v7039
        %v7149 = vmul.f32 %v6634, %v7043
        %v7150 = vmul.f32 %v6635, %v7047
        %v7151 = vmul.f32 %v6636, %v7051
        %v7152 = vmul.f32 %v6637, %v7039
        %v7153 = vmul.f32 %v6638, %v7043
        %v7154 = vmul.f32 %v6639, %v7047
        %v7155 = vmul.f32 %v6640, %v7051
        %v7156 = vmul.f32 %v6641, %v7039
        %v7157 = vmul.f32 %v6642, %v7043
        %v7158 = vmul.f32 %v6643, %v7047
        %v7159 = vmul.f32 %v6644, %v7051
        %v7160 = vmul.f32 %v6645, %v7039
        %v7161 = vmul.f32 %v6646, %v7043
        %v7162 = vmul.f32 %v6647, %v7047
        %v7163 = vmul.f32 %v6648, %v7051
        %v7164 = vmul.f32 %v6649, %v7039
        %v7165 = vmul.f32 %v6650, %v7043
        %v7166 = vmul.f32 %v6651, %v7047
        %v7167 = vmul.f32 %v6652, %v7051
        %v7168 = vmul.f32 %v6653, %v7039
        %v7169 = vmul.f32 %v6654, %v7043
        %v7170 = vmul.f32 %v6655, %v7047
        %v7171 = vmul.f32 %v6656, %v7051
        %v7172 = vmul.f32 %v6657, %v7039
        %v7173 = vmul.f32 %v6658, %v7043
        %v7174 = vmul.f32 %v6659, %v7047
        %v7175 = vmul.f32 %v6660, %v7051
        %v7176 = vmul.f32 %v6661, %v7039
        %v7177 = vmul.f32 %v6662, %v7043
        %v7178 = vmul.f32 %v6663, %v7047
        %v7179 = vmul.f32 %v6664, %v7051
        %v7181 = vlaneseq
        %v7182 = vshrl.u32 %v7181, 7
        %v7183 = vsub.s32 0, %v7182
        %v7184 = vrot.slane %v7014, %v7183
        %v7185 = vlaneseq
        %v7186 = vshrl.u32 %v7185, 7
        %v7187 = vsub.s32 1, %v7186
        %v7188 = vrot.slane %v7014, %v7187
        %v7189 = vlaneseq
        %v7190 = vshrl.u32 %v7189, 7
        %v7191 = vsub.s32 2, %v7190
        %v7192 = vrot.slane %v7014, %v7191
        %v7193 = vlaneseq
        %v7194 = vshrl.u32 %v7193, 7
        %v7195 = vsub.s32 3, %v7194
        %v7196 = vrot.slane %v7014, %v7195
        %v7201 = vmul.f32 %v7184, %v7052
        %v7202 = vmul.f32 %v7188, %v7053
        %v7203 = vmul.f32 %v7192, %v7054
        %v7204 = vmul.f32 %v7196, %v7055
        %v7205 = vmul.f32 %v7184, %v7056
        %v7206 = vmul.f32 %v7188, %v7057
        %v7207 = vmul.f32 %v7192, %v7058
        %v7208 = vmul.f32 %v7196, %v7059
        %v7209 = vmul.f32 %v7184, %v7060
        %v7210 = vmul.f32 %v7188, %v7061
        %v7211 = vmul.f32 %v7192, %v7062
        %v7212 = vmul.f32 %v7196, %v7063
        %v7213 = vmul.f32 %v7184, %v7064
        %v7214 = vmul.f32 %v7188, %v7065
        %v7215 = vmul.f32 %v7192, %v7066
        %v7216 = vmul.f32 %v7196, %v7067
        %v7217 = vmul.f32 %v7184, %v7068
        %v7218 = vmul.f32 %v7188, %v7069
        %v7219 = vmul.f32 %v7192, %v7070
        %v7220 = vmul.f32 %v7196, %v7071
        %v7221 = vmul.f32 %v7184, %v7072
        %v7222 = vmul.f32 %v7188, %v7073
        %v7223 = vmul.f32 %v7192, %v7074
        %v7224 = vmul.f32 %v7196, %v7075
        %v7225 = vmul.f32 %v7184, %v7076
        %v7226 = vmul.f32 %v7188, %v7077
        %v7227 = vmul.f32 %v7192, %v7078
        %v7228 = vmul.f32 %v7196, %v7079
        %v7229 = vmul.f32 %v7184, %v7080
        %v7230 = vmul.f32 %v7188, %v7081
        %v7231 = vmul.f32 %v7192, %v7082
        %v7232 = vmul.f32 %v7196, %v7083
        %v7233 = vmul.f32 %v7184, %v7084
        %v7234 = vmul.f32 %v7188, %v7085
        %v7235 = vmul.f32 %v7192, %v7086
        %v7236 = vmul.f32 %v7196, %v7087
        %v7237 = vmul.f32 %v7184, %v7088
        %v7238 = vmul.f32 %v7188, %v7089
        %v7239 = vmul.f32 %v7192, %v7090
        %v7240 = vmul.f32 %v7196, %v7091
        %v7241 = vmul.f32 %v7184, %v7092
        %v7242 = vmul.f32 %v7188, %v7093
        %v7243 = vmul.f32 %v7192, %v7094
        %v7244 = vmul.f32 %v7196, %v7095
        %v7245 = vmul.f32 %v7184, %v7096
        %v7246 = vmul.f32 %v7188, %v7097
        %v7247 = vmul.f32 %v7192, %v7098
        %v7248 = vmul.f32 %v7196, %v7099
        %v7249 = vmul.f32 %v7184, %v7100
        %v7250 = vmul.f32 %v7188, %v7101
        %v7251 = vmul.f32 %v7192, %v7102
        %v7252 = vmul.f32 %v7196, %v7103
        %v7253 = vmul.f32 %v7184, %v7104
        %v7254 = vmul.f32 %v7188, %v7105
        %v7255 = vmul.f32 %v7192, %v7106
        %v7256 = vmul.f32 %v7196, %v7107
        %v7257 = vmul.f32 %v7184, %v7108
        %v7258 = vmul.f32 %v7188, %v7109
        %v7259 = vmul.f32 %v7192, %v7110
        %v7260 = vmul.f32 %v7196, %v7111
        %v7261 = vmul.f32 %v7184, %v7112
        %v7262 = vmul.f32 %v7188, %v7113
        %v7263 = vmul.f32 %v7192, %v7114
        %v7264 = vmul.f32 %v7196, %v7115
        %v7265 = vmul.f32 %v7184, %v7116
        %v7266 = vmul.f32 %v7188, %v7117
        %v7267 = vmul.f32 %v7192, %v7118
        %v7268 = vmul.f32 %v7196, %v7119
        %v7269 = vmul.f32 %v7184, %v7120
        %v7270 = vmul.f32 %v7188, %v7121
        %v7271 = vmul.f32 %v7192, %v7122
        %v7272 = vmul.f32 %v7196, %v7123
        %v7273 = vmul.f32 %v7184, %v7124
        %v7274 = vmul.f32 %v7188, %v7125
        %v7275 = vmul.f32 %v7192, %v7126
        %v7276 = vmul.f32 %v7196, %v7127
        %v7277 = vmul.f32 %v7184, %v7128
        %v7278 = vmul.f32 %v7188, %v7129
        %v7279 = vmul.f32 %v7192, %v7130
        %v7280 = vmul.f32 %v7196, %v7131
        %v7281 = vmul.f32 %v7184, %v7132
        %v7282 = vmul.f32 %v7188, %v7133
        %v7283 = vmul.f32 %v7192, %v7134
        %v7284 = vmul.f32 %v7196, %v7135
        %v7285 = vmul.f32 %v7184, %v7136
        %v7286 = vmul.f32 %v7188, %v7137
        %v7287 = vmul.f32 %v7192, %v7138
        %v7288 = vmul.f32 %v7196, %v7139
        %v7289 = vmul.f32 %v7184, %v7140
        %v7290 = vmul.f32 %v7188, %v7141
        %v7291 = vmul.f32 %v7192, %v7142
        %v7292 = vmul.f32 %v7196, %v7143
        %v7293 = vmul.f32 %v7184, %v7144
        %v7294 = vmul.f32 %v7188, %v7145
        %v7295 = vmul.f32 %v7192, %v7146
        %v7296 = vmul.f32 %v7196, %v7147
        %v7297 = vmul.f32 %v7184, %v7148
        %v7298 = vmul.f32 %v7188, %v7149
        %v7299 = vmul.f32 %v7192, %v7150
        %v7300 = vmul.f32 %v7196, %v7151
        %v7301 = vmul.f32 %v7184, %v7152
        %v7302 = vmul.f32 %v7188, %v7153
        %v7303 = vmul.f32 %v7192, %v7154
        %v7304 = vmul.f32 %v7196, %v7155
        %v7305 = vmul.f32 %v7184, %v7156
        %v7306 = vmul.f32 %v7188, %v7157
        %v7307 = vmul.f32 %v7192, %v7158
        %v7308 = vmul.f32 %v7196, %v7159
        %v7309 = vmul.f32 %v7184, %v7160
        %v7310 = vmul.f32 %v7188, %v7161
        %v7311 = vmul.f32 %v7192, %v7162
        %v7312 = vmul.f32 %v7196, %v7163
        %v7313 = vmul.f32 %v7184, %v7164
        %v7314 = vmul.f32 %v7188, %v7165
        %v7315 = vmul.f32 %v7192, %v7166
        %v7316 = vmul.f32 %v7196, %v7167
        %v7317 = vmul.f32 %v7184, %v7168
        %v7318 = vmul.f32 %v7188, %v7169
        %v7319 = vmul.f32 %v7192, %v7170
        %v7320 = vmul.f32 %v7196, %v7171
        %v7321 = vmul.f32 %v7184, %v7172
        %v7322 = vmul.f32 %v7188, %v7173
        %v7323 = vmul.f32 %v7192, %v7174
        %v7324 = vmul.f32 %v7196, %v7175
        %v7325 = vmul.f32 %v7184, %v7176
        %v7326 = vmul.f32 %v7188, %v7177
        %v7327 = vmul.f32 %v7192, %v7178
        %v7328 = vmul.f32 %v7196, %v7179
        %v7329 = vld [vmem:[%s9] sm:$0xf]
        %v7331 = vlaneseq
        %v7332 = vshrl.u32 %v7331, 7
        %v7333 = vsub.s32 0, %v7332
        %v7334 = vrot.slane %v7329, %v7333
        %v7335 = vlaneseq
        %v7336 = vshrl.u32 %v7335, 7
        %v7337 = vsub.s32 1, %v7336
        %v7338 = vrot.slane %v7329, %v7337
        %v7339 = vlaneseq
        %v7340 = vshrl.u32 %v7339, 7
        %v7341 = vsub.s32 2, %v7340
        %v7342 = vrot.slane %v7329, %v7341
        %v7343 = vlaneseq
        %v7344 = vshrl.u32 %v7343, 7
        %v7345 = vsub.s32 3, %v7344
        %v7346 = vrot.slane %v7329, %v7345
        %v7351 = vadd.f32 %v7201, %v7334
        %v7352 = vadd.f32 %v7202, %v7338
        %v7353 = vadd.f32 %v7203, %v7342
        %v7354 = vadd.f32 %v7204, %v7346
        %v7355 = vadd.f32 %v7205, %v7334
        %v7356 = vadd.f32 %v7206, %v7338
        %v7357 = vadd.f32 %v7207, %v7342
        %v7358 = vadd.f32 %v7208, %v7346
        %v7359 = vadd.f32 %v7209, %v7334
        %v7360 = vadd.f32 %v7210, %v7338
        %v7361 = vadd.f32 %v7211, %v7342
        %v7362 = vadd.f32 %v7212, %v7346
        %v7363 = vadd.f32 %v7213, %v7334
        %v7364 = vadd.f32 %v7214, %v7338
        %v7365 = vadd.f32 %v7215, %v7342
        %v7366 = vadd.f32 %v7216, %v7346
        %v7367 = vadd.f32 %v7217, %v7334
        %v7368 = vadd.f32 %v7218, %v7338
        %v7369 = vadd.f32 %v7219, %v7342
        %v7370 = vadd.f32 %v7220, %v7346
        %v7371 = vadd.f32 %v7221, %v7334
        %v7372 = vadd.f32 %v7222, %v7338
        %v7373 = vadd.f32 %v7223, %v7342
        %v7374 = vadd.f32 %v7224, %v7346
        %v7375 = vadd.f32 %v7225, %v7334
        %v7376 = vadd.f32 %v7226, %v7338
        %v7377 = vadd.f32 %v7227, %v7342
        %v7378 = vadd.f32 %v7228, %v7346
        %v7379 = vadd.f32 %v7229, %v7334
        %v7380 = vadd.f32 %v7230, %v7338
        %v7381 = vadd.f32 %v7231, %v7342
        %v7382 = vadd.f32 %v7232, %v7346
        %v7383 = vadd.f32 %v7233, %v7334
        %v7384 = vadd.f32 %v7234, %v7338
        %v7385 = vadd.f32 %v7235, %v7342
        %v7386 = vadd.f32 %v7236, %v7346
        %v7387 = vadd.f32 %v7237, %v7334
        %v7388 = vadd.f32 %v7238, %v7338
        %v7389 = vadd.f32 %v7239, %v7342
        %v7390 = vadd.f32 %v7240, %v7346
        %v7391 = vadd.f32 %v7241, %v7334
        %v7392 = vadd.f32 %v7242, %v7338
        %v7393 = vadd.f32 %v7243, %v7342
        %v7394 = vadd.f32 %v7244, %v7346
        %v7395 = vadd.f32 %v7245, %v7334
        %v7396 = vadd.f32 %v7246, %v7338
        %v7397 = vadd.f32 %v7247, %v7342
        %v7398 = vadd.f32 %v7248, %v7346
        %v7399 = vadd.f32 %v7249, %v7334
        %v7400 = vadd.f32 %v7250, %v7338
        %v7401 = vadd.f32 %v7251, %v7342
        %v7402 = vadd.f32 %v7252, %v7346
        %v7403 = vadd.f32 %v7253, %v7334
        %v7404 = vadd.f32 %v7254, %v7338
        %v7405 = vadd.f32 %v7255, %v7342
        %v7406 = vadd.f32 %v7256, %v7346
        %v7407 = vadd.f32 %v7257, %v7334
        %v7408 = vadd.f32 %v7258, %v7338
        %v7409 = vadd.f32 %v7259, %v7342
        %v7410 = vadd.f32 %v7260, %v7346
        %v7411 = vadd.f32 %v7261, %v7334
        %v7412 = vadd.f32 %v7262, %v7338
        %v7413 = vadd.f32 %v7263, %v7342
        %v7414 = vadd.f32 %v7264, %v7346
        %v7415 = vadd.f32 %v7265, %v7334
        %v7416 = vadd.f32 %v7266, %v7338
        %v7417 = vadd.f32 %v7267, %v7342
        %v7418 = vadd.f32 %v7268, %v7346
        %v7419 = vadd.f32 %v7269, %v7334
        %v7420 = vadd.f32 %v7270, %v7338
        %v7421 = vadd.f32 %v7271, %v7342
        %v7422 = vadd.f32 %v7272, %v7346
        %v7423 = vadd.f32 %v7273, %v7334
        %v7424 = vadd.f32 %v7274, %v7338
        %v7425 = vadd.f32 %v7275, %v7342
        %v7426 = vadd.f32 %v7276, %v7346
        %v7427 = vadd.f32 %v7277, %v7334
        %v7428 = vadd.f32 %v7278, %v7338
        %v7429 = vadd.f32 %v7279, %v7342
        %v7430 = vadd.f32 %v7280, %v7346
        %v7431 = vadd.f32 %v7281, %v7334
        %v7432 = vadd.f32 %v7282, %v7338
        %v7433 = vadd.f32 %v7283, %v7342
        %v7434 = vadd.f32 %v7284, %v7346
        %v7435 = vadd.f32 %v7285, %v7334
        %v7436 = vadd.f32 %v7286, %v7338
        %v7437 = vadd.f32 %v7287, %v7342
        %v7438 = vadd.f32 %v7288, %v7346
        %v7439 = vadd.f32 %v7289, %v7334
        %v7440 = vadd.f32 %v7290, %v7338
        %v7441 = vadd.f32 %v7291, %v7342
        %v7442 = vadd.f32 %v7292, %v7346
        %v7443 = vadd.f32 %v7293, %v7334
        %v7444 = vadd.f32 %v7294, %v7338
        %v7445 = vadd.f32 %v7295, %v7342
        %v7446 = vadd.f32 %v7296, %v7346
        %v7447 = vadd.f32 %v7297, %v7334
        %v7448 = vadd.f32 %v7298, %v7338
        %v7449 = vadd.f32 %v7299, %v7342
        %v7450 = vadd.f32 %v7300, %v7346
        %v7451 = vadd.f32 %v7301, %v7334
        %v7452 = vadd.f32 %v7302, %v7338
        %v7453 = vadd.f32 %v7303, %v7342
        %v7454 = vadd.f32 %v7304, %v7346
        %v7455 = vadd.f32 %v7305, %v7334
        %v7456 = vadd.f32 %v7306, %v7338
        %v7457 = vadd.f32 %v7307, %v7342
        %v7458 = vadd.f32 %v7308, %v7346
        %v7459 = vadd.f32 %v7309, %v7334
        %v7460 = vadd.f32 %v7310, %v7338
        %v7461 = vadd.f32 %v7311, %v7342
        %v7462 = vadd.f32 %v7312, %v7346
        %v7463 = vadd.f32 %v7313, %v7334
        %v7464 = vadd.f32 %v7314, %v7338
        %v7465 = vadd.f32 %v7315, %v7342
        %v7466 = vadd.f32 %v7316, %v7346
        %v7467 = vadd.f32 %v7317, %v7334
        %v7468 = vadd.f32 %v7318, %v7338
        %v7469 = vadd.f32 %v7319, %v7342
        %v7470 = vadd.f32 %v7320, %v7346
        %v7471 = vadd.f32 %v7321, %v7334
        %v7472 = vadd.f32 %v7322, %v7338
        %v7473 = vadd.f32 %v7323, %v7342
        %v7474 = vadd.f32 %v7324, %v7346
        %v7475 = vadd.f32 %v7325, %v7334
        %v7476 = vadd.f32 %v7326, %v7338
        %v7477 = vadd.f32 %v7327, %v7342
        %v7478 = vadd.f32 %v7328, %v7346
        %v7479 = vadd.f32 %v7351, %v6537
        %v7480 = vadd.f32 %v7352, %v6538
        %v7481 = vadd.f32 %v7353, %v6539
        %v7482 = vadd.f32 %v7354, %v6540
        %v7483 = vadd.f32 %v7355, %v6541
        %v7484 = vadd.f32 %v7356, %v6542
        %v7485 = vadd.f32 %v7357, %v6543
        %v7486 = vadd.f32 %v7358, %v6544
        %v7487 = vadd.f32 %v7359, %v6545
        %v7488 = vadd.f32 %v7360, %v6546
        %v7489 = vadd.f32 %v7361, %v6547
        %v7490 = vadd.f32 %v7362, %v6548
        %v7491 = vadd.f32 %v7363, %v6549
        %v7492 = vadd.f32 %v7364, %v6550
        %v7493 = vadd.f32 %v7365, %v6551
        %v7494 = vadd.f32 %v7366, %v6552
        %v7495 = vadd.f32 %v7367, %v6553
        %v7496 = vadd.f32 %v7368, %v6554
        %v7497 = vadd.f32 %v7369, %v6555
        %v7498 = vadd.f32 %v7370, %v6556
        %v7499 = vadd.f32 %v7371, %v6557
        %v7500 = vadd.f32 %v7372, %v6558
        %v7501 = vadd.f32 %v7373, %v6559
        %v7502 = vadd.f32 %v7374, %v6560
        %v7503 = vadd.f32 %v7375, %v6561
        %v7504 = vadd.f32 %v7376, %v6562
        %v7505 = vadd.f32 %v7377, %v6563
        %v7506 = vadd.f32 %v7378, %v6564
        %v7507 = vadd.f32 %v7379, %v6565
        %v7508 = vadd.f32 %v7380, %v6566
        %v7509 = vadd.f32 %v7381, %v6567
        %v7510 = vadd.f32 %v7382, %v6568
        %v7511 = vadd.f32 %v7383, %v6569
        %v7512 = vadd.f32 %v7384, %v6570
        %v7513 = vadd.f32 %v7385, %v6571
        %v7514 = vadd.f32 %v7386, %v6572
        %v7515 = vadd.f32 %v7387, %v6573
        %v7516 = vadd.f32 %v7388, %v6574
        %v7517 = vadd.f32 %v7389, %v6575
        %v7518 = vadd.f32 %v7390, %v6576
        %v7519 = vadd.f32 %v7391, %v6577
        %v7520 = vadd.f32 %v7392, %v6578
        %v7521 = vadd.f32 %v7393, %v6579
        %v7522 = vadd.f32 %v7394, %v6580
        %v7523 = vadd.f32 %v7395, %v6581
        %v7524 = vadd.f32 %v7396, %v6582
        %v7525 = vadd.f32 %v7397, %v6583
        %v7526 = vadd.f32 %v7398, %v6584
        %v7527 = vadd.f32 %v7399, %v6585
        %v7528 = vadd.f32 %v7400, %v6586
        %v7529 = vadd.f32 %v7401, %v6587
        %v7530 = vadd.f32 %v7402, %v6588
        %v7531 = vadd.f32 %v7403, %v6589
        %v7532 = vadd.f32 %v7404, %v6590
        %v7533 = vadd.f32 %v7405, %v6591
        %v7534 = vadd.f32 %v7406, %v6592
        %v7535 = vadd.f32 %v7407, %v6593
        %v7536 = vadd.f32 %v7408, %v6594
        %v7537 = vadd.f32 %v7409, %v6595
        %v7538 = vadd.f32 %v7410, %v6596
        %v7539 = vadd.f32 %v7411, %v6597
        %v7540 = vadd.f32 %v7412, %v6598
        %v7541 = vadd.f32 %v7413, %v6599
        %v7542 = vadd.f32 %v7414, %v6600
        %v7543 = vadd.f32 %v7415, %v6601
        %v7544 = vadd.f32 %v7416, %v6602
        %v7545 = vadd.f32 %v7417, %v6603
        %v7546 = vadd.f32 %v7418, %v6604
        %v7547 = vadd.f32 %v7419, %v6605
        %v7548 = vadd.f32 %v7420, %v6606
        %v7549 = vadd.f32 %v7421, %v6607
        %v7550 = vadd.f32 %v7422, %v6608
        %v7551 = vadd.f32 %v7423, %v6609
        %v7552 = vadd.f32 %v7424, %v6610
        %v7553 = vadd.f32 %v7425, %v6611
        %v7554 = vadd.f32 %v7426, %v6612
        %v7555 = vadd.f32 %v7427, %v6613
        %v7556 = vadd.f32 %v7428, %v6614
        %v7557 = vadd.f32 %v7429, %v6615
        %v7558 = vadd.f32 %v7430, %v6616
        %v7559 = vadd.f32 %v7431, %v6617
        %v7560 = vadd.f32 %v7432, %v6618
        %v7561 = vadd.f32 %v7433, %v6619
        %v7562 = vadd.f32 %v7434, %v6620
        %v7563 = vadd.f32 %v7435, %v6621
        %v7564 = vadd.f32 %v7436, %v6622
        %v7565 = vadd.f32 %v7437, %v6623
        %v7566 = vadd.f32 %v7438, %v6624
        %v7567 = vadd.f32 %v7439, %v6625
        %v7568 = vadd.f32 %v7440, %v6626
        %v7569 = vadd.f32 %v7441, %v6627
        %v7570 = vadd.f32 %v7442, %v6628
        %v7571 = vadd.f32 %v7443, %v6629
        %v7572 = vadd.f32 %v7444, %v6630
        %v7573 = vadd.f32 %v7445, %v6631
        %v7574 = vadd.f32 %v7446, %v6632
        %v7575 = vadd.f32 %v7447, %v6633
        %v7576 = vadd.f32 %v7448, %v6634
        %v7577 = vadd.f32 %v7449, %v6635
        %v7578 = vadd.f32 %v7450, %v6636
        %v7579 = vadd.f32 %v7451, %v6637
        %v7580 = vadd.f32 %v7452, %v6638
        %v7581 = vadd.f32 %v7453, %v6639
        %v7582 = vadd.f32 %v7454, %v6640
        %v7583 = vadd.f32 %v7455, %v6641
        %v7584 = vadd.f32 %v7456, %v6642
        %v7585 = vadd.f32 %v7457, %v6643
        %v7586 = vadd.f32 %v7458, %v6644
        %v7587 = vadd.f32 %v7459, %v6645
        %v7588 = vadd.f32 %v7460, %v6646
        %v7589 = vadd.f32 %v7461, %v6647
        %v7590 = vadd.f32 %v7462, %v6648
        %v7591 = vadd.f32 %v7463, %v6649
        %v7592 = vadd.f32 %v7464, %v6650
        %v7593 = vadd.f32 %v7465, %v6651
        %v7594 = vadd.f32 %v7466, %v6652
        %v7595 = vadd.f32 %v7467, %v6653
        %v7596 = vadd.f32 %v7468, %v6654
        %v7597 = vadd.f32 %v7469, %v6655
        %v7598 = vadd.f32 %v7470, %v6656
        %v7599 = vadd.f32 %v7471, %v6657
        %v7600 = vadd.f32 %v7472, %v6658
        %v7601 = vadd.f32 %v7473, %v6659
        %v7602 = vadd.f32 %v7474, %v6660
        %v7603 = vadd.f32 %v7475, %v6661
        %v7604 = vadd.f32 %v7476, %v6662
        %v7605 = vadd.f32 %v7477, %v6663
        %v7606 = vadd.f32 %v7478, %v6664
        %v7607 = vpack.c.bf16 %v7483, %v7479
        %v7608 = vpack.c.bf16 %v7484, %v7480
        %v7609 = vpack.c.bf16 %v7485, %v7481
        %v7610 = vpack.c.bf16 %v7486, %v7482
        %v7611 = vpack.c.bf16 %v7491, %v7487
        %v7612 = vpack.c.bf16 %v7492, %v7488
        %v7613 = vpack.c.bf16 %v7493, %v7489
        %v7614 = vpack.c.bf16 %v7494, %v7490
        %v7615 = vpack.c.bf16 %v7499, %v7495
        %v7616 = vpack.c.bf16 %v7500, %v7496
        %v7617 = vpack.c.bf16 %v7501, %v7497
        %v7618 = vpack.c.bf16 %v7502, %v7498
        %v7619 = vpack.c.bf16 %v7507, %v7503
        %v7620 = vpack.c.bf16 %v7508, %v7504
        %v7621 = vpack.c.bf16 %v7509, %v7505
        %v7622 = vpack.c.bf16 %v7510, %v7506
        %v7623 = vpack.c.bf16 %v7515, %v7511
        %v7624 = vpack.c.bf16 %v7516, %v7512
        %v7625 = vpack.c.bf16 %v7517, %v7513
        %v7626 = vpack.c.bf16 %v7518, %v7514
        %v7627 = vpack.c.bf16 %v7523, %v7519
        %v7628 = vpack.c.bf16 %v7524, %v7520
        %v7629 = vpack.c.bf16 %v7525, %v7521
        %v7630 = vpack.c.bf16 %v7526, %v7522
        %v7631 = vpack.c.bf16 %v7531, %v7527
        %v7632 = vpack.c.bf16 %v7532, %v7528
        %v7633 = vpack.c.bf16 %v7533, %v7529
        %v7634 = vpack.c.bf16 %v7534, %v7530
        %v7635 = vpack.c.bf16 %v7539, %v7535
        %v7636 = vpack.c.bf16 %v7540, %v7536
        %v7637 = vpack.c.bf16 %v7541, %v7537
        %v7638 = vpack.c.bf16 %v7542, %v7538
        %v7639 = vpack.c.bf16 %v7547, %v7543
        %v7640 = vpack.c.bf16 %v7548, %v7544
        %v7641 = vpack.c.bf16 %v7549, %v7545
        %v7642 = vpack.c.bf16 %v7550, %v7546
        %v7643 = vpack.c.bf16 %v7555, %v7551
        %v7644 = vpack.c.bf16 %v7556, %v7552
        %v7645 = vpack.c.bf16 %v7557, %v7553
        %v7646 = vpack.c.bf16 %v7558, %v7554
        %v7647 = vpack.c.bf16 %v7563, %v7559
        %v7648 = vpack.c.bf16 %v7564, %v7560
        %v7649 = vpack.c.bf16 %v7565, %v7561
        %v7650 = vpack.c.bf16 %v7566, %v7562
        %v7651 = vpack.c.bf16 %v7571, %v7567
        %v7652 = vpack.c.bf16 %v7572, %v7568
        %v7653 = vpack.c.bf16 %v7573, %v7569
        %v7654 = vpack.c.bf16 %v7574, %v7570
        %v7655 = vpack.c.bf16 %v7579, %v7575
        %v7656 = vpack.c.bf16 %v7580, %v7576
        %v7657 = vpack.c.bf16 %v7581, %v7577
        %v7658 = vpack.c.bf16 %v7582, %v7578
        %v7659 = vpack.c.bf16 %v7587, %v7583
        %v7660 = vpack.c.bf16 %v7588, %v7584
        %v7661 = vpack.c.bf16 %v7589, %v7585
        %v7662 = vpack.c.bf16 %v7590, %v7586
        %v7663 = vpack.c.bf16 %v7595, %v7591
        %v7664 = vpack.c.bf16 %v7596, %v7592
        %v7665 = vpack.c.bf16 %v7597, %v7593
        %v7666 = vpack.c.bf16 %v7598, %v7594
        %v7667 = vpack.c.bf16 %v7603, %v7599
        %v7668 = vpack.c.bf16 %v7604, %v7600
        %v7669 = vpack.c.bf16 %v7605, %v7601
        %v7670 = vpack.c.bf16 %v7606, %v7602
        %v7671 = vld [vmem:[#allocation14] sm:$0xf]
        %v7672 = vld [vmem:[#allocation14 + $0x4] sm:$0xf]
        %v7673 = vld [vmem:[#allocation14 + $0x8] sm:$0xf]
        %v7674 = vld [vmem:[#allocation14 + $0xc] sm:$0xf]
        %v7675 = vld [vmem:[#allocation14 + $0x10] sm:$0xf]
        %v7676 = vld [vmem:[#allocation14 + $0x14] sm:$0xf]
        %v7677 = vld [vmem:[#allocation14 + $0x18] sm:$0xf]
        %v7678 = vld [vmem:[#allocation14 + $0x1c] sm:$0xf]
        %v7679 = vld [vmem:[#allocation14 + $0x20] sm:$0xf]
        %v7680 = vld [vmem:[#allocation14 + $0x24] sm:$0xf]
        %v7681 = vld [vmem:[#allocation14 + $0x28] sm:$0xf]
        %v7682 = vld [vmem:[#allocation14 + $0x2c] sm:$0xf]
        %v7683 = vld [vmem:[#allocation14 + $0x30] sm:$0xf]
        %v7684 = vld [vmem:[#allocation14 + $0x34] sm:$0xf]
        %v7685 = vld [vmem:[#allocation14 + $0x38] sm:$0xf]
        %v7686 = vld [vmem:[#allocation14 + $0x3c] sm:$0xf]
        %v7687 = vld [vmem:[#allocation14 + $0x40] sm:$0xf]
        %v7688 = vld [vmem:[#allocation14 + $0x44] sm:$0xf]
        %v7689 = vld [vmem:[#allocation14 + $0x48] sm:$0xf]
        %v7690 = vld [vmem:[#allocation14 + $0x4c] sm:$0xf]
        %v7691 = vld [vmem:[#allocation14 + $0x50] sm:$0xf]
        %v7692 = vld [vmem:[#allocation14 + $0x54] sm:$0xf]
        %v7693 = vld [vmem:[#allocation14 + $0x58] sm:$0xf]
        %v7694 = vld [vmem:[#allocation14 + $0x5c] sm:$0xf]
        %v7695 = vld [vmem:[#allocation14 + $0x60] sm:$0xf]
        %v7696 = vld [vmem:[#allocation14 + $0x64] sm:$0xf]
        %v7697 = vld [vmem:[#allocation14 + $0x68] sm:$0xf]
        %v7698 = vld [vmem:[#allocation14 + $0x6c] sm:$0xf]
        %v7699 = vld [vmem:[#allocation14 + $0x70] sm:$0xf]
        %v7700 = vld [vmem:[#allocation14 + $0x74] sm:$0xf]
        %v7701 = vld [vmem:[#allocation14 + $0x78] sm:$0xf]
        %v7702 = vld [vmem:[#allocation14 + $0x7c] sm:$0xf]
        %v7703 = vld [vmem:[#allocation14 + $0x80] sm:$0xf]
        %v7704 = vld [vmem:[#allocation14 + $0x84] sm:$0xf]
        %v7705 = vld [vmem:[#allocation14 + $0x88] sm:$0xf]
        %v7706 = vld [vmem:[#allocation14 + $0x8c] sm:$0xf]
        %v7707 = vld [vmem:[#allocation14 + $0x90] sm:$0xf]
        %v7708 = vld [vmem:[#allocation14 + $0x94] sm:$0xf]
        %v7709 = vld [vmem:[#allocation14 + $0x98] sm:$0xf]
        %v7710 = vld [vmem:[#allocation14 + $0x9c] sm:$0xf]
        %v7711 = vld [vmem:[#allocation14 + $0xa0] sm:$0xf]
        %v7712 = vld [vmem:[#allocation14 + $0xa4] sm:$0xf]
        %v7713 = vld [vmem:[#allocation14 + $0xa8] sm:$0xf]
        %v7714 = vld [vmem:[#allocation14 + $0xac] sm:$0xf]
        %v7715 = vld [vmem:[#allocation14 + $0xb0] sm:$0xf]
        %v7716 = vld [vmem:[#allocation14 + $0xb4] sm:$0xf]
        %v7717 = vld [vmem:[#allocation14 + $0xb8] sm:$0xf]
        %v7718 = vld [vmem:[#allocation14 + $0xbc] sm:$0xf]
        %v7719 = vld [vmem:[#allocation14 + $0xc0] sm:$0xf]
        %v7720 = vld [vmem:[#allocation14 + $0xc4] sm:$0xf]
        %v7721 = vld [vmem:[#allocation14 + $0xc8] sm:$0xf]
        %v7722 = vld [vmem:[#allocation14 + $0xcc] sm:$0xf]
        %v7723 = vld [vmem:[#allocation14 + $0xd0] sm:$0xf]
        %v7724 = vld [vmem:[#allocation14 + $0xd4] sm:$0xf]
        %v7725 = vld [vmem:[#allocation14 + $0xd8] sm:$0xf]
        %v7726 = vld [vmem:[#allocation14 + $0xdc] sm:$0xf]
        %v7727 = vld [vmem:[#allocation14 + $0xe0] sm:$0xf]
        %v7728 = vld [vmem:[#allocation14 + $0xe4] sm:$0xf]
        %v7729 = vld [vmem:[#allocation14 + $0xe8] sm:$0xf]
        %v7730 = vld [vmem:[#allocation14 + $0xec] sm:$0xf]
        %v7731 = vld [vmem:[#allocation14 + $0xf0] sm:$0xf]
        %v7732 = vld [vmem:[#allocation14 + $0xf4] sm:$0xf]
        %v7733 = vld [vmem:[#allocation14 + $0xf8] sm:$0xf]
        %v7734 = vld [vmem:[#allocation14 + $0xfc] sm:$0xf]
        %v7735 = vld [vmem:[%s11] sm:$0x1]
        %v7737 = vlaneseq
        %v7738 = vshrl.u32 %v7737, 7
        %v7739 = vsub.s32 0, %v7738
        %v7740 = vrot.slane %v7735, %v7739
        %v7806 = vunpack.c.l.b16 %v7671
        %v7807 = vunpack.c.l.b16 %v7672
        %v7808 = vunpack.c.l.b16 %v7673
        %v7809 = vunpack.c.l.b16 %v7674
        %v7810 = vunpack.c.l.b16 %v7675
        %v7811 = vunpack.c.l.b16 %v7676
        %v7812 = vunpack.c.l.b16 %v7677
        %v7813 = vunpack.c.l.b16 %v7678
        %v7814 = vunpack.c.l.b16 %v7679
        %v7815 = vunpack.c.l.b16 %v7680
        %v7816 = vunpack.c.l.b16 %v7681
        %v7817 = vunpack.c.l.b16 %v7682
        %v7818 = vunpack.c.l.b16 %v7683
        %v7819 = vunpack.c.l.b16 %v7684
        %v7820 = vunpack.c.l.b16 %v7685
        %v7821 = vunpack.c.l.b16 %v7686
        %v7822 = vunpack.c.l.b16 %v7687
        %v7823 = vunpack.c.l.b16 %v7688
        %v7824 = vunpack.c.l.b16 %v7689
        %v7825 = vunpack.c.l.b16 %v7690
        %v7826 = vunpack.c.l.b16 %v7691
        %v7827 = vunpack.c.l.b16 %v7692
        %v7828 = vunpack.c.l.b16 %v7693
        %v7829 = vunpack.c.l.b16 %v7694
        %v7830 = vunpack.c.l.b16 %v7695
        %v7831 = vunpack.c.l.b16 %v7696
        %v7832 = vunpack.c.l.b16 %v7697
        %v7833 = vunpack.c.l.b16 %v7698
        %v7834 = vunpack.c.l.b16 %v7699
        %v7835 = vunpack.c.l.b16 %v7700
        %v7836 = vunpack.c.l.b16 %v7701
        %v7837 = vunpack.c.l.b16 %v7702
        %v7838 = vunpack.c.l.b16 %v7703
        %v7839 = vunpack.c.l.b16 %v7704
        %v7840 = vunpack.c.l.b16 %v7705
        %v7841 = vunpack.c.l.b16 %v7706
        %v7842 = vunpack.c.l.b16 %v7707
        %v7843 = vunpack.c.l.b16 %v7708
        %v7844 = vunpack.c.l.b16 %v7709
        %v7845 = vunpack.c.l.b16 %v7710
        %v7846 = vunpack.c.l.b16 %v7711
        %v7847 = vunpack.c.l.b16 %v7712
        %v7848 = vunpack.c.l.b16 %v7713
        %v7849 = vunpack.c.l.b16 %v7714
        %v7850 = vunpack.c.l.b16 %v7715
        %v7851 = vunpack.c.l.b16 %v7716
        %v7852 = vunpack.c.l.b16 %v7717
        %v7853 = vunpack.c.l.b16 %v7718
        %v7854 = vunpack.c.l.b16 %v7719
        %v7855 = vunpack.c.l.b16 %v7720
        %v7856 = vunpack.c.l.b16 %v7721
        %v7857 = vunpack.c.l.b16 %v7722
        %v7858 = vunpack.c.l.b16 %v7723
        %v7859 = vunpack.c.l.b16 %v7724
        %v7860 = vunpack.c.l.b16 %v7725
        %v7861 = vunpack.c.l.b16 %v7726
        %v7862 = vunpack.c.l.b16 %v7727
        %v7863 = vunpack.c.l.b16 %v7728
        %v7864 = vunpack.c.l.b16 %v7729
        %v7865 = vunpack.c.l.b16 %v7730
        %v7866 = vunpack.c.l.b16 %v7731
        %v7867 = vunpack.c.l.b16 %v7732
        %v7868 = vunpack.c.l.b16 %v7733
        %v7869 = vunpack.c.l.b16 %v7734
        %v7870 = vpack.c.b16 %v7807, %v7806
        %v7871 = vpack.c.b16 %v7809, %v7808
        %v7872 = vpack.c.b16 %v7811, %v7810
        %v7873 = vpack.c.b16 %v7813, %v7812
        %v7874 = vpack.c.b16 %v7815, %v7814
        %v7875 = vpack.c.b16 %v7817, %v7816
        %v7876 = vpack.c.b16 %v7819, %v7818
        %v7877 = vpack.c.b16 %v7821, %v7820
        %v7878 = vpack.c.b16 %v7823, %v7822
        %v7879 = vpack.c.b16 %v7825, %v7824
        %v7880 = vpack.c.b16 %v7827, %v7826
        %v7881 = vpack.c.b16 %v7829, %v7828
        %v7882 = vpack.c.b16 %v7831, %v7830
        %v7883 = vpack.c.b16 %v7833, %v7832
        %v7884 = vpack.c.b16 %v7835, %v7834
        %v7885 = vpack.c.b16 %v7837, %v7836
        %v7886 = vpack.c.b16 %v7839, %v7838
        %v7887 = vpack.c.b16 %v7841, %v7840
        %v7888 = vpack.c.b16 %v7843, %v7842
        %v7889 = vpack.c.b16 %v7845, %v7844
        %v7890 = vpack.c.b16 %v7847, %v7846
        %v7891 = vpack.c.b16 %v7849, %v7848
        %v7892 = vpack.c.b16 %v7851, %v7850
        %v7893 = vpack.c.b16 %v7853, %v7852
        %v7894 = vpack.c.b16 %v7855, %v7854
        %v7895 = vpack.c.b16 %v7857, %v7856
        %v7896 = vpack.c.b16 %v7859, %v7858
        %v7897 = vpack.c.b16 %v7861, %v7860
        %v7898 = vpack.c.b16 %v7863, %v7862
        %v7899 = vpack.c.b16 %v7865, %v7864
        %v7900 = vpack.c.b16 %v7867, %v7866
        %v7901 = vpack.c.b16 %v7869, %v7868
        %7934 = vmatprep.subr.bf16.mxu0 0
        %7935 = vmatpush1.bf16.msra.mxu0 %v7877
        %7936 = vmatprep.subr.bf16.mxu0 0
        %7937 = vmatpush1.bf16.msra.mxu0 %v7876
        %7938 = vmatprep.subr.bf16.mxu0 0
        %7939 = vmatpush1.bf16.msra.mxu0 %v7875
        %7940 = vmatprep.subr.bf16.mxu0 0
        %7941 = vmatpush1.bf16.msra.mxu0 %v7874
        %7942 = vmatprep.subr.bf16.mxu0 0
        %7943 = vmatpush1.bf16.msra.mxu0 %v7873
        %7944 = vmatprep.subr.bf16.mxu0 0
        %7945 = vmatpush1.bf16.msra.mxu0 %v7872
        %7946 = vmatprep.subr.bf16.mxu0 0
        %7947 = vmatpush1.bf16.msra.mxu0 %v7871
        %7948 = vmatprep.subr.bf16.mxu0 0
        %7949 = vmatpush1.bf16.msra.mxu0 %v7870
        %7950 = vmatprep.subr.bf16.mxu0 0
        %7951 = vmatpush2.bf16.msra.mxu0 %v7885
        %7952 = vmatprep.subr.bf16.mxu0 0
        %7953 = vmatpush2.bf16.msra.mxu0 %v7884
        %7954 = vmatprep.subr.bf16.mxu0 0
        %7955 = vmatpush2.bf16.msra.mxu0 %v7883
        %7956 = vmatprep.subr.bf16.mxu0 0
        %7957 = vmatpush2.bf16.msra.mxu0 %v7882
        %7958 = vmatprep.subr.bf16.mxu0 0
        %7959 = vmatpush2.bf16.msra.mxu0 %v7881
        %7960 = vmatprep.subr.bf16.mxu0 0
        %7961 = vmatpush2.bf16.msra.mxu0 %v7880
        %7962 = vmatprep.subr.bf16.mxu0 0
        %7963 = vmatpush2.bf16.msra.mxu0 %v7879
        %7964 = vmatprep.subr.bf16.mxu0 0
        %7965 = vmatpush2.bf16.msra.mxu0 %v7878
        %7966 = vmatprep.mubr.bf16.mxu0 %v7608
        %7967 = vmatmul.mubr.bf16.gmra.mxu0 %v7607
        %v7968 = vpop.f32.mrf.mxu0
        %v7969 = vadd.f32 %v7740, %v7968
        %v7970 = vpop.f32.mrf.mxu0
        %v7971 = vpop.f32.mrf.mxu0
        %v7972 = vadd.f32 %v7740, %v7971
        %v7973 = vpop.f32.mrf.mxu0
        %7974 = vmatprep.mubr.bf16.mxu0 %v7612
        %7975 = vmatmul.mubr.bf16.gmra.mxu0 %v7611
        %v7976 = vpop.f32.mrf.mxu0
        %v7977 = vadd.f32 %v7740, %v7976
        %v7978 = vpop.f32.mrf.mxu0
        %v7979 = vpop.f32.mrf.mxu0
        %v7980 = vadd.f32 %v7740, %v7979
        %v7981 = vpop.f32.mrf.mxu0
        %7982 = vmatprep.mubr.bf16.mxu0 %v7616
        %7983 = vmatmul.mubr.bf16.gmra.mxu0 %v7615
        %v7984 = vpop.f32.mrf.mxu0
        %v7985 = vadd.f32 %v7740, %v7984
        %v7986 = vpop.f32.mrf.mxu0
        %v7987 = vpop.f32.mrf.mxu0
        %v7988 = vadd.f32 %v7740, %v7987
        %v7989 = vpop.f32.mrf.mxu0
        %7990 = vmatprep.mubr.bf16.mxu0 %v7620
        %7991 = vmatmul.mubr.bf16.gmra.mxu0 %v7619
        %v7992 = vpop.f32.mrf.mxu0
        %v7993 = vadd.f32 %v7740, %v7992
        %v7994 = vpop.f32.mrf.mxu0
        %v7995 = vpop.f32.mrf.mxu0
        %v7996 = vadd.f32 %v7740, %v7995
        %v7997 = vpop.f32.mrf.mxu0
        %7998 = vmatprep.mubr.bf16.mxu0 %v7624
        %7999 = vmatmul.mubr.bf16.gmra.mxu0 %v7623
        %v8000 = vpop.f32.mrf.mxu0
        %v8001 = vadd.f32 %v7740, %v8000
        %v8002 = vpop.f32.mrf.mxu0
        %v8003 = vpop.f32.mrf.mxu0
        %v8004 = vadd.f32 %v7740, %v8003
        %v8005 = vpop.f32.mrf.mxu0
        %8006 = vmatprep.mubr.bf16.mxu0 %v7628
        %8007 = vmatmul.mubr.bf16.gmra.mxu0 %v7627
        %v8008 = vpop.f32.mrf.mxu0
        %v8009 = vadd.f32 %v7740, %v8008
        %v8010 = vpop.f32.mrf.mxu0
        %v8011 = vpop.f32.mrf.mxu0
        %v8012 = vadd.f32 %v7740, %v8011
        %v8013 = vpop.f32.mrf.mxu0
        %8014 = vmatprep.mubr.bf16.mxu0 %v7632
        %8015 = vmatmul.mubr.bf16.gmra.mxu0 %v7631
        %v8016 = vpop.f32.mrf.mxu0
        %v8017 = vadd.f32 %v7740, %v8016
        %v8018 = vpop.f32.mrf.mxu0
        %v8019 = vpop.f32.mrf.mxu0
        %v8020 = vadd.f32 %v7740, %v8019
        %v8021 = vpop.f32.mrf.mxu0
        %8022 = vmatprep.mubr.bf16.mxu0 %v7636
        %8023 = vmatmul.mubr.bf16.gmra.mxu0 %v7635
        %v8024 = vpop.f32.mrf.mxu0
        %v8025 = vadd.f32 %v7740, %v8024
        %v8026 = vpop.f32.mrf.mxu0
        %v8027 = vpop.f32.mrf.mxu0
        %v8028 = vadd.f32 %v7740, %v8027
        %v8029 = vpop.f32.mrf.mxu0
        %8030 = vmatprep.mubr.bf16.mxu0 %v7640
        %8031 = vmatmul.mubr.bf16.gmra.mxu0 %v7639
        %v8032 = vpop.f32.mrf.mxu0
        %v8033 = vadd.f32 %v7740, %v8032
        %v8034 = vpop.f32.mrf.mxu0
        %v8035 = vpop.f32.mrf.mxu0
        %v8036 = vadd.f32 %v7740, %v8035
        %v8037 = vpop.f32.mrf.mxu0
        %8038 = vmatprep.mubr.bf16.mxu0 %v7644
        %8039 = vmatmul.mubr.bf16.gmra.mxu0 %v7643
        %v8040 = vpop.f32.mrf.mxu0
        %v8041 = vadd.f32 %v7740, %v8040
        %v8042 = vpop.f32.mrf.mxu0
        %v8043 = vpop.f32.mrf.mxu0
        %v8044 = vadd.f32 %v7740, %v8043
        %v8045 = vpop.f32.mrf.mxu0
        %8046 = vmatprep.mubr.bf16.mxu0 %v7648
        %8047 = vmatmul.mubr.bf16.gmra.mxu0 %v7647
        %v8048 = vpop.f32.mrf.mxu0
        %v8049 = vadd.f32 %v7740, %v8048
        %v8050 = vpop.f32.mrf.mxu0
        %v8051 = vpop.f32.mrf.mxu0
        %v8052 = vadd.f32 %v7740, %v8051
        %v8053 = vpop.f32.mrf.mxu0
        %8054 = vmatprep.mubr.bf16.mxu0 %v7652
        %8055 = vmatmul.mubr.bf16.gmra.mxu0 %v7651
        %v8056 = vpop.f32.mrf.mxu0
        %v8057 = vadd.f32 %v7740, %v8056
        %v8058 = vpop.f32.mrf.mxu0
        %v8059 = vpop.f32.mrf.mxu0
        %v8060 = vadd.f32 %v7740, %v8059
        %v8061 = vpop.f32.mrf.mxu0
        %8062 = vmatprep.mubr.bf16.mxu0 %v7656
        %8063 = vmatmul.mubr.bf16.gmra.mxu0 %v7655
        %v8064 = vpop.f32.mrf.mxu0
        %v8065 = vadd.f32 %v7740, %v8064
        %v8066 = vpop.f32.mrf.mxu0
        %v8067 = vpop.f32.mrf.mxu0
        %v8068 = vadd.f32 %v7740, %v8067
        %v8069 = vpop.f32.mrf.mxu0
        %8070 = vmatprep.mubr.bf16.mxu0 %v7660
        %8071 = vmatmul.mubr.bf16.gmra.mxu0 %v7659
        %v8072 = vpop.f32.mrf.mxu0
        %v8073 = vadd.f32 %v7740, %v8072
        %v8074 = vpop.f32.mrf.mxu0
        %v8075 = vpop.f32.mrf.mxu0
        %v8076 = vadd.f32 %v7740, %v8075
        %v8077 = vpop.f32.mrf.mxu0
        %8078 = vmatprep.mubr.bf16.mxu0 %v7664
        %8079 = vmatmul.mubr.bf16.gmra.mxu0 %v7663
        %v8080 = vpop.f32.mrf.mxu0
        %v8081 = vadd.f32 %v7740, %v8080
        %v8082 = vpop.f32.mrf.mxu0
        %v8083 = vpop.f32.mrf.mxu0
        %v8084 = vadd.f32 %v7740, %v8083
        %v8085 = vpop.f32.mrf.mxu0
        %8086 = vmatprep.mubr.bf16.mxu0 %v7668
        %8087 = vmatmul.mubr.bf16.gmra.mxu0 %v7667
        %v8088 = vpop.f32.mrf.mxu0
        %v8089 = vadd.f32 %v7740, %v8088
        %v8090 = vpop.f32.mrf.mxu0
        %v8091 = vpop.f32.mrf.mxu0
        %v8092 = vadd.f32 %v7740, %v8091
        %v8093 = vpop.f32.mrf.mxu0
        %8094 = vdwg.mxu0
        %8095 = vmatprep.subr.bf16.mxu0 0
        %8096 = vmatpush1.bf16.msra.mxu0 %v7893
        %8097 = vmatprep.subr.bf16.mxu0 0
        %8098 = vmatpush1.bf16.msra.mxu0 %v7892
        %8099 = vmatprep.subr.bf16.mxu0 0
        %8100 = vmatpush1.bf16.msra.mxu0 %v7891
        %8101 = vmatprep.subr.bf16.mxu0 0
        %8102 = vmatpush1.bf16.msra.mxu0 %v7890
        %8103 = vmatprep.subr.bf16.mxu0 0
        %8104 = vmatpush1.bf16.msra.mxu0 %v7889
        %8105 = vmatprep.subr.bf16.mxu0 0
        %8106 = vmatpush1.bf16.msra.mxu0 %v7888
        %8107 = vmatprep.subr.bf16.mxu0 0
        %8108 = vmatpush1.bf16.msra.mxu0 %v7887
        %8109 = vmatprep.subr.bf16.mxu0 0
        %8110 = vmatpush1.bf16.msra.mxu0 %v7886
        %8111 = vmatprep.subr.bf16.mxu0 0
        %8112 = vmatpush2.bf16.msra.mxu0 %v7901
        %8113 = vmatprep.subr.bf16.mxu0 0
        %8114 = vmatpush2.bf16.msra.mxu0 %v7900
        %8115 = vmatprep.subr.bf16.mxu0 0
        %8116 = vmatpush2.bf16.msra.mxu0 %v7899
        %8117 = vmatprep.subr.bf16.mxu0 0
        %8118 = vmatpush2.bf16.msra.mxu0 %v7898
        %8119 = vmatprep.subr.bf16.mxu0 0
        %8120 = vmatpush2.bf16.msra.mxu0 %v7897
        %8121 = vmatprep.subr.bf16.mxu0 0
        %8122 = vmatpush2.bf16.msra.mxu0 %v7896
        %8123 = vmatprep.subr.bf16.mxu0 0
        %8124 = vmatpush2.bf16.msra.mxu0 %v7895
        %8125 = vmatprep.subr.bf16.mxu0 0
        %8126 = vmatpush2.bf16.msra.mxu0 %v7894
        %8127 = vmatprep.mubr.bf16.mxu0 %v7610
        %8128 = vmatmul.mubr.bf16.gmra.mxu0 %v7609
        %v8129 = vpop.f32.mrf.mxu0
        %v8130 = vadd.f32 %v7969, %v8129
        %v8131 = vpop.f32.mrf.mxu0
        %v8132 = vpop.f32.mrf.mxu0
        %v8133 = vadd.f32 %v7972, %v8132
        %v8134 = vpop.f32.mrf.mxu0
        %8135 = vmatprep.mubr.bf16.mxu0 %v7614
        %8136 = vmatmul.mubr.bf16.gmra.mxu0 %v7613
        %v8137 = vpop.f32.mrf.mxu0
        %v8138 = vadd.f32 %v7977, %v8137
        %v8139 = vpop.f32.mrf.mxu0
        %v8140 = vpop.f32.mrf.mxu0
        %v8141 = vadd.f32 %v7980, %v8140
        %v8142 = vpop.f32.mrf.mxu0
        %8143 = vmatprep.mubr.bf16.mxu0 %v7618
        %8144 = vmatmul.mubr.bf16.gmra.mxu0 %v7617
        %v8145 = vpop.f32.mrf.mxu0
        %v8146 = vadd.f32 %v7985, %v8145
        %v8147 = vpop.f32.mrf.mxu0
        %v8148 = vpop.f32.mrf.mxu0
        %v8149 = vadd.f32 %v7988, %v8148
        %v8150 = vpop.f32.mrf.mxu0
        %8151 = vmatprep.mubr.bf16.mxu0 %v7622
        %8152 = vmatmul.mubr.bf16.gmra.mxu0 %v7621
        %v8153 = vpop.f32.mrf.mxu0
        %v8154 = vadd.f32 %v7993, %v8153
        %v8155 = vpop.f32.mrf.mxu0
        %v8156 = vpop.f32.mrf.mxu0
        %v8157 = vadd.f32 %v7996, %v8156
        %v8158 = vpop.f32.mrf.mxu0
        %8159 = vmatprep.mubr.bf16.mxu0 %v7626
        %8160 = vmatmul.mubr.bf16.gmra.mxu0 %v7625
        %v8161 = vpop.f32.mrf.mxu0
        %v8162 = vadd.f32 %v8001, %v8161
        %v8163 = vpop.f32.mrf.mxu0
        %v8164 = vpop.f32.mrf.mxu0
        %v8165 = vadd.f32 %v8004, %v8164
        %v8166 = vpop.f32.mrf.mxu0
        %8167 = vmatprep.mubr.bf16.mxu0 %v7630
        %8168 = vmatmul.mubr.bf16.gmra.mxu0 %v7629
        %v8169 = vpop.f32.mrf.mxu0
        %v8170 = vadd.f32 %v8009, %v8169
        %v8171 = vpop.f32.mrf.mxu0
        %v8172 = vpop.f32.mrf.mxu0
        %v8173 = vadd.f32 %v8012, %v8172
        %v8174 = vpop.f32.mrf.mxu0
        %8175 = vmatprep.mubr.bf16.mxu0 %v7634
        %8176 = vmatmul.mubr.bf16.gmra.mxu0 %v7633
        %v8177 = vpop.f32.mrf.mxu0
        %v8178 = vadd.f32 %v8017, %v8177
        %v8179 = vpop.f32.mrf.mxu0
        %v8180 = vpop.f32.mrf.mxu0
        %v8181 = vadd.f32 %v8020, %v8180
        %v8182 = vpop.f32.mrf.mxu0
        %8183 = vmatprep.mubr.bf16.mxu0 %v7638
        %8184 = vmatmul.mubr.bf16.gmra.mxu0 %v7637
        %v8185 = vpop.f32.mrf.mxu0
        %v8186 = vadd.f32 %v8025, %v8185
        %v8187 = vpop.f32.mrf.mxu0
        %v8188 = vpop.f32.mrf.mxu0
        %v8189 = vadd.f32 %v8028, %v8188
        %v8190 = vpop.f32.mrf.mxu0
        %8191 = vmatprep.mubr.bf16.mxu0 %v7642
        %8192 = vmatmul.mubr.bf16.gmra.mxu0 %v7641
        %v8193 = vpop.f32.mrf.mxu0
        %v8194 = vadd.f32 %v8033, %v8193
        %v8195 = vpop.f32.mrf.mxu0
        %v8196 = vpop.f32.mrf.mxu0
        %v8197 = vadd.f32 %v8036, %v8196
        %v8198 = vpop.f32.mrf.mxu0
        %8199 = vmatprep.mubr.bf16.mxu0 %v7646
        %8200 = vmatmul.mubr.bf16.gmra.mxu0 %v7645
        %v8201 = vpop.f32.mrf.mxu0
        %v8202 = vadd.f32 %v8041, %v8201
        %v8203 = vpop.f32.mrf.mxu0
        %v8204 = vpop.f32.mrf.mxu0
        %v8205 = vadd.f32 %v8044, %v8204
        %v8206 = vpop.f32.mrf.mxu0
        %8207 = vmatprep.mubr.bf16.mxu0 %v7650
        %8208 = vmatmul.mubr.bf16.gmra.mxu0 %v7649
        %v8209 = vpop.f32.mrf.mxu0
        %v8210 = vadd.f32 %v8049, %v8209
        %v8211 = vpop.f32.mrf.mxu0
        %v8212 = vpop.f32.mrf.mxu0
        %v8213 = vadd.f32 %v8052, %v8212
        %v8214 = vpop.f32.mrf.mxu0
        %8215 = vmatprep.mubr.bf16.mxu0 %v7654
        %8216 = vmatmul.mubr.bf16.gmra.mxu0 %v7653
        %v8217 = vpop.f32.mrf.mxu0
        %v8218 = vadd.f32 %v8057, %v8217
        %v8219 = vpop.f32.mrf.mxu0
        %v8220 = vpop.f32.mrf.mxu0
        %v8221 = vadd.f32 %v8060, %v8220
        %v8222 = vpop.f32.mrf.mxu0
        %8223 = vmatprep.mubr.bf16.mxu0 %v7658
        %8224 = vmatmul.mubr.bf16.gmra.mxu0 %v7657
        %v8225 = vpop.f32.mrf.mxu0
        %v8226 = vadd.f32 %v8065, %v8225
        %v8227 = vpop.f32.mrf.mxu0
        %v8228 = vpop.f32.mrf.mxu0
        %v8229 = vadd.f32 %v8068, %v8228
        %v8230 = vpop.f32.mrf.mxu0
        %8231 = vmatprep.mubr.bf16.mxu0 %v7662
        %8232 = vmatmul.mubr.bf16.gmra.mxu0 %v7661
        %v8233 = vpop.f32.mrf.mxu0
        %v8234 = vadd.f32 %v8073, %v8233
        %v8235 = vpop.f32.mrf.mxu0
        %v8236 = vpop.f32.mrf.mxu0
        %v8237 = vadd.f32 %v8076, %v8236
        %v8238 = vpop.f32.mrf.mxu0
        %8239 = vmatprep.mubr.bf16.mxu0 %v7666
        %8240 = vmatmul.mubr.bf16.gmra.mxu0 %v7665
        %v8241 = vpop.f32.mrf.mxu0
        %v8242 = vadd.f32 %v8081, %v8241
        %v8243 = vpop.f32.mrf.mxu0
        %v8244 = vpop.f32.mrf.mxu0
        %v8245 = vadd.f32 %v8084, %v8244
        %v8246 = vpop.f32.mrf.mxu0
        %8247 = vmatprep.mubr.bf16.mxu0 %v7670
        %8248 = vmatmul.mubr.bf16.gmra.mxu0 %v7669
        %v8249 = vpop.f32.mrf.mxu0
        %v8250 = vadd.f32 %v8089, %v8249
        %v8251 = vpop.f32.mrf.mxu0
        %v8252 = vpop.f32.mrf.mxu0
        %v8253 = vadd.f32 %v8092, %v8252
        %v8254 = vpop.f32.mrf.mxu0
        %8255 = vdwg.mxu0
        %v8256 = vadd.f32 %v2346, %v8130
        %v8257 = vadd.f32 %v2324, %v8133
        %v8258 = vadd.f32 %v2347, %v8138
        %v8259 = vadd.f32 %v2325, %v8141
        %v8260 = vadd.f32 %v2348, %v8146
        %v8261 = vadd.f32 %v2326, %v8149
        %v8262 = vadd.f32 %v2349, %v8154
        %v8263 = vadd.f32 %v2327, %v8157
        %v8264 = vadd.f32 %v2350, %v8162
        %v8265 = vadd.f32 %v2328, %v8165
        %v8266 = vadd.f32 %v2351, %v8170
        %v8267 = vadd.f32 %v2329, %v8173
        %v8268 = vadd.f32 %v2352, %v8178
        %v8269 = vadd.f32 %v2330, %v8181
        %v8270 = vadd.f32 %v2353, %v8186
        %v8271 = vadd.f32 %v2331, %v8189
        %v8272 = vadd.f32 %v2354, %v8194
        %v8273 = vadd.f32 %v2332, %v8197
        %v8274 = vadd.f32 %v2355, %v8202
        %v8275 = vadd.f32 %v2333, %v8205
        %v8276 = vadd.f32 %v2356, %v8210
        %v8277 = vadd.f32 %v2334, %v8213
        %v8278 = vadd.f32 %v2357, %v8218
        %v8279 = vadd.f32 %v2335, %v8221
        %v8280 = vadd.f32 %v2358, %v8226
        %v8281 = vadd.f32 %v2336, %v8229
        %v8282 = vadd.f32 %v2359, %v8234
        %v8283 = vadd.f32 %v2337, %v8237
        %v8284 = vadd.f32 %v2360, %v8242
        %v8285 = vadd.f32 %v2338, %v8245
        %v8286 = vadd.f32 %v2361, %v8250
        %v8287 = vadd.f32 %v2339, %v8253
        %8288 = vst [vmem:[%s527] sm:$0xff] %v8256
        %8289 = vst [vmem:[%s527 + $0x8] sm:$0xff] %v8257
        %8290 = vst [vmem:[%s527 + $0x10] sm:$0xff] %v8258
        %8291 = vst [vmem:[%s527 + $0x18] sm:$0xff] %v8259
        %8292 = vst [vmem:[%s527 + $0x20] sm:$0xff] %v8260
        %8293 = vst [vmem:[%s527 + $0x28] sm:$0xff] %v8261
        %8294 = vst [vmem:[%s527 + $0x30] sm:$0xff] %v8262
        %8295 = vst [vmem:[%s527 + $0x38] sm:$0xff] %v8263
        %8296 = vst [vmem:[%s527 + $0x40] sm:$0xff] %v8264
        %8297 = vst [vmem:[%s527 + $0x48] sm:$0xff] %v8265
        %8298 = vst [vmem:[%s527 + $0x50] sm:$0xff] %v8266
        %8299 = vst [vmem:[%s527 + $0x58] sm:$0xff] %v8267
        %8300 = vst [vmem:[%s527 + $0x60] sm:$0xff] %v8268
        %8301 = vst [vmem:[%s527 + $0x68] sm:$0xff] %v8269
        %8302 = vst [vmem:[%s527 + $0x70] sm:$0xff] %v8270
        %8303 = vst [vmem:[%s527 + $0x78] sm:$0xff] %v8271
        %8304 = vst [vmem:[%s527 + $0x80] sm:$0xff] %v8272
        %8305 = vst [vmem:[%s527 + $0x88] sm:$0xff] %v8273
        %8306 = vst [vmem:[%s527 + $0x90] sm:$0xff] %v8274
        %8307 = vst [vmem:[%s527 + $0x98] sm:$0xff] %v8275
        %8308 = vst [vmem:[%s527 + $0xa0] sm:$0xff] %v8276
        %8309 = vst [vmem:[%s527 + $0xa8] sm:$0xff] %v8277
        %8310 = vst [vmem:[%s527 + $0xb0] sm:$0xff] %v8278
        %8311 = vst [vmem:[%s527 + $0xb8] sm:$0xff] %v8279
        %8312 = vst [vmem:[%s527 + $0xc0] sm:$0xff] %v8280
        %8313 = vst [vmem:[%s527 + $0xc8] sm:$0xff] %v8281
        %8314 = vst [vmem:[%s527 + $0xd0] sm:$0xff] %v8282
        %8315 = vst [vmem:[%s527 + $0xd8] sm:$0xff] %v8283
        %8316 = vst [vmem:[%s527 + $0xe0] sm:$0xff] %v8284
        %8317 = vst [vmem:[%s527 + $0xe8] sm:$0xff] %v8285
        %8318 = vst [vmem:[%s527 + $0xf0] sm:$0xff] %v8286
        %8319 = vst [vmem:[%s527 + $0xf8] sm:$0xff] %v8287
        %s8320 = sand.u32 %s298, 1
        %s8321 = scalar_lea.sflag [#allocation4], %s8320
        %s8322 = sand.u32 %s298, 1
        %s8323 = smul.addr %s8322, 256
        %s8324 = scalar_lea.vmem [#allocation16], %s8323
        // Predicated region
        $region101: #{tpu_custom_call.1} parent=67 // pred_check
          %p8325 = pneg %p308
        $region102: #{tpu_custom_call.1} parent=67 // pred_check_branch
          %8327 = sbr.rel (%p8325) target = $region104
        $region103: #{tpu_custom_call.1} parent=67 // pred_region
          %s8329 = ssub.s32 4096, 4096
          %8330 = vsyncadd %s8321, %s8329
          %s8331 = smul.addr %s33, 32
          %s8332 = smul.addr %s8331, 128
          %s8333 = scalar_lea.hbm %s12, %s8332
          %s8334 = sshll.u32 %s8324, 4
          %s8335 = int_to_ptr.vmem [resolvable:$true] %s8334
          %8340 = dma.vmem_to_hbm [thread:$0]  %s8335, 4096, %s8333, %s8321, 128, 128, 8
        $region104: #{tpu_custom_call.1} parent=67 // pred_fallthru
          _
      $region68: #{tpu_custom_call.1} parent=5 // pred_fallthru
        _
      %p8341 = scmp.le.s32.totalorder 2, %s28
      // Predicated region
      $region105: #{tpu_custom_call.1} parent=5 // pred_check
        %p8342 = pneg %p8341
      $region106: #{tpu_custom_call.1} parent=5 // pred_check_branch
        %8344 = sbr.rel (%p8342) target = $region108
      $region107: #{tpu_custom_call.1} parent=5 // pred_region
        %s8345 = ssub.s32 %s28, 2
        // Predicated region
        $region109: #{tpu_custom_call.1} parent=107 // pred_check
          %p8346 = pneg %p314
        $region110: #{tpu_custom_call.1} parent=107 // pred_check_branch
          %8348 = sbr.rel (%p8346) target = $region112
        $region111: #{tpu_custom_call.1} parent=107 // pred_region
          %s8349 = sand.u32 %s299, 1
          %s8350 = scalar_lea.sflag [#allocation4], %s8349
          %s8351 = sand.u32 %s299, 1
          %s8352 = smul.addr %s8351, 256
          %s8353 = scalar_lea.vmem [#allocation16], %s8352
          %8354 = dma.done %s8350, 4096
        $region112: #{tpu_custom_call.1} parent=107 // pred_fallthru
          _
      $region108: #{tpu_custom_call.1} parent=5 // pred_fallthru
        _
    $region6: #{tpu_custom_call.1} parent=1 // loop_footer
      %s32 = sadd.s32 1, %s28
    $region7: #{tpu_custom_call.1} parent=1 // loop_footer_branch
      %27 = sbr.rel target = $region3
    $region8: #{tpu_custom_call.1} parent=1 // loop_exit
      _
    %8355 = vsyncpa [#allocation3], 1
    %s8356 = scalar_lea.sflag [#allocation3], 1
    %8357 = vsyncpa %s8356, 1
    %8358 = vsyncpa [#allocation6], 1
    %8359 = vsyncpa [#allocation9], 1
    %8360 = vsyncpa [#allocation12], 1
    %8361 = vsyncpa [#allocation15], 1
    %8362 = vsyncpa [#allocation4], 1
    %s8363 = scalar_lea.sflag [#allocation4], 1
    %8364 = vsyncpa %s8363, 1

</llo_original>
